<compile_context>
chip_gen: v5e
topology: v5e:2x2
jax: 0.10.0
libtpu: 0.0.40
codegen_flags: <defaults>
</compile_context>

<pallas_src>
import jax
import jax.numpy as jnp
from jax import lax
from jax.experimental import pallas as pl
from jax.experimental.pallas import tpu as pltpu

V = 80      # vocab size
VP = 128    # lane-padded vocab size for the output head
E = 8       # embedding dim
H = 256     # LSTM hidden size


def lstm_kernel(xproj_ref,            # (T, B, 4H)  gathered (embed @ Wih0 + b0) per token
                whh0_ref,             # (H, 4H)     layer-0 recurrent weights
                w1_ref,               # (2H, 4H)    concat([Wih1, Whh1], axis=0)
                b1_ref,               # (1, 4H)     layer-1 bias (b_ih + b_hh)
                wout_ref,             # (H, VP)     head weight, zero-padded to 128 lanes
                bout_ref,             # (1, VP)     head bias, zero-padded
                out_ref,              # (B, VP)
                hcat_s,               # (B, 2H)  [:, :H] = h0, [:, H:] = h1
                c0_s, c1_s):          # (B, H)   cell states
    T = xproj_ref.shape[0]

    # zero-initialize recurrent state
    hcat_s[...] = jnp.zeros_like(hcat_s)
    c0_s[...] = jnp.zeros_like(c0_s)
    c1_s[...] = jnp.zeros_like(c1_s)

    # loop-invariant weights (VMEM resident, loaded once)
    whh0 = whh0_ref[...]
    w1 = w1_ref[...]
    b1 = b1_ref[...]

    def gates_to_hc(gates, c_prev):
        i = jax.nn.sigmoid(gates[:, 0 * H:1 * H])
        f = jax.nn.sigmoid(gates[:, 1 * H:2 * H])
        g = jnp.tanh(gates[:, 2 * H:3 * H])
        o = jax.nn.sigmoid(gates[:, 3 * H:4 * H])
        c_new = f * c_prev + i * g
        h_new = o * jnp.tanh(c_new)
        return h_new, c_new

    def step(t, carry):
        # --- layer 0: input projection was pre-folded into the gathered table ---
        gates0 = xproj_ref[t] + jnp.dot(hcat_s[:, :H], whh0,
                                        preferred_element_type=jnp.float32)
        h0_new, c0_new = gates_to_hc(gates0, c0_s[...])
        c0_s[...] = c0_new
        hcat_s[:, :H] = h0_new            # hcat = [h0_new | h1_prev]

        # --- layer 1: single fused matmul over the concatenated state (K = 2H) ---
        gates1 = jnp.dot(hcat_s[...], w1,
                         preferred_element_type=jnp.float32) + b1
        h1_new, c1_new = gates_to_hc(gates1, c1_s[...])
        c1_s[...] = c1_new
        hcat_s[:, H:] = h1_new
        return carry

    lax.fori_loop(0, T, step, 0, unroll=True)

    # Linear head on the last step's layer-1 hidden state, lane-dense (B, 128) output.
    out_ref[...] = (jnp.dot(hcat_s[:, H:], wout_ref[...],
                            preferred_element_type=jnp.float32) + bout_ref[...])


def char_lstm_forward(tokens, params):
    B, T = tokens.shape

    # Fold embedding + layer-0 input projection (+ layer-0 bias) into one lookup table.
    proj_table = params["embed"] @ params["wih0"] + params["b0"]       # (V, 4H)
    x_proj = jnp.take(proj_table, tokens, axis=0)                      # (B, T, 4H)
    x_proj = jnp.transpose(x_proj, (1, 0, 2)).astype(jnp.float32)      # (T, B, 4H) time-major

    # Fuse layer-1's two matmuls via weight concatenation.
    w1 = jnp.concatenate([params["wih1"], params["whh1"]], axis=0)     # (2H, 4H)

    # Lane-dense head: pad V=80 -> 128.
    wout_p = jnp.zeros((H, VP), jnp.float32).at[:, :V].set(params["wout"])
    bout_p = jnp.zeros((1, VP), jnp.float32).at[:, :V].set(params["bout"])

    grid_spec = pltpu.PrefetchScalarGridSpec(
        num_scalar_prefetch=0,
        grid=(1,),                                            # single invocation
        in_specs=[
            pl.BlockSpec((T, B, 4 * H), lambda i: (0, 0, 0)),  # x_proj (full, resident)
            pl.BlockSpec((H, 4 * H), lambda i: (0, 0)),        # W_hh layer0
            pl.BlockSpec((2 * H, 4 * H), lambda i: (0, 0)),    # fused W layer1
            pl.BlockSpec((1, 4 * H), lambda i: (0, 0)),        # bias layer1
            pl.BlockSpec((H, VP), lambda i: (0, 0)),           # W_out (padded)
            pl.BlockSpec((1, VP), lambda i: (0, 0)),           # b_out (padded)
        ],
        out_specs=pl.BlockSpec((B, VP), lambda i: (0, 0)),
        scratch_shapes=[
            pltpu.VMEM((B, 2 * H), jnp.float32),   # [h0 | h1]
            pltpu.VMEM((B, H), jnp.float32),       # c0
            pltpu.VMEM((B, H), jnp.float32),       # c1
        ],
    )

    out_padded = pl.pallas_call(
        lstm_kernel,
        out_shape=jax.ShapeDtypeStruct((B, VP), jnp.float32),
        grid_spec=grid_spec,
        compiler_params=pltpu.CompilerParams(
            dimension_semantics=("arbitrary",)),
    )(x_proj, params["whh0"], w1, params["b1"], wout_p, bout_p)

    return out_padded[:, :V]


def char_lstm_reference(tokens, params):
    """Pure-JAX reference for correctness checking (PyTorch LSTM semantics)."""
    B, T = tokens.shape
    x = jnp.take(params["embed"], tokens, axis=0)               # (B, T, E)

    def run_layer(x_seq, wih, whh, b):
        def step(carry, x_t):
            h, c = carry
            gates = x_t @ wih + h @ whh + b[0]
            i = jax.nn.sigmoid(gates[:, 0 * H:1 * H])
            f = jax.nn.sigmoid(gates[:, 1 * H:2 * H])
            g = jnp.tanh(gates[:, 2 * H:3 * H])
            o = jax.nn.sigmoid(gates[:, 3 * H:4 * H])
            c_new = f * c + i * g
            h_new = o * jnp.tanh(c_new)
            return (h_new, c_new), h_new

        h0 = jnp.zeros((B, H), jnp.float32)
        c0 = jnp.zeros((B, H), jnp.float32)
        _, hs = jax.lax.scan(step, (h0, c0), jnp.transpose(x_seq, (1, 0, 2)))
        return jnp.transpose(hs, (1, 0, 2))                      # (B, T, H)

    h_l0 = run_layer(x, params["wih0"], params["whh0"], params["b0"])
    h_l1 = run_layer(h_l0, params["wih1"], params["whh1"], params["b1"])
    return h_l1[:, -1, :] @ params["wout"] + params["bout"][0]


def init_params(key):
    ks = jax.random.split(key, 12)
    bound = 1.0 / jnp.sqrt(H)
    u = lambda k, shape: jax.random.uniform(k, shape, jnp.float32, -bound, bound)
    params = {
        "embed": jax.random.normal(ks[0], (V, E), jnp.float32),
        # PyTorch stores weight_ih_l* as (4H, in); we pre-transpose to (in, 4H).
        "wih0": u(ks[1], (E, 4 * H)),
        "whh0": u(ks[2], (H, 4 * H)),
        "b0":   u(ks[3], (1, 4 * H)) + u(ks[4], (1, 4 * H)),     # b_ih + b_hh
        "wih1": u(ks[5], (H, 4 * H)),
        "whh1": u(ks[6], (H, 4 * H)),
        "b1":   u(ks[7], (1, 4 * H)) + u(ks[8], (1, 4 * H)),
        "wout": u(ks[9], (H, V)),
        "bout": u(ks[10], (1, V)),
    }
    return params


if __name__ == "__main__":
    key = jax.random.PRNGKey(0)
    pkey, tkey = jax.random.split(key)
    params = init_params(pkey)

    B, T = 8, 8          # B multiple of 8 -> full f32 sublane occupancy
    tokens = jax.random.randint(tkey, (B, T), 0, V, dtype=jnp.int32)

    out = jax.block_until_ready(char_lstm_forward(tokens, params))
    ref = jax.block_until_ready(char_lstm_reference(tokens, params))

    assert out.shape == (B, V), out.shape
    assert jnp.allclose(out, ref, atol=1e-4, rtol=1e-4), float(jnp.max(jnp.abs(out - ref)))
    print("KERNEL_OK")
</pallas_src>

<mosaic_0001>
module attributes {stable_mosaic.version = 11 : i64} {
  func.func @lstm_kernel(%arg0: i32, %arg1: memref<8x8x1024xf32, #tpu.memory_space<vmem>>, %arg2: memref<256x1024xf32, #tpu.memory_space<vmem>>, %arg3: memref<512x1024xf32, #tpu.memory_space<vmem>>, %arg4: memref<1x1024xf32, #tpu.memory_space<vmem>>, %arg5: memref<256x128xf32, #tpu.memory_space<vmem>>, %arg6: memref<1x128xf32, #tpu.memory_space<vmem>>, %arg7: memref<8x128xf32, #tpu.memory_space<vmem>>, %arg8: memref<8x512xf32, #tpu.memory_space<vmem>>, %arg9: memref<8x256xf32, #tpu.memory_space<vmem>>, %arg10: memref<8x256xf32, #tpu.memory_space<vmem>>) attributes {dimension_semantics = [#tpu.dimension_semantics<arbitrary>], iteration_bounds = array<i64: 1>, scalar_prefetch = 0 : i64, scratch_operands = 3 : i64, tpu.core_type = #tpu.core_type<tc>, window_params = [{pipeline_mode = #tpu.pipeline_mode<synchronous>, transform_indices = @transform_0, window_bounds = array<i64: 8, 8, 1024>}, {pipeline_mode = #tpu.pipeline_mode<synchronous>, transform_indices = @transform_1, window_bounds = array<i64: 256, 1024>}, {pipeline_mode = #tpu.pipeline_mode<synchronous>, transform_indices = @transform_2, window_bounds = array<i64: 512, 1024>}, {pipeline_mode = #tpu.pipeline_mode<synchronous>, transform_indices = @transform_3, window_bounds = array<i64: 1, 1024>}, {pipeline_mode = #tpu.pipeline_mode<synchronous>, transform_indices = @transform_4, window_bounds = array<i64: 256, 128>}, {pipeline_mode = #tpu.pipeline_mode<synchronous>, transform_indices = @transform_5, window_bounds = array<i64: 1, 128>}, {pipeline_mode = #tpu.pipeline_mode<synchronous>, transform_indices = @transform_6, window_bounds = array<i64: 8, 128>}]} {
    %cst = arith.constant 0.000000e+00 : f32
    %0 = vector.broadcast %cst : f32 to vector<8x512xf32>
    %c0 = arith.constant 0 : index
    %c0_0 = arith.constant 0 : index
    %1 = vector.load %arg8[%c0, %c0_0] : memref<8x512xf32, #tpu.memory_space<vmem>>, vector<8x512xf32>
    tpu.vector_store %arg8[%c0, %c0_0], %0 {strides = array<i32>} : memref<8x512xf32, #tpu.memory_space<vmem>>, vector<8x512xf32>,
    %cst_1 = arith.constant 0.000000e+00 : f32
    %2 = vector.broadcast %cst_1 : f32 to vector<8x256xf32>
    %c0_2 = arith.constant 0 : index
    %c0_3 = arith.constant 0 : index
    %3 = vector.load %arg9[%c0_2, %c0_3] : memref<8x256xf32, #tpu.memory_space<vmem>>, vector<8x256xf32>
    tpu.vector_store %arg9[%c0_2, %c0_3], %2 {strides = array<i32>} : memref<8x256xf32, #tpu.memory_space<vmem>>, vector<8x256xf32>,
    %cst_4 = arith.constant 0.000000e+00 : f32
    %4 = vector.broadcast %cst_4 : f32 to vector<8x256xf32>
    %c0_5 = arith.constant 0 : index
    %c0_6 = arith.constant 0 : index
    %5 = vector.load %arg10[%c0_5, %c0_6] : memref<8x256xf32, #tpu.memory_space<vmem>>, vector<8x256xf32>
    tpu.vector_store %arg10[%c0_5, %c0_6], %4 {strides = array<i32>} : memref<8x256xf32, #tpu.memory_space<vmem>>, vector<8x256xf32>,
    %c0_7 = arith.constant 0 : index
    %c0_8 = arith.constant 0 : index
    %6 = vector.load %arg2[%c0_7, %c0_8] : memref<256x1024xf32, #tpu.memory_space<vmem>>, vector<256x1024xf32>
    %c0_9 = arith.constant 0 : index
    %c0_10 = arith.constant 0 : index
    %7 = vector.load %arg3[%c0_9, %c0_10] : memref<512x1024xf32, #tpu.memory_space<vmem>>, vector<512x1024xf32>
    %c0_11 = arith.constant 0 : index
    %c0_12 = arith.constant 0 : index
    %8 = vector.load %arg4[%c0_11, %c0_12] : memref<1x1024xf32, #tpu.memory_space<vmem>>, vector<1x1024xf32>
    %c0_i32 = arith.constant 0 : i32
    %9 = arith.index_cast %c0_i32 : i32 to index
    %c0_13 = arith.constant 0 : index
    %c0_14 = arith.constant 0 : index
    %10 = vector.load %arg1[%9, %c0_13, %c0_14] : memref<8x8x1024xf32, #tpu.memory_space<vmem>>, vector<1x8x1024xf32>
    %11 = vector.shape_cast %10 : vector<1x8x1024xf32> to vector<8x1024xf32>
    %c0_15 = arith.constant 0 : index
    %c0_16 = arith.constant 0 : index
    %12 = vector.load %arg8[%c0_15, %c0_16] : memref<8x512xf32, #tpu.memory_space<vmem>>, vector<8x256xf32>
    %cst_17 = arith.constant dense<0.000000e+00> : vector<8x1024xf32>
    %13 = tpu.matmul %12, %6, %cst_17 {dimension_numbers = #tpu.dot_dimension_numbers<[1], [0], [0], [1], [0, 0, 1, 1], [], []>} : vector<8x256xf32>, vector<256x1024xf32>, vector<8x1024xf32> -> vector<8x1024xf32>
    %14 = arith.addf %11, %13 : vector<8x1024xf32>
    %c0_18 = arith.constant 0 : index
    %c0_19 = arith.constant 0 : index
    %15 = vector.load %arg9[%c0_18, %c0_19] : memref<8x256xf32, #tpu.memory_space<vmem>>, vector<8x256xf32>
    %16 = vector.extract_strided_slice %14 {offsets = [0, 0], sizes = [8, 256], strides = [1, 1]} : vector<8x1024xf32> to vector<8x256xf32>
    %17 = arith.negf %16 : vector<8x256xf32>
    %18 = math.exp %17 : vector<8x256xf32>
    %cst_20 = arith.constant 1.000000e+00 : f32
    %19 = vector.broadcast %cst_20 : f32 to vector<8x256xf32>
    %20 = arith.addf %19, %18 : vector<8x256xf32>
    %21 = arith.divf %19, %20 : vector<8x256xf32>
    %22 = vector.extract_strided_slice %14 {offsets = [0, 256], sizes = [8, 256], strides = [1, 1]} : vector<8x1024xf32> to vector<8x256xf32>
    %23 = arith.negf %22 : vector<8x256xf32>
    %24 = math.exp %23 : vector<8x256xf32>
    %cst_21 = arith.constant 1.000000e+00 : f32
    %25 = vector.broadcast %cst_21 : f32 to vector<8x256xf32>
    %26 = arith.addf %25, %24 : vector<8x256xf32>
    %27 = arith.divf %25, %26 : vector<8x256xf32>
    %28 = vector.extract_strided_slice %14 {offsets = [0, 512], sizes = [8, 256], strides = [1, 1]} : vector<8x1024xf32> to vector<8x256xf32>
    %29 = math.tanh %28 : vector<8x256xf32>
    %30 = vector.extract_strided_slice %14 {offsets = [0, 768], sizes = [8, 256], strides = [1, 1]} : vector<8x1024xf32> to vector<8x256xf32>
    %31 = arith.negf %30 : vector<8x256xf32>
    %32 = math.exp %31 : vector<8x256xf32>
    %cst_22 = arith.constant 1.000000e+00 : f32
    %33 = vector.broadcast %cst_22 : f32 to vector<8x256xf32>
    %34 = arith.addf %33, %32 : vector<8x256xf32>
    %35 = arith.divf %33, %34 : vector<8x256xf32>
    %36 = arith.mulf %27, %15 : vector<8x256xf32>
    %37 = arith.mulf %21, %29 : vector<8x256xf32>
    %38 = arith.addf %36, %37 : vector<8x256xf32>
    %39 = math.tanh %38 : vector<8x256xf32>
    %40 = arith.mulf %35, %39 : vector<8x256xf32>
    %c0_23 = arith.constant 0 : index
    %c0_24 = arith.constant 0 : index
    %41 = vector.load %arg9[%c0_23, %c0_24] : memref<8x256xf32, #tpu.memory_space<vmem>>, vector<8x256xf32>
    tpu.vector_store %arg9[%c0_23, %c0_24], %38 {strides = array<i32>} : memref<8x256xf32, #tpu.memory_space<vmem>>, vector<8x256xf32>,
    %c0_25 = arith.constant 0 : index
    %c0_26 = arith.constant 0 : index
    %42 = vector.load %arg8[%c0_25, %c0_26] : memref<8x512xf32, #tpu.memory_space<vmem>>, vector<8x256xf32>
    tpu.vector_store %arg8[%c0_25, %c0_26], %40 {strides = array<i32>} : memref<8x512xf32, #tpu.memory_space<vmem>>, vector<8x256xf32>,
    %c0_27 = arith.constant 0 : index
    %c0_28 = arith.constant 0 : index
    %43 = vector.load %arg8[%c0_27, %c0_28] : memref<8x512xf32, #tpu.memory_space<vmem>>, vector<8x512xf32>
    %cst_29 = arith.constant dense<0.000000e+00> : vector<8x1024xf32>
    %44 = tpu.matmul %43, %7, %cst_29 {dimension_numbers = #tpu.dot_dimension_numbers<[1], [0], [0], [1], [0, 0, 1, 1], [], []>} : vector<8x512xf32>, vector<512x1024xf32>, vector<8x1024xf32> -> vector<8x1024xf32>
    %45 = vector.broadcast %8 : vector<1x1024xf32> to vector<8x1024xf32>
    %46 = arith.addf %44, %45 : vector<8x1024xf32>
    %c0_30 = arith.constant 0 : index
    %c0_31 = arith.constant 0 : index
    %47 = vector.load %arg10[%c0_30, %c0_31] : memref<8x256xf32, #tpu.memory_space<vmem>>, vector<8x256xf32>
    %48 = vector.extract_strided_slice %46 {offsets = [0, 0], sizes = [8, 256], strides = [1, 1]} : vector<8x1024xf32> to vector<8x256xf32>
    %49 = arith.negf %48 : vector<8x256xf32>
    %50 = math.exp %49 : vector<8x256xf32>
    %cst_32 = arith.constant 1.000000e+00 : f32
    %51 = vector.broadcast %cst_32 : f32 to vector<8x256xf32>
    %52 = arith.addf %51, %50 : vector<8x256xf32>
    %53 = arith.divf %51, %52 : vector<8x256xf32>
    %54 = vector.extract_strided_slice %46 {offsets = [0, 256], sizes = [8, 256], strides = [1, 1]} : vector<8x1024xf32> to vector<8x256xf32>
    %55 = arith.negf %54 : vector<8x256xf32>
    %56 = math.exp %55 : vector<8x256xf32>
    %cst_33 = arith.constant 1.000000e+00 : f32
    %57 = vector.broadcast %cst_33 : f32 to vector<8x256xf32>
    %58 = arith.addf %57, %56 : vector<8x256xf32>
    %59 = arith.divf %57, %58 : vector<8x256xf32>
    %60 = vector.extract_strided_slice %46 {offsets = [0, 512], sizes = [8, 256], strides = [1, 1]} : vector<8x1024xf32> to vector<8x256xf32>
    %61 = math.tanh %60 : vector<8x256xf32>
    %62 = vector.extract_strided_slice %46 {offsets = [0, 768], sizes = [8, 256], strides = [1, 1]} : vector<8x1024xf32> to vector<8x256xf32>
    %63 = arith.negf %62 : vector<8x256xf32>
    %64 = math.exp %63 : vector<8x256xf32>
    %cst_34 = arith.constant 1.000000e+00 : f32
    %65 = vector.broadcast %cst_34 : f32 to vector<8x256xf32>
    %66 = arith.addf %65, %64 : vector<8x256xf32>
    %67 = arith.divf %65, %66 : vector<8x256xf32>
    %68 = arith.mulf %59, %47 : vector<8x256xf32>
    %69 = arith.mulf %53, %61 : vector<8x256xf32>
    %70 = arith.addf %68, %69 : vector<8x256xf32>
    %71 = math.tanh %70 : vector<8x256xf32>
    %72 = arith.mulf %67, %71 : vector<8x256xf32>
    %c0_35 = arith.constant 0 : index
    %c0_36 = arith.constant 0 : index
    %73 = vector.load %arg10[%c0_35, %c0_36] : memref<8x256xf32, #tpu.memory_space<vmem>>, vector<8x256xf32>
    tpu.vector_store %arg10[%c0_35, %c0_36], %70 {strides = array<i32>} : memref<8x256xf32, #tpu.memory_space<vmem>>, vector<8x256xf32>,
    %c0_37 = arith.constant 0 : index
    %c256 = arith.constant 256 : index
    %74 = vector.load %arg8[%c0_37, %c256] : memref<8x512xf32, #tpu.memory_space<vmem>>, vector<8x256xf32>
    tpu.vector_store %arg8[%c0_37, %c256], %72 {strides = array<i32>} : memref<8x512xf32, #tpu.memory_space<vmem>>, vector<8x256xf32>,
    %c1_i32 = arith.constant 1 : i32
    %75 = arith.index_cast %c1_i32 : i32 to index
    %c0_38 = arith.constant 0 : index
    %c0_39 = arith.constant 0 : index
    %76 = vector.load %arg1[%75, %c0_38, %c0_39] : memref<8x8x1024xf32, #tpu.memory_space<vmem>>, vector<1x8x1024xf32>
    %77 = vector.shape_cast %76 : vector<1x8x1024xf32> to vector<8x1024xf32>
    %c0_40 = arith.constant 0 : index
    %c0_41 = arith.constant 0 : index
    %78 = vector.load %arg8[%c0_40, %c0_41] : memref<8x512xf32, #tpu.memory_space<vmem>>, vector<8x256xf32>
    %cst_42 = arith.constant dense<0.000000e+00> : vector<8x1024xf32>
    %79 = tpu.matmul %78, %6, %cst_42 {dimension_numbers = #tpu.dot_dimension_numbers<[1], [0], [0], [1], [0, 0, 1, 1], [], []>} : vector<8x256xf32>, vector<256x1024xf32>, vector<8x1024xf32> -> vector<8x1024xf32>
    %80 = arith.addf %77, %79 : vector<8x1024xf32>
    %c0_43 = arith.constant 0 : index
    %c0_44 = arith.constant 0 : index
    %81 = vector.load %arg9[%c0_43, %c0_44] : memref<8x256xf32, #tpu.memory_space<vmem>>, vector<8x256xf32>
    %82 = vector.extract_strided_slice %80 {offsets = [0, 0], sizes = [8, 256], strides = [1, 1]} : vector<8x1024xf32> to vector<8x256xf32>
    %83 = arith.negf %82 : vector<8x256xf32>
    %84 = math.exp %83 : vector<8x256xf32>
    %cst_45 = arith.constant 1.000000e+00 : f32
    %85 = vector.broadcast %cst_45 : f32 to vector<8x256xf32>
    %86 = arith.addf %85, %84 : vector<8x256xf32>
    %87 = arith.divf %85, %86 : vector<8x256xf32>
    %88 = vector.extract_strided_slice %80 {offsets = [0, 256], sizes = [8, 256], strides = [1, 1]} : vector<8x1024xf32> to vector<8x256xf32>
    %89 = arith.negf %88 : vector<8x256xf32>
    %90 = math.exp %89 : vector<8x256xf32>
    %cst_46 = arith.constant 1.000000e+00 : f32
    %91 = vector.broadcast %cst_46 : f32 to vector<8x256xf32>
    %92 = arith.addf %91, %90 : vector<8x256xf32>
    %93 = arith.divf %91, %92 : vector<8x256xf32>
    %94 = vector.extract_strided_slice %80 {offsets = [0, 512], sizes = [8, 256], strides = [1, 1]} : vector<8x1024xf32> to vector<8x256xf32>
    %95 = math.tanh %94 : vector<8x256xf32>
    %96 = vector.extract_strided_slice %80 {offsets = [0, 768], sizes = [8, 256], strides = [1, 1]} : vector<8x1024xf32> to vector<8x256xf32>
    %97 = arith.negf %96 : vector<8x256xf32>
    %98 = math.exp %97 : vector<8x256xf32>
    %cst_47 = arith.constant 1.000000e+00 : f32
    %99 = vector.broadcast %cst_47 : f32 to vector<8x256xf32>
    %100 = arith.addf %99, %98 : vector<8x256xf32>
    %101 = arith.divf %99, %100 : vector<8x256xf32>
    %102 = arith.mulf %93, %81 : vector<8x256xf32>
    %103 = arith.mulf %87, %95 : vector<8x256xf32>
    %104 = arith.addf %102, %103 : vector<8x256xf32>
    %105 = math.tanh %104 : vector<8x256xf32>
    %106 = arith.mulf %101, %105 : vector<8x256xf32>
    %c0_48 = arith.constant 0 : index
    %c0_49 = arith.constant 0 : index
    %107 = vector.load %arg9[%c0_48, %c0_49] : memref<8x256xf32, #tpu.memory_space<vmem>>, vector<8x256xf32>
    tpu.vector_store %arg9[%c0_48, %c0_49], %104 {strides = array<i32>} : memref<8x256xf32, #tpu.memory_space<vmem>>, vector<8x256xf32>,
    %c0_50 = arith.constant 0 : index
    %c0_51 = arith.constant 0 : index
    %108 = vector.load %arg8[%c0_50, %c0_51] : memref<8x512xf32, #tpu.memory_space<vmem>>, vector<8x256xf32>
    tpu.vector_store %arg8[%c0_50, %c0_51], %106 {strides = array<i32>} : memref<8x512xf32, #tpu.memory_space<vmem>>, vector<8x256xf32>,
    %c0_52 = arith.constant 0 : index
    %c0_53 = arith.constant 0 : index
    %109 = vector.load %arg8[%c0_52, %c0_53] : memref<8x512xf32, #tpu.memory_space<vmem>>, vector<8x512xf32>
    %cst_54 = arith.constant dense<0.000000e+00> : vector<8x1024xf32>
    %110 = tpu.matmul %109, %7, %cst_54 {dimension_numbers = #tpu.dot_dimension_numbers<[1], [0], [0], [1], [0, 0, 1, 1], [], []>} : vector<8x512xf32>, vector<512x1024xf32>, vector<8x1024xf32> -> vector<8x1024xf32>
    %111 = vector.broadcast %8 : vector<1x1024xf32> to vector<8x1024xf32>
    %112 = arith.addf %110, %111 : vector<8x1024xf32>
    %c0_55 = arith.constant 0 : index
    %c0_56 = arith.constant 0 : index
    %113 = vector.load %arg10[%c0_55, %c0_56] : memref<8x256xf32, #tpu.memory_space<vmem>>, vector<8x256xf32>
    %114 = vector.extract_strided_slice %112 {offsets = [0, 0], sizes = [8, 256], strides = [1, 1]} : vector<8x1024xf32> to vector<8x256xf32>
    %115 = arith.negf %114 : vector<8x256xf32>
    %116 = math.exp %115 : vector<8x256xf32>
    %cst_57 = arith.constant 1.000000e+00 : f32
    %117 = vector.broadcast %cst_57 : f32 to vector<8x256xf32>
    %118 = arith.addf %117, %116 : vector<8x256xf32>
    %119 = arith.divf %117, %118 : vector<8x256xf32>
    %120 = vector.extract_strided_slice %112 {offsets = [0, 256], sizes = [8, 256], strides = [1, 1]} : vector<8x1024xf32> to vector<8x256xf32>
    %121 = arith.negf %120 : vector<8x256xf32>
    %122 = math.exp %121 : vector<8x256xf32>
    %cst_58 = arith.constant 1.000000e+00 : f32
    %123 = vector.broadcast %cst_58 : f32 to vector<8x256xf32>
    %124 = arith.addf %123, %122 : vector<8x256xf32>
    %125 = arith.divf %123, %124 : vector<8x256xf32>
    %126 = vector.extract_strided_slice %112 {offsets = [0, 512], sizes = [8, 256], strides = [1, 1]} : vector<8x1024xf32> to vector<8x256xf32>
    %127 = math.tanh %126 : vector<8x256xf32>
    %128 = vector.extract_strided_slice %112 {offsets = [0, 768], sizes = [8, 256], strides = [1, 1]} : vector<8x1024xf32> to vector<8x256xf32>
    %129 = arith.negf %128 : vector<8x256xf32>
    %130 = math.exp %129 : vector<8x256xf32>
    %cst_59 = arith.constant 1.000000e+00 : f32
    %131 = vector.broadcast %cst_59 : f32 to vector<8x256xf32>
    %132 = arith.addf %131, %130 : vector<8x256xf32>
    %133 = arith.divf %131, %132 : vector<8x256xf32>
    %134 = arith.mulf %125, %113 : vector<8x256xf32>
    %135 = arith.mulf %119, %127 : vector<8x256xf32>
    %136 = arith.addf %134, %135 : vector<8x256xf32>
    %137 = math.tanh %136 : vector<8x256xf32>
    %138 = arith.mulf %133, %137 : vector<8x256xf32>
    %c0_60 = arith.constant 0 : index
    %c0_61 = arith.constant 0 : index
    %139 = vector.load %arg10[%c0_60, %c0_61] : memref<8x256xf32, #tpu.memory_space<vmem>>, vector<8x256xf32>
    tpu.vector_store %arg10[%c0_60, %c0_61], %136 {strides = array<i32>} : memref<8x256xf32, #tpu.memory_space<vmem>>, vector<8x256xf32>,
    %c0_62 = arith.constant 0 : index
    %c256_63 = arith.constant 256 : index
    %140 = vector.load %arg8[%c0_62, %c256_63] : memref<8x512xf32, #tpu.memory_space<vmem>>, vector<8x256xf32>
    tpu.vector_store %arg8[%c0_62, %c256_63], %138 {strides = array<i32>} : memref<8x512xf32, #tpu.memory_space<vmem>>, vector<8x256xf32>,
    %c2_i32 = arith.constant 2 : i32
    %141 = arith.index_cast %c2_i32 : i32 to index
    %c0_64 = arith.constant 0 : index
    %c0_65 = arith.constant 0 : index
    %142 = vector.load %arg1[%141, %c0_64, %c0_65] : memref<8x8x1024xf32, #tpu.memory_space<vmem>>, vector<1x8x1024xf32>
    %143 = vector.shape_cast %142 : vector<1x8x1024xf32> to vector<8x1024xf32>
    %c0_66 = arith.constant 0 : index
    %c0_67 = arith.constant 0 : index
    %144 = vector.load %arg8[%c0_66, %c0_67] : memref<8x512xf32, #tpu.memory_space<vmem>>, vector<8x256xf32>
    %cst_68 = arith.constant dense<0.000000e+00> : vector<8x1024xf32>
    %145 = tpu.matmul %144, %6, %cst_68 {dimension_numbers = #tpu.dot_dimension_numbers<[1], [0], [0], [1], [0, 0, 1, 1], [], []>} : vector<8x256xf32>, vector<256x1024xf32>, vector<8x1024xf32> -> vector<8x1024xf32>
    %146 = arith.addf %143, %145 : vector<8x1024xf32>
    %c0_69 = arith.constant 0 : index
    %c0_70 = arith.constant 0 : index
    %147 = vector.load %arg9[%c0_69, %c0_70] : memref<8x256xf32, #tpu.memory_space<vmem>>, vector<8x256xf32>
    %148 = vector.extract_strided_slice %146 {offsets = [0, 0], sizes = [8, 256], strides = [1, 1]} : vector<8x1024xf32> to vector<8x256xf32>
    %149 = arith.negf %148 : vector<8x256xf32>
    %150 = math.exp %149 : vector<8x256xf32>
    %cst_71 = arith.constant 1.000000e+00 : f32
    %151 = vector.broadcast %cst_71 : f32 to vector<8x256xf32>
    %152 = arith.addf %151, %150 : vector<8x256xf32>
    %153 = arith.divf %151, %152 : vector<8x256xf32>
    %154 = vector.extract_strided_slice %146 {offsets = [0, 256], sizes = [8, 256], strides = [1, 1]} : vector<8x1024xf32> to vector<8x256xf32>
    %155 = arith.negf %154 : vector<8x256xf32>
    %156 = math.exp %155 : vector<8x256xf32>
    %cst_72 = arith.constant 1.000000e+00 : f32
    %157 = vector.broadcast %cst_72 : f32 to vector<8x256xf32>
    %158 = arith.addf %157, %156 : vector<8x256xf32>
    %159 = arith.divf %157, %158 : vector<8x256xf32>
    %160 = vector.extract_strided_slice %146 {offsets = [0, 512], sizes = [8, 256], strides = [1, 1]} : vector<8x1024xf32> to vector<8x256xf32>
    %161 = math.tanh %160 : vector<8x256xf32>
    %162 = vector.extract_strided_slice %146 {offsets = [0, 768], sizes = [8, 256], strides = [1, 1]} : vector<8x1024xf32> to vector<8x256xf32>
    %163 = arith.negf %162 : vector<8x256xf32>
    %164 = math.exp %163 : vector<8x256xf32>
    %cst_73 = arith.constant 1.000000e+00 : f32
    %165 = vector.broadcast %cst_73 : f32 to vector<8x256xf32>
    %166 = arith.addf %165, %164 : vector<8x256xf32>
    %167 = arith.divf %165, %166 : vector<8x256xf32>
    %168 = arith.mulf %159, %147 : vector<8x256xf32>
    %169 = arith.mulf %153, %161 : vector<8x256xf32>
    %170 = arith.addf %168, %169 : vector<8x256xf32>
    %171 = math.tanh %170 : vector<8x256xf32>
    %172 = arith.mulf %167, %171 : vector<8x256xf32>
    %c0_74 = arith.constant 0 : index
    %c0_75 = arith.constant 0 : index
    %173 = vector.load %arg9[%c0_74, %c0_75] : memref<8x256xf32, #tpu.memory_space<vmem>>, vector<8x256xf32>
    tpu.vector_store %arg9[%c0_74, %c0_75], %170 {strides = array<i32>} : memref<8x256xf32, #tpu.memory_space<vmem>>, vector<8x256xf32>,
    %c0_76 = arith.constant 0 : index
    %c0_77 = arith.constant 0 : index
    %174 = vector.load %arg8[%c0_76, %c0_77] : memref<8x512xf32, #tpu.memory_space<vmem>>, vector<8x256xf32>
    tpu.vector_store %arg8[%c0_76, %c0_77], %172 {strides = array<i32>} : memref<8x512xf32, #tpu.memory_space<vmem>>, vector<8x256xf32>,
    %c0_78 = arith.constant 0 : index
    %c0_79 = arith.constant 0 : index
    %175 = vector.load %arg8[%c0_78, %c0_79] : memref<8x512xf32, #tpu.memory_space<vmem>>, vector<8x512xf32>
    %cst_80 = arith.constant dense<0.000000e+00> : vector<8x1024xf32>
    %176 = tpu.matmul %175, %7, %cst_80 {dimension_numbers = #tpu.dot_dimension_numbers<[1], [0], [0], [1], [0, 0, 1, 1], [], []>} : vector<8x512xf32>, vector<512x1024xf32>, vector<8x1024xf32> -> vector<8x1024xf32>
    %177 = vector.broadcast %8 : vector<1x1024xf32> to vector<8x1024xf32>
    %178 = arith.addf %176, %177 : vector<8x1024xf32>
    %c0_81 = arith.constant 0 : index
    %c0_82 = arith.constant 0 : index
    %179 = vector.load %arg10[%c0_81, %c0_82] : memref<8x256xf32, #tpu.memory_space<vmem>>, vector<8x256xf32>
    %180 = vector.extract_strided_slice %178 {offsets = [0, 0], sizes = [8, 256], strides = [1, 1]} : vector<8x1024xf32> to vector<8x256xf32>
    %181 = arith.negf %180 : vector<8x256xf32>
    %182 = math.exp %181 : vector<8x256xf32>
    %cst_83 = arith.constant 1.000000e+00 : f32
    %183 = vector.broadcast %cst_83 : f32 to vector<8x256xf32>
    %184 = arith.addf %183, %182 : vector<8x256xf32>
    %185 = arith.divf %183, %184 : vector<8x256xf32>
    %186 = vector.extract_strided_slice %178 {offsets = [0, 256], sizes = [8, 256], strides = [1, 1]} : vector<8x1024xf32> to vector<8x256xf32>
    %187 = arith.negf %186 : vector<8x256xf32>
    %188 = math.exp %187 : vector<8x256xf32>
    %cst_84 = arith.constant 1.000000e+00 : f32
    %189 = vector.broadcast %cst_84 : f32 to vector<8x256xf32>
    %190 = arith.addf %189, %188 : vector<8x256xf32>
    %191 = arith.divf %189, %190 : vector<8x256xf32>
    %192 = vector.extract_strided_slice %178 {offsets = [0, 512], sizes = [8, 256], strides = [1, 1]} : vector<8x1024xf32> to vector<8x256xf32>
    %193 = math.tanh %192 : vector<8x256xf32>
    %194 = vector.extract_strided_slice %178 {offsets = [0, 768], sizes = [8, 256], strides = [1, 1]} : vector<8x1024xf32> to vector<8x256xf32>
    %195 = arith.negf %194 : vector<8x256xf32>
    %196 = math.exp %195 : vector<8x256xf32>
    %cst_85 = arith.constant 1.000000e+00 : f32
    %197 = vector.broadcast %cst_85 : f32 to vector<8x256xf32>
    %198 = arith.addf %197, %196 : vector<8x256xf32>
    %199 = arith.divf %197, %198 : vector<8x256xf32>
    %200 = arith.mulf %191, %179 : vector<8x256xf32>
    %201 = arith.mulf %185, %193 : vector<8x256xf32>
    %202 = arith.addf %200, %201 : vector<8x256xf32>
    %203 = math.tanh %202 : vector<8x256xf32>
    %204 = arith.mulf %199, %203 : vector<8x256xf32>
    %c0_86 = arith.constant 0 : index
    %c0_87 = arith.constant 0 : index
    %205 = vector.load %arg10[%c0_86, %c0_87] : memref<8x256xf32, #tpu.memory_space<vmem>>, vector<8x256xf32>
    tpu.vector_store %arg10[%c0_86, %c0_87], %202 {strides = array<i32>} : memref<8x256xf32, #tpu.memory_space<vmem>>, vector<8x256xf32>,
    %c0_88 = arith.constant 0 : index
    %c256_89 = arith.constant 256 : index
    %206 = vector.load %arg8[%c0_88, %c256_89] : memref<8x512xf32, #tpu.memory_space<vmem>>, vector<8x256xf32>
    tpu.vector_store %arg8[%c0_88, %c256_89], %204 {strides = array<i32>} : memref<8x512xf32, #tpu.memory_space<vmem>>, vector<8x256xf32>,
    %c3_i32 = arith.constant 3 : i32
    %207 = arith.index_cast %c3_i32 : i32 to index
    %c0_90 = arith.constant 0 : index
    %c0_91 = arith.constant 0 : index
    %208 = vector.load %arg1[%207, %c0_90, %c0_91] : memref<8x8x1024xf32, #tpu.memory_space<vmem>>, vector<1x8x1024xf32>
    %209 = vector.shape_cast %208 : vector<1x8x1024xf32> to vector<8x1024xf32>
    %c0_92 = arith.constant 0 : index
    %c0_93 = arith.constant 0 : index
    %210 = vector.load %arg8[%c0_92, %c0_93] : memref<8x512xf32, #tpu.memory_space<vmem>>, vector<8x256xf32>
    %cst_94 = arith.constant dense<0.000000e+00> : vector<8x1024xf32>
    %211 = tpu.matmul %210, %6, %cst_94 {dimension_numbers = #tpu.dot_dimension_numbers<[1], [0], [0], [1], [0, 0, 1, 1], [], []>} : vector<8x256xf32>, vector<256x1024xf32>, vector<8x1024xf32> -> vector<8x1024xf32>
    %212 = arith.addf %209, %211 : vector<8x1024xf32>
    %c0_95 = arith.constant 0 : index
    %c0_96 = arith.constant 0 : index
    %213 = vector.load %arg9[%c0_95, %c0_96] : memref<8x256xf32, #tpu.memory_space<vmem>>, vector<8x256xf32>
    %214 = vector.extract_strided_slice %212 {offsets = [0, 0], sizes = [8, 256], strides = [1, 1]} : vector<8x1024xf32> to vector<8x256xf32>
    %215 = arith.negf %214 : vector<8x256xf32>
    %216 = math.exp %215 : vector<8x256xf32>
    %cst_97 = arith.constant 1.000000e+00 : f32
    %217 = vector.broadcast %cst_97 : f32 to vector<8x256xf32>
    %218 = arith.addf %217, %216 : vector<8x256xf32>
    %219 = arith.divf %217, %218 : vector<8x256xf32>
    %220 = vector.extract_strided_slice %212 {offsets = [0, 256], sizes = [8, 256], strides = [1, 1]} : vector<8x1024xf32> to vector<8x256xf32>
    %221 = arith.negf %220 : vector<8x256xf32>
    %222 = math.exp %221 : vector<8x256xf32>
    %cst_98 = arith.constant 1.000000e+00 : f32
    %223 = vector.broadcast %cst_98 : f32 to vector<8x256xf32>
    %224 = arith.addf %223, %222 : vector<8x256xf32>
    %225 = arith.divf %223, %224 : vector<8x256xf32>
    %226 = vector.extract_strided_slice %212 {offsets = [0, 512], sizes = [8, 256], strides = [1, 1]} : vector<8x1024xf32> to vector<8x256xf32>
    %227 = math.tanh %226 : vector<8x256xf32>
    %228 = vector.extract_strided_slice %212 {offsets = [0, 768], sizes = [8, 256], strides = [1, 1]} : vector<8x1024xf32> to vector<8x256xf32>
    %229 = arith.negf %228 : vector<8x256xf32>
    %230 = math.exp %229 : vector<8x256xf32>
    %cst_99 = arith.constant 1.000000e+00 : f32
    %231 = vector.broadcast %cst_99 : f32 to vector<8x256xf32>
    %232 = arith.addf %231, %230 : vector<8x256xf32>
    %233 = arith.divf %231, %232 : vector<8x256xf32>
    %234 = arith.mulf %225, %213 : vector<8x256xf32>
    %235 = arith.mulf %219, %227 : vector<8x256xf32>
    %236 = arith.addf %234, %235 : vector<8x256xf32>
    %237 = math.tanh %236 : vector<8x256xf32>
    %238 = arith.mulf %233, %237 : vector<8x256xf32>
    %c0_100 = arith.constant 0 : index
    %c0_101 = arith.constant 0 : index
    %239 = vector.load %arg9[%c0_100, %c0_101] : memref<8x256xf32, #tpu.memory_space<vmem>>, vector<8x256xf32>
    tpu.vector_store %arg9[%c0_100, %c0_101], %236 {strides = array<i32>} : memref<8x256xf32, #tpu.memory_space<vmem>>, vector<8x256xf32>,
    %c0_102 = arith.constant 0 : index
    %c0_103 = arith.constant 0 : index
    %240 = vector.load %arg8[%c0_102, %c0_103] : memref<8x512xf32, #tpu.memory_space<vmem>>, vector<8x256xf32>
    tpu.vector_store %arg8[%c0_102, %c0_103], %238 {strides = array<i32>} : memref<8x512xf32, #tpu.memory_space<vmem>>, vector<8x256xf32>,
    %c0_104 = arith.constant 0 : index
    %c0_105 = arith.constant 0 : index
    %241 = vector.load %arg8[%c0_104, %c0_105] : memref<8x512xf32, #tpu.memory_space<vmem>>, vector<8x512xf32>
    %cst_106 = arith.constant dense<0.000000e+00> : vector<8x1024xf32>
    %242 = tpu.matmul %241, %7, %cst_106 {dimension_numbers = #tpu.dot_dimension_numbers<[1], [0], [0], [1], [0, 0, 1, 1], [], []>} : vector<8x512xf32>, vector<512x1024xf32>, vector<8x1024xf32> -> vector<8x1024xf32>
    %243 = vector.broadcast %8 : vector<1x1024xf32> to vector<8x1024xf32>
    %244 = arith.addf %242, %243 : vector<8x1024xf32>
    %c0_107 = arith.constant 0 : index
    %c0_108 = arith.constant 0 : index
    %245 = vector.load %arg10[%c0_107, %c0_108] : memref<8x256xf32, #tpu.memory_space<vmem>>, vector<8x256xf32>
    %246 = vector.extract_strided_slice %244 {offsets = [0, 0], sizes = [8, 256], strides = [1, 1]} : vector<8x1024xf32> to vector<8x256xf32>
    %247 = arith.negf %246 : vector<8x256xf32>
    %248 = math.exp %247 : vector<8x256xf32>
    %cst_109 = arith.constant 1.000000e+00 : f32
    %249 = vector.broadcast %cst_109 : f32 to vector<8x256xf32>
    %250 = arith.addf %249, %248 : vector<8x256xf32>
    %251 = arith.divf %249, %250 : vector<8x256xf32>
    %252 = vector.extract_strided_slice %244 {offsets = [0, 256], sizes = [8, 256], strides = [1, 1]} : vector<8x1024xf32> to vector<8x256xf32>
    %253 = arith.negf %252 : vector<8x256xf32>
    %254 = math.exp %253 : vector<8x256xf32>
    %cst_110 = arith.constant 1.000000e+00 : f32
    %255 = vector.broadcast %cst_110 : f32 to vector<8x256xf32>
    %256 = arith.addf %255, %254 : vector<8x256xf32>
    %257 = arith.divf %255, %256 : vector<8x256xf32>
    %258 = vector.extract_strided_slice %244 {offsets = [0, 512], sizes = [8, 256], strides = [1, 1]} : vector<8x1024xf32> to vector<8x256xf32>
    %259 = math.tanh %258 : vector<8x256xf32>
    %260 = vector.extract_strided_slice %244 {offsets = [0, 768], sizes = [8, 256], strides = [1, 1]} : vector<8x1024xf32> to vector<8x256xf32>
    %261 = arith.negf %260 : vector<8x256xf32>
    %262 = math.exp %261 : vector<8x256xf32>
    %cst_111 = arith.constant 1.000000e+00 : f32
    %263 = vector.broadcast %cst_111 : f32 to vector<8x256xf32>
    %264 = arith.addf %263, %262 : vector<8x256xf32>
    %265 = arith.divf %263, %264 : vector<8x256xf32>
    %266 = arith.mulf %257, %245 : vector<8x256xf32>
    %267 = arith.mulf %251, %259 : vector<8x256xf32>
    %268 = arith.addf %266, %267 : vector<8x256xf32>
    %269 = math.tanh %268 : vector<8x256xf32>
    %270 = arith.mulf %265, %269 : vector<8x256xf32>
    %c0_112 = arith.constant 0 : index
    %c0_113 = arith.constant 0 : index
    %271 = vector.load %arg10[%c0_112, %c0_113] : memref<8x256xf32, #tpu.memory_space<vmem>>, vector<8x256xf32>
    tpu.vector_store %arg10[%c0_112, %c0_113], %268 {strides = array<i32>} : memref<8x256xf32, #tpu.memory_space<vmem>>, vector<8x256xf32>,
    %c0_114 = arith.constant 0 : index
    %c256_115 = arith.constant 256 : index
    %272 = vector.load %arg8[%c0_114, %c256_115] : memref<8x512xf32, #tpu.memory_space<vmem>>, vector<8x256xf32>
    tpu.vector_store %arg8[%c0_114, %c256_115], %270 {strides = array<i32>} : memref<8x512xf32, #tpu.memory_space<vmem>>, vector<8x256xf32>,
    %c4_i32 = arith.constant 4 : i32
    %273 = arith.index_cast %c4_i32 : i32 to index
    %c0_116 = arith.constant 0 : index
    %c0_117 = arith.constant 0 : index
    %274 = vector.load %arg1[%273, %c0_116, %c0_117] : memref<8x8x1024xf32, #tpu.memory_space<vmem>>, vector<1x8x1024xf32>
    %275 = vector.shape_cast %274 : vector<1x8x1024xf32> to vector<8x1024xf32>
    %c0_118 = arith.constant 0 : index
    %c0_119 = arith.constant 0 : index
    %276 = vector.load %arg8[%c0_118, %c0_119] : memref<8x512xf32, #tpu.memory_space<vmem>>, vector<8x256xf32>
    %cst_120 = arith.constant dense<0.000000e+00> : vector<8x1024xf32>
    %277 = tpu.matmul %276, %6, %cst_120 {dimension_numbers = #tpu.dot_dimension_numbers<[1], [0], [0], [1], [0, 0, 1, 1], [], []>} : vector<8x256xf32>, vector<256x1024xf32>, vector<8x1024xf32> -> vector<8x1024xf32>
    %278 = arith.addf %275, %277 : vector<8x1024xf32>
    %c0_121 = arith.constant 0 : index
    %c0_122 = arith.constant 0 : index
    %279 = vector.load %arg9[%c0_121, %c0_122] : memref<8x256xf32, #tpu.memory_space<vmem>>, vector<8x256xf32>
    %280 = vector.extract_strided_slice %278 {offsets = [0, 0], sizes = [8, 256], strides = [1, 1]} : vector<8x1024xf32> to vector<8x256xf32>
    %281 = arith.negf %280 : vector<8x256xf32>
    %282 = math.exp %281 : vector<8x256xf32>
    %cst_123 = arith.constant 1.000000e+00 : f32
    %283 = vector.broadcast %cst_123 : f32 to vector<8x256xf32>
    %284 = arith.addf %283, %282 : vector<8x256xf32>
    %285 = arith.divf %283, %284 : vector<8x256xf32>
    %286 = vector.extract_strided_slice %278 {offsets = [0, 256], sizes = [8, 256], strides = [1, 1]} : vector<8x1024xf32> to vector<8x256xf32>
    %287 = arith.negf %286 : vector<8x256xf32>
    %288 = math.exp %287 : vector<8x256xf32>
    %cst_124 = arith.constant 1.000000e+00 : f32
    %289 = vector.broadcast %cst_124 : f32 to vector<8x256xf32>
    %290 = arith.addf %289, %288 : vector<8x256xf32>
    %291 = arith.divf %289, %290 : vector<8x256xf32>
    %292 = vector.extract_strided_slice %278 {offsets = [0, 512], sizes = [8, 256], strides = [1, 1]} : vector<8x1024xf32> to vector<8x256xf32>
    %293 = math.tanh %292 : vector<8x256xf32>
    %294 = vector.extract_strided_slice %278 {offsets = [0, 768], sizes = [8, 256], strides = [1, 1]} : vector<8x1024xf32> to vector<8x256xf32>
    %295 = arith.negf %294 : vector<8x256xf32>
    %296 = math.exp %295 : vector<8x256xf32>
    %cst_125 = arith.constant 1.000000e+00 : f32
    %297 = vector.broadcast %cst_125 : f32 to vector<8x256xf32>
    %298 = arith.addf %297, %296 : vector<8x256xf32>
    %299 = arith.divf %297, %298 : vector<8x256xf32>
    %300 = arith.mulf %291, %279 : vector<8x256xf32>
    %301 = arith.mulf %285, %293 : vector<8x256xf32>
    %302 = arith.addf %300, %301 : vector<8x256xf32>
    %303 = math.tanh %302 : vector<8x256xf32>
    %304 = arith.mulf %299, %303 : vector<8x256xf32>
    %c0_126 = arith.constant 0 : index
    %c0_127 = arith.constant 0 : index
    %305 = vector.load %arg9[%c0_126, %c0_127] : memref<8x256xf32, #tpu.memory_space<vmem>>, vector<8x256xf32>
    tpu.vector_store %arg9[%c0_126, %c0_127], %302 {strides = array<i32>} : memref<8x256xf32, #tpu.memory_space<vmem>>, vector<8x256xf32>,
    %c0_128 = arith.constant 0 : index
    %c0_129 = arith.constant 0 : index
    %306 = vector.load %arg8[%c0_128, %c0_129] : memref<8x512xf32, #tpu.memory_space<vmem>>, vector<8x256xf32>
    tpu.vector_store %arg8[%c0_128, %c0_129], %304 {strides = array<i32>} : memref<8x512xf32, #tpu.memory_space<vmem>>, vector<8x256xf32>,
    %c0_130 = arith.constant 0 : index
    %c0_131 = arith.constant 0 : index
    %307 = vector.load %arg8[%c0_130, %c0_131] : memref<8x512xf32, #tpu.memory_space<vmem>>, vector<8x512xf32>
    %cst_132 = arith.constant dense<0.000000e+00> : vector<8x1024xf32>
    %308 = tpu.matmul %307, %7, %cst_132 {dimension_numbers = #tpu.dot_dimension_numbers<[1], [0], [0], [1], [0, 0, 1, 1], [], []>} : vector<8x512xf32>, vector<512x1024xf32>, vector<8x1024xf32> -> vector<8x1024xf32>
    %309 = vector.broadcast %8 : vector<1x1024xf32> to vector<8x1024xf32>
    %310 = arith.addf %308, %309 : vector<8x1024xf32>
    %c0_133 = arith.constant 0 : index
    %c0_134 = arith.constant 0 : index
    %311 = vector.load %arg10[%c0_133, %c0_134] : memref<8x256xf32, #tpu.memory_space<vmem>>, vector<8x256xf32>
    %312 = vector.extract_strided_slice %310 {offsets = [0, 0], sizes = [8, 256], strides = [1, 1]} : vector<8x1024xf32> to vector<8x256xf32>
    %313 = arith.negf %312 : vector<8x256xf32>
    %314 = math.exp %313 : vector<8x256xf32>
    %cst_135 = arith.constant 1.000000e+00 : f32
    %315 = vector.broadcast %cst_135 : f32 to vector<8x256xf32>
    %316 = arith.addf %315, %314 : vector<8x256xf32>
    %317 = arith.divf %315, %316 : vector<8x256xf32>
    %318 = vector.extract_strided_slice %310 {offsets = [0, 256], sizes = [8, 256], strides = [1, 1]} : vector<8x1024xf32> to vector<8x256xf32>
    %319 = arith.negf %318 : vector<8x256xf32>
    %320 = math.exp %319 : vector<8x256xf32>
    %cst_136 = arith.constant 1.000000e+00 : f32
    %321 = vector.broadcast %cst_136 : f32 to vector<8x256xf32>
    %322 = arith.addf %321, %320 : vector<8x256xf32>
    %323 = arith.divf %321, %322 : vector<8x256xf32>
    %324 = vector.extract_strided_slice %310 {offsets = [0, 512], sizes = [8, 256], strides = [1, 1]} : vector<8x1024xf32> to vector<8x256xf32>
    %325 = math.tanh %324 : vector<8x256xf32>
    %326 = vector.extract_strided_slice %310 {offsets = [0, 768], sizes = [8, 256], strides = [1, 1]} : vector<8x1024xf32> to vector<8x256xf32>
    %327 = arith.negf %326 : vector<8x256xf32>
    %328 = math.exp %327 : vector<8x256xf32>
    %cst_137 = arith.constant 1.000000e+00 : f32
    %329 = vector.broadcast %cst_137 : f32 to vector<8x256xf32>
    %330 = arith.addf %329, %328 : vector<8x256xf32>
    %331 = arith.divf %329, %330 : vector<8x256xf32>
    %332 = arith.mulf %323, %311 : vector<8x256xf32>
    %333 = arith.mulf %317, %325 : vector<8x256xf32>
    %334 = arith.addf %332, %333 : vector<8x256xf32>
    %335 = math.tanh %334 : vector<8x256xf32>
    %336 = arith.mulf %331, %335 : vector<8x256xf32>
    %c0_138 = arith.constant 0 : index
    %c0_139 = arith.constant 0 : index
    %337 = vector.load %arg10[%c0_138, %c0_139] : memref<8x256xf32, #tpu.memory_space<vmem>>, vector<8x256xf32>
    tpu.vector_store %arg10[%c0_138, %c0_139], %334 {strides = array<i32>} : memref<8x256xf32, #tpu.memory_space<vmem>>, vector<8x256xf32>,
    %c0_140 = arith.constant 0 : index
    %c256_141 = arith.constant 256 : index
    %338 = vector.load %arg8[%c0_140, %c256_141] : memref<8x512xf32, #tpu.memory_space<vmem>>, vector<8x256xf32>
    tpu.vector_store %arg8[%c0_140, %c256_141], %336 {strides = array<i32>} : memref<8x512xf32, #tpu.memory_space<vmem>>, vector<8x256xf32>,
    %c5_i32 = arith.constant 5 : i32
    %339 = arith.index_cast %c5_i32 : i32 to index
    %c0_142 = arith.constant 0 : index
    %c0_143 = arith.constant 0 : index
    %340 = vector.load %arg1[%339, %c0_142, %c0_143] : memref<8x8x1024xf32, #tpu.memory_space<vmem>>, vector<1x8x1024xf32>
    %341 = vector.shape_cast %340 : vector<1x8x1024xf32> to vector<8x1024xf32>
    %c0_144 = arith.constant 0 : index
    %c0_145 = arith.constant 0 : index
    %342 = vector.load %arg8[%c0_144, %c0_145] : memref<8x512xf32, #tpu.memory_space<vmem>>, vector<8x256xf32>
    %cst_146 = arith.constant dense<0.000000e+00> : vector<8x1024xf32>
    %343 = tpu.matmul %342, %6, %cst_146 {dimension_numbers = #tpu.dot_dimension_numbers<[1], [0], [0], [1], [0, 0, 1, 1], [], []>} : vector<8x256xf32>, vector<256x1024xf32>, vector<8x1024xf32> -> vector<8x1024xf32>
    %344 = arith.addf %341, %343 : vector<8x1024xf32>
    %c0_147 = arith.constant 0 : index
    %c0_148 = arith.constant 0 : index
    %345 = vector.load %arg9[%c0_147, %c0_148] : memref<8x256xf32, #tpu.memory_space<vmem>>, vector<8x256xf32>
    %346 = vector.extract_strided_slice %344 {offsets = [0, 0], sizes = [8, 256], strides = [1, 1]} : vector<8x1024xf32> to vector<8x256xf32>
    %347 = arith.negf %346 : vector<8x256xf32>
    %348 = math.exp %347 : vector<8x256xf32>
    %cst_149 = arith.constant 1.000000e+00 : f32
    %349 = vector.broadcast %cst_149 : f32 to vector<8x256xf32>
    %350 = arith.addf %349, %348 : vector<8x256xf32>
    %351 = arith.divf %349, %350 : vector<8x256xf32>
    %352 = vector.extract_strided_slice %344 {offsets = [0, 256], sizes = [8, 256], strides = [1, 1]} : vector<8x1024xf32> to vector<8x256xf32>
    %353 = arith.negf %352 : vector<8x256xf32>
    %354 = math.exp %353 : vector<8x256xf32>
    %cst_150 = arith.constant 1.000000e+00 : f32
    %355 = vector.broadcast %cst_150 : f32 to vector<8x256xf32>
    %356 = arith.addf %355, %354 : vector<8x256xf32>
    %357 = arith.divf %355, %356 : vector<8x256xf32>
    %358 = vector.extract_strided_slice %344 {offsets = [0, 512], sizes = [8, 256], strides = [1, 1]} : vector<8x1024xf32> to vector<8x256xf32>
    %359 = math.tanh %358 : vector<8x256xf32>
    %360 = vector.extract_strided_slice %344 {offsets = [0, 768], sizes = [8, 256], strides = [1, 1]} : vector<8x1024xf32> to vector<8x256xf32>
    %361 = arith.negf %360 : vector<8x256xf32>
    %362 = math.exp %361 : vector<8x256xf32>
    %cst_151 = arith.constant 1.000000e+00 : f32
    %363 = vector.broadcast %cst_151 : f32 to vector<8x256xf32>
    %364 = arith.addf %363, %362 : vector<8x256xf32>
    %365 = arith.divf %363, %364 : vector<8x256xf32>
    %366 = arith.mulf %357, %345 : vector<8x256xf32>
    %367 = arith.mulf %351, %359 : vector<8x256xf32>
    %368 = arith.addf %366, %367 : vector<8x256xf32>
    %369 = math.tanh %368 : vector<8x256xf32>
    %370 = arith.mulf %365, %369 : vector<8x256xf32>
    %c0_152 = arith.constant 0 : index
    %c0_153 = arith.constant 0 : index
    %371 = vector.load %arg9[%c0_152, %c0_153] : memref<8x256xf32, #tpu.memory_space<vmem>>, vector<8x256xf32>
    tpu.vector_store %arg9[%c0_152, %c0_153], %368 {strides = array<i32>} : memref<8x256xf32, #tpu.memory_space<vmem>>, vector<8x256xf32>,
    %c0_154 = arith.constant 0 : index
    %c0_155 = arith.constant 0 : index
    %372 = vector.load %arg8[%c0_154, %c0_155] : memref<8x512xf32, #tpu.memory_space<vmem>>, vector<8x256xf32>
    tpu.vector_store %arg8[%c0_154, %c0_155], %370 {strides = array<i32>} : memref<8x512xf32, #tpu.memory_space<vmem>>, vector<8x256xf32>,
    %c0_156 = arith.constant 0 : index
    %c0_157 = arith.constant 0 : index
    %373 = vector.load %arg8[%c0_156, %c0_157] : memref<8x512xf32, #tpu.memory_space<vmem>>, vector<8x512xf32>
    %cst_158 = arith.constant dense<0.000000e+00> : vector<8x1024xf32>
    %374 = tpu.matmul %373, %7, %cst_158 {dimension_numbers = #tpu.dot_dimension_numbers<[1], [0], [0], [1], [0, 0, 1, 1], [], []>} : vector<8x512xf32>, vector<512x1024xf32>, vector<8x1024xf32> -> vector<8x1024xf32>
    %375 = vector.broadcast %8 : vector<1x1024xf32> to vector<8x1024xf32>
    %376 = arith.addf %374, %375 : vector<8x1024xf32>
    %c0_159 = arith.constant 0 : index
    %c0_160 = arith.constant 0 : index
    %377 = vector.load %arg10[%c0_159, %c0_160] : memref<8x256xf32, #tpu.memory_space<vmem>>, vector<8x256xf32>
    %378 = vector.extract_strided_slice %376 {offsets = [0, 0], sizes = [8, 256], strides = [1, 1]} : vector<8x1024xf32> to vector<8x256xf32>
    %379 = arith.negf %378 : vector<8x256xf32>
    %380 = math.exp %379 : vector<8x256xf32>
    %cst_161 = arith.constant 1.000000e+00 : f32
    %381 = vector.broadcast %cst_161 : f32 to vector<8x256xf32>
    %382 = arith.addf %381, %380 : vector<8x256xf32>
    %383 = arith.divf %381, %382 : vector<8x256xf32>
    %384 = vector.extract_strided_slice %376 {offsets = [0, 256], sizes = [8, 256], strides = [1, 1]} : vector<8x1024xf32> to vector<8x256xf32>
    %385 = arith.negf %384 : vector<8x256xf32>
    %386 = math.exp %385 : vector<8x256xf32>
    %cst_162 = arith.constant 1.000000e+00 : f32
    %387 = vector.broadcast %cst_162 : f32 to vector<8x256xf32>
    %388 = arith.addf %387, %386 : vector<8x256xf32>
    %389 = arith.divf %387, %388 : vector<8x256xf32>
    %390 = vector.extract_strided_slice %376 {offsets = [0, 512], sizes = [8, 256], strides = [1, 1]} : vector<8x1024xf32> to vector<8x256xf32>
    %391 = math.tanh %390 : vector<8x256xf32>
    %392 = vector.extract_strided_slice %376 {offsets = [0, 768], sizes = [8, 256], strides = [1, 1]} : vector<8x1024xf32> to vector<8x256xf32>
    %393 = arith.negf %392 : vector<8x256xf32>
    %394 = math.exp %393 : vector<8x256xf32>
    %cst_163 = arith.constant 1.000000e+00 : f32
    %395 = vector.broadcast %cst_163 : f32 to vector<8x256xf32>
    %396 = arith.addf %395, %394 : vector<8x256xf32>
    %397 = arith.divf %395, %396 : vector<8x256xf32>
    %398 = arith.mulf %389, %377 : vector<8x256xf32>
    %399 = arith.mulf %383, %391 : vector<8x256xf32>
    %400 = arith.addf %398, %399 : vector<8x256xf32>
    %401 = math.tanh %400 : vector<8x256xf32>
    %402 = arith.mulf %397, %401 : vector<8x256xf32>
    %c0_164 = arith.constant 0 : index
    %c0_165 = arith.constant 0 : index
    %403 = vector.load %arg10[%c0_164, %c0_165] : memref<8x256xf32, #tpu.memory_space<vmem>>, vector<8x256xf32>
    tpu.vector_store %arg10[%c0_164, %c0_165], %400 {strides = array<i32>} : memref<8x256xf32, #tpu.memory_space<vmem>>, vector<8x256xf32>,
    %c0_166 = arith.constant 0 : index
    %c256_167 = arith.constant 256 : index
    %404 = vector.load %arg8[%c0_166, %c256_167] : memref<8x512xf32, #tpu.memory_space<vmem>>, vector<8x256xf32>
    tpu.vector_store %arg8[%c0_166, %c256_167], %402 {strides = array<i32>} : memref<8x512xf32, #tpu.memory_space<vmem>>, vector<8x256xf32>,
    %c6_i32 = arith.constant 6 : i32
    %405 = arith.index_cast %c6_i32 : i32 to index
    %c0_168 = arith.constant 0 : index
    %c0_169 = arith.constant 0 : index
    %406 = vector.load %arg1[%405, %c0_168, %c0_169] : memref<8x8x1024xf32, #tpu.memory_space<vmem>>, vector<1x8x1024xf32>
    %407 = vector.shape_cast %406 : vector<1x8x1024xf32> to vector<8x1024xf32>
    %c0_170 = arith.constant 0 : index
    %c0_171 = arith.constant 0 : index
    %408 = vector.load %arg8[%c0_170, %c0_171] : memref<8x512xf32, #tpu.memory_space<vmem>>, vector<8x256xf32>
    %cst_172 = arith.constant dense<0.000000e+00> : vector<8x1024xf32>
    %409 = tpu.matmul %408, %6, %cst_172 {dimension_numbers = #tpu.dot_dimension_numbers<[1], [0], [0], [1], [0, 0, 1, 1], [], []>} : vector<8x256xf32>, vector<256x1024xf32>, vector<8x1024xf32> -> vector<8x1024xf32>
    %410 = arith.addf %407, %409 : vector<8x1024xf32>
    %c0_173 = arith.constant 0 : index
    %c0_174 = arith.constant 0 : index
    %411 = vector.load %arg9[%c0_173, %c0_174] : memref<8x256xf32, #tpu.memory_space<vmem>>, vector<8x256xf32>
    %412 = vector.extract_strided_slice %410 {offsets = [0, 0], sizes = [8, 256], strides = [1, 1]} : vector<8x1024xf32> to vector<8x256xf32>
    %413 = arith.negf %412 : vector<8x256xf32>
    %414 = math.exp %413 : vector<8x256xf32>
    %cst_175 = arith.constant 1.000000e+00 : f32
    %415 = vector.broadcast %cst_175 : f32 to vector<8x256xf32>
    %416 = arith.addf %415, %414 : vector<8x256xf32>
    %417 = arith.divf %415, %416 : vector<8x256xf32>
    %418 = vector.extract_strided_slice %410 {offsets = [0, 256], sizes = [8, 256], strides = [1, 1]} : vector<8x1024xf32> to vector<8x256xf32>
    %419 = arith.negf %418 : vector<8x256xf32>
    %420 = math.exp %419 : vector<8x256xf32>
    %cst_176 = arith.constant 1.000000e+00 : f32
    %421 = vector.broadcast %cst_176 : f32 to vector<8x256xf32>
    %422 = arith.addf %421, %420 : vector<8x256xf32>
    %423 = arith.divf %421, %422 : vector<8x256xf32>
    %424 = vector.extract_strided_slice %410 {offsets = [0, 512], sizes = [8, 256], strides = [1, 1]} : vector<8x1024xf32> to vector<8x256xf32>
    %425 = math.tanh %424 : vector<8x256xf32>
    %426 = vector.extract_strided_slice %410 {offsets = [0, 768], sizes = [8, 256], strides = [1, 1]} : vector<8x1024xf32> to vector<8x256xf32>
    %427 = arith.negf %426 : vector<8x256xf32>
    %428 = math.exp %427 : vector<8x256xf32>
    %cst_177 = arith.constant 1.000000e+00 : f32
    %429 = vector.broadcast %cst_177 : f32 to vector<8x256xf32>
    %430 = arith.addf %429, %428 : vector<8x256xf32>
    %431 = arith.divf %429, %430 : vector<8x256xf32>
    %432 = arith.mulf %423, %411 : vector<8x256xf32>
    %433 = arith.mulf %417, %425 : vector<8x256xf32>
    %434 = arith.addf %432, %433 : vector<8x256xf32>
    %435 = math.tanh %434 : vector<8x256xf32>
    %436 = arith.mulf %431, %435 : vector<8x256xf32>
    %c0_178 = arith.constant 0 : index
    %c0_179 = arith.constant 0 : index
    %437 = vector.load %arg9[%c0_178, %c0_179] : memref<8x256xf32, #tpu.memory_space<vmem>>, vector<8x256xf32>
    tpu.vector_store %arg9[%c0_178, %c0_179], %434 {strides = array<i32>} : memref<8x256xf32, #tpu.memory_space<vmem>>, vector<8x256xf32>,
    %c0_180 = arith.constant 0 : index
    %c0_181 = arith.constant 0 : index
    %438 = vector.load %arg8[%c0_180, %c0_181] : memref<8x512xf32, #tpu.memory_space<vmem>>, vector<8x256xf32>
    tpu.vector_store %arg8[%c0_180, %c0_181], %436 {strides = array<i32>} : memref<8x512xf32, #tpu.memory_space<vmem>>, vector<8x256xf32>,
    %c0_182 = arith.constant 0 : index
    %c0_183 = arith.constant 0 : index
    %439 = vector.load %arg8[%c0_182, %c0_183] : memref<8x512xf32, #tpu.memory_space<vmem>>, vector<8x512xf32>
    %cst_184 = arith.constant dense<0.000000e+00> : vector<8x1024xf32>
    %440 = tpu.matmul %439, %7, %cst_184 {dimension_numbers = #tpu.dot_dimension_numbers<[1], [0], [0], [1], [0, 0, 1, 1], [], []>} : vector<8x512xf32>, vector<512x1024xf32>, vector<8x1024xf32> -> vector<8x1024xf32>
    %441 = vector.broadcast %8 : vector<1x1024xf32> to vector<8x1024xf32>
    %442 = arith.addf %440, %441 : vector<8x1024xf32>
    %c0_185 = arith.constant 0 : index
    %c0_186 = arith.constant 0 : index
    %443 = vector.load %arg10[%c0_185, %c0_186] : memref<8x256xf32, #tpu.memory_space<vmem>>, vector<8x256xf32>
    %444 = vector.extract_strided_slice %442 {offsets = [0, 0], sizes = [8, 256], strides = [1, 1]} : vector<8x1024xf32> to vector<8x256xf32>
    %445 = arith.negf %444 : vector<8x256xf32>
    %446 = math.exp %445 : vector<8x256xf32>
    %cst_187 = arith.constant 1.000000e+00 : f32
    %447 = vector.broadcast %cst_187 : f32 to vector<8x256xf32>
    %448 = arith.addf %447, %446 : vector<8x256xf32>
    %449 = arith.divf %447, %448 : vector<8x256xf32>
    %450 = vector.extract_strided_slice %442 {offsets = [0, 256], sizes = [8, 256], strides = [1, 1]} : vector<8x1024xf32> to vector<8x256xf32>
    %451 = arith.negf %450 : vector<8x256xf32>
    %452 = math.exp %451 : vector<8x256xf32>
    %cst_188 = arith.constant 1.000000e+00 : f32
    %453 = vector.broadcast %cst_188 : f32 to vector<8x256xf32>
    %454 = arith.addf %453, %452 : vector<8x256xf32>
    %455 = arith.divf %453, %454 : vector<8x256xf32>
    %456 = vector.extract_strided_slice %442 {offsets = [0, 512], sizes = [8, 256], strides = [1, 1]} : vector<8x1024xf32> to vector<8x256xf32>
    %457 = math.tanh %456 : vector<8x256xf32>
    %458 = vector.extract_strided_slice %442 {offsets = [0, 768], sizes = [8, 256], strides = [1, 1]} : vector<8x1024xf32> to vector<8x256xf32>
    %459 = arith.negf %458 : vector<8x256xf32>
    %460 = math.exp %459 : vector<8x256xf32>
    %cst_189 = arith.constant 1.000000e+00 : f32
    %461 = vector.broadcast %cst_189 : f32 to vector<8x256xf32>
    %462 = arith.addf %461, %460 : vector<8x256xf32>
    %463 = arith.divf %461, %462 : vector<8x256xf32>
    %464 = arith.mulf %455, %443 : vector<8x256xf32>
    %465 = arith.mulf %449, %457 : vector<8x256xf32>
    %466 = arith.addf %464, %465 : vector<8x256xf32>
    %467 = math.tanh %466 : vector<8x256xf32>
    %468 = arith.mulf %463, %467 : vector<8x256xf32>
    %c0_190 = arith.constant 0 : index
    %c0_191 = arith.constant 0 : index
    %469 = vector.load %arg10[%c0_190, %c0_191] : memref<8x256xf32, #tpu.memory_space<vmem>>, vector<8x256xf32>
    tpu.vector_store %arg10[%c0_190, %c0_191], %466 {strides = array<i32>} : memref<8x256xf32, #tpu.memory_space<vmem>>, vector<8x256xf32>,
    %c0_192 = arith.constant 0 : index
    %c256_193 = arith.constant 256 : index
    %470 = vector.load %arg8[%c0_192, %c256_193] : memref<8x512xf32, #tpu.memory_space<vmem>>, vector<8x256xf32>
    tpu.vector_store %arg8[%c0_192, %c256_193], %468 {strides = array<i32>} : memref<8x512xf32, #tpu.memory_space<vmem>>, vector<8x256xf32>,
    %c7_i32 = arith.constant 7 : i32
    %471 = arith.index_cast %c7_i32 : i32 to index
    %c0_194 = arith.constant 0 : index
    %c0_195 = arith.constant 0 : index
    %472 = vector.load %arg1[%471, %c0_194, %c0_195] : memref<8x8x1024xf32, #tpu.memory_space<vmem>>, vector<1x8x1024xf32>
    %473 = vector.shape_cast %472 : vector<1x8x1024xf32> to vector<8x1024xf32>
    %c0_196 = arith.constant 0 : index
    %c0_197 = arith.constant 0 : index
    %474 = vector.load %arg8[%c0_196, %c0_197] : memref<8x512xf32, #tpu.memory_space<vmem>>, vector<8x256xf32>
    %cst_198 = arith.constant dense<0.000000e+00> : vector<8x1024xf32>
    %475 = tpu.matmul %474, %6, %cst_198 {dimension_numbers = #tpu.dot_dimension_numbers<[1], [0], [0], [1], [0, 0, 1, 1], [], []>} : vector<8x256xf32>, vector<256x1024xf32>, vector<8x1024xf32> -> vector<8x1024xf32>
    %476 = arith.addf %473, %475 : vector<8x1024xf32>
    %c0_199 = arith.constant 0 : index
    %c0_200 = arith.constant 0 : index
    %477 = vector.load %arg9[%c0_199, %c0_200] : memref<8x256xf32, #tpu.memory_space<vmem>>, vector<8x256xf32>
    %478 = vector.extract_strided_slice %476 {offsets = [0, 0], sizes = [8, 256], strides = [1, 1]} : vector<8x1024xf32> to vector<8x256xf32>
    %479 = arith.negf %478 : vector<8x256xf32>
    %480 = math.exp %479 : vector<8x256xf32>
    %cst_201 = arith.constant 1.000000e+00 : f32
    %481 = vector.broadcast %cst_201 : f32 to vector<8x256xf32>
    %482 = arith.addf %481, %480 : vector<8x256xf32>
    %483 = arith.divf %481, %482 : vector<8x256xf32>
    %484 = vector.extract_strided_slice %476 {offsets = [0, 256], sizes = [8, 256], strides = [1, 1]} : vector<8x1024xf32> to vector<8x256xf32>
    %485 = arith.negf %484 : vector<8x256xf32>
    %486 = math.exp %485 : vector<8x256xf32>
    %cst_202 = arith.constant 1.000000e+00 : f32
    %487 = vector.broadcast %cst_202 : f32 to vector<8x256xf32>
    %488 = arith.addf %487, %486 : vector<8x256xf32>
    %489 = arith.divf %487, %488 : vector<8x256xf32>
    %490 = vector.extract_strided_slice %476 {offsets = [0, 512], sizes = [8, 256], strides = [1, 1]} : vector<8x1024xf32> to vector<8x256xf32>
    %491 = math.tanh %490 : vector<8x256xf32>
    %492 = vector.extract_strided_slice %476 {offsets = [0, 768], sizes = [8, 256], strides = [1, 1]} : vector<8x1024xf32> to vector<8x256xf32>
    %493 = arith.negf %492 : vector<8x256xf32>
    %494 = math.exp %493 : vector<8x256xf32>
    %cst_203 = arith.constant 1.000000e+00 : f32
    %495 = vector.broadcast %cst_203 : f32 to vector<8x256xf32>
    %496 = arith.addf %495, %494 : vector<8x256xf32>
    %497 = arith.divf %495, %496 : vector<8x256xf32>
    %498 = arith.mulf %489, %477 : vector<8x256xf32>
    %499 = arith.mulf %483, %491 : vector<8x256xf32>
    %500 = arith.addf %498, %499 : vector<8x256xf32>
    %501 = math.tanh %500 : vector<8x256xf32>
    %502 = arith.mulf %497, %501 : vector<8x256xf32>
    %c0_204 = arith.constant 0 : index
    %c0_205 = arith.constant 0 : index
    %503 = vector.load %arg9[%c0_204, %c0_205] : memref<8x256xf32, #tpu.memory_space<vmem>>, vector<8x256xf32>
    tpu.vector_store %arg9[%c0_204, %c0_205], %500 {strides = array<i32>} : memref<8x256xf32, #tpu.memory_space<vmem>>, vector<8x256xf32>,
    %c0_206 = arith.constant 0 : index
    %c0_207 = arith.constant 0 : index
    %504 = vector.load %arg8[%c0_206, %c0_207] : memref<8x512xf32, #tpu.memory_space<vmem>>, vector<8x256xf32>
    tpu.vector_store %arg8[%c0_206, %c0_207], %502 {strides = array<i32>} : memref<8x512xf32, #tpu.memory_space<vmem>>, vector<8x256xf32>,
    %c0_208 = arith.constant 0 : index
    %c0_209 = arith.constant 0 : index
    %505 = vector.load %arg8[%c0_208, %c0_209] : memref<8x512xf32, #tpu.memory_space<vmem>>, vector<8x512xf32>
    %cst_210 = arith.constant dense<0.000000e+00> : vector<8x1024xf32>
    %506 = tpu.matmul %505, %7, %cst_210 {dimension_numbers = #tpu.dot_dimension_numbers<[1], [0], [0], [1], [0, 0, 1, 1], [], []>} : vector<8x512xf32>, vector<512x1024xf32>, vector<8x1024xf32> -> vector<8x1024xf32>
    %507 = vector.broadcast %8 : vector<1x1024xf32> to vector<8x1024xf32>
    %508 = arith.addf %506, %507 : vector<8x1024xf32>
    %c0_211 = arith.constant 0 : index
    %c0_212 = arith.constant 0 : index
    %509 = vector.load %arg10[%c0_211, %c0_212] : memref<8x256xf32, #tpu.memory_space<vmem>>, vector<8x256xf32>
    %510 = vector.extract_strided_slice %508 {offsets = [0, 0], sizes = [8, 256], strides = [1, 1]} : vector<8x1024xf32> to vector<8x256xf32>
    %511 = arith.negf %510 : vector<8x256xf32>
    %512 = math.exp %511 : vector<8x256xf32>
    %cst_213 = arith.constant 1.000000e+00 : f32
    %513 = vector.broadcast %cst_213 : f32 to vector<8x256xf32>
    %514 = arith.addf %513, %512 : vector<8x256xf32>
    %515 = arith.divf %513, %514 : vector<8x256xf32>
    %516 = vector.extract_strided_slice %508 {offsets = [0, 256], sizes = [8, 256], strides = [1, 1]} : vector<8x1024xf32> to vector<8x256xf32>
    %517 = arith.negf %516 : vector<8x256xf32>
    %518 = math.exp %517 : vector<8x256xf32>
    %cst_214 = arith.constant 1.000000e+00 : f32
    %519 = vector.broadcast %cst_214 : f32 to vector<8x256xf32>
    %520 = arith.addf %519, %518 : vector<8x256xf32>
    %521 = arith.divf %519, %520 : vector<8x256xf32>
    %522 = vector.extract_strided_slice %508 {offsets = [0, 512], sizes = [8, 256], strides = [1, 1]} : vector<8x1024xf32> to vector<8x256xf32>
    %523 = math.tanh %522 : vector<8x256xf32>
    %524 = vector.extract_strided_slice %508 {offsets = [0, 768], sizes = [8, 256], strides = [1, 1]} : vector<8x1024xf32> to vector<8x256xf32>
    %525 = arith.negf %524 : vector<8x256xf32>
    %526 = math.exp %525 : vector<8x256xf32>
    %cst_215 = arith.constant 1.000000e+00 : f32
    %527 = vector.broadcast %cst_215 : f32 to vector<8x256xf32>
    %528 = arith.addf %527, %526 : vector<8x256xf32>
    %529 = arith.divf %527, %528 : vector<8x256xf32>
    %530 = arith.mulf %521, %509 : vector<8x256xf32>
    %531 = arith.mulf %515, %523 : vector<8x256xf32>
    %532 = arith.addf %530, %531 : vector<8x256xf32>
    %533 = math.tanh %532 : vector<8x256xf32>
    %534 = arith.mulf %529, %533 : vector<8x256xf32>
    %c0_216 = arith.constant 0 : index
    %c0_217 = arith.constant 0 : index
    %535 = vector.load %arg10[%c0_216, %c0_217] : memref<8x256xf32, #tpu.memory_space<vmem>>, vector<8x256xf32>
    tpu.vector_store %arg10[%c0_216, %c0_217], %532 {strides = array<i32>} : memref<8x256xf32, #tpu.memory_space<vmem>>, vector<8x256xf32>,
    %c0_218 = arith.constant 0 : index
    %c256_219 = arith.constant 256 : index
    %536 = vector.load %arg8[%c0_218, %c256_219] : memref<8x512xf32, #tpu.memory_space<vmem>>, vector<8x256xf32>
    tpu.vector_store %arg8[%c0_218, %c256_219], %534 {strides = array<i32>} : memref<8x512xf32, #tpu.memory_space<vmem>>, vector<8x256xf32>,
    %c8_i32 = arith.constant 8 : i32
    %c0_220 = arith.constant 0 : index
    %c256_221 = arith.constant 256 : index
    %537 = vector.load %arg8[%c0_220, %c256_221] : memref<8x512xf32, #tpu.memory_space<vmem>>, vector<8x256xf32>
    %c0_222 = arith.constant 0 : index
    %c0_223 = arith.constant 0 : index
    %538 = vector.load %arg5[%c0_222, %c0_223] : memref<256x128xf32, #tpu.memory_space<vmem>>, vector<256x128xf32>
    %cst_224 = arith.constant dense<0.000000e+00> : vector<8x128xf32>
    %539 = tpu.matmul %537, %538, %cst_224 {dimension_numbers = #tpu.dot_dimension_numbers<[1], [0], [0], [1], [0, 0, 1, 1], [], []>} : vector<8x256xf32>, vector<256x128xf32>, vector<8x128xf32> -> vector<8x128xf32>
    %c0_225 = arith.constant 0 : index
    %c0_226 = arith.constant 0 : index
    %540 = vector.load %arg6[%c0_225, %c0_226] : memref<1x128xf32, #tpu.memory_space<vmem>>, vector<1x128xf32>
    %541 = vector.broadcast %540 : vector<1x128xf32> to vector<8x128xf32>
    %542 = arith.addf %539, %541 : vector<8x128xf32>
    %c0_227 = arith.constant 0 : index
    %c0_228 = arith.constant 0 : index
    %543 = vector.load %arg7[%c0_227, %c0_228] : memref<8x128xf32, #tpu.memory_space<vmem>>, vector<8x128xf32>
    tpu.vector_store %arg7[%c0_227, %c0_228], %542 {strides = array<i32>} : memref<8x128xf32, #tpu.memory_space<vmem>>, vector<8x128xf32>,
    return
  }
  func.func @transform_0(%arg0: i32) -> (i32, i32, i32) {
    %c0_i32 = arith.constant 0 : i32
    %c0_i32_0 = arith.constant 0 : i32
    %c0_i32_1 = arith.constant 0 : i32
    %c0_i32_2 = arith.constant 0 : i32
    return %c0_i32, %c0_i32_0, %c0_i32_1 : i32, i32, i32
  }
  func.func @transform_1(%arg0: i32) -> (i32, i32) {
    %c0_i32 = arith.constant 0 : i32
    %c0_i32_0 = arith.constant 0 : i32
    %c0_i32_1 = arith.constant 0 : i32
    return %c0_i32, %c0_i32_0 : i32, i32
  }
  func.func @transform_2(%arg0: i32) -> (i32, i32) {
    %c0_i32 = arith.constant 0 : i32
    %c0_i32_0 = arith.constant 0 : i32
    %c0_i32_1 = arith.constant 0 : i32
    return %c0_i32, %c0_i32_0 : i32, i32
  }
  func.func @transform_3(%arg0: i32) -> (i32, i32) {
    %c0_i32 = arith.constant 0 : i32
    %c0_i32_0 = arith.constant 0 : i32
    %c0_i32_1 = arith.constant 0 : i32
    return %c0_i32, %c0_i32_0 : i32, i32
  }
  func.func @transform_4(%arg0: i32) -> (i32, i32) {
    %c0_i32 = arith.constant 0 : i32
    %c0_i32_0 = arith.constant 0 : i32
    %c0_i32_1 = arith.constant 0 : i32
    return %c0_i32, %c0_i32_0 : i32, i32
  }
  func.func @transform_5(%arg0: i32) -> (i32, i32) {
    %c0_i32 = arith.constant 0 : i32
    %c0_i32_0 = arith.constant 0 : i32
    %c0_i32_1 = arith.constant 0 : i32
    return %c0_i32, %c0_i32_0 : i32, i32
  }
  func.func @transform_6(%arg0: i32) -> (i32, i32) {
    %c0_i32 = arith.constant 0 : i32
    %c0_i32_0 = arith.constant 0 : i32
    %c0_i32_1 = arith.constant 0 : i32
    return %c0_i32, %c0_i32_0 : i32, i32
  }
}

</mosaic_0001>

<llo_original>
// kernel: tpu_custom_call.1
$region0: #{tpu_custom_call.1}
  #allocation0 [shape = 'u32[]', space=smem, size = 0x4, offset = 0x4, fixed_abs, tag = 'smem constant byte address 0x4 - core index']
  #allocation1 [shape = 'u32[72,128]{1,0:T(1,128)}', space=vmem, size = 0x9000, scoped, tag = 'internal scratch']
  #allocation2 [shape = 'f32[8,512]{1,0:T(8,128)}', space=vmem, size = 0x4000, scoped, tag = 'scratch operand']
  #allocation3 [shape = 'f32[8,256]{1,0:T(8,128)}', space=vmem, size = 0x2000, scoped, tag = 'scratch operand']
  #allocation4 [shape = 'f32[8,256]{1,0:T(8,128)}', space=vmem, size = 0x2000, scoped, tag = 'scratch operand']
  %s0 = inlined_call_operand.hbm [shape: f32[8,8,1024], index: 0, kind: input, shape index: {}]
  %s1 = inlined_call_operand.hbm [shape: f32[256,1024], index: 1, kind: input, shape index: {}]
  %s2 = inlined_call_operand.hbm [shape: f32[512,1024], index: 2, kind: input, shape index: {}]
  %s3 = inlined_call_operand.hbm [shape: f32[1,1024], index: 3, kind: input, shape index: {}]
  %s4 = inlined_call_operand.hbm [shape: f32[256,128], index: 4, kind: input, shape index: {}]
  %s5 = inlined_call_operand.hbm [shape: f32[1,128], index: 5, kind: input, shape index: {}]
  %s6 = inlined_call_operand.hbm [shape: f32[8,128], index: 6, kind: output, shape index: {}]
  %s7 = sld [smem:[#allocation0]]
  $region58: #{tpu_custom_call.1} parent=0
    _
  %s9 = ssub.s32 1, %s7
  %s10 = scalar_select 0, %s9, %s7
  $region1: #{tpu_custom_call.1} parent=0
    #allocation5 [shape = 'u8[262144]{0}', space=vmem, size = 0x40000, scoped, tag = 'input window, operand 0, single buffered']
    #allocation6 [shape = 's32[1]{0}', space=sflag, size = 0x4, scoped, tag = 'scoped memory for tpu_custom_call.1']
    #allocation7 [shape = 's32[1]{0}', space=sflag, size = 0x4, scoped, tag = 'scoped memory for tpu_custom_call.1']
    #allocation8 [shape = 'u8[1048576]{0}', space=vmem, size = 0x100000, scoped, tag = 'input window, operand 1, single buffered']
    #allocation9 [shape = 's32[1]{0}', space=sflag, size = 0x4, scoped, tag = 'scoped memory for tpu_custom_call.1']
    #allocation10 [shape = 'u8[2097152]{0}', space=vmem, size = 0x200000, scoped, tag = 'input window, operand 2, single buffered']
    #allocation11 [shape = 'u8[4096]{0}', space=vmem, size = 0x1000, scoped, tag = 'input window, operand 3, single buffered']
    #allocation12 [shape = 's32[1]{0}', space=sflag, size = 0x4, scoped, tag = 'scoped memory for tpu_custom_call.1']
    #allocation13 [shape = 'u8[131072]{0}', space=vmem, size = 0x20000, scoped, tag = 'input window, operand 4, single buffered']
    #allocation14 [shape = 'u8[512]{0}', space=vmem, size = 0x400, scoped, tag = 'input window, operand 5, single buffered']
    #allocation15 [shape = 's32[1]{0}', space=sflag, size = 0x4, scoped, tag = 'scoped memory for tpu_custom_call.1']
    #allocation16 [shape = 'u8[4096]{0}', space=vmem, size = 0x1000, scoped, tag = 'output window, operand 0, single buffered']
    %11 = vsyncpa [#allocation6], 0
    %12 = vsyncpa [#allocation9], 0
    %13 = vsyncpa [#allocation12], 0
    %14 = vsyncpa [#allocation15], 0
    %15 = vsyncpa [#allocation7], 0
    // Predicated region
    $region2: #{tpu_custom_call.1} parent=1 // pred_check
      _
    $region3: #{tpu_custom_call.1} parent=1 // pred_check_branch
      %17 = sbr.rel (0) target = $region5
    $region4: #{tpu_custom_call.1} parent=1 // pred_region
      %19 = vsyncadd [#allocation6], 0
      %s20 = sshll.u32 %s0, 4
      %s21 = int_to_ptr.hbm [resolvable:$true] %s20
      %s22 = sshll.u32 [#allocation5], 4
      %s23 = int_to_ptr.vmem [resolvable:$true] %s22
      %28 = dma.hbm_to_vmem [thread:$0]  %s21, 8192, %s23, [#allocation6], 1024, 1024, 64
    $region5: #{tpu_custom_call.1} parent=1 // pred_fallthru
      _
    // Predicated region
    $region6: #{tpu_custom_call.1} parent=1 // pred_check
      _
    $region7: #{tpu_custom_call.1} parent=1 // pred_check_branch
      %30 = sbr.rel (0) target = $region9
    $region8: #{tpu_custom_call.1} parent=1 // pred_region
      %32 = vsyncadd [#allocation9], 0
      %s33 = sshll.u32 %s1, 4
      %s34 = int_to_ptr.hbm [resolvable:$true] %s33
      %s35 = sshll.u32 [#allocation8], 4
      %s36 = int_to_ptr.vmem [resolvable:$true] %s35
      %41 = dma.hbm_to_vmem [thread:$0]  %s34, 32768, %s36, [#allocation9], 1024, 1024, 64
    $region9: #{tpu_custom_call.1} parent=1 // pred_fallthru
      _
    // Predicated region
    $region10: #{tpu_custom_call.1} parent=1 // pred_check
      _
    $region11: #{tpu_custom_call.1} parent=1 // pred_check_branch
      %43 = sbr.rel (0) target = $region13
    $region12: #{tpu_custom_call.1} parent=1 // pred_region
      %45 = vsyncadd [#allocation9], 0
      %s46 = sshll.u32 %s2, 4
      %s47 = int_to_ptr.hbm [resolvable:$true] %s46
      %s48 = sshll.u32 [#allocation10], 4
      %s49 = int_to_ptr.vmem [resolvable:$true] %s48
      %54 = dma.hbm_to_vmem [thread:$0]  %s47, 65536, %s49, [#allocation9], 1024, 1024, 64
    $region13: #{tpu_custom_call.1} parent=1 // pred_fallthru
      _
    // Predicated region
    $region14: #{tpu_custom_call.1} parent=1 // pred_check
      _
    $region15: #{tpu_custom_call.1} parent=1 // pred_check_branch
      %56 = sbr.rel (0) target = $region17
    $region16: #{tpu_custom_call.1} parent=1 // pred_region
      %58 = vsyncadd [#allocation12], 0
      %s60 = sshll.u32 %s3, 4
      %s61 = int_to_ptr.hbm [resolvable:$true] %s60
      %s62 = sshll.u32 [#allocation11], 4
      %s63 = int_to_ptr.vmem [resolvable:$true] %s62
      %65 = dma.hbm_to_vmem [thread:$0]  %s61, 128, %s63, [#allocation12]
    $region17: #{tpu_custom_call.1} parent=1 // pred_fallthru
      _
    // Predicated region
    $region18: #{tpu_custom_call.1} parent=1 // pred_check
      _
    $region19: #{tpu_custom_call.1} parent=1 // pred_check_branch
      %67 = sbr.rel (0) target = $region21
    $region20: #{tpu_custom_call.1} parent=1 // pred_region
      %69 = vsyncadd [#allocation12], 0
      %s70 = sshll.u32 %s4, 4
      %s71 = int_to_ptr.hbm [resolvable:$true] %s70
      %s72 = sshll.u32 [#allocation13], 4
      %s73 = int_to_ptr.vmem [resolvable:$true] %s72
      %78 = dma.hbm_to_vmem [thread:$0]  %s71, 4096, %s73, [#allocation12], 128, 128, 8
    $region21: #{tpu_custom_call.1} parent=1 // pred_fallthru
      _
    // Predicated region
    $region22: #{tpu_custom_call.1} parent=1 // pred_check
      _
    $region23: #{tpu_custom_call.1} parent=1 // pred_check_branch
      %80 = sbr.rel (0) target = $region25
    $region24: #{tpu_custom_call.1} parent=1 // pred_region
      %82 = vsyncadd [#allocation15], 0
      %s84 = sshll.u32 %s5, 4
      %s85 = int_to_ptr.hbm [resolvable:$true] %s84
      %s86 = sshll.u32 [#allocation14], 4
      %s87 = int_to_ptr.vmem [resolvable:$true] %s86
      %89 = dma.hbm_to_vmem [thread:$0]  %s85, 16, %s87, [#allocation15]
    $region25: #{tpu_custom_call.1} parent=1 // pred_fallthru
      _
    // Predicated region
    $region26: #{tpu_custom_call.1} parent=1 // pred_check
      _
    $region27: #{tpu_custom_call.1} parent=1 // pred_check_branch
      %91 = sbr.rel (0) target = $region29
    $region28: #{tpu_custom_call.1} parent=1 // pred_region
      %93 = dma.done [#allocation6], 8192
    $region29: #{tpu_custom_call.1} parent=1 // pred_fallthru
      _
    // Predicated region
    $region30: #{tpu_custom_call.1} parent=1 // pred_check
      _
    $region31: #{tpu_custom_call.1} parent=1 // pred_check_branch
      %95 = sbr.rel (0) target = $region33
    $region32: #{tpu_custom_call.1} parent=1 // pred_region
      %97 = dma.done [#allocation9], 32768
    $region33: #{tpu_custom_call.1} parent=1 // pred_fallthru
      _
    // Predicated region
    $region34: #{tpu_custom_call.1} parent=1 // pred_check
      _
    $region35: #{tpu_custom_call.1} parent=1 // pred_check_branch
      %99 = sbr.rel (0) target = $region37
    $region36: #{tpu_custom_call.1} parent=1 // pred_region
      %101 = dma.done [#allocation9], 65536
    $region37: #{tpu_custom_call.1} parent=1 // pred_fallthru
      _
    // Predicated region
    $region38: #{tpu_custom_call.1} parent=1 // pred_check
      _
    $region39: #{tpu_custom_call.1} parent=1 // pred_check_branch
      %103 = sbr.rel (0) target = $region41
    $region40: #{tpu_custom_call.1} parent=1 // pred_region
      %105 = dma.done [#allocation12], 128
    $region41: #{tpu_custom_call.1} parent=1 // pred_fallthru
      _
    // Predicated region
    $region42: #{tpu_custom_call.1} parent=1 // pred_check
      _
    $region43: #{tpu_custom_call.1} parent=1 // pred_check_branch
      %107 = sbr.rel (0) target = $region45
    $region44: #{tpu_custom_call.1} parent=1 // pred_region
      %109 = dma.done [#allocation12], 4096
    $region45: #{tpu_custom_call.1} parent=1 // pred_fallthru
      _
    // Predicated region
    $region46: #{tpu_custom_call.1} parent=1 // pred_check
      _
    $region47: #{tpu_custom_call.1} parent=1 // pred_check_branch
      %111 = sbr.rel (0) target = $region49
    $region48: #{tpu_custom_call.1} parent=1 // pred_region
      %113 = dma.done [#allocation15], 16
    $region49: #{tpu_custom_call.1} parent=1 // pred_fallthru
      _
    %114 = vst [vmem:[#allocation2] sm:$0xff] 0.0
    %115 = vst [vmem:[#allocation2 + $0x8] sm:$0xff] 0.0
    %116 = vst [vmem:[#allocation2 + $0x10] sm:$0xff] 0.0
    %117 = vst [vmem:[#allocation2 + $0x18] sm:$0xff] 0.0
    %118 = vst [vmem:[#allocation3] sm:$0xff] 0.0
    %119 = vst [vmem:[#allocation3 + $0x8] sm:$0xff] 0.0
    %120 = vst [vmem:[#allocation4] sm:$0xff] 0.0
    %121 = vst [vmem:[#allocation4 + $0x8] sm:$0xff] 0.0
    %v122 = vld [vmem:[#allocation8] sm:$0xff]
    %v123 = vld [vmem:[#allocation8 + $0x8] sm:$0xff]
    %v124 = vld [vmem:[#allocation8 + $0x10] sm:$0xff]
    %v125 = vld [vmem:[#allocation8 + $0x18] sm:$0xff]
    %v126 = vld [vmem:[#allocation8 + $0x20] sm:$0xff]
    %v127 = vld [vmem:[#allocation8 + $0x28] sm:$0xff]
    %v128 = vld [vmem:[#allocation8 + $0x30] sm:$0xff]
    %v129 = vld [vmem:[#allocation8 + $0x38] sm:$0xff]
    %v130 = vld [vmem:[#allocation8 + $0x40] sm:$0xff]
    %v131 = vld [vmem:[#allocation8 + $0x48] sm:$0xff]
    %v132 = vld [vmem:[#allocation8 + $0x50] sm:$0xff]
    %v133 = vld [vmem:[#allocation8 + $0x58] sm:$0xff]
    %v134 = vld [vmem:[#allocation8 + $0x60] sm:$0xff]
    %v135 = vld [vmem:[#allocation8 + $0x68] sm:$0xff]
    %v136 = vld [vmem:[#allocation8 + $0x70] sm:$0xff]
    %v137 = vld [vmem:[#allocation8 + $0x78] sm:$0xff]
    %v138 = vld [vmem:[#allocation8 + $0x80] sm:$0xff]
    %v139 = vld [vmem:[#allocation8 + $0x88] sm:$0xff]
    %v140 = vld [vmem:[#allocation8 + $0x90] sm:$0xff]
    %v141 = vld [vmem:[#allocation8 + $0x98] sm:$0xff]
    %v142 = vld [vmem:[#allocation8 + $0xa0] sm:$0xff]
    %v143 = vld [vmem:[#allocation8 + $0xa8] sm:$0xff]
    %v144 = vld [vmem:[#allocation8 + $0xb0] sm:$0xff]
    %v145 = vld [vmem:[#allocation8 + $0xb8] sm:$0xff]
    %v146 = vld [vmem:[#allocation8 + $0xc0] sm:$0xff]
    %v147 = vld [vmem:[#allocation8 + $0xc8] sm:$0xff]
    %v148 = vld [vmem:[#allocation8 + $0xd0] sm:$0xff]
    %v149 = vld [vmem:[#allocation8 + $0xd8] sm:$0xff]
    %v150 = vld [vmem:[#allocation8 + $0xe0] sm:$0xff]
    %v151 = vld [vmem:[#allocation8 + $0xe8] sm:$0xff]
    %v152 = vld [vmem:[#allocation8 + $0xf0] sm:$0xff]
    %v153 = vld [vmem:[#allocation8 + $0xf8] sm:$0xff]
    %v154 = vld [vmem:[#allocation8 + $0x100] sm:$0xff]
    %v155 = vld [vmem:[#allocation8 + $0x108] sm:$0xff]
    %v156 = vld [vmem:[#allocation8 + $0x110] sm:$0xff]
    %v157 = vld [vmem:[#allocation8 + $0x118] sm:$0xff]
    %v158 = vld [vmem:[#allocation8 + $0x120] sm:$0xff]
    %v159 = vld [vmem:[#allocation8 + $0x128] sm:$0xff]
    %v160 = vld [vmem:[#allocation8 + $0x130] sm:$0xff]
    %v161 = vld [vmem:[#allocation8 + $0x138] sm:$0xff]
    %v162 = vld [vmem:[#allocation8 + $0x140] sm:$0xff]
    %v163 = vld [vmem:[#allocation8 + $0x148] sm:$0xff]
    %v164 = vld [vmem:[#allocation8 + $0x150] sm:$0xff]
    %v165 = vld [vmem:[#allocation8 + $0x158] sm:$0xff]
    %v166 = vld [vmem:[#allocation8 + $0x160] sm:$0xff]
    %v167 = vld [vmem:[#allocation8 + $0x168] sm:$0xff]
    %v168 = vld [vmem:[#allocation8 + $0x170] sm:$0xff]
    %v169 = vld [vmem:[#allocation8 + $0x178] sm:$0xff]
    %v170 = vld [vmem:[#allocation8 + $0x180] sm:$0xff]
    %v171 = vld [vmem:[#allocation8 + $0x188] sm:$0xff]
    %v172 = vld [vmem:[#allocation8 + $0x190] sm:$0xff]
    %v173 = vld [vmem:[#allocation8 + $0x198] sm:$0xff]
    %v174 = vld [vmem:[#allocation8 + $0x1a0] sm:$0xff]
    %v175 = vld [vmem:[#allocation8 + $0x1a8] sm:$0xff]
    %v176 = vld [vmem:[#allocation8 + $0x1b0] sm:$0xff]
    %v177 = vld [vmem:[#allocation8 + $0x1b8] sm:$0xff]
    %v178 = vld [vmem:[#allocation8 + $0x1c0] sm:$0xff]
    %v179 = vld [vmem:[#allocation8 + $0x1c8] sm:$0xff]
    %v180 = vld [vmem:[#allocation8 + $0x1d0] sm:$0xff]
    %v181 = vld [vmem:[#allocation8 + $0x1d8] sm:$0xff]
    %v182 = vld [vmem:[#allocation8 + $0x1e0] sm:$0xff]
    %v183 = vld [vmem:[#allocation8 + $0x1e8] sm:$0xff]
    %v184 = vld [vmem:[#allocation8 + $0x1f0] sm:$0xff]
    %v185 = vld [vmem:[#allocation8 + $0x1f8] sm:$0xff]
    %v186 = vld [vmem:[#allocation8 + $0x200] sm:$0xff]
    %v187 = vld [vmem:[#allocation8 + $0x208] sm:$0xff]
    %v188 = vld [vmem:[#allocation8 + $0x210] sm:$0xff]
    %v189 = vld [vmem:[#allocation8 + $0x218] sm:$0xff]
    %v190 = vld [vmem:[#allocation8 + $0x220] sm:$0xff]
    %v191 = vld [vmem:[#allocation8 + $0x228] sm:$0xff]
    %v192 = vld [vmem:[#allocation8 + $0x230] sm:$0xff]
    %v193 = vld [vmem:[#allocation8 + $0x238] sm:$0xff]
    %v194 = vld [vmem:[#allocation8 + $0x240] sm:$0xff]
    %v195 = vld [vmem:[#allocation8 + $0x248] sm:$0xff]
    %v196 = vld [vmem:[#allocation8 + $0x250] sm:$0xff]
    %v197 = vld [vmem:[#allocation8 + $0x258] sm:$0xff]
    %v198 = vld [vmem:[#allocation8 + $0x260] sm:$0xff]
    %v199 = vld [vmem:[#allocation8 + $0x268] sm:$0xff]
    %v200 = vld [vmem:[#allocation8 + $0x270] sm:$0xff]
    %v201 = vld [vmem:[#allocation8 + $0x278] sm:$0xff]
    %v202 = vld [vmem:[#allocation8 + $0x280] sm:$0xff]
    %v203 = vld [vmem:[#allocation8 + $0x288] sm:$0xff]
    %v204 = vld [vmem:[#allocation8 + $0x290] sm:$0xff]
    %v205 = vld [vmem:[#allocation8 + $0x298] sm:$0xff]
    %v206 = vld [vmem:[#allocation8 + $0x2a0] sm:$0xff]
    %v207 = vld [vmem:[#allocation8 + $0x2a8] sm:$0xff]
    %v208 = vld [vmem:[#allocation8 + $0x2b0] sm:$0xff]
    %v209 = vld [vmem:[#allocation8 + $0x2b8] sm:$0xff]
    %v210 = vld [vmem:[#allocation8 + $0x2c0] sm:$0xff]
    %v211 = vld [vmem:[#allocation8 + $0x2c8] sm:$0xff]
    %v212 = vld [vmem:[#allocation8 + $0x2d0] sm:$0xff]
    %v213 = vld [vmem:[#allocation8 + $0x2d8] sm:$0xff]
    %v214 = vld [vmem:[#allocation8 + $0x2e0] sm:$0xff]
    %v215 = vld [vmem:[#allocation8 + $0x2e8] sm:$0xff]
    %v216 = vld [vmem:[#allocation8 + $0x2f0] sm:$0xff]
    %v217 = vld [vmem:[#allocation8 + $0x2f8] sm:$0xff]
    %v218 = vld [vmem:[#allocation8 + $0x300] sm:$0xff]
    %v219 = vld [vmem:[#allocation8 + $0x308] sm:$0xff]
    %v220 = vld [vmem:[#allocation8 + $0x310] sm:$0xff]
    %v221 = vld [vmem:[#allocation8 + $0x318] sm:$0xff]
    %v222 = vld [vmem:[#allocation8 + $0x320] sm:$0xff]
    %v223 = vld [vmem:[#allocation8 + $0x328] sm:$0xff]
    %v224 = vld [vmem:[#allocation8 + $0x330] sm:$0xff]
    %v225 = vld [vmem:[#allocation8 + $0x338] sm:$0xff]
    %v226 = vld [vmem:[#allocation8 + $0x340] sm:$0xff]
    %v227 = vld [vmem:[#allocation8 + $0x348] sm:$0xff]
    %v228 = vld [vmem:[#allocation8 + $0x350] sm:$0xff]
    %v229 = vld [vmem:[#allocation8 + $0x358] sm:$0xff]
    %v230 = vld [vmem:[#allocation8 + $0x360] sm:$0xff]
    %v231 = vld [vmem:[#allocation8 + $0x368] sm:$0xff]
    %v232 = vld [vmem:[#allocation8 + $0x370] sm:$0xff]
    %v233 = vld [vmem:[#allocation8 + $0x378] sm:$0xff]
    %v234 = vld [vmem:[#allocation8 + $0x380] sm:$0xff]
    %v235 = vld [vmem:[#allocation8 + $0x388] sm:$0xff]
    %v236 = vld [vmem:[#allocation8 + $0x390] sm:$0xff]
    %v237 = vld [vmem:[#allocation8 + $0x398] sm:$0xff]
    %v238 = vld [vmem:[#allocation8 + $0x3a0] sm:$0xff]
    %v239 = vld [vmem:[#allocation8 + $0x3a8] sm:$0xff]
    %v240 = vld [vmem:[#allocation8 + $0x3b0] sm:$0xff]
    %v241 = vld [vmem:[#allocation8 + $0x3b8] sm:$0xff]
    %v242 = vld [vmem:[#allocation8 + $0x3c0] sm:$0xff]
    %v243 = vld [vmem:[#allocation8 + $0x3c8] sm:$0xff]
    %v244 = vld [vmem:[#allocation8 + $0x3d0] sm:$0xff]
    %v245 = vld [vmem:[#allocation8 + $0x3d8] sm:$0xff]
    %v246 = vld [vmem:[#allocation8 + $0x3e0] sm:$0xff]
    %v247 = vld [vmem:[#allocation8 + $0x3e8] sm:$0xff]
    %v248 = vld [vmem:[#allocation8 + $0x3f0] sm:$0xff]
    %v249 = vld [vmem:[#allocation8 + $0x3f8] sm:$0xff]
    %v250 = vld [vmem:[#allocation8 + $0x400] sm:$0xff]
    %v251 = vld [vmem:[#allocation8 + $0x408] sm:$0xff]
    %v252 = vld [vmem:[#allocation8 + $0x410] sm:$0xff]
    %v253 = vld [vmem:[#allocation8 + $0x418] sm:$0xff]
    %v254 = vld [vmem:[#allocation8 + $0x420] sm:$0xff]
    %v255 = vld [vmem:[#allocation8 + $0x428] sm:$0xff]
    %v256 = vld [vmem:[#allocation8 + $0x430] sm:$0xff]
    %v257 = vld [vmem:[#allocation8 + $0x438] sm:$0xff]
    %v258 = vld [vmem:[#allocation8 + $0x440] sm:$0xff]
    %v259 = vld [vmem:[#allocation8 + $0x448] sm:$0xff]
    %v260 = vld [vmem:[#allocation8 + $0x450] sm:$0xff]
    %v261 = vld [vmem:[#allocation8 + $0x458] sm:$0xff]
    %v262 = vld [vmem:[#allocation8 + $0x460] sm:$0xff]
    %v263 = vld [vmem:[#allocation8 + $0x468] sm:$0xff]
    %v264 = vld [vmem:[#allocation8 + $0x470] sm:$0xff]
    %v265 = vld [vmem:[#allocation8 + $0x478] sm:$0xff]
    %v266 = vld [vmem:[#allocation8 + $0x480] sm:$0xff]
    %v267 = vld [vmem:[#allocation8 + $0x488] sm:$0xff]
    %v268 = vld [vmem:[#allocation8 + $0x490] sm:$0xff]
    %v269 = vld [vmem:[#allocation8 + $0x498] sm:$0xff]
    %v270 = vld [vmem:[#allocation8 + $0x4a0] sm:$0xff]
    %v271 = vld [vmem:[#allocation8 + $0x4a8] sm:$0xff]
    %v272 = vld [vmem:[#allocation8 + $0x4b0] sm:$0xff]
    %v273 = vld [vmem:[#allocation8 + $0x4b8] sm:$0xff]
    %v274 = vld [vmem:[#allocation8 + $0x4c0] sm:$0xff]
    %v275 = vld [vmem:[#allocation8 + $0x4c8] sm:$0xff]
    %v276 = vld [vmem:[#allocation8 + $0x4d0] sm:$0xff]
    %v277 = vld [vmem:[#allocation8 + $0x4d8] sm:$0xff]
    %v278 = vld [vmem:[#allocation8 + $0x4e0] sm:$0xff]
    %v279 = vld [vmem:[#allocation8 + $0x4e8] sm:$0xff]
    %v280 = vld [vmem:[#allocation8 + $0x4f0] sm:$0xff]
    %v281 = vld [vmem:[#allocation8 + $0x4f8] sm:$0xff]
    %v282 = vld [vmem:[#allocation8 + $0x500] sm:$0xff]
    %v283 = vld [vmem:[#allocation8 + $0x508] sm:$0xff]
    %v284 = vld [vmem:[#allocation8 + $0x510] sm:$0xff]
    %v285 = vld [vmem:[#allocation8 + $0x518] sm:$0xff]
    %v286 = vld [vmem:[#allocation8 + $0x520] sm:$0xff]
    %v287 = vld [vmem:[#allocation8 + $0x528] sm:$0xff]
    %v288 = vld [vmem:[#allocation8 + $0x530] sm:$0xff]
    %v289 = vld [vmem:[#allocation8 + $0x538] sm:$0xff]
    %v290 = vld [vmem:[#allocation8 + $0x540] sm:$0xff]
    %v291 = vld [vmem:[#allocation8 + $0x548] sm:$0xff]
    %v292 = vld [vmem:[#allocation8 + $0x550] sm:$0xff]
    %v293 = vld [vmem:[#allocation8 + $0x558] sm:$0xff]
    %v294 = vld [vmem:[#allocation8 + $0x560] sm:$0xff]
    %v295 = vld [vmem:[#allocation8 + $0x568] sm:$0xff]
    %v296 = vld [vmem:[#allocation8 + $0x570] sm:$0xff]
    %v297 = vld [vmem:[#allocation8 + $0x578] sm:$0xff]
    %v298 = vld [vmem:[#allocation8 + $0x580] sm:$0xff]
    %v299 = vld [vmem:[#allocation8 + $0x588] sm:$0xff]
    %v300 = vld [vmem:[#allocation8 + $0x590] sm:$0xff]
    %v301 = vld [vmem:[#allocation8 + $0x598] sm:$0xff]
    %v302 = vld [vmem:[#allocation8 + $0x5a0] sm:$0xff]
    %v303 = vld [vmem:[#allocation8 + $0x5a8] sm:$0xff]
    %v304 = vld [vmem:[#allocation8 + $0x5b0] sm:$0xff]
    %v305 = vld [vmem:[#allocation8 + $0x5b8] sm:$0xff]
    %v306 = vld [vmem:[#allocation8 + $0x5c0] sm:$0xff]
    %v307 = vld [vmem:[#allocation8 + $0x5c8] sm:$0xff]
    %v308 = vld [vmem:[#allocation8 + $0x5d0] sm:$0xff]
    %v309 = vld [vmem:[#allocation8 + $0x5d8] sm:$0xff]
    %v310 = vld [vmem:[#allocation8 + $0x5e0] sm:$0xff]
    %v311 = vld [vmem:[#allocation8 + $0x5e8] sm:$0xff]
    %v312 = vld [vmem:[#allocation8 + $0x5f0] sm:$0xff]
    %v313 = vld [vmem:[#allocation8 + $0x5f8] sm:$0xff]
    %v314 = vld [vmem:[#allocation8 + $0x600] sm:$0xff]
    %v315 = vld [vmem:[#allocation8 + $0x608] sm:$0xff]
    %v316 = vld [vmem:[#allocation8 + $0x610] sm:$0xff]
    %v317 = vld [vmem:[#allocation8 + $0x618] sm:$0xff]
    %v318 = vld [vmem:[#allocation8 + $0x620] sm:$0xff]
    %v319 = vld [vmem:[#allocation8 + $0x628] sm:$0xff]
    %v320 = vld [vmem:[#allocation8 + $0x630] sm:$0xff]
    %v321 = vld [vmem:[#allocation8 + $0x638] sm:$0xff]
    %v322 = vld [vmem:[#allocation8 + $0x640] sm:$0xff]
    %v323 = vld [vmem:[#allocation8 + $0x648] sm:$0xff]
    %v324 = vld [vmem:[#allocation8 + $0x650] sm:$0xff]
    %v325 = vld [vmem:[#allocation8 + $0x658] sm:$0xff]
    %v326 = vld [vmem:[#allocation8 + $0x660] sm:$0xff]
    %v327 = vld [vmem:[#allocation8 + $0x668] sm:$0xff]
    %v328 = vld [vmem:[#allocation8 + $0x670] sm:$0xff]
    %v329 = vld [vmem:[#allocation8 + $0x678] sm:$0xff]
    %v330 = vld [vmem:[#allocation8 + $0x680] sm:$0xff]
    %v331 = vld [vmem:[#allocation8 + $0x688] sm:$0xff]
    %v332 = vld [vmem:[#allocation8 + $0x690] sm:$0xff]
    %v333 = vld [vmem:[#allocation8 + $0x698] sm:$0xff]
    %v334 = vld [vmem:[#allocation8 + $0x6a0] sm:$0xff]
    %v335 = vld [vmem:[#allocation8 + $0x6a8] sm:$0xff]
    %v336 = vld [vmem:[#allocation8 + $0x6b0] sm:$0xff]
    %v337 = vld [vmem:[#allocation8 + $0x6b8] sm:$0xff]
    %v338 = vld [vmem:[#allocation8 + $0x6c0] sm:$0xff]
    %v339 = vld [vmem:[#allocation8 + $0x6c8] sm:$0xff]
    %v340 = vld [vmem:[#allocation8 + $0x6d0] sm:$0xff]
    %v341 = vld [vmem:[#allocation8 + $0x6d8] sm:$0xff]
    %v342 = vld [vmem:[#allocation8 + $0x6e0] sm:$0xff]
    %v343 = vld [vmem:[#allocation8 + $0x6e8] sm:$0xff]
    %v344 = vld [vmem:[#allocation8 + $0x6f0] sm:$0xff]
    %v345 = vld [vmem:[#allocation8 + $0x6f8] sm:$0xff]
    %v346 = vld [vmem:[#allocation8 + $0x700] sm:$0xff]
    %v347 = vld [vmem:[#allocation8 + $0x708] sm:$0xff]
    %v348 = vld [vmem:[#allocation8 + $0x710] sm:$0xff]
    %v349 = vld [vmem:[#allocation8 + $0x718] sm:$0xff]
    %v350 = vld [vmem:[#allocation8 + $0x720] sm:$0xff]
    %v351 = vld [vmem:[#allocation8 + $0x728] sm:$0xff]
    %v352 = vld [vmem:[#allocation8 + $0x730] sm:$0xff]
    %v353 = vld [vmem:[#allocation8 + $0x738] sm:$0xff]
    %v354 = vld [vmem:[#allocation8 + $0x740] sm:$0xff]
    %v355 = vld [vmem:[#allocation8 + $0x748] sm:$0xff]
    %v356 = vld [vmem:[#allocation8 + $0x750] sm:$0xff]
    %v357 = vld [vmem:[#allocation8 + $0x758] sm:$0xff]
    %v358 = vld [vmem:[#allocation8 + $0x760] sm:$0xff]
    %v359 = vld [vmem:[#allocation8 + $0x768] sm:$0xff]
    %v360 = vld [vmem:[#allocation8 + $0x770] sm:$0xff]
    %v361 = vld [vmem:[#allocation8 + $0x778] sm:$0xff]
    %v362 = vld [vmem:[#allocation8 + $0x780] sm:$0xff]
    %v363 = vld [vmem:[#allocation8 + $0x788] sm:$0xff]
    %v364 = vld [vmem:[#allocation8 + $0x790] sm:$0xff]
    %v365 = vld [vmem:[#allocation8 + $0x798] sm:$0xff]
    %v366 = vld [vmem:[#allocation8 + $0x7a0] sm:$0xff]
    %v367 = vld [vmem:[#allocation8 + $0x7a8] sm:$0xff]
    %v368 = vld [vmem:[#allocation8 + $0x7b0] sm:$0xff]
    %v369 = vld [vmem:[#allocation8 + $0x7b8] sm:$0xff]
    %v370 = vld [vmem:[#allocation8 + $0x7c0] sm:$0xff]
    %v371 = vld [vmem:[#allocation8 + $0x7c8] sm:$0xff]
    %v372 = vld [vmem:[#allocation8 + $0x7d0] sm:$0xff]
    %v373 = vld [vmem:[#allocation8 + $0x7d8] sm:$0xff]
    %v374 = vld [vmem:[#allocation8 + $0x7e0] sm:$0xff]
    %v375 = vld [vmem:[#allocation8 + $0x7e8] sm:$0xff]
    %v376 = vld [vmem:[#allocation8 + $0x7f0] sm:$0xff]
    %v377 = vld [vmem:[#allocation8 + $0x7f8] sm:$0xff]
    %v378 = vld [vmem:[#allocation10] sm:$0xff]
    %v379 = vld [vmem:[#allocation10 + $0x8] sm:$0xff]
    %v380 = vld [vmem:[#allocation10 + $0x10] sm:$0xff]
    %v381 = vld [vmem:[#allocation10 + $0x18] sm:$0xff]
    %v382 = vld [vmem:[#allocation10 + $0x20] sm:$0xff]
    %v383 = vld [vmem:[#allocation10 + $0x28] sm:$0xff]
    %v384 = vld [vmem:[#allocation10 + $0x30] sm:$0xff]
    %v385 = vld [vmem:[#allocation10 + $0x38] sm:$0xff]
    %v386 = vld [vmem:[#allocation10 + $0x40] sm:$0xff]
    %v387 = vld [vmem:[#allocation10 + $0x48] sm:$0xff]
    %v388 = vld [vmem:[#allocation10 + $0x50] sm:$0xff]
    %v389 = vld [vmem:[#allocation10 + $0x58] sm:$0xff]
    %v390 = vld [vmem:[#allocation10 + $0x60] sm:$0xff]
    %v391 = vld [vmem:[#allocation10 + $0x68] sm:$0xff]
    %v392 = vld [vmem:[#allocation10 + $0x70] sm:$0xff]
    %v393 = vld [vmem:[#allocation10 + $0x78] sm:$0xff]
    %v394 = vld [vmem:[#allocation10 + $0x80] sm:$0xff]
    %v395 = vld [vmem:[#allocation10 + $0x88] sm:$0xff]
    %v396 = vld [vmem:[#allocation10 + $0x90] sm:$0xff]
    %v397 = vld [vmem:[#allocation10 + $0x98] sm:$0xff]
    %v398 = vld [vmem:[#allocation10 + $0xa0] sm:$0xff]
    %v399 = vld [vmem:[#allocation10 + $0xa8] sm:$0xff]
    %v400 = vld [vmem:[#allocation10 + $0xb0] sm:$0xff]
    %v401 = vld [vmem:[#allocation10 + $0xb8] sm:$0xff]
    %v402 = vld [vmem:[#allocation10 + $0xc0] sm:$0xff]
    %v403 = vld [vmem:[#allocation10 + $0xc8] sm:$0xff]
    %v404 = vld [vmem:[#allocation10 + $0xd0] sm:$0xff]
    %v405 = vld [vmem:[#allocation10 + $0xd8] sm:$0xff]
    %v406 = vld [vmem:[#allocation10 + $0xe0] sm:$0xff]
    %v407 = vld [vmem:[#allocation10 + $0xe8] sm:$0xff]
    %v408 = vld [vmem:[#allocation10 + $0xf0] sm:$0xff]
    %v409 = vld [vmem:[#allocation10 + $0xf8] sm:$0xff]
    %v410 = vld [vmem:[#allocation10 + $0x100] sm:$0xff]
    %v411 = vld [vmem:[#allocation10 + $0x108] sm:$0xff]
    %v412 = vld [vmem:[#allocation10 + $0x110] sm:$0xff]
    %v413 = vld [vmem:[#allocation10 + $0x118] sm:$0xff]
    %v414 = vld [vmem:[#allocation10 + $0x120] sm:$0xff]
    %v415 = vld [vmem:[#allocation10 + $0x128] sm:$0xff]
    %v416 = vld [vmem:[#allocation10 + $0x130] sm:$0xff]
    %v417 = vld [vmem:[#allocation10 + $0x138] sm:$0xff]
    %v418 = vld [vmem:[#allocation10 + $0x140] sm:$0xff]
    %v419 = vld [vmem:[#allocation10 + $0x148] sm:$0xff]
    %v420 = vld [vmem:[#allocation10 + $0x150] sm:$0xff]
    %v421 = vld [vmem:[#allocation10 + $0x158] sm:$0xff]
    %v422 = vld [vmem:[#allocation10 + $0x160] sm:$0xff]
    %v423 = vld [vmem:[#allocation10 + $0x168] sm:$0xff]
    %v424 = vld [vmem:[#allocation10 + $0x170] sm:$0xff]
    %v425 = vld [vmem:[#allocation10 + $0x178] sm:$0xff]
    %v426 = vld [vmem:[#allocation10 + $0x180] sm:$0xff]
    %v427 = vld [vmem:[#allocation10 + $0x188] sm:$0xff]
    %v428 = vld [vmem:[#allocation10 + $0x190] sm:$0xff]
    %v429 = vld [vmem:[#allocation10 + $0x198] sm:$0xff]
    %v430 = vld [vmem:[#allocation10 + $0x1a0] sm:$0xff]
    %v431 = vld [vmem:[#allocation10 + $0x1a8] sm:$0xff]
    %v432 = vld [vmem:[#allocation10 + $0x1b0] sm:$0xff]
    %v433 = vld [vmem:[#allocation10 + $0x1b8] sm:$0xff]
    %v434 = vld [vmem:[#allocation10 + $0x1c0] sm:$0xff]
    %v435 = vld [vmem:[#allocation10 + $0x1c8] sm:$0xff]
    %v436 = vld [vmem:[#allocation10 + $0x1d0] sm:$0xff]
    %v437 = vld [vmem:[#allocation10 + $0x1d8] sm:$0xff]
    %v438 = vld [vmem:[#allocation10 + $0x1e0] sm:$0xff]
    %v439 = vld [vmem:[#allocation10 + $0x1e8] sm:$0xff]
    %v440 = vld [vmem:[#allocation10 + $0x1f0] sm:$0xff]
    %v441 = vld [vmem:[#allocation10 + $0x1f8] sm:$0xff]
    %v442 = vld [vmem:[#allocation10 + $0x200] sm:$0xff]
    %v443 = vld [vmem:[#allocation10 + $0x208] sm:$0xff]
    %v444 = vld [vmem:[#allocation10 + $0x210] sm:$0xff]
    %v445 = vld [vmem:[#allocation10 + $0x218] sm:$0xff]
    %v446 = vld [vmem:[#allocation10 + $0x220] sm:$0xff]
    %v447 = vld [vmem:[#allocation10 + $0x228] sm:$0xff]
    %v448 = vld [vmem:[#allocation10 + $0x230] sm:$0xff]
    %v449 = vld [vmem:[#allocation10 + $0x238] sm:$0xff]
    %v450 = vld [vmem:[#allocation10 + $0x240] sm:$0xff]
    %v451 = vld [vmem:[#allocation10 + $0x248] sm:$0xff]
    %v452 = vld [vmem:[#allocation10 + $0x250] sm:$0xff]
    %v453 = vld [vmem:[#allocation10 + $0x258] sm:$0xff]
    %v454 = vld [vmem:[#allocation10 + $0x260] sm:$0xff]
    %v455 = vld [vmem:[#allocation10 + $0x268] sm:$0xff]
    %v456 = vld [vmem:[#allocation10 + $0x270] sm:$0xff]
    %v457 = vld [vmem:[#allocation10 + $0x278] sm:$0xff]
    %v458 = vld [vmem:[#allocation10 + $0x280] sm:$0xff]
    %v459 = vld [vmem:[#allocation10 + $0x288] sm:$0xff]
    %v460 = vld [vmem:[#allocation10 + $0x290] sm:$0xff]
    %v461 = vld [vmem:[#allocation10 + $0x298] sm:$0xff]
    %v462 = vld [vmem:[#allocation10 + $0x2a0] sm:$0xff]
    %v463 = vld [vmem:[#allocation10 + $0x2a8] sm:$0xff]
    %v464 = vld [vmem:[#allocation10 + $0x2b0] sm:$0xff]
    %v465 = vld [vmem:[#allocation10 + $0x2b8] sm:$0xff]
    %v466 = vld [vmem:[#allocation10 + $0x2c0] sm:$0xff]
    %v467 = vld [vmem:[#allocation10 + $0x2c8] sm:$0xff]
    %v468 = vld [vmem:[#allocation10 + $0x2d0] sm:$0xff]
    %v469 = vld [vmem:[#allocation10 + $0x2d8] sm:$0xff]
    %v470 = vld [vmem:[#allocation10 + $0x2e0] sm:$0xff]
    %v471 = vld [vmem:[#allocation10 + $0x2e8] sm:$0xff]
    %v472 = vld [vmem:[#allocation10 + $0x2f0] sm:$0xff]
    %v473 = vld [vmem:[#allocation10 + $0x2f8] sm:$0xff]
    %v474 = vld [vmem:[#allocation10 + $0x300] sm:$0xff]
    %v475 = vld [vmem:[#allocation10 + $0x308] sm:$0xff]
    %v476 = vld [vmem:[#allocation10 + $0x310] sm:$0xff]
    %v477 = vld [vmem:[#allocation10 + $0x318] sm:$0xff]
    %v478 = vld [vmem:[#allocation10 + $0x320] sm:$0xff]
    %v479 = vld [vmem:[#allocation10 + $0x328] sm:$0xff]
    %v480 = vld [vmem:[#allocation10 + $0x330] sm:$0xff]
    %v481 = vld [vmem:[#allocation10 + $0x338] sm:$0xff]
    %v482 = vld [vmem:[#allocation10 + $0x340] sm:$0xff]
    %v483 = vld [vmem:[#allocation10 + $0x348] sm:$0xff]
    %v484 = vld [vmem:[#allocation10 + $0x350] sm:$0xff]
    %v485 = vld [vmem:[#allocation10 + $0x358] sm:$0xff]
    %v486 = vld [vmem:[#allocation10 + $0x360] sm:$0xff]
    %v487 = vld [vmem:[#allocation10 + $0x368] sm:$0xff]
    %v488 = vld [vmem:[#allocation10 + $0x370] sm:$0xff]
    %v489 = vld [vmem:[#allocation10 + $0x378] sm:$0xff]
    %v490 = vld [vmem:[#allocation10 + $0x380] sm:$0xff]
    %v491 = vld [vmem:[#allocation10 + $0x388] sm:$0xff]
    %v492 = vld [vmem:[#allocation10 + $0x390] sm:$0xff]
    %v493 = vld [vmem:[#allocation10 + $0x398] sm:$0xff]
    %v494 = vld [vmem:[#allocation10 + $0x3a0] sm:$0xff]
    %v495 = vld [vmem:[#allocation10 + $0x3a8] sm:$0xff]
    %v496 = vld [vmem:[#allocation10 + $0x3b0] sm:$0xff]
    %v497 = vld [vmem:[#allocation10 + $0x3b8] sm:$0xff]
    %v498 = vld [vmem:[#allocation10 + $0x3c0] sm:$0xff]
    %v499 = vld [vmem:[#allocation10 + $0x3c8] sm:$0xff]
    %v500 = vld [vmem:[#allocation10 + $0x3d0] sm:$0xff]
    %v501 = vld [vmem:[#allocation10 + $0x3d8] sm:$0xff]
    %v502 = vld [vmem:[#allocation10 + $0x3e0] sm:$0xff]
    %v503 = vld [vmem:[#allocation10 + $0x3e8] sm:$0xff]
    %v504 = vld [vmem:[#allocation10 + $0x3f0] sm:$0xff]
    %v505 = vld [vmem:[#allocation10 + $0x3f8] sm:$0xff]
    %v506 = vld [vmem:[#allocation10 + $0x400] sm:$0xff]
    %v507 = vld [vmem:[#allocation10 + $0x408] sm:$0xff]
    %v508 = vld [vmem:[#allocation10 + $0x410] sm:$0xff]
    %v509 = vld [vmem:[#allocation10 + $0x418] sm:$0xff]
    %v510 = vld [vmem:[#allocation10 + $0x420] sm:$0xff]
    %v511 = vld [vmem:[#allocation10 + $0x428] sm:$0xff]
    %v512 = vld [vmem:[#allocation10 + $0x430] sm:$0xff]
    %v513 = vld [vmem:[#allocation10 + $0x438] sm:$0xff]
    %v514 = vld [vmem:[#allocation10 + $0x440] sm:$0xff]
    %v515 = vld [vmem:[#allocation10 + $0x448] sm:$0xff]
    %v516 = vld [vmem:[#allocation10 + $0x450] sm:$0xff]
    %v517 = vld [vmem:[#allocation10 + $0x458] sm:$0xff]
    %v518 = vld [vmem:[#allocation10 + $0x460] sm:$0xff]
    %v519 = vld [vmem:[#allocation10 + $0x468] sm:$0xff]
    %v520 = vld [vmem:[#allocation10 + $0x470] sm:$0xff]
    %v521 = vld [vmem:[#allocation10 + $0x478] sm:$0xff]
    %v522 = vld [vmem:[#allocation10 + $0x480] sm:$0xff]
    %v523 = vld [vmem:[#allocation10 + $0x488] sm:$0xff]
    %v524 = vld [vmem:[#allocation10 + $0x490] sm:$0xff]
    %v525 = vld [vmem:[#allocation10 + $0x498] sm:$0xff]
    %v526 = vld [vmem:[#allocation10 + $0x4a0] sm:$0xff]
    %v527 = vld [vmem:[#allocation10 + $0x4a8] sm:$0xff]
    %v528 = vld [vmem:[#allocation10 + $0x4b0] sm:$0xff]
    %v529 = vld [vmem:[#allocation10 + $0x4b8] sm:$0xff]
    %v530 = vld [vmem:[#allocation10 + $0x4c0] sm:$0xff]
    %v531 = vld [vmem:[#allocation10 + $0x4c8] sm:$0xff]
    %v532 = vld [vmem:[#allocation10 + $0x4d0] sm:$0xff]
    %v533 = vld [vmem:[#allocation10 + $0x4d8] sm:$0xff]
    %v534 = vld [vmem:[#allocation10 + $0x4e0] sm:$0xff]
    %v535 = vld [vmem:[#allocation10 + $0x4e8] sm:$0xff]
    %v536 = vld [vmem:[#allocation10 + $0x4f0] sm:$0xff]
    %v537 = vld [vmem:[#allocation10 + $0x4f8] sm:$0xff]
    %v538 = vld [vmem:[#allocation10 + $0x500] sm:$0xff]
    %v539 = vld [vmem:[#allocation10 + $0x508] sm:$0xff]
    %v540 = vld [vmem:[#allocation10 + $0x510] sm:$0xff]
    %v541 = vld [vmem:[#allocation10 + $0x518] sm:$0xff]
    %v542 = vld [vmem:[#allocation10 + $0x520] sm:$0xff]
    %v543 = vld [vmem:[#allocation10 + $0x528] sm:$0xff]
    %v544 = vld [vmem:[#allocation10 + $0x530] sm:$0xff]
    %v545 = vld [vmem:[#allocation10 + $0x538] sm:$0xff]
    %v546 = vld [vmem:[#allocation10 + $0x540] sm:$0xff]
    %v547 = vld [vmem:[#allocation10 + $0x548] sm:$0xff]
    %v548 = vld [vmem:[#allocation10 + $0x550] sm:$0xff]
    %v549 = vld [vmem:[#allocation10 + $0x558] sm:$0xff]
    %v550 = vld [vmem:[#allocation10 + $0x560] sm:$0xff]
    %v551 = vld [vmem:[#allocation10 + $0x568] sm:$0xff]
    %v552 = vld [vmem:[#allocation10 + $0x570] sm:$0xff]
    %v553 = vld [vmem:[#allocation10 + $0x578] sm:$0xff]
    %v554 = vld [vmem:[#allocation10 + $0x580] sm:$0xff]
    %v555 = vld [vmem:[#allocation10 + $0x588] sm:$0xff]
    %v556 = vld [vmem:[#allocation10 + $0x590] sm:$0xff]
    %v557 = vld [vmem:[#allocation10 + $0x598] sm:$0xff]
    %v558 = vld [vmem:[#allocation10 + $0x5a0] sm:$0xff]
    %v559 = vld [vmem:[#allocation10 + $0x5a8] sm:$0xff]
    %v560 = vld [vmem:[#allocation10 + $0x5b0] sm:$0xff]
    %v561 = vld [vmem:[#allocation10 + $0x5b8] sm:$0xff]
    %v562 = vld [vmem:[#allocation10 + $0x5c0] sm:$0xff]
    %v563 = vld [vmem:[#allocation10 + $0x5c8] sm:$0xff]
    %v564 = vld [vmem:[#allocation10 + $0x5d0] sm:$0xff]
    %v565 = vld [vmem:[#allocation10 + $0x5d8] sm:$0xff]
    %v566 = vld [vmem:[#allocation10 + $0x5e0] sm:$0xff]
    %v567 = vld [vmem:[#allocation10 + $0x5e8] sm:$0xff]
    %v568 = vld [vmem:[#allocation10 + $0x5f0] sm:$0xff]
    %v569 = vld [vmem:[#allocation10 + $0x5f8] sm:$0xff]
    %v570 = vld [vmem:[#allocation10 + $0x600] sm:$0xff]
    %v571 = vld [vmem:[#allocation10 + $0x608] sm:$0xff]
    %v572 = vld [vmem:[#allocation10 + $0x610] sm:$0xff]
    %v573 = vld [vmem:[#allocation10 + $0x618] sm:$0xff]
    %v574 = vld [vmem:[#allocation10 + $0x620] sm:$0xff]
    %v575 = vld [vmem:[#allocation10 + $0x628] sm:$0xff]
    %v576 = vld [vmem:[#allocation10 + $0x630] sm:$0xff]
    %v577 = vld [vmem:[#allocation10 + $0x638] sm:$0xff]
    %v578 = vld [vmem:[#allocation10 + $0x640] sm:$0xff]
    %v579 = vld [vmem:[#allocation10 + $0x648] sm:$0xff]
    %v580 = vld [vmem:[#allocation10 + $0x650] sm:$0xff]
    %v581 = vld [vmem:[#allocation10 + $0x658] sm:$0xff]
    %v582 = vld [vmem:[#allocation10 + $0x660] sm:$0xff]
    %v583 = vld [vmem:[#allocation10 + $0x668] sm:$0xff]
    %v584 = vld [vmem:[#allocation10 + $0x670] sm:$0xff]
    %v585 = vld [vmem:[#allocation10 + $0x678] sm:$0xff]
    %v586 = vld [vmem:[#allocation10 + $0x680] sm:$0xff]
    %v587 = vld [vmem:[#allocation10 + $0x688] sm:$0xff]
    %v588 = vld [vmem:[#allocation10 + $0x690] sm:$0xff]
    %v589 = vld [vmem:[#allocation10 + $0x698] sm:$0xff]
    %v590 = vld [vmem:[#allocation10 + $0x6a0] sm:$0xff]
    %v591 = vld [vmem:[#allocation10 + $0x6a8] sm:$0xff]
    %v592 = vld [vmem:[#allocation10 + $0x6b0] sm:$0xff]
    %v593 = vld [vmem:[#allocation10 + $0x6b8] sm:$0xff]
    %v594 = vld [vmem:[#allocation10 + $0x6c0] sm:$0xff]
    %v595 = vld [vmem:[#allocation10 + $0x6c8] sm:$0xff]
    %v596 = vld [vmem:[#allocation10 + $0x6d0] sm:$0xff]
    %v597 = vld [vmem:[#allocation10 + $0x6d8] sm:$0xff]
    %v598 = vld [vmem:[#allocation10 + $0x6e0] sm:$0xff]
    %v599 = vld [vmem:[#allocation10 + $0x6e8] sm:$0xff]
    %v600 = vld [vmem:[#allocation10 + $0x6f0] sm:$0xff]
    %v601 = vld [vmem:[#allocation10 + $0x6f8] sm:$0xff]
    %v602 = vld [vmem:[#allocation10 + $0x700] sm:$0xff]
    %v603 = vld [vmem:[#allocation10 + $0x708] sm:$0xff]
    %v604 = vld [vmem:[#allocation10 + $0x710] sm:$0xff]
    %v605 = vld [vmem:[#allocation10 + $0x718] sm:$0xff]
    %v606 = vld [vmem:[#allocation10 + $0x720] sm:$0xff]
    %v607 = vld [vmem:[#allocation10 + $0x728] sm:$0xff]
    %v608 = vld [vmem:[#allocation10 + $0x730] sm:$0xff]
    %v609 = vld [vmem:[#allocation10 + $0x738] sm:$0xff]
    %v610 = vld [vmem:[#allocation10 + $0x740] sm:$0xff]
    %v611 = vld [vmem:[#allocation10 + $0x748] sm:$0xff]
    %v612 = vld [vmem:[#allocation10 + $0x750] sm:$0xff]
    %v613 = vld [vmem:[#allocation10 + $0x758] sm:$0xff]
    %v614 = vld [vmem:[#allocation10 + $0x760] sm:$0xff]
    %v615 = vld [vmem:[#allocation10 + $0x768] sm:$0xff]
    %v616 = vld [vmem:[#allocation10 + $0x770] sm:$0xff]
    %v617 = vld [vmem:[#allocation10 + $0x778] sm:$0xff]
    %v618 = vld [vmem:[#allocation10 + $0x780] sm:$0xff]
    %v619 = vld [vmem:[#allocation10 + $0x788] sm:$0xff]
    %v620 = vld [vmem:[#allocation10 + $0x790] sm:$0xff]
    %v621 = vld [vmem:[#allocation10 + $0x798] sm:$0xff]
    %v622 = vld [vmem:[#allocation10 + $0x7a0] sm:$0xff]
    %v623 = vld [vmem:[#allocation10 + $0x7a8] sm:$0xff]
    %v624 = vld [vmem:[#allocation10 + $0x7b0] sm:$0xff]
    %v625 = vld [vmem:[#allocation10 + $0x7b8] sm:$0xff]
    %v626 = vld [vmem:[#allocation10 + $0x7c0] sm:$0xff]
    %v627 = vld [vmem:[#allocation10 + $0x7c8] sm:$0xff]
    %v628 = vld [vmem:[#allocation10 + $0x7d0] sm:$0xff]
    %v629 = vld [vmem:[#allocation10 + $0x7d8] sm:$0xff]
    %v630 = vld [vmem:[#allocation10 + $0x7e0] sm:$0xff]
    %v631 = vld [vmem:[#allocation10 + $0x7e8] sm:$0xff]
    %v632 = vld [vmem:[#allocation10 + $0x7f0] sm:$0xff]
    %v633 = vld [vmem:[#allocation10 + $0x7f8] sm:$0xff]
    %v634 = vld [vmem:[#allocation10 + $0x800] sm:$0xff]
    %v635 = vld [vmem:[#allocation10 + $0x808] sm:$0xff]
    %v636 = vld [vmem:[#allocation10 + $0x810] sm:$0xff]
    %v637 = vld [vmem:[#allocation10 + $0x818] sm:$0xff]
    %v638 = vld [vmem:[#allocation10 + $0x820] sm:$0xff]
    %v639 = vld [vmem:[#allocation10 + $0x828] sm:$0xff]
    %v640 = vld [vmem:[#allocation10 + $0x830] sm:$0xff]
    %v641 = vld [vmem:[#allocation10 + $0x838] sm:$0xff]
    %v642 = vld [vmem:[#allocation10 + $0x840] sm:$0xff]
    %v643 = vld [vmem:[#allocation10 + $0x848] sm:$0xff]
    %v644 = vld [vmem:[#allocation10 + $0x850] sm:$0xff]
    %v645 = vld [vmem:[#allocation10 + $0x858] sm:$0xff]
    %v646 = vld [vmem:[#allocation10 + $0x860] sm:$0xff]
    %v647 = vld [vmem:[#allocation10 + $0x868] sm:$0xff]
    %v648 = vld [vmem:[#allocation10 + $0x870] sm:$0xff]
    %v649 = vld [vmem:[#allocation10 + $0x878] sm:$0xff]
    %v650 = vld [vmem:[#allocation10 + $0x880] sm:$0xff]
    %v651 = vld [vmem:[#allocation10 + $0x888] sm:$0xff]
    %v652 = vld [vmem:[#allocation10 + $0x890] sm:$0xff]
    %v653 = vld [vmem:[#allocation10 + $0x898] sm:$0xff]
    %v654 = vld [vmem:[#allocation10 + $0x8a0] sm:$0xff]
    %v655 = vld [vmem:[#allocation10 + $0x8a8] sm:$0xff]
    %v656 = vld [vmem:[#allocation10 + $0x8b0] sm:$0xff]
    %v657 = vld [vmem:[#allocation10 + $0x8b8] sm:$0xff]
    %v658 = vld [vmem:[#allocation10 + $0x8c0] sm:$0xff]
    %v659 = vld [vmem:[#allocation10 + $0x8c8] sm:$0xff]
    %v660 = vld [vmem:[#allocation10 + $0x8d0] sm:$0xff]
    %v661 = vld [vmem:[#allocation10 + $0x8d8] sm:$0xff]
    %v662 = vld [vmem:[#allocation10 + $0x8e0] sm:$0xff]
    %v663 = vld [vmem:[#allocation10 + $0x8e8] sm:$0xff]
    %v664 = vld [vmem:[#allocation10 + $0x8f0] sm:$0xff]
    %v665 = vld [vmem:[#allocation10 + $0x8f8] sm:$0xff]
    %v666 = vld [vmem:[#allocation10 + $0x900] sm:$0xff]
    %v667 = vld [vmem:[#allocation10 + $0x908] sm:$0xff]
    %v668 = vld [vmem:[#allocation10 + $0x910] sm:$0xff]
    %v669 = vld [vmem:[#allocation10 + $0x918] sm:$0xff]
    %v670 = vld [vmem:[#allocation10 + $0x920] sm:$0xff]
    %v671 = vld [vmem:[#allocation10 + $0x928] sm:$0xff]
    %v672 = vld [vmem:[#allocation10 + $0x930] sm:$0xff]
    %v673 = vld [vmem:[#allocation10 + $0x938] sm:$0xff]
    %v674 = vld [vmem:[#allocation10 + $0x940] sm:$0xff]
    %v675 = vld [vmem:[#allocation10 + $0x948] sm:$0xff]
    %v676 = vld [vmem:[#allocation10 + $0x950] sm:$0xff]
    %v677 = vld [vmem:[#allocation10 + $0x958] sm:$0xff]
    %v678 = vld [vmem:[#allocation10 + $0x960] sm:$0xff]
    %v679 = vld [vmem:[#allocation10 + $0x968] sm:$0xff]
    %v680 = vld [vmem:[#allocation10 + $0x970] sm:$0xff]
    %v681 = vld [vmem:[#allocation10 + $0x978] sm:$0xff]
    %v682 = vld [vmem:[#allocation10 + $0x980] sm:$0xff]
    %v683 = vld [vmem:[#allocation10 + $0x988] sm:$0xff]
    %v684 = vld [vmem:[#allocation10 + $0x990] sm:$0xff]
    %v685 = vld [vmem:[#allocation10 + $0x998] sm:$0xff]
    %v686 = vld [vmem:[#allocation10 + $0x9a0] sm:$0xff]
    %v687 = vld [vmem:[#allocation10 + $0x9a8] sm:$0xff]
    %v688 = vld [vmem:[#allocation10 + $0x9b0] sm:$0xff]
    %v689 = vld [vmem:[#allocation10 + $0x9b8] sm:$0xff]
    %v690 = vld [vmem:[#allocation10 + $0x9c0] sm:$0xff]
    %v691 = vld [vmem:[#allocation10 + $0x9c8] sm:$0xff]
    %v692 = vld [vmem:[#allocation10 + $0x9d0] sm:$0xff]
    %v693 = vld [vmem:[#allocation10 + $0x9d8] sm:$0xff]
    %v694 = vld [vmem:[#allocation10 + $0x9e0] sm:$0xff]
    %v695 = vld [vmem:[#allocation10 + $0x9e8] sm:$0xff]
    %v696 = vld [vmem:[#allocation10 + $0x9f0] sm:$0xff]
    %v697 = vld [vmem:[#allocation10 + $0x9f8] sm:$0xff]
    %v698 = vld [vmem:[#allocation10 + $0xa00] sm:$0xff]
    %v699 = vld [vmem:[#allocation10 + $0xa08] sm:$0xff]
    %v700 = vld [vmem:[#allocation10 + $0xa10] sm:$0xff]
    %v701 = vld [vmem:[#allocation10 + $0xa18] sm:$0xff]
    %v702 = vld [vmem:[#allocation10 + $0xa20] sm:$0xff]
    %v703 = vld [vmem:[#allocation10 + $0xa28] sm:$0xff]
    %v704 = vld [vmem:[#allocation10 + $0xa30] sm:$0xff]
    %v705 = vld [vmem:[#allocation10 + $0xa38] sm:$0xff]
    %v706 = vld [vmem:[#allocation10 + $0xa40] sm:$0xff]
    %v707 = vld [vmem:[#allocation10 + $0xa48] sm:$0xff]
    %v708 = vld [vmem:[#allocation10 + $0xa50] sm:$0xff]
    %v709 = vld [vmem:[#allocation10 + $0xa58] sm:$0xff]
    %v710 = vld [vmem:[#allocation10 + $0xa60] sm:$0xff]
    %v711 = vld [vmem:[#allocation10 + $0xa68] sm:$0xff]
    %v712 = vld [vmem:[#allocation10 + $0xa70] sm:$0xff]
    %v713 = vld [vmem:[#allocation10 + $0xa78] sm:$0xff]
    %v714 = vld [vmem:[#allocation10 + $0xa80] sm:$0xff]
    %v715 = vld [vmem:[#allocation10 + $0xa88] sm:$0xff]
    %v716 = vld [vmem:[#allocation10 + $0xa90] sm:$0xff]
    %v717 = vld [vmem:[#allocation10 + $0xa98] sm:$0xff]
    %v718 = vld [vmem:[#allocation10 + $0xaa0] sm:$0xff]
    %v719 = vld [vmem:[#allocation10 + $0xaa8] sm:$0xff]
    %v720 = vld [vmem:[#allocation10 + $0xab0] sm:$0xff]
    %v721 = vld [vmem:[#allocation10 + $0xab8] sm:$0xff]
    %v722 = vld [vmem:[#allocation10 + $0xac0] sm:$0xff]
    %v723 = vld [vmem:[#allocation10 + $0xac8] sm:$0xff]
    %v724 = vld [vmem:[#allocation10 + $0xad0] sm:$0xff]
    %v725 = vld [vmem:[#allocation10 + $0xad8] sm:$0xff]
    %v726 = vld [vmem:[#allocation10 + $0xae0] sm:$0xff]
    %v727 = vld [vmem:[#allocation10 + $0xae8] sm:$0xff]
    %v728 = vld [vmem:[#allocation10 + $0xaf0] sm:$0xff]
    %v729 = vld [vmem:[#allocation10 + $0xaf8] sm:$0xff]
    %v730 = vld [vmem:[#allocation10 + $0xb00] sm:$0xff]
    %v731 = vld [vmem:[#allocation10 + $0xb08] sm:$0xff]
    %v732 = vld [vmem:[#allocation10 + $0xb10] sm:$0xff]
    %v733 = vld [vmem:[#allocation10 + $0xb18] sm:$0xff]
    %v734 = vld [vmem:[#allocation10 + $0xb20] sm:$0xff]
    %v735 = vld [vmem:[#allocation10 + $0xb28] sm:$0xff]
    %v736 = vld [vmem:[#allocation10 + $0xb30] sm:$0xff]
    %v737 = vld [vmem:[#allocation10 + $0xb38] sm:$0xff]
    %v738 = vld [vmem:[#allocation10 + $0xb40] sm:$0xff]
    %v739 = vld [vmem:[#allocation10 + $0xb48] sm:$0xff]
    %v740 = vld [vmem:[#allocation10 + $0xb50] sm:$0xff]
    %v741 = vld [vmem:[#allocation10 + $0xb58] sm:$0xff]
    %v742 = vld [vmem:[#allocation10 + $0xb60] sm:$0xff]
    %v743 = vld [vmem:[#allocation10 + $0xb68] sm:$0xff]
    %v744 = vld [vmem:[#allocation10 + $0xb70] sm:$0xff]
    %v745 = vld [vmem:[#allocation10 + $0xb78] sm:$0xff]
    %v746 = vld [vmem:[#allocation10 + $0xb80] sm:$0xff]
    %v747 = vld [vmem:[#allocation10 + $0xb88] sm:$0xff]
    %v748 = vld [vmem:[#allocation10 + $0xb90] sm:$0xff]
    %v749 = vld [vmem:[#allocation10 + $0xb98] sm:$0xff]
    %v750 = vld [vmem:[#allocation10 + $0xba0] sm:$0xff]
    %v751 = vld [vmem:[#allocation10 + $0xba8] sm:$0xff]
    %v752 = vld [vmem:[#allocation10 + $0xbb0] sm:$0xff]
    %v753 = vld [vmem:[#allocation10 + $0xbb8] sm:$0xff]
    %v754 = vld [vmem:[#allocation10 + $0xbc0] sm:$0xff]
    %v755 = vld [vmem:[#allocation10 + $0xbc8] sm:$0xff]
    %v756 = vld [vmem:[#allocation10 + $0xbd0] sm:$0xff]
    %v757 = vld [vmem:[#allocation10 + $0xbd8] sm:$0xff]
    %v758 = vld [vmem:[#allocation10 + $0xbe0] sm:$0xff]
    %v759 = vld [vmem:[#allocation10 + $0xbe8] sm:$0xff]
    %v760 = vld [vmem:[#allocation10 + $0xbf0] sm:$0xff]
    %v761 = vld [vmem:[#allocation10 + $0xbf8] sm:$0xff]
    %v762 = vld [vmem:[#allocation10 + $0xc00] sm:$0xff]
    %v763 = vld [vmem:[#allocation10 + $0xc08] sm:$0xff]
    %v764 = vld [vmem:[#allocation10 + $0xc10] sm:$0xff]
    %v765 = vld [vmem:[#allocation10 + $0xc18] sm:$0xff]
    %v766 = vld [vmem:[#allocation10 + $0xc20] sm:$0xff]
    %v767 = vld [vmem:[#allocation10 + $0xc28] sm:$0xff]
    %v768 = vld [vmem:[#allocation10 + $0xc30] sm:$0xff]
    %v769 = vld [vmem:[#allocation10 + $0xc38] sm:$0xff]
    %v770 = vld [vmem:[#allocation10 + $0xc40] sm:$0xff]
    %v771 = vld [vmem:[#allocation10 + $0xc48] sm:$0xff]
    %v772 = vld [vmem:[#allocation10 + $0xc50] sm:$0xff]
    %v773 = vld [vmem:[#allocation10 + $0xc58] sm:$0xff]
    %v774 = vld [vmem:[#allocation10 + $0xc60] sm:$0xff]
    %v775 = vld [vmem:[#allocation10 + $0xc68] sm:$0xff]
    %v776 = vld [vmem:[#allocation10 + $0xc70] sm:$0xff]
    %v777 = vld [vmem:[#allocation10 + $0xc78] sm:$0xff]
    %v778 = vld [vmem:[#allocation10 + $0xc80] sm:$0xff]
    %v779 = vld [vmem:[#allocation10 + $0xc88] sm:$0xff]
    %v780 = vld [vmem:[#allocation10 + $0xc90] sm:$0xff]
    %v781 = vld [vmem:[#allocation10 + $0xc98] sm:$0xff]
    %v782 = vld [vmem:[#allocation10 + $0xca0] sm:$0xff]
    %v783 = vld [vmem:[#allocation10 + $0xca8] sm:$0xff]
    %v784 = vld [vmem:[#allocation10 + $0xcb0] sm:$0xff]
    %v785 = vld [vmem:[#allocation10 + $0xcb8] sm:$0xff]
    %v786 = vld [vmem:[#allocation10 + $0xcc0] sm:$0xff]
    %v787 = vld [vmem:[#allocation10 + $0xcc8] sm:$0xff]
    %v788 = vld [vmem:[#allocation10 + $0xcd0] sm:$0xff]
    %v789 = vld [vmem:[#allocation10 + $0xcd8] sm:$0xff]
    %v790 = vld [vmem:[#allocation10 + $0xce0] sm:$0xff]
    %v791 = vld [vmem:[#allocation10 + $0xce8] sm:$0xff]
    %v792 = vld [vmem:[#allocation10 + $0xcf0] sm:$0xff]
    %v793 = vld [vmem:[#allocation10 + $0xcf8] sm:$0xff]
    %v794 = vld [vmem:[#allocation10 + $0xd00] sm:$0xff]
    %v795 = vld [vmem:[#allocation10 + $0xd08] sm:$0xff]
    %v796 = vld [vmem:[#allocation10 + $0xd10] sm:$0xff]
    %v797 = vld [vmem:[#allocation10 + $0xd18] sm:$0xff]
    %v798 = vld [vmem:[#allocation10 + $0xd20] sm:$0xff]
    %v799 = vld [vmem:[#allocation10 + $0xd28] sm:$0xff]
    %v800 = vld [vmem:[#allocation10 + $0xd30] sm:$0xff]
    %v801 = vld [vmem:[#allocation10 + $0xd38] sm:$0xff]
    %v802 = vld [vmem:[#allocation10 + $0xd40] sm:$0xff]
    %v803 = vld [vmem:[#allocation10 + $0xd48] sm:$0xff]
    %v804 = vld [vmem:[#allocation10 + $0xd50] sm:$0xff]
    %v805 = vld [vmem:[#allocation10 + $0xd58] sm:$0xff]
    %v806 = vld [vmem:[#allocation10 + $0xd60] sm:$0xff]
    %v807 = vld [vmem:[#allocation10 + $0xd68] sm:$0xff]
    %v808 = vld [vmem:[#allocation10 + $0xd70] sm:$0xff]
    %v809 = vld [vmem:[#allocation10 + $0xd78] sm:$0xff]
    %v810 = vld [vmem:[#allocation10 + $0xd80] sm:$0xff]
    %v811 = vld [vmem:[#allocation10 + $0xd88] sm:$0xff]
    %v812 = vld [vmem:[#allocation10 + $0xd90] sm:$0xff]
    %v813 = vld [vmem:[#allocation10 + $0xd98] sm:$0xff]
    %v814 = vld [vmem:[#allocation10 + $0xda0] sm:$0xff]
    %v815 = vld [vmem:[#allocation10 + $0xda8] sm:$0xff]
    %v816 = vld [vmem:[#allocation10 + $0xdb0] sm:$0xff]
    %v817 = vld [vmem:[#allocation10 + $0xdb8] sm:$0xff]
    %v818 = vld [vmem:[#allocation10 + $0xdc0] sm:$0xff]
    %v819 = vld [vmem:[#allocation10 + $0xdc8] sm:$0xff]
    %v820 = vld [vmem:[#allocation10 + $0xdd0] sm:$0xff]
    %v821 = vld [vmem:[#allocation10 + $0xdd8] sm:$0xff]
    %v822 = vld [vmem:[#allocation10 + $0xde0] sm:$0xff]
    %v823 = vld [vmem:[#allocation10 + $0xde8] sm:$0xff]
    %v824 = vld [vmem:[#allocation10 + $0xdf0] sm:$0xff]
    %v825 = vld [vmem:[#allocation10 + $0xdf8] sm:$0xff]
    %v826 = vld [vmem:[#allocation10 + $0xe00] sm:$0xff]
    %v827 = vld [vmem:[#allocation10 + $0xe08] sm:$0xff]
    %v828 = vld [vmem:[#allocation10 + $0xe10] sm:$0xff]
    %v829 = vld [vmem:[#allocation10 + $0xe18] sm:$0xff]
    %v830 = vld [vmem:[#allocation10 + $0xe20] sm:$0xff]
    %v831 = vld [vmem:[#allocation10 + $0xe28] sm:$0xff]
    %v832 = vld [vmem:[#allocation10 + $0xe30] sm:$0xff]
    %v833 = vld [vmem:[#allocation10 + $0xe38] sm:$0xff]
    %v834 = vld [vmem:[#allocation10 + $0xe40] sm:$0xff]
    %v835 = vld [vmem:[#allocation10 + $0xe48] sm:$0xff]
    %v836 = vld [vmem:[#allocation10 + $0xe50] sm:$0xff]
    %v837 = vld [vmem:[#allocation10 + $0xe58] sm:$0xff]
    %v838 = vld [vmem:[#allocation10 + $0xe60] sm:$0xff]
    %v839 = vld [vmem:[#allocation10 + $0xe68] sm:$0xff]
    %v840 = vld [vmem:[#allocation10 + $0xe70] sm:$0xff]
    %v841 = vld [vmem:[#allocation10 + $0xe78] sm:$0xff]
    %v842 = vld [vmem:[#allocation10 + $0xe80] sm:$0xff]
    %v843 = vld [vmem:[#allocation10 + $0xe88] sm:$0xff]
    %v844 = vld [vmem:[#allocation10 + $0xe90] sm:$0xff]
    %v845 = vld [vmem:[#allocation10 + $0xe98] sm:$0xff]
    %v846 = vld [vmem:[#allocation10 + $0xea0] sm:$0xff]
    %v847 = vld [vmem:[#allocation10 + $0xea8] sm:$0xff]
    %v848 = vld [vmem:[#allocation10 + $0xeb0] sm:$0xff]
    %v849 = vld [vmem:[#allocation10 + $0xeb8] sm:$0xff]
    %v850 = vld [vmem:[#allocation10 + $0xec0] sm:$0xff]
    %v851 = vld [vmem:[#allocation10 + $0xec8] sm:$0xff]
    %v852 = vld [vmem:[#allocation10 + $0xed0] sm:$0xff]
    %v853 = vld [vmem:[#allocation10 + $0xed8] sm:$0xff]
    %v854 = vld [vmem:[#allocation10 + $0xee0] sm:$0xff]
    %v855 = vld [vmem:[#allocation10 + $0xee8] sm:$0xff]
    %v856 = vld [vmem:[#allocation10 + $0xef0] sm:$0xff]
    %v857 = vld [vmem:[#allocation10 + $0xef8] sm:$0xff]
    %v858 = vld [vmem:[#allocation10 + $0xf00] sm:$0xff]
    %v859 = vld [vmem:[#allocation10 + $0xf08] sm:$0xff]
    %v860 = vld [vmem:[#allocation10 + $0xf10] sm:$0xff]
    %v861 = vld [vmem:[#allocation10 + $0xf18] sm:$0xff]
    %v862 = vld [vmem:[#allocation10 + $0xf20] sm:$0xff]
    %v863 = vld [vmem:[#allocation10 + $0xf28] sm:$0xff]
    %v864 = vld [vmem:[#allocation10 + $0xf30] sm:$0xff]
    %v865 = vld [vmem:[#allocation10 + $0xf38] sm:$0xff]
    %v866 = vld [vmem:[#allocation10 + $0xf40] sm:$0xff]
    %v867 = vld [vmem:[#allocation10 + $0xf48] sm:$0xff]
    %v868 = vld [vmem:[#allocation10 + $0xf50] sm:$0xff]
    %v869 = vld [vmem:[#allocation10 + $0xf58] sm:$0xff]
    %v870 = vld [vmem:[#allocation10 + $0xf60] sm:$0xff]
    %v871 = vld [vmem:[#allocation10 + $0xf68] sm:$0xff]
    %v872 = vld [vmem:[#allocation10 + $0xf70] sm:$0xff]
    %v873 = vld [vmem:[#allocation10 + $0xf78] sm:$0xff]
    %v874 = vld [vmem:[#allocation10 + $0xf80] sm:$0xff]
    %v875 = vld [vmem:[#allocation10 + $0xf88] sm:$0xff]
    %v876 = vld [vmem:[#allocation10 + $0xf90] sm:$0xff]
    %v877 = vld [vmem:[#allocation10 + $0xf98] sm:$0xff]
    %v878 = vld [vmem:[#allocation10 + $0xfa0] sm:$0xff]
    %v879 = vld [vmem:[#allocation10 + $0xfa8] sm:$0xff]
    %v880 = vld [vmem:[#allocation10 + $0xfb0] sm:$0xff]
    %v881 = vld [vmem:[#allocation10 + $0xfb8] sm:$0xff]
    %v882 = vld [vmem:[#allocation10 + $0xfc0] sm:$0xff]
    %v883 = vld [vmem:[#allocation10 + $0xfc8] sm:$0xff]
    %v884 = vld [vmem:[#allocation10 + $0xfd0] sm:$0xff]
    %v885 = vld [vmem:[#allocation10 + $0xfd8] sm:$0xff]
    %v886 = vld [vmem:[#allocation10 + $0xfe0] sm:$0xff]
    %v887 = vld [vmem:[#allocation10 + $0xfe8] sm:$0xff]
    %v888 = vld [vmem:[#allocation10 + $0xff0] sm:$0xff]
    %v889 = vld [vmem:[#allocation10 + $0xff8] sm:$0xff]
    %v890 = vld [vmem:[#allocation11] sm:$0xff]
    %v891 = vld [vmem:[#allocation5] sm:$0xff]
    %v892 = vld [vmem:[#allocation5 + $0x8] sm:$0xff]
    %v893 = vld [vmem:[#allocation5 + $0x10] sm:$0xff]
    %v894 = vld [vmem:[#allocation5 + $0x18] sm:$0xff]
    %v895 = vld [vmem:[#allocation5 + $0x20] sm:$0xff]
    %v896 = vld [vmem:[#allocation5 + $0x28] sm:$0xff]
    %v897 = vld [vmem:[#allocation5 + $0x30] sm:$0xff]
    %v898 = vld [vmem:[#allocation5 + $0x38] sm:$0xff]
    %v899 = vld [vmem:[#allocation2] sm:$0xff]
    %v900 = vld [vmem:[#allocation2 + $0x8] sm:$0xff]
    %901 = vmatpush.msra.mxu0 %v242
    %902 = vmatpush.msra.mxu0 %v234
    %903 = vmatpush.msra.mxu0 %v226
    %904 = vmatpush.msra.mxu0 %v218
    %905 = vmatpush.msra.mxu0 %v210
    %906 = vmatpush.msra.mxu0 %v202
    %907 = vmatpush.msra.mxu0 %v194
    %908 = vmatpush.msra.mxu0 %v186
    %909 = vmatpush.msra.mxu0 %v178
    %910 = vmatpush.msra.mxu0 %v170
    %911 = vmatpush.msra.mxu0 %v162
    %912 = vmatpush.msra.mxu0 %v154
    %913 = vmatpush.msra.mxu0 %v146
    %914 = vmatpush.msra.mxu0 %v138
    %915 = vmatpush.msra.mxu0 %v130
    %916 = vmatpush.msra.mxu0 %v122
    %917 = vmatmul.f32.gmra.mxu0 %v899
    %v918 = vpop.f32.mrf.mxu0
    %v919 = vadd.f32 0.0, %v918
    %920 = vdwg.mxu0
    %921 = vmatpush.msra.mxu0 %v370
    %922 = vmatpush.msra.mxu0 %v362
    %923 = vmatpush.msra.mxu0 %v354
    %924 = vmatpush.msra.mxu0 %v346
    %925 = vmatpush.msra.mxu0 %v338
    %926 = vmatpush.msra.mxu0 %v330
    %927 = vmatpush.msra.mxu0 %v322
    %928 = vmatpush.msra.mxu0 %v314
    %929 = vmatpush.msra.mxu0 %v306
    %930 = vmatpush.msra.mxu0 %v298
    %931 = vmatpush.msra.mxu0 %v290
    %932 = vmatpush.msra.mxu0 %v282
    %933 = vmatpush.msra.mxu0 %v274
    %934 = vmatpush.msra.mxu0 %v266
    %935 = vmatpush.msra.mxu0 %v258
    %936 = vmatpush.msra.mxu0 %v250
    %937 = vmatmul.f32.gmra.mxu0 %v900
    %v938 = vpop.f32.mrf.mxu0
    %v939 = vadd.f32 %v919, %v938
    %940 = vdwg.mxu0
    %941 = vmatpush.msra.mxu0 %v243
    %942 = vmatpush.msra.mxu0 %v235
    %943 = vmatpush.msra.mxu0 %v227
    %944 = vmatpush.msra.mxu0 %v219
    %945 = vmatpush.msra.mxu0 %v211
    %946 = vmatpush.msra.mxu0 %v203
    %947 = vmatpush.msra.mxu0 %v195
    %948 = vmatpush.msra.mxu0 %v187
    %949 = vmatpush.msra.mxu0 %v179
    %950 = vmatpush.msra.mxu0 %v171
    %951 = vmatpush.msra.mxu0 %v163
    %952 = vmatpush.msra.mxu0 %v155
    %953 = vmatpush.msra.mxu0 %v147
    %954 = vmatpush.msra.mxu0 %v139
    %955 = vmatpush.msra.mxu0 %v131
    %956 = vmatpush.msra.mxu0 %v123
    %957 = vmatmul.f32.gmra.mxu0 %v899
    %v958 = vpop.f32.mrf.mxu0
    %v959 = vadd.f32 0.0, %v958
    %960 = vdwg.mxu0
    %961 = vmatpush.msra.mxu0 %v371
    %962 = vmatpush.msra.mxu0 %v363
    %963 = vmatpush.msra.mxu0 %v355
    %964 = vmatpush.msra.mxu0 %v347
    %965 = vmatpush.msra.mxu0 %v339
    %966 = vmatpush.msra.mxu0 %v331
    %967 = vmatpush.msra.mxu0 %v323
    %968 = vmatpush.msra.mxu0 %v315
    %969 = vmatpush.msra.mxu0 %v307
    %970 = vmatpush.msra.mxu0 %v299
    %971 = vmatpush.msra.mxu0 %v291
    %972 = vmatpush.msra.mxu0 %v283
    %973 = vmatpush.msra.mxu0 %v275
    %974 = vmatpush.msra.mxu0 %v267
    %975 = vmatpush.msra.mxu0 %v259
    %976 = vmatpush.msra.mxu0 %v251
    %977 = vmatmul.f32.gmra.mxu0 %v900
    %v978 = vpop.f32.mrf.mxu0
    %v979 = vadd.f32 %v959, %v978
    %980 = vdwg.mxu0
    %981 = vmatpush.msra.mxu0 %v244
    %982 = vmatpush.msra.mxu0 %v236
    %983 = vmatpush.msra.mxu0 %v228
    %984 = vmatpush.msra.mxu0 %v220
    %985 = vmatpush.msra.mxu0 %v212
    %986 = vmatpush.msra.mxu0 %v204
    %987 = vmatpush.msra.mxu0 %v196
    %988 = vmatpush.msra.mxu0 %v188
    %989 = vmatpush.msra.mxu0 %v180
    %990 = vmatpush.msra.mxu0 %v172
    %991 = vmatpush.msra.mxu0 %v164
    %992 = vmatpush.msra.mxu0 %v156
    %993 = vmatpush.msra.mxu0 %v148
    %994 = vmatpush.msra.mxu0 %v140
    %995 = vmatpush.msra.mxu0 %v132
    %996 = vmatpush.msra.mxu0 %v124
    %997 = vmatmul.f32.gmra.mxu0 %v899
    %v998 = vpop.f32.mrf.mxu0
    %v999 = vadd.f32 0.0, %v998
    %1000 = vdwg.mxu0
    %1001 = vmatpush.msra.mxu0 %v372
    %1002 = vmatpush.msra.mxu0 %v364
    %1003 = vmatpush.msra.mxu0 %v356
    %1004 = vmatpush.msra.mxu0 %v348
    %1005 = vmatpush.msra.mxu0 %v340
    %1006 = vmatpush.msra.mxu0 %v332
    %1007 = vmatpush.msra.mxu0 %v324
    %1008 = vmatpush.msra.mxu0 %v316
    %1009 = vmatpush.msra.mxu0 %v308
    %1010 = vmatpush.msra.mxu0 %v300
    %1011 = vmatpush.msra.mxu0 %v292
    %1012 = vmatpush.msra.mxu0 %v284
    %1013 = vmatpush.msra.mxu0 %v276
    %1014 = vmatpush.msra.mxu0 %v268
    %1015 = vmatpush.msra.mxu0 %v260
    %1016 = vmatpush.msra.mxu0 %v252
    %1017 = vmatmul.f32.gmra.mxu0 %v900
    %v1018 = vpop.f32.mrf.mxu0
    %v1019 = vadd.f32 %v999, %v1018
    %1020 = vdwg.mxu0
    %1021 = vmatpush.msra.mxu0 %v245
    %1022 = vmatpush.msra.mxu0 %v237
    %1023 = vmatpush.msra.mxu0 %v229
    %1024 = vmatpush.msra.mxu0 %v221
    %1025 = vmatpush.msra.mxu0 %v213
    %1026 = vmatpush.msra.mxu0 %v205
    %1027 = vmatpush.msra.mxu0 %v197
    %1028 = vmatpush.msra.mxu0 %v189
    %1029 = vmatpush.msra.mxu0 %v181
    %1030 = vmatpush.msra.mxu0 %v173
    %1031 = vmatpush.msra.mxu0 %v165
    %1032 = vmatpush.msra.mxu0 %v157
    %1033 = vmatpush.msra.mxu0 %v149
    %1034 = vmatpush.msra.mxu0 %v141
    %1035 = vmatpush.msra.mxu0 %v133
    %1036 = vmatpush.msra.mxu0 %v125
    %1037 = vmatmul.f32.gmra.mxu0 %v899
    %v1038 = vpop.f32.mrf.mxu0
    %v1039 = vadd.f32 0.0, %v1038
    %1040 = vdwg.mxu0
    %1041 = vmatpush.msra.mxu0 %v373
    %1042 = vmatpush.msra.mxu0 %v365
    %1043 = vmatpush.msra.mxu0 %v357
    %1044 = vmatpush.msra.mxu0 %v349
    %1045 = vmatpush.msra.mxu0 %v341
    %1046 = vmatpush.msra.mxu0 %v333
    %1047 = vmatpush.msra.mxu0 %v325
    %1048 = vmatpush.msra.mxu0 %v317
    %1049 = vmatpush.msra.mxu0 %v309
    %1050 = vmatpush.msra.mxu0 %v301
    %1051 = vmatpush.msra.mxu0 %v293
    %1052 = vmatpush.msra.mxu0 %v285
    %1053 = vmatpush.msra.mxu0 %v277
    %1054 = vmatpush.msra.mxu0 %v269
    %1055 = vmatpush.msra.mxu0 %v261
    %1056 = vmatpush.msra.mxu0 %v253
    %1057 = vmatmul.f32.gmra.mxu0 %v900
    %v1058 = vpop.f32.mrf.mxu0
    %v1059 = vadd.f32 %v1039, %v1058
    %1060 = vdwg.mxu0
    %1061 = vmatpush.msra.mxu0 %v246
    %1062 = vmatpush.msra.mxu0 %v238
    %1063 = vmatpush.msra.mxu0 %v230
    %1064 = vmatpush.msra.mxu0 %v222
    %1065 = vmatpush.msra.mxu0 %v214
    %1066 = vmatpush.msra.mxu0 %v206
    %1067 = vmatpush.msra.mxu0 %v198
    %1068 = vmatpush.msra.mxu0 %v190
    %1069 = vmatpush.msra.mxu0 %v182
    %1070 = vmatpush.msra.mxu0 %v174
    %1071 = vmatpush.msra.mxu0 %v166
    %1072 = vmatpush.msra.mxu0 %v158
    %1073 = vmatpush.msra.mxu0 %v150
    %1074 = vmatpush.msra.mxu0 %v142
    %1075 = vmatpush.msra.mxu0 %v134
    %1076 = vmatpush.msra.mxu0 %v126
    %1077 = vmatmul.f32.gmra.mxu0 %v899
    %v1078 = vpop.f32.mrf.mxu0
    %v1079 = vadd.f32 0.0, %v1078
    %1080 = vdwg.mxu0
    %1081 = vmatpush.msra.mxu0 %v374
    %1082 = vmatpush.msra.mxu0 %v366
    %1083 = vmatpush.msra.mxu0 %v358
    %1084 = vmatpush.msra.mxu0 %v350
    %1085 = vmatpush.msra.mxu0 %v342
    %1086 = vmatpush.msra.mxu0 %v334
    %1087 = vmatpush.msra.mxu0 %v326
    %1088 = vmatpush.msra.mxu0 %v318
    %1089 = vmatpush.msra.mxu0 %v310
    %1090 = vmatpush.msra.mxu0 %v302
    %1091 = vmatpush.msra.mxu0 %v294
    %1092 = vmatpush.msra.mxu0 %v286
    %1093 = vmatpush.msra.mxu0 %v278
    %1094 = vmatpush.msra.mxu0 %v270
    %1095 = vmatpush.msra.mxu0 %v262
    %1096 = vmatpush.msra.mxu0 %v254
    %1097 = vmatmul.f32.gmra.mxu0 %v900
    %v1098 = vpop.f32.mrf.mxu0
    %v1099 = vadd.f32 %v1079, %v1098
    %1100 = vdwg.mxu0
    %1101 = vmatpush.msra.mxu0 %v247
    %1102 = vmatpush.msra.mxu0 %v239
    %1103 = vmatpush.msra.mxu0 %v231
    %1104 = vmatpush.msra.mxu0 %v223
    %1105 = vmatpush.msra.mxu0 %v215
    %1106 = vmatpush.msra.mxu0 %v207
    %1107 = vmatpush.msra.mxu0 %v199
    %1108 = vmatpush.msra.mxu0 %v191
    %1109 = vmatpush.msra.mxu0 %v183
    %1110 = vmatpush.msra.mxu0 %v175
    %1111 = vmatpush.msra.mxu0 %v167
    %1112 = vmatpush.msra.mxu0 %v159
    %1113 = vmatpush.msra.mxu0 %v151
    %1114 = vmatpush.msra.mxu0 %v143
    %1115 = vmatpush.msra.mxu0 %v135
    %1116 = vmatpush.msra.mxu0 %v127
    %1117 = vmatmul.f32.gmra.mxu0 %v899
    %v1118 = vpop.f32.mrf.mxu0
    %v1119 = vadd.f32 0.0, %v1118
    %1120 = vdwg.mxu0
    %1121 = vmatpush.msra.mxu0 %v375
    %1122 = vmatpush.msra.mxu0 %v367
    %1123 = vmatpush.msra.mxu0 %v359
    %1124 = vmatpush.msra.mxu0 %v351
    %1125 = vmatpush.msra.mxu0 %v343
    %1126 = vmatpush.msra.mxu0 %v335
    %1127 = vmatpush.msra.mxu0 %v327
    %1128 = vmatpush.msra.mxu0 %v319
    %1129 = vmatpush.msra.mxu0 %v311
    %1130 = vmatpush.msra.mxu0 %v303
    %1131 = vmatpush.msra.mxu0 %v295
    %1132 = vmatpush.msra.mxu0 %v287
    %1133 = vmatpush.msra.mxu0 %v279
    %1134 = vmatpush.msra.mxu0 %v271
    %1135 = vmatpush.msra.mxu0 %v263
    %1136 = vmatpush.msra.mxu0 %v255
    %1137 = vmatmul.f32.gmra.mxu0 %v900
    %v1138 = vpop.f32.mrf.mxu0
    %v1139 = vadd.f32 %v1119, %v1138
    %1140 = vdwg.mxu0
    %1141 = vmatpush.msra.mxu0 %v248
    %1142 = vmatpush.msra.mxu0 %v240
    %1143 = vmatpush.msra.mxu0 %v232
    %1144 = vmatpush.msra.mxu0 %v224
    %1145 = vmatpush.msra.mxu0 %v216
    %1146 = vmatpush.msra.mxu0 %v208
    %1147 = vmatpush.msra.mxu0 %v200
    %1148 = vmatpush.msra.mxu0 %v192
    %1149 = vmatpush.msra.mxu0 %v184
    %1150 = vmatpush.msra.mxu0 %v176
    %1151 = vmatpush.msra.mxu0 %v168
    %1152 = vmatpush.msra.mxu0 %v160
    %1153 = vmatpush.msra.mxu0 %v152
    %1154 = vmatpush.msra.mxu0 %v144
    %1155 = vmatpush.msra.mxu0 %v136
    %1156 = vmatpush.msra.mxu0 %v128
    %1157 = vmatmul.f32.gmra.mxu0 %v899
    %v1158 = vpop.f32.mrf.mxu0
    %v1159 = vadd.f32 0.0, %v1158
    %1160 = vdwg.mxu0
    %1161 = vmatpush.msra.mxu0 %v376
    %1162 = vmatpush.msra.mxu0 %v368
    %1163 = vmatpush.msra.mxu0 %v360
    %1164 = vmatpush.msra.mxu0 %v352
    %1165 = vmatpush.msra.mxu0 %v344
    %1166 = vmatpush.msra.mxu0 %v336
    %1167 = vmatpush.msra.mxu0 %v328
    %1168 = vmatpush.msra.mxu0 %v320
    %1169 = vmatpush.msra.mxu0 %v312
    %1170 = vmatpush.msra.mxu0 %v304
    %1171 = vmatpush.msra.mxu0 %v296
    %1172 = vmatpush.msra.mxu0 %v288
    %1173 = vmatpush.msra.mxu0 %v280
    %1174 = vmatpush.msra.mxu0 %v272
    %1175 = vmatpush.msra.mxu0 %v264
    %1176 = vmatpush.msra.mxu0 %v256
    %1177 = vmatmul.f32.gmra.mxu0 %v900
    %v1178 = vpop.f32.mrf.mxu0
    %v1179 = vadd.f32 %v1159, %v1178
    %1180 = vdwg.mxu0
    %1181 = vmatpush.msra.mxu0 %v249
    %1182 = vmatpush.msra.mxu0 %v241
    %1183 = vmatpush.msra.mxu0 %v233
    %1184 = vmatpush.msra.mxu0 %v225
    %1185 = vmatpush.msra.mxu0 %v217
    %1186 = vmatpush.msra.mxu0 %v209
    %1187 = vmatpush.msra.mxu0 %v201
    %1188 = vmatpush.msra.mxu0 %v193
    %1189 = vmatpush.msra.mxu0 %v185
    %1190 = vmatpush.msra.mxu0 %v177
    %1191 = vmatpush.msra.mxu0 %v169
    %1192 = vmatpush.msra.mxu0 %v161
    %1193 = vmatpush.msra.mxu0 %v153
    %1194 = vmatpush.msra.mxu0 %v145
    %1195 = vmatpush.msra.mxu0 %v137
    %1196 = vmatpush.msra.mxu0 %v129
    %1197 = vmatmul.f32.gmra.mxu0 %v899
    %v1198 = vpop.f32.mrf.mxu0
    %v1199 = vadd.f32 0.0, %v1198
    %1200 = vdwg.mxu0
    %1201 = vmatpush.msra.mxu0 %v377
    %1202 = vmatpush.msra.mxu0 %v369
    %1203 = vmatpush.msra.mxu0 %v361
    %1204 = vmatpush.msra.mxu0 %v353
    %1205 = vmatpush.msra.mxu0 %v345
    %1206 = vmatpush.msra.mxu0 %v337
    %1207 = vmatpush.msra.mxu0 %v329
    %1208 = vmatpush.msra.mxu0 %v321
    %1209 = vmatpush.msra.mxu0 %v313
    %1210 = vmatpush.msra.mxu0 %v305
    %1211 = vmatpush.msra.mxu0 %v297
    %1212 = vmatpush.msra.mxu0 %v289
    %1213 = vmatpush.msra.mxu0 %v281
    %1214 = vmatpush.msra.mxu0 %v273
    %1215 = vmatpush.msra.mxu0 %v265
    %1216 = vmatpush.msra.mxu0 %v257
    %1217 = vmatmul.f32.gmra.mxu0 %v900
    %v1218 = vpop.f32.mrf.mxu0
    %v1219 = vadd.f32 %v1199, %v1218
    %1220 = vdwg.mxu0
    %v1221 = vadd.f32 %v891, %v939
    %v1222 = vadd.f32 %v892, %v979
    %v1223 = vadd.f32 %v893, %v1019
    %v1224 = vadd.f32 %v894, %v1059
    %v1225 = vadd.f32 %v895, %v1099
    %v1226 = vadd.f32 %v896, %v1139
    %v1227 = vadd.f32 %v897, %v1179
    %v1228 = vadd.f32 %v898, %v1219
    %v1229 = vld [vmem:[#allocation3] sm:$0xff]
    %v1230 = vld [vmem:[#allocation3 + $0x8] sm:$0xff]
    %v1231 = vxor.u32 %v1221, 2147483648
    %v1232 = vxor.u32 %v1222, 2147483648
    %v1233 = vmul.f32 %v1231, 1.442695
    %v1234 = vpow.pop %v1233
    %v1235 = vmul.f32 %v1232, 1.442695
    %v1236 = vpow.pop %v1235
    %v1237 = vadd.f32 %v1234, 1.0
    %v1238 = vadd.f32 %v1236, 1.0
    %v1239 = vrcp.pop %v1237
    %v1240 = vmul.f32 %v1237, %v1239
    %v1241 = vsub.f32 1.0, %v1240
    %v1242 = vmul.f32 %v1239, %v1241
    %v1243 = vadd.f32 %v1239, %v1242
    %vm1244 = vweird.f32 %v1237
    %vm1245 = vweird.f32 %v1239
    %vm1246 = vmor %vm1244, %vm1245
    %v1247 = vsel %vm1246, %v1239, %v1243
    %v1248 = vand.u32 2147483647, %v1237
    %vm1249 = vcmp.eq.f32.partialorder %v1248, 8.507059e+37
    %v1250 = vand.u32 %v1237, 2147483648
    %v1251 = vor.u32 1.1754944e-38, %v1250
    %v1252 = vsel %vm1249, %v1251, %v1247
    %v1253 = vmul.f32 1.0, %v1252
    %v1254 = vrcp.pop %v1238
    %v1255 = vmul.f32 %v1238, %v1254
    %v1256 = vsub.f32 1.0, %v1255
    %v1257 = vmul.f32 %v1254, %v1256
    %v1258 = vadd.f32 %v1254, %v1257
    %vm1259 = vweird.f32 %v1238
    %vm1260 = vweird.f32 %v1254
    %vm1261 = vmor %vm1259, %vm1260
    %v1262 = vsel %vm1261, %v1254, %v1258
    %v1263 = vand.u32 2147483647, %v1238
    %vm1264 = vcmp.eq.f32.partialorder %v1263, 8.507059e+37
    %v1265 = vand.u32 %v1238, 2147483648
    %v1266 = vor.u32 1.1754944e-38, %v1265
    %v1267 = vsel %vm1264, %v1266, %v1262
    %v1268 = vmul.f32 1.0, %v1267
    %v1269 = vxor.u32 %v1223, 2147483648
    %v1270 = vxor.u32 %v1224, 2147483648
    %v1271 = vmul.f32 %v1269, 1.442695
    %v1272 = vpow.pop %v1271
    %v1273 = vmul.f32 %v1270, 1.442695
    %v1274 = vpow.pop %v1273
    %v1275 = vadd.f32 %v1272, 1.0
    %v1276 = vadd.f32 %v1274, 1.0
    %v1277 = vrcp.pop %v1275
    %v1278 = vmul.f32 %v1275, %v1277
    %v1279 = vsub.f32 1.0, %v1278
    %v1280 = vmul.f32 %v1277, %v1279
    %v1281 = vadd.f32 %v1277, %v1280
    %vm1282 = vweird.f32 %v1275
    %vm1283 = vweird.f32 %v1277
    %vm1284 = vmor %vm1282, %vm1283
    %v1285 = vsel %vm1284, %v1277, %v1281
    %v1286 = vand.u32 2147483647, %v1275
    %vm1287 = vcmp.eq.f32.partialorder %v1286, 8.507059e+37
    %v1288 = vand.u32 %v1275, 2147483648
    %v1289 = vor.u32 1.1754944e-38, %v1288
    %v1290 = vsel %vm1287, %v1289, %v1285
    %v1291 = vmul.f32 1.0, %v1290
    %v1292 = vrcp.pop %v1276
    %v1293 = vmul.f32 %v1276, %v1292
    %v1294 = vsub.f32 1.0, %v1293
    %v1295 = vmul.f32 %v1292, %v1294
    %v1296 = vadd.f32 %v1292, %v1295
    %vm1297 = vweird.f32 %v1276
    %vm1298 = vweird.f32 %v1292
    %vm1299 = vmor %vm1297, %vm1298
    %v1300 = vsel %vm1299, %v1292, %v1296
    %v1301 = vand.u32 2147483647, %v1276
    %vm1302 = vcmp.eq.f32.partialorder %v1301, 8.507059e+37
    %v1303 = vand.u32 %v1276, 2147483648
    %v1304 = vor.u32 1.1754944e-38, %v1303
    %v1305 = vsel %vm1302, %v1304, %v1300
    %v1306 = vmul.f32 1.0, %v1305
    %v1307 = vtanh.pop %v1225
    %v1308 = vtanh.pop %v1226
    %v1309 = vxor.u32 %v1227, 2147483648
    %v1310 = vxor.u32 %v1228, 2147483648
    %v1311 = vmul.f32 %v1309, 1.442695
    %v1312 = vpow.pop %v1311
    %v1313 = vmul.f32 %v1310, 1.442695
    %v1314 = vpow.pop %v1313
    %v1315 = vadd.f32 %v1312, 1.0
    %v1316 = vadd.f32 %v1314, 1.0
    %v1317 = vrcp.pop %v1315
    %v1318 = vmul.f32 %v1315, %v1317
    %v1319 = vsub.f32 1.0, %v1318
    %v1320 = vmul.f32 %v1317, %v1319
    %v1321 = vadd.f32 %v1317, %v1320
    %vm1322 = vweird.f32 %v1315
    %vm1323 = vweird.f32 %v1317
    %vm1324 = vmor %vm1322, %vm1323
    %v1325 = vsel %vm1324, %v1317, %v1321
    %v1326 = vand.u32 2147483647, %v1315
    %vm1327 = vcmp.eq.f32.partialorder %v1326, 8.507059e+37
    %v1328 = vand.u32 %v1315, 2147483648
    %v1329 = vor.u32 1.1754944e-38, %v1328
    %v1330 = vsel %vm1327, %v1329, %v1325
    %v1331 = vmul.f32 1.0, %v1330
    %v1332 = vrcp.pop %v1316
    %v1333 = vmul.f32 %v1316, %v1332
    %v1334 = vsub.f32 1.0, %v1333
    %v1335 = vmul.f32 %v1332, %v1334
    %v1336 = vadd.f32 %v1332, %v1335
    %vm1337 = vweird.f32 %v1316
    %vm1338 = vweird.f32 %v1332
    %vm1339 = vmor %vm1337, %vm1338
    %v1340 = vsel %vm1339, %v1332, %v1336
    %v1341 = vand.u32 2147483647, %v1316
    %vm1342 = vcmp.eq.f32.partialorder %v1341, 8.507059e+37
    %v1343 = vand.u32 %v1316, 2147483648
    %v1344 = vor.u32 1.1754944e-38, %v1343
    %v1345 = vsel %vm1342, %v1344, %v1340
    %v1346 = vmul.f32 1.0, %v1345
    %v1347 = vmul.f32 %v1291, %v1229
    %v1348 = vmul.f32 %v1306, %v1230
    %v1349 = vmul.f32 %v1253, %v1307
    %v1350 = vmul.f32 %v1268, %v1308
    %v1351 = vadd.f32 %v1347, %v1349
    %v1352 = vadd.f32 %v1348, %v1350
    %v1353 = vtanh.pop %v1351
    %v1354 = vtanh.pop %v1352
    %v1355 = vmul.f32 %v1331, %v1353
    %v1356 = vmul.f32 %v1346, %v1354
    %1357 = vst [vmem:[#allocation3] sm:$0xff] %v1351
    %1358 = vst [vmem:[#allocation3 + $0x8] sm:$0xff] %v1352
    %1359 = vst [vmem:[#allocation2] sm:$0xff] %v1355
    %1360 = vst [vmem:[#allocation2 + $0x8] sm:$0xff] %v1356
    %v1361 = vld [vmem:[#allocation2] sm:$0xff]
    %v1362 = vld [vmem:[#allocation2 + $0x8] sm:$0xff]
    %v1363 = vld [vmem:[#allocation2 + $0x10] sm:$0xff]
    %v1364 = vld [vmem:[#allocation2 + $0x18] sm:$0xff]
    %v1366 = vperm.slane %v890, 0
    %v1367 = vperm.slane %v890, 1
    %v1368 = vperm.slane %v890, 2
    %v1369 = vperm.slane %v890, 3
    %v1370 = vperm.slane %v890, 4
    %v1371 = vperm.slane %v890, 5
    %v1372 = vperm.slane %v890, 6
    %v1373 = vperm.slane %v890, 7
    %1382 = vmatpush.msra.mxu0 %v498
    %1383 = vmatpush.msra.mxu0 %v490
    %1384 = vmatpush.msra.mxu0 %v482
    %1385 = vmatpush.msra.mxu0 %v474
    %1386 = vmatpush.msra.mxu0 %v466
    %1387 = vmatpush.msra.mxu0 %v458
    %1388 = vmatpush.msra.mxu0 %v450
    %1389 = vmatpush.msra.mxu0 %v442
    %1390 = vmatpush.msra.mxu0 %v434
    %1391 = vmatpush.msra.mxu0 %v426
    %1392 = vmatpush.msra.mxu0 %v418
    %1393 = vmatpush.msra.mxu0 %v410
    %1394 = vmatpush.msra.mxu0 %v402
    %1395 = vmatpush.msra.mxu0 %v394
    %1396 = vmatpush.msra.mxu0 %v386
    %1397 = vmatpush.msra.mxu0 %v378
    %1398 = vmatmul.f32.gmra.mxu0 %v1361
    %v1399 = vpop.f32.mrf.mxu0
    %v1400 = vadd.f32 %v1366, %v1399
    %1401 = vdwg.mxu0
    %1402 = vmatpush.msra.mxu0 %v626
    %1403 = vmatpush.msra.mxu0 %v618
    %1404 = vmatpush.msra.mxu0 %v610
    %1405 = vmatpush.msra.mxu0 %v602
    %1406 = vmatpush.msra.mxu0 %v594
    %1407 = vmatpush.msra.mxu0 %v586
    %1408 = vmatpush.msra.mxu0 %v578
    %1409 = vmatpush.msra.mxu0 %v570
    %1410 = vmatpush.msra.mxu0 %v562
    %1411 = vmatpush.msra.mxu0 %v554
    %1412 = vmatpush.msra.mxu0 %v546
    %1413 = vmatpush.msra.mxu0 %v538
    %1414 = vmatpush.msra.mxu0 %v530
    %1415 = vmatpush.msra.mxu0 %v522
    %1416 = vmatpush.msra.mxu0 %v514
    %1417 = vmatpush.msra.mxu0 %v506
    %1418 = vmatmul.f32.gmra.mxu0 %v1362
    %v1419 = vpop.f32.mrf.mxu0
    %v1420 = vadd.f32 %v1400, %v1419
    %1421 = vdwg.mxu0
    %1422 = vmatpush.msra.mxu0 %v754
    %1423 = vmatpush.msra.mxu0 %v746
    %1424 = vmatpush.msra.mxu0 %v738
    %1425 = vmatpush.msra.mxu0 %v730
    %1426 = vmatpush.msra.mxu0 %v722
    %1427 = vmatpush.msra.mxu0 %v714
    %1428 = vmatpush.msra.mxu0 %v706
    %1429 = vmatpush.msra.mxu0 %v698
    %1430 = vmatpush.msra.mxu0 %v690
    %1431 = vmatpush.msra.mxu0 %v682
    %1432 = vmatpush.msra.mxu0 %v674
    %1433 = vmatpush.msra.mxu0 %v666
    %1434 = vmatpush.msra.mxu0 %v658
    %1435 = vmatpush.msra.mxu0 %v650
    %1436 = vmatpush.msra.mxu0 %v642
    %1437 = vmatpush.msra.mxu0 %v634
    %1438 = vmatmul.f32.gmra.mxu0 %v1363
    %v1439 = vpop.f32.mrf.mxu0
    %v1440 = vadd.f32 %v1420, %v1439
    %1441 = vdwg.mxu0
    %1442 = vmatpush.msra.mxu0 %v882
    %1443 = vmatpush.msra.mxu0 %v874
    %1444 = vmatpush.msra.mxu0 %v866
    %1445 = vmatpush.msra.mxu0 %v858
    %1446 = vmatpush.msra.mxu0 %v850
    %1447 = vmatpush.msra.mxu0 %v842
    %1448 = vmatpush.msra.mxu0 %v834
    %1449 = vmatpush.msra.mxu0 %v826
    %1450 = vmatpush.msra.mxu0 %v818
    %1451 = vmatpush.msra.mxu0 %v810
    %1452 = vmatpush.msra.mxu0 %v802
    %1453 = vmatpush.msra.mxu0 %v794
    %1454 = vmatpush.msra.mxu0 %v786
    %1455 = vmatpush.msra.mxu0 %v778
    %1456 = vmatpush.msra.mxu0 %v770
    %1457 = vmatpush.msra.mxu0 %v762
    %1458 = vmatmul.f32.gmra.mxu0 %v1364
    %v1459 = vpop.f32.mrf.mxu0
    %v1460 = vadd.f32 %v1440, %v1459
    %1461 = vdwg.mxu0
    %1462 = vmatpush.msra.mxu0 %v499
    %1463 = vmatpush.msra.mxu0 %v491
    %1464 = vmatpush.msra.mxu0 %v483
    %1465 = vmatpush.msra.mxu0 %v475
    %1466 = vmatpush.msra.mxu0 %v467
    %1467 = vmatpush.msra.mxu0 %v459
    %1468 = vmatpush.msra.mxu0 %v451
    %1469 = vmatpush.msra.mxu0 %v443
    %1470 = vmatpush.msra.mxu0 %v435
    %1471 = vmatpush.msra.mxu0 %v427
    %1472 = vmatpush.msra.mxu0 %v419
    %1473 = vmatpush.msra.mxu0 %v411
    %1474 = vmatpush.msra.mxu0 %v403
    %1475 = vmatpush.msra.mxu0 %v395
    %1476 = vmatpush.msra.mxu0 %v387
    %1477 = vmatpush.msra.mxu0 %v379
    %1478 = vmatmul.f32.gmra.mxu0 %v1361
    %v1479 = vpop.f32.mrf.mxu0
    %v1480 = vadd.f32 %v1367, %v1479
    %1481 = vdwg.mxu0
    %1482 = vmatpush.msra.mxu0 %v627
    %1483 = vmatpush.msra.mxu0 %v619
    %1484 = vmatpush.msra.mxu0 %v611
    %1485 = vmatpush.msra.mxu0 %v603
    %1486 = vmatpush.msra.mxu0 %v595
    %1487 = vmatpush.msra.mxu0 %v587
    %1488 = vmatpush.msra.mxu0 %v579
    %1489 = vmatpush.msra.mxu0 %v571
    %1490 = vmatpush.msra.mxu0 %v563
    %1491 = vmatpush.msra.mxu0 %v555
    %1492 = vmatpush.msra.mxu0 %v547
    %1493 = vmatpush.msra.mxu0 %v539
    %1494 = vmatpush.msra.mxu0 %v531
    %1495 = vmatpush.msra.mxu0 %v523
    %1496 = vmatpush.msra.mxu0 %v515
    %1497 = vmatpush.msra.mxu0 %v507
    %1498 = vmatmul.f32.gmra.mxu0 %v1362
    %v1499 = vpop.f32.mrf.mxu0
    %v1500 = vadd.f32 %v1480, %v1499
    %1501 = vdwg.mxu0
    %1502 = vmatpush.msra.mxu0 %v755
    %1503 = vmatpush.msra.mxu0 %v747
    %1504 = vmatpush.msra.mxu0 %v739
    %1505 = vmatpush.msra.mxu0 %v731
    %1506 = vmatpush.msra.mxu0 %v723
    %1507 = vmatpush.msra.mxu0 %v715
    %1508 = vmatpush.msra.mxu0 %v707
    %1509 = vmatpush.msra.mxu0 %v699
    %1510 = vmatpush.msra.mxu0 %v691
    %1511 = vmatpush.msra.mxu0 %v683
    %1512 = vmatpush.msra.mxu0 %v675
    %1513 = vmatpush.msra.mxu0 %v667
    %1514 = vmatpush.msra.mxu0 %v659
    %1515 = vmatpush.msra.mxu0 %v651
    %1516 = vmatpush.msra.mxu0 %v643
    %1517 = vmatpush.msra.mxu0 %v635
    %1518 = vmatmul.f32.gmra.mxu0 %v1363
    %v1519 = vpop.f32.mrf.mxu0
    %v1520 = vadd.f32 %v1500, %v1519
    %1521 = vdwg.mxu0
    %1522 = vmatpush.msra.mxu0 %v883
    %1523 = vmatpush.msra.mxu0 %v875
    %1524 = vmatpush.msra.mxu0 %v867
    %1525 = vmatpush.msra.mxu0 %v859
    %1526 = vmatpush.msra.mxu0 %v851
    %1527 = vmatpush.msra.mxu0 %v843
    %1528 = vmatpush.msra.mxu0 %v835
    %1529 = vmatpush.msra.mxu0 %v827
    %1530 = vmatpush.msra.mxu0 %v819
    %1531 = vmatpush.msra.mxu0 %v811
    %1532 = vmatpush.msra.mxu0 %v803
    %1533 = vmatpush.msra.mxu0 %v795
    %1534 = vmatpush.msra.mxu0 %v787
    %1535 = vmatpush.msra.mxu0 %v779
    %1536 = vmatpush.msra.mxu0 %v771
    %1537 = vmatpush.msra.mxu0 %v763
    %1538 = vmatmul.f32.gmra.mxu0 %v1364
    %v1539 = vpop.f32.mrf.mxu0
    %v1540 = vadd.f32 %v1520, %v1539
    %1541 = vdwg.mxu0
    %1542 = vmatpush.msra.mxu0 %v500
    %1543 = vmatpush.msra.mxu0 %v492
    %1544 = vmatpush.msra.mxu0 %v484
    %1545 = vmatpush.msra.mxu0 %v476
    %1546 = vmatpush.msra.mxu0 %v468
    %1547 = vmatpush.msra.mxu0 %v460
    %1548 = vmatpush.msra.mxu0 %v452
    %1549 = vmatpush.msra.mxu0 %v444
    %1550 = vmatpush.msra.mxu0 %v436
    %1551 = vmatpush.msra.mxu0 %v428
    %1552 = vmatpush.msra.mxu0 %v420
    %1553 = vmatpush.msra.mxu0 %v412
    %1554 = vmatpush.msra.mxu0 %v404
    %1555 = vmatpush.msra.mxu0 %v396
    %1556 = vmatpush.msra.mxu0 %v388
    %1557 = vmatpush.msra.mxu0 %v380
    %1558 = vmatmul.f32.gmra.mxu0 %v1361
    %v1559 = vpop.f32.mrf.mxu0
    %v1560 = vadd.f32 %v1368, %v1559
    %1561 = vdwg.mxu0
    %1562 = vmatpush.msra.mxu0 %v628
    %1563 = vmatpush.msra.mxu0 %v620
    %1564 = vmatpush.msra.mxu0 %v612
    %1565 = vmatpush.msra.mxu0 %v604
    %1566 = vmatpush.msra.mxu0 %v596
    %1567 = vmatpush.msra.mxu0 %v588
    %1568 = vmatpush.msra.mxu0 %v580
    %1569 = vmatpush.msra.mxu0 %v572
    %1570 = vmatpush.msra.mxu0 %v564
    %1571 = vmatpush.msra.mxu0 %v556
    %1572 = vmatpush.msra.mxu0 %v548
    %1573 = vmatpush.msra.mxu0 %v540
    %1574 = vmatpush.msra.mxu0 %v532
    %1575 = vmatpush.msra.mxu0 %v524
    %1576 = vmatpush.msra.mxu0 %v516
    %1577 = vmatpush.msra.mxu0 %v508
    %1578 = vmatmul.f32.gmra.mxu0 %v1362
    %v1579 = vpop.f32.mrf.mxu0
    %v1580 = vadd.f32 %v1560, %v1579
    %1581 = vdwg.mxu0
    %1582 = vmatpush.msra.mxu0 %v756
    %1583 = vmatpush.msra.mxu0 %v748
    %1584 = vmatpush.msra.mxu0 %v740
    %1585 = vmatpush.msra.mxu0 %v732
    %1586 = vmatpush.msra.mxu0 %v724
    %1587 = vmatpush.msra.mxu0 %v716
    %1588 = vmatpush.msra.mxu0 %v708
    %1589 = vmatpush.msra.mxu0 %v700
    %1590 = vmatpush.msra.mxu0 %v692
    %1591 = vmatpush.msra.mxu0 %v684
    %1592 = vmatpush.msra.mxu0 %v676
    %1593 = vmatpush.msra.mxu0 %v668
    %1594 = vmatpush.msra.mxu0 %v660
    %1595 = vmatpush.msra.mxu0 %v652
    %1596 = vmatpush.msra.mxu0 %v644
    %1597 = vmatpush.msra.mxu0 %v636
    %1598 = vmatmul.f32.gmra.mxu0 %v1363
    %v1599 = vpop.f32.mrf.mxu0
    %v1600 = vadd.f32 %v1580, %v1599
    %1601 = vdwg.mxu0
    %1602 = vmatpush.msra.mxu0 %v884
    %1603 = vmatpush.msra.mxu0 %v876
    %1604 = vmatpush.msra.mxu0 %v868
    %1605 = vmatpush.msra.mxu0 %v860
    %1606 = vmatpush.msra.mxu0 %v852
    %1607 = vmatpush.msra.mxu0 %v844
    %1608 = vmatpush.msra.mxu0 %v836
    %1609 = vmatpush.msra.mxu0 %v828
    %1610 = vmatpush.msra.mxu0 %v820
    %1611 = vmatpush.msra.mxu0 %v812
    %1612 = vmatpush.msra.mxu0 %v804
    %1613 = vmatpush.msra.mxu0 %v796
    %1614 = vmatpush.msra.mxu0 %v788
    %1615 = vmatpush.msra.mxu0 %v780
    %1616 = vmatpush.msra.mxu0 %v772
    %1617 = vmatpush.msra.mxu0 %v764
    %1618 = vmatmul.f32.gmra.mxu0 %v1364
    %v1619 = vpop.f32.mrf.mxu0
    %v1620 = vadd.f32 %v1600, %v1619
    %1621 = vdwg.mxu0
    %1622 = vmatpush.msra.mxu0 %v501
    %1623 = vmatpush.msra.mxu0 %v493
    %1624 = vmatpush.msra.mxu0 %v485
    %1625 = vmatpush.msra.mxu0 %v477
    %1626 = vmatpush.msra.mxu0 %v469
    %1627 = vmatpush.msra.mxu0 %v461
    %1628 = vmatpush.msra.mxu0 %v453
    %1629 = vmatpush.msra.mxu0 %v445
    %1630 = vmatpush.msra.mxu0 %v437
    %1631 = vmatpush.msra.mxu0 %v429
    %1632 = vmatpush.msra.mxu0 %v421
    %1633 = vmatpush.msra.mxu0 %v413
    %1634 = vmatpush.msra.mxu0 %v405
    %1635 = vmatpush.msra.mxu0 %v397
    %1636 = vmatpush.msra.mxu0 %v389
    %1637 = vmatpush.msra.mxu0 %v381
    %1638 = vmatmul.f32.gmra.mxu0 %v1361
    %v1639 = vpop.f32.mrf.mxu0
    %v1640 = vadd.f32 %v1369, %v1639
    %1641 = vdwg.mxu0
    %1642 = vmatpush.msra.mxu0 %v629
    %1643 = vmatpush.msra.mxu0 %v621
    %1644 = vmatpush.msra.mxu0 %v613
    %1645 = vmatpush.msra.mxu0 %v605
    %1646 = vmatpush.msra.mxu0 %v597
    %1647 = vmatpush.msra.mxu0 %v589
    %1648 = vmatpush.msra.mxu0 %v581
    %1649 = vmatpush.msra.mxu0 %v573
    %1650 = vmatpush.msra.mxu0 %v565
    %1651 = vmatpush.msra.mxu0 %v557
    %1652 = vmatpush.msra.mxu0 %v549
    %1653 = vmatpush.msra.mxu0 %v541
    %1654 = vmatpush.msra.mxu0 %v533
    %1655 = vmatpush.msra.mxu0 %v525
    %1656 = vmatpush.msra.mxu0 %v517
    %1657 = vmatpush.msra.mxu0 %v509
    %1658 = vmatmul.f32.gmra.mxu0 %v1362
    %v1659 = vpop.f32.mrf.mxu0
    %v1660 = vadd.f32 %v1640, %v1659
    %1661 = vdwg.mxu0
    %1662 = vmatpush.msra.mxu0 %v757
    %1663 = vmatpush.msra.mxu0 %v749
    %1664 = vmatpush.msra.mxu0 %v741
    %1665 = vmatpush.msra.mxu0 %v733
    %1666 = vmatpush.msra.mxu0 %v725
    %1667 = vmatpush.msra.mxu0 %v717
    %1668 = vmatpush.msra.mxu0 %v709
    %1669 = vmatpush.msra.mxu0 %v701
    %1670 = vmatpush.msra.mxu0 %v693
    %1671 = vmatpush.msra.mxu0 %v685
    %1672 = vmatpush.msra.mxu0 %v677
    %1673 = vmatpush.msra.mxu0 %v669
    %1674 = vmatpush.msra.mxu0 %v661
    %1675 = vmatpush.msra.mxu0 %v653
    %1676 = vmatpush.msra.mxu0 %v645
    %1677 = vmatpush.msra.mxu0 %v637
    %1678 = vmatmul.f32.gmra.mxu0 %v1363
    %v1679 = vpop.f32.mrf.mxu0
    %v1680 = vadd.f32 %v1660, %v1679
    %1681 = vdwg.mxu0
    %1682 = vmatpush.msra.mxu0 %v885
    %1683 = vmatpush.msra.mxu0 %v877
    %1684 = vmatpush.msra.mxu0 %v869
    %1685 = vmatpush.msra.mxu0 %v861
    %1686 = vmatpush.msra.mxu0 %v853
    %1687 = vmatpush.msra.mxu0 %v845
    %1688 = vmatpush.msra.mxu0 %v837
    %1689 = vmatpush.msra.mxu0 %v829
    %1690 = vmatpush.msra.mxu0 %v821
    %1691 = vmatpush.msra.mxu0 %v813
    %1692 = vmatpush.msra.mxu0 %v805
    %1693 = vmatpush.msra.mxu0 %v797
    %1694 = vmatpush.msra.mxu0 %v789
    %1695 = vmatpush.msra.mxu0 %v781
    %1696 = vmatpush.msra.mxu0 %v773
    %1697 = vmatpush.msra.mxu0 %v765
    %1698 = vmatmul.f32.gmra.mxu0 %v1364
    %v1699 = vpop.f32.mrf.mxu0
    %v1700 = vadd.f32 %v1680, %v1699
    %1701 = vdwg.mxu0
    %1702 = vmatpush.msra.mxu0 %v502
    %1703 = vmatpush.msra.mxu0 %v494
    %1704 = vmatpush.msra.mxu0 %v486
    %1705 = vmatpush.msra.mxu0 %v478
    %1706 = vmatpush.msra.mxu0 %v470
    %1707 = vmatpush.msra.mxu0 %v462
    %1708 = vmatpush.msra.mxu0 %v454
    %1709 = vmatpush.msra.mxu0 %v446
    %1710 = vmatpush.msra.mxu0 %v438
    %1711 = vmatpush.msra.mxu0 %v430
    %1712 = vmatpush.msra.mxu0 %v422
    %1713 = vmatpush.msra.mxu0 %v414
    %1714 = vmatpush.msra.mxu0 %v406
    %1715 = vmatpush.msra.mxu0 %v398
    %1716 = vmatpush.msra.mxu0 %v390
    %1717 = vmatpush.msra.mxu0 %v382
    %1718 = vmatmul.f32.gmra.mxu0 %v1361
    %v1719 = vpop.f32.mrf.mxu0
    %v1720 = vadd.f32 %v1370, %v1719
    %1721 = vdwg.mxu0
    %1722 = vmatpush.msra.mxu0 %v630
    %1723 = vmatpush.msra.mxu0 %v622
    %1724 = vmatpush.msra.mxu0 %v614
    %1725 = vmatpush.msra.mxu0 %v606
    %1726 = vmatpush.msra.mxu0 %v598
    %1727 = vmatpush.msra.mxu0 %v590
    %1728 = vmatpush.msra.mxu0 %v582
    %1729 = vmatpush.msra.mxu0 %v574
    %1730 = vmatpush.msra.mxu0 %v566
    %1731 = vmatpush.msra.mxu0 %v558
    %1732 = vmatpush.msra.mxu0 %v550
    %1733 = vmatpush.msra.mxu0 %v542
    %1734 = vmatpush.msra.mxu0 %v534
    %1735 = vmatpush.msra.mxu0 %v526
    %1736 = vmatpush.msra.mxu0 %v518
    %1737 = vmatpush.msra.mxu0 %v510
    %1738 = vmatmul.f32.gmra.mxu0 %v1362
    %v1739 = vpop.f32.mrf.mxu0
    %v1740 = vadd.f32 %v1720, %v1739
    %1741 = vdwg.mxu0
    %1742 = vmatpush.msra.mxu0 %v758
    %1743 = vmatpush.msra.mxu0 %v750
    %1744 = vmatpush.msra.mxu0 %v742
    %1745 = vmatpush.msra.mxu0 %v734
    %1746 = vmatpush.msra.mxu0 %v726
    %1747 = vmatpush.msra.mxu0 %v718
    %1748 = vmatpush.msra.mxu0 %v710
    %1749 = vmatpush.msra.mxu0 %v702
    %1750 = vmatpush.msra.mxu0 %v694
    %1751 = vmatpush.msra.mxu0 %v686
    %1752 = vmatpush.msra.mxu0 %v678
    %1753 = vmatpush.msra.mxu0 %v670
    %1754 = vmatpush.msra.mxu0 %v662
    %1755 = vmatpush.msra.mxu0 %v654
    %1756 = vmatpush.msra.mxu0 %v646
    %1757 = vmatpush.msra.mxu0 %v638
    %1758 = vmatmul.f32.gmra.mxu0 %v1363
    %v1759 = vpop.f32.mrf.mxu0
    %v1760 = vadd.f32 %v1740, %v1759
    %1761 = vdwg.mxu0
    %1762 = vmatpush.msra.mxu0 %v886
    %1763 = vmatpush.msra.mxu0 %v878
    %1764 = vmatpush.msra.mxu0 %v870
    %1765 = vmatpush.msra.mxu0 %v862
    %1766 = vmatpush.msra.mxu0 %v854
    %1767 = vmatpush.msra.mxu0 %v846
    %1768 = vmatpush.msra.mxu0 %v838
    %1769 = vmatpush.msra.mxu0 %v830
    %1770 = vmatpush.msra.mxu0 %v822
    %1771 = vmatpush.msra.mxu0 %v814
    %1772 = vmatpush.msra.mxu0 %v806
    %1773 = vmatpush.msra.mxu0 %v798
    %1774 = vmatpush.msra.mxu0 %v790
    %1775 = vmatpush.msra.mxu0 %v782
    %1776 = vmatpush.msra.mxu0 %v774
    %1777 = vmatpush.msra.mxu0 %v766
    %1778 = vmatmul.f32.gmra.mxu0 %v1364
    %v1779 = vpop.f32.mrf.mxu0
    %v1780 = vadd.f32 %v1760, %v1779
    %1781 = vdwg.mxu0
    %1782 = vmatpush.msra.mxu0 %v503
    %1783 = vmatpush.msra.mxu0 %v495
    %1784 = vmatpush.msra.mxu0 %v487
    %1785 = vmatpush.msra.mxu0 %v479
    %1786 = vmatpush.msra.mxu0 %v471
    %1787 = vmatpush.msra.mxu0 %v463
    %1788 = vmatpush.msra.mxu0 %v455
    %1789 = vmatpush.msra.mxu0 %v447
    %1790 = vmatpush.msra.mxu0 %v439
    %1791 = vmatpush.msra.mxu0 %v431
    %1792 = vmatpush.msra.mxu0 %v423
    %1793 = vmatpush.msra.mxu0 %v415
    %1794 = vmatpush.msra.mxu0 %v407
    %1795 = vmatpush.msra.mxu0 %v399
    %1796 = vmatpush.msra.mxu0 %v391
    %1797 = vmatpush.msra.mxu0 %v383
    %1798 = vmatmul.f32.gmra.mxu0 %v1361
    %v1799 = vpop.f32.mrf.mxu0
    %v1800 = vadd.f32 %v1371, %v1799
    %1801 = vdwg.mxu0
    %1802 = vmatpush.msra.mxu0 %v631
    %1803 = vmatpush.msra.mxu0 %v623
    %1804 = vmatpush.msra.mxu0 %v615
    %1805 = vmatpush.msra.mxu0 %v607
    %1806 = vmatpush.msra.mxu0 %v599
    %1807 = vmatpush.msra.mxu0 %v591
    %1808 = vmatpush.msra.mxu0 %v583
    %1809 = vmatpush.msra.mxu0 %v575
    %1810 = vmatpush.msra.mxu0 %v567
    %1811 = vmatpush.msra.mxu0 %v559
    %1812 = vmatpush.msra.mxu0 %v551
    %1813 = vmatpush.msra.mxu0 %v543
    %1814 = vmatpush.msra.mxu0 %v535
    %1815 = vmatpush.msra.mxu0 %v527
    %1816 = vmatpush.msra.mxu0 %v519
    %1817 = vmatpush.msra.mxu0 %v511
    %1818 = vmatmul.f32.gmra.mxu0 %v1362
    %v1819 = vpop.f32.mrf.mxu0
    %v1820 = vadd.f32 %v1800, %v1819
    %1821 = vdwg.mxu0
    %1822 = vmatpush.msra.mxu0 %v759
    %1823 = vmatpush.msra.mxu0 %v751
    %1824 = vmatpush.msra.mxu0 %v743
    %1825 = vmatpush.msra.mxu0 %v735
    %1826 = vmatpush.msra.mxu0 %v727
    %1827 = vmatpush.msra.mxu0 %v719
    %1828 = vmatpush.msra.mxu0 %v711
    %1829 = vmatpush.msra.mxu0 %v703
    %1830 = vmatpush.msra.mxu0 %v695
    %1831 = vmatpush.msra.mxu0 %v687
    %1832 = vmatpush.msra.mxu0 %v679
    %1833 = vmatpush.msra.mxu0 %v671
    %1834 = vmatpush.msra.mxu0 %v663
    %1835 = vmatpush.msra.mxu0 %v655
    %1836 = vmatpush.msra.mxu0 %v647
    %1837 = vmatpush.msra.mxu0 %v639
    %1838 = vmatmul.f32.gmra.mxu0 %v1363
    %v1839 = vpop.f32.mrf.mxu0
    %v1840 = vadd.f32 %v1820, %v1839
    %1841 = vdwg.mxu0
    %1842 = vmatpush.msra.mxu0 %v887
    %1843 = vmatpush.msra.mxu0 %v879
    %1844 = vmatpush.msra.mxu0 %v871
    %1845 = vmatpush.msra.mxu0 %v863
    %1846 = vmatpush.msra.mxu0 %v855
    %1847 = vmatpush.msra.mxu0 %v847
    %1848 = vmatpush.msra.mxu0 %v839
    %1849 = vmatpush.msra.mxu0 %v831
    %1850 = vmatpush.msra.mxu0 %v823
    %1851 = vmatpush.msra.mxu0 %v815
    %1852 = vmatpush.msra.mxu0 %v807
    %1853 = vmatpush.msra.mxu0 %v799
    %1854 = vmatpush.msra.mxu0 %v791
    %1855 = vmatpush.msra.mxu0 %v783
    %1856 = vmatpush.msra.mxu0 %v775
    %1857 = vmatpush.msra.mxu0 %v767
    %1858 = vmatmul.f32.gmra.mxu0 %v1364
    %v1859 = vpop.f32.mrf.mxu0
    %v1860 = vadd.f32 %v1840, %v1859
    %1861 = vdwg.mxu0
    %1862 = vmatpush.msra.mxu0 %v504
    %1863 = vmatpush.msra.mxu0 %v496
    %1864 = vmatpush.msra.mxu0 %v488
    %1865 = vmatpush.msra.mxu0 %v480
    %1866 = vmatpush.msra.mxu0 %v472
    %1867 = vmatpush.msra.mxu0 %v464
    %1868 = vmatpush.msra.mxu0 %v456
    %1869 = vmatpush.msra.mxu0 %v448
    %1870 = vmatpush.msra.mxu0 %v440
    %1871 = vmatpush.msra.mxu0 %v432
    %1872 = vmatpush.msra.mxu0 %v424
    %1873 = vmatpush.msra.mxu0 %v416
    %1874 = vmatpush.msra.mxu0 %v408
    %1875 = vmatpush.msra.mxu0 %v400
    %1876 = vmatpush.msra.mxu0 %v392
    %1877 = vmatpush.msra.mxu0 %v384
    %1878 = vmatmul.f32.gmra.mxu0 %v1361
    %v1879 = vpop.f32.mrf.mxu0
    %v1880 = vadd.f32 %v1372, %v1879
    %1881 = vdwg.mxu0
    %1882 = vmatpush.msra.mxu0 %v632
    %1883 = vmatpush.msra.mxu0 %v624
    %1884 = vmatpush.msra.mxu0 %v616
    %1885 = vmatpush.msra.mxu0 %v608
    %1886 = vmatpush.msra.mxu0 %v600
    %1887 = vmatpush.msra.mxu0 %v592
    %1888 = vmatpush.msra.mxu0 %v584
    %1889 = vmatpush.msra.mxu0 %v576
    %1890 = vmatpush.msra.mxu0 %v568
    %1891 = vmatpush.msra.mxu0 %v560
    %1892 = vmatpush.msra.mxu0 %v552
    %1893 = vmatpush.msra.mxu0 %v544
    %1894 = vmatpush.msra.mxu0 %v536
    %1895 = vmatpush.msra.mxu0 %v528
    %1896 = vmatpush.msra.mxu0 %v520
    %1897 = vmatpush.msra.mxu0 %v512
    %1898 = vmatmul.f32.gmra.mxu0 %v1362
    %v1899 = vpop.f32.mrf.mxu0
    %v1900 = vadd.f32 %v1880, %v1899
    %1901 = vdwg.mxu0
    %1902 = vmatpush.msra.mxu0 %v760
    %1903 = vmatpush.msra.mxu0 %v752
    %1904 = vmatpush.msra.mxu0 %v744
    %1905 = vmatpush.msra.mxu0 %v736
    %1906 = vmatpush.msra.mxu0 %v728
    %1907 = vmatpush.msra.mxu0 %v720
    %1908 = vmatpush.msra.mxu0 %v712
    %1909 = vmatpush.msra.mxu0 %v704
    %1910 = vmatpush.msra.mxu0 %v696
    %1911 = vmatpush.msra.mxu0 %v688
    %1912 = vmatpush.msra.mxu0 %v680
    %1913 = vmatpush.msra.mxu0 %v672
    %1914 = vmatpush.msra.mxu0 %v664
    %1915 = vmatpush.msra.mxu0 %v656
    %1916 = vmatpush.msra.mxu0 %v648
    %1917 = vmatpush.msra.mxu0 %v640
    %1918 = vmatmul.f32.gmra.mxu0 %v1363
    %v1919 = vpop.f32.mrf.mxu0
    %v1920 = vadd.f32 %v1900, %v1919
    %1921 = vdwg.mxu0
    %1922 = vmatpush.msra.mxu0 %v888
    %1923 = vmatpush.msra.mxu0 %v880
    %1924 = vmatpush.msra.mxu0 %v872
    %1925 = vmatpush.msra.mxu0 %v864
    %1926 = vmatpush.msra.mxu0 %v856
    %1927 = vmatpush.msra.mxu0 %v848
    %1928 = vmatpush.msra.mxu0 %v840
    %1929 = vmatpush.msra.mxu0 %v832
    %1930 = vmatpush.msra.mxu0 %v824
    %1931 = vmatpush.msra.mxu0 %v816
    %1932 = vmatpush.msra.mxu0 %v808
    %1933 = vmatpush.msra.mxu0 %v800
    %1934 = vmatpush.msra.mxu0 %v792
    %1935 = vmatpush.msra.mxu0 %v784
    %1936 = vmatpush.msra.mxu0 %v776
    %1937 = vmatpush.msra.mxu0 %v768
    %1938 = vmatmul.f32.gmra.mxu0 %v1364
    %v1939 = vpop.f32.mrf.mxu0
    %v1940 = vadd.f32 %v1920, %v1939
    %1941 = vdwg.mxu0
    %1942 = vmatpush.msra.mxu0 %v505
    %1943 = vmatpush.msra.mxu0 %v497
    %1944 = vmatpush.msra.mxu0 %v489
    %1945 = vmatpush.msra.mxu0 %v481
    %1946 = vmatpush.msra.mxu0 %v473
    %1947 = vmatpush.msra.mxu0 %v465
    %1948 = vmatpush.msra.mxu0 %v457
    %1949 = vmatpush.msra.mxu0 %v449
    %1950 = vmatpush.msra.mxu0 %v441
    %1951 = vmatpush.msra.mxu0 %v433
    %1952 = vmatpush.msra.mxu0 %v425
    %1953 = vmatpush.msra.mxu0 %v417
    %1954 = vmatpush.msra.mxu0 %v409
    %1955 = vmatpush.msra.mxu0 %v401
    %1956 = vmatpush.msra.mxu0 %v393
    %1957 = vmatpush.msra.mxu0 %v385
    %1958 = vmatmul.f32.gmra.mxu0 %v1361
    %v1959 = vpop.f32.mrf.mxu0
    %v1960 = vadd.f32 %v1373, %v1959
    %1961 = vdwg.mxu0
    %1962 = vmatpush.msra.mxu0 %v633
    %1963 = vmatpush.msra.mxu0 %v625
    %1964 = vmatpush.msra.mxu0 %v617
    %1965 = vmatpush.msra.mxu0 %v609
    %1966 = vmatpush.msra.mxu0 %v601
    %1967 = vmatpush.msra.mxu0 %v593
    %1968 = vmatpush.msra.mxu0 %v585
    %1969 = vmatpush.msra.mxu0 %v577
    %1970 = vmatpush.msra.mxu0 %v569
    %1971 = vmatpush.msra.mxu0 %v561
    %1972 = vmatpush.msra.mxu0 %v553
    %1973 = vmatpush.msra.mxu0 %v545
    %1974 = vmatpush.msra.mxu0 %v537
    %1975 = vmatpush.msra.mxu0 %v529
    %1976 = vmatpush.msra.mxu0 %v521
    %1977 = vmatpush.msra.mxu0 %v513
    %1978 = vmatmul.f32.gmra.mxu0 %v1362
    %v1979 = vpop.f32.mrf.mxu0
    %v1980 = vadd.f32 %v1960, %v1979
    %1981 = vdwg.mxu0
    %1982 = vmatpush.msra.mxu0 %v761
    %1983 = vmatpush.msra.mxu0 %v753
    %1984 = vmatpush.msra.mxu0 %v745
    %1985 = vmatpush.msra.mxu0 %v737
    %1986 = vmatpush.msra.mxu0 %v729
    %1987 = vmatpush.msra.mxu0 %v721
    %1988 = vmatpush.msra.mxu0 %v713
    %1989 = vmatpush.msra.mxu0 %v705
    %1990 = vmatpush.msra.mxu0 %v697
    %1991 = vmatpush.msra.mxu0 %v689
    %1992 = vmatpush.msra.mxu0 %v681
    %1993 = vmatpush.msra.mxu0 %v673
    %1994 = vmatpush.msra.mxu0 %v665
    %1995 = vmatpush.msra.mxu0 %v657
    %1996 = vmatpush.msra.mxu0 %v649
    %1997 = vmatpush.msra.mxu0 %v641
    %1998 = vmatmul.f32.gmra.mxu0 %v1363
    %v1999 = vpop.f32.mrf.mxu0
    %v2000 = vadd.f32 %v1980, %v1999
    %2001 = vdwg.mxu0
    %2002 = vmatpush.msra.mxu0 %v889
    %2003 = vmatpush.msra.mxu0 %v881
    %2004 = vmatpush.msra.mxu0 %v873
    %2005 = vmatpush.msra.mxu0 %v865
    %2006 = vmatpush.msra.mxu0 %v857
    %2007 = vmatpush.msra.mxu0 %v849
    %2008 = vmatpush.msra.mxu0 %v841
    %2009 = vmatpush.msra.mxu0 %v833
    %2010 = vmatpush.msra.mxu0 %v825
    %2011 = vmatpush.msra.mxu0 %v817
    %2012 = vmatpush.msra.mxu0 %v809
    %2013 = vmatpush.msra.mxu0 %v801
    %2014 = vmatpush.msra.mxu0 %v793
    %2015 = vmatpush.msra.mxu0 %v785
    %2016 = vmatpush.msra.mxu0 %v777
    %2017 = vmatpush.msra.mxu0 %v769
    %2018 = vmatmul.f32.gmra.mxu0 %v1364
    %v2019 = vpop.f32.mrf.mxu0
    %v2020 = vadd.f32 %v2000, %v2019
    %2021 = vdwg.mxu0
    %v2022 = vld [vmem:[#allocation4] sm:$0xff]
    %v2023 = vld [vmem:[#allocation4 + $0x8] sm:$0xff]
    %v2024 = vxor.u32 %v1460, 2147483648
    %v2025 = vxor.u32 %v1540, 2147483648
    %v2026 = vmul.f32 %v2024, 1.442695
    %v2027 = vpow.pop %v2026
    %v2028 = vmul.f32 %v2025, 1.442695
    %v2029 = vpow.pop %v2028
    %v2030 = vadd.f32 %v2027, 1.0
    %v2031 = vadd.f32 %v2029, 1.0
    %v2032 = vrcp.pop %v2030
    %v2033 = vmul.f32 %v2030, %v2032
    %v2034 = vsub.f32 1.0, %v2033
    %v2035 = vmul.f32 %v2032, %v2034
    %v2036 = vadd.f32 %v2032, %v2035
    %vm2037 = vweird.f32 %v2030
    %vm2038 = vweird.f32 %v2032
    %vm2039 = vmor %vm2037, %vm2038
    %v2040 = vsel %vm2039, %v2032, %v2036
    %v2041 = vand.u32 2147483647, %v2030
    %vm2042 = vcmp.eq.f32.partialorder %v2041, 8.507059e+37
    %v2043 = vand.u32 %v2030, 2147483648
    %v2044 = vor.u32 1.1754944e-38, %v2043
    %v2045 = vsel %vm2042, %v2044, %v2040
    %v2046 = vmul.f32 1.0, %v2045
    %v2047 = vrcp.pop %v2031
    %v2048 = vmul.f32 %v2031, %v2047
    %v2049 = vsub.f32 1.0, %v2048
    %v2050 = vmul.f32 %v2047, %v2049
    %v2051 = vadd.f32 %v2047, %v2050
    %vm2052 = vweird.f32 %v2031
    %vm2053 = vweird.f32 %v2047
    %vm2054 = vmor %vm2052, %vm2053
    %v2055 = vsel %vm2054, %v2047, %v2051
    %v2056 = vand.u32 2147483647, %v2031
    %vm2057 = vcmp.eq.f32.partialorder %v2056, 8.507059e+37
    %v2058 = vand.u32 %v2031, 2147483648
    %v2059 = vor.u32 1.1754944e-38, %v2058
    %v2060 = vsel %vm2057, %v2059, %v2055
    %v2061 = vmul.f32 1.0, %v2060
    %v2062 = vxor.u32 %v1620, 2147483648
    %v2063 = vxor.u32 %v1700, 2147483648
    %v2064 = vmul.f32 %v2062, 1.442695
    %v2065 = vpow.pop %v2064
    %v2066 = vmul.f32 %v2063, 1.442695
    %v2067 = vpow.pop %v2066
    %v2068 = vadd.f32 %v2065, 1.0
    %v2069 = vadd.f32 %v2067, 1.0
    %v2070 = vrcp.pop %v2068
    %v2071 = vmul.f32 %v2068, %v2070
    %v2072 = vsub.f32 1.0, %v2071
    %v2073 = vmul.f32 %v2070, %v2072
    %v2074 = vadd.f32 %v2070, %v2073
    %vm2075 = vweird.f32 %v2068
    %vm2076 = vweird.f32 %v2070
    %vm2077 = vmor %vm2075, %vm2076
    %v2078 = vsel %vm2077, %v2070, %v2074
    %v2079 = vand.u32 2147483647, %v2068
    %vm2080 = vcmp.eq.f32.partialorder %v2079, 8.507059e+37
    %v2081 = vand.u32 %v2068, 2147483648
    %v2082 = vor.u32 1.1754944e-38, %v2081
    %v2083 = vsel %vm2080, %v2082, %v2078
    %v2084 = vmul.f32 1.0, %v2083
    %v2085 = vrcp.pop %v2069
    %v2086 = vmul.f32 %v2069, %v2085
    %v2087 = vsub.f32 1.0, %v2086
    %v2088 = vmul.f32 %v2085, %v2087
    %v2089 = vadd.f32 %v2085, %v2088
    %vm2090 = vweird.f32 %v2069
    %vm2091 = vweird.f32 %v2085
    %vm2092 = vmor %vm2090, %vm2091
    %v2093 = vsel %vm2092, %v2085, %v2089
    %v2094 = vand.u32 2147483647, %v2069
    %vm2095 = vcmp.eq.f32.partialorder %v2094, 8.507059e+37
    %v2096 = vand.u32 %v2069, 2147483648
    %v2097 = vor.u32 1.1754944e-38, %v2096
    %v2098 = vsel %vm2095, %v2097, %v2093
    %v2099 = vmul.f32 1.0, %v2098
    %v2100 = vtanh.pop %v1780
    %v2101 = vtanh.pop %v1860
    %v2102 = vxor.u32 %v1940, 2147483648
    %v2103 = vxor.u32 %v2020, 2147483648
    %v2104 = vmul.f32 %v2102, 1.442695
    %v2105 = vpow.pop %v2104
    %v2106 = vmul.f32 %v2103, 1.442695
    %v2107 = vpow.pop %v2106
    %v2108 = vadd.f32 %v2105, 1.0
    %v2109 = vadd.f32 %v2107, 1.0
    %v2110 = vrcp.pop %v2108
    %v2111 = vmul.f32 %v2108, %v2110
    %v2112 = vsub.f32 1.0, %v2111
    %v2113 = vmul.f32 %v2110, %v2112
    %v2114 = vadd.f32 %v2110, %v2113
    %vm2115 = vweird.f32 %v2108
    %vm2116 = vweird.f32 %v2110
    %vm2117 = vmor %vm2115, %vm2116
    %v2118 = vsel %vm2117, %v2110, %v2114
    %v2119 = vand.u32 2147483647, %v2108
    %vm2120 = vcmp.eq.f32.partialorder %v2119, 8.507059e+37
    %v2121 = vand.u32 %v2108, 2147483648
    %v2122 = vor.u32 1.1754944e-38, %v2121
    %v2123 = vsel %vm2120, %v2122, %v2118
    %v2124 = vmul.f32 1.0, %v2123
    %v2125 = vrcp.pop %v2109
    %v2126 = vmul.f32 %v2109, %v2125
    %v2127 = vsub.f32 1.0, %v2126
    %v2128 = vmul.f32 %v2125, %v2127
    %v2129 = vadd.f32 %v2125, %v2128
    %vm2130 = vweird.f32 %v2109
    %vm2131 = vweird.f32 %v2125
    %vm2132 = vmor %vm2130, %vm2131
    %v2133 = vsel %vm2132, %v2125, %v2129
    %v2134 = vand.u32 2147483647, %v2109
    %vm2135 = vcmp.eq.f32.partialorder %v2134, 8.507059e+37
    %v2136 = vand.u32 %v2109, 2147483648
    %v2137 = vor.u32 1.1754944e-38, %v2136
    %v2138 = vsel %vm2135, %v2137, %v2133
    %v2139 = vmul.f32 1.0, %v2138
    %v2140 = vmul.f32 %v2084, %v2022
    %v2141 = vmul.f32 %v2099, %v2023
    %v2142 = vmul.f32 %v2046, %v2100
    %v2143 = vmul.f32 %v2061, %v2101
    %v2144 = vadd.f32 %v2140, %v2142
    %v2145 = vadd.f32 %v2141, %v2143
    %v2146 = vtanh.pop %v2144
    %v2147 = vtanh.pop %v2145
    %v2148 = vmul.f32 %v2124, %v2146
    %v2149 = vmul.f32 %v2139, %v2147
    %2150 = vst [vmem:[#allocation4] sm:$0xff] %v2144
    %2151 = vst [vmem:[#allocation4 + $0x8] sm:$0xff] %v2145
    %2152 = vst [vmem:[#allocation2 + $0x10] sm:$0xff] %v2148
    %2153 = vst [vmem:[#allocation2 + $0x18] sm:$0xff] %v2149
    %s2154 = scalar_lea.vmem [#allocation5], 64
    %v2155 = vld [vmem:[%s2154] sm:$0xff]
    %v2156 = vld [vmem:[%s2154 + $0x8] sm:$0xff]
    %v2157 = vld [vmem:[%s2154 + $0x10] sm:$0xff]
    %v2158 = vld [vmem:[%s2154 + $0x18] sm:$0xff]
    %v2159 = vld [vmem:[%s2154 + $0x20] sm:$0xff]
    %v2160 = vld [vmem:[%s2154 + $0x28] sm:$0xff]
    %v2161 = vld [vmem:[%s2154 + $0x30] sm:$0xff]
    %v2162 = vld [vmem:[%s2154 + $0x38] sm:$0xff]
    %v2163 = vld [vmem:[#allocation2] sm:$0xff]
    %v2164 = vld [vmem:[#allocation2 + $0x8] sm:$0xff]
    %2165 = vmatpush.msra.mxu0 %v242
    %2166 = vmatpush.msra.mxu0 %v234
    %2167 = vmatpush.msra.mxu0 %v226
    %2168 = vmatpush.msra.mxu0 %v218
    %2169 = vmatpush.msra.mxu0 %v210
    %2170 = vmatpush.msra.mxu0 %v202
    %2171 = vmatpush.msra.mxu0 %v194
    %2172 = vmatpush.msra.mxu0 %v186
    %2173 = vmatpush.msra.mxu0 %v178
    %2174 = vmatpush.msra.mxu0 %v170
    %2175 = vmatpush.msra.mxu0 %v162
    %2176 = vmatpush.msra.mxu0 %v154
    %2177 = vmatpush.msra.mxu0 %v146
    %2178 = vmatpush.msra.mxu0 %v138
    %2179 = vmatpush.msra.mxu0 %v130
    %2180 = vmatpush.msra.mxu0 %v122
    %2181 = vmatmul.f32.gmra.mxu0 %v2163
    %v2182 = vpop.f32.mrf.mxu0
    %v2183 = vadd.f32 0.0, %v2182
    %2184 = vdwg.mxu0
    %2185 = vmatpush.msra.mxu0 %v370
    %2186 = vmatpush.msra.mxu0 %v362
    %2187 = vmatpush.msra.mxu0 %v354
    %2188 = vmatpush.msra.mxu0 %v346
    %2189 = vmatpush.msra.mxu0 %v338
    %2190 = vmatpush.msra.mxu0 %v330
    %2191 = vmatpush.msra.mxu0 %v322
    %2192 = vmatpush.msra.mxu0 %v314
    %2193 = vmatpush.msra.mxu0 %v306
    %2194 = vmatpush.msra.mxu0 %v298
    %2195 = vmatpush.msra.mxu0 %v290
    %2196 = vmatpush.msra.mxu0 %v282
    %2197 = vmatpush.msra.mxu0 %v274
    %2198 = vmatpush.msra.mxu0 %v266
    %2199 = vmatpush.msra.mxu0 %v258
    %2200 = vmatpush.msra.mxu0 %v250
    %2201 = vmatmul.f32.gmra.mxu0 %v2164
    %v2202 = vpop.f32.mrf.mxu0
    %v2203 = vadd.f32 %v2183, %v2202
    %2204 = vdwg.mxu0
    %2205 = vmatpush.msra.mxu0 %v243
    %2206 = vmatpush.msra.mxu0 %v235
    %2207 = vmatpush.msra.mxu0 %v227
    %2208 = vmatpush.msra.mxu0 %v219
    %2209 = vmatpush.msra.mxu0 %v211
    %2210 = vmatpush.msra.mxu0 %v203
    %2211 = vmatpush.msra.mxu0 %v195
    %2212 = vmatpush.msra.mxu0 %v187
    %2213 = vmatpush.msra.mxu0 %v179
    %2214 = vmatpush.msra.mxu0 %v171
    %2215 = vmatpush.msra.mxu0 %v163
    %2216 = vmatpush.msra.mxu0 %v155
    %2217 = vmatpush.msra.mxu0 %v147
    %2218 = vmatpush.msra.mxu0 %v139
    %2219 = vmatpush.msra.mxu0 %v131
    %2220 = vmatpush.msra.mxu0 %v123
    %2221 = vmatmul.f32.gmra.mxu0 %v2163
    %v2222 = vpop.f32.mrf.mxu0
    %v2223 = vadd.f32 0.0, %v2222
    %2224 = vdwg.mxu0
    %2225 = vmatpush.msra.mxu0 %v371
    %2226 = vmatpush.msra.mxu0 %v363
    %2227 = vmatpush.msra.mxu0 %v355
    %2228 = vmatpush.msra.mxu0 %v347
    %2229 = vmatpush.msra.mxu0 %v339
    %2230 = vmatpush.msra.mxu0 %v331
    %2231 = vmatpush.msra.mxu0 %v323
    %2232 = vmatpush.msra.mxu0 %v315
    %2233 = vmatpush.msra.mxu0 %v307
    %2234 = vmatpush.msra.mxu0 %v299
    %2235 = vmatpush.msra.mxu0 %v291
    %2236 = vmatpush.msra.mxu0 %v283
    %2237 = vmatpush.msra.mxu0 %v275
    %2238 = vmatpush.msra.mxu0 %v267
    %2239 = vmatpush.msra.mxu0 %v259
    %2240 = vmatpush.msra.mxu0 %v251
    %2241 = vmatmul.f32.gmra.mxu0 %v2164
    %v2242 = vpop.f32.mrf.mxu0
    %v2243 = vadd.f32 %v2223, %v2242
    %2244 = vdwg.mxu0
    %2245 = vmatpush.msra.mxu0 %v244
    %2246 = vmatpush.msra.mxu0 %v236
    %2247 = vmatpush.msra.mxu0 %v228
    %2248 = vmatpush.msra.mxu0 %v220
    %2249 = vmatpush.msra.mxu0 %v212
    %2250 = vmatpush.msra.mxu0 %v204
    %2251 = vmatpush.msra.mxu0 %v196
    %2252 = vmatpush.msra.mxu0 %v188
    %2253 = vmatpush.msra.mxu0 %v180
    %2254 = vmatpush.msra.mxu0 %v172
    %2255 = vmatpush.msra.mxu0 %v164
    %2256 = vmatpush.msra.mxu0 %v156
    %2257 = vmatpush.msra.mxu0 %v148
    %2258 = vmatpush.msra.mxu0 %v140
    %2259 = vmatpush.msra.mxu0 %v132
    %2260 = vmatpush.msra.mxu0 %v124
    %2261 = vmatmul.f32.gmra.mxu0 %v2163
    %v2262 = vpop.f32.mrf.mxu0
    %v2263 = vadd.f32 0.0, %v2262
    %2264 = vdwg.mxu0
    %2265 = vmatpush.msra.mxu0 %v372
    %2266 = vmatpush.msra.mxu0 %v364
    %2267 = vmatpush.msra.mxu0 %v356
    %2268 = vmatpush.msra.mxu0 %v348
    %2269 = vmatpush.msra.mxu0 %v340
    %2270 = vmatpush.msra.mxu0 %v332
    %2271 = vmatpush.msra.mxu0 %v324
    %2272 = vmatpush.msra.mxu0 %v316
    %2273 = vmatpush.msra.mxu0 %v308
    %2274 = vmatpush.msra.mxu0 %v300
    %2275 = vmatpush.msra.mxu0 %v292
    %2276 = vmatpush.msra.mxu0 %v284
    %2277 = vmatpush.msra.mxu0 %v276
    %2278 = vmatpush.msra.mxu0 %v268
    %2279 = vmatpush.msra.mxu0 %v260
    %2280 = vmatpush.msra.mxu0 %v252
    %2281 = vmatmul.f32.gmra.mxu0 %v2164
    %v2282 = vpop.f32.mrf.mxu0
    %v2283 = vadd.f32 %v2263, %v2282
    %2284 = vdwg.mxu0
    %2285 = vmatpush.msra.mxu0 %v245
    %2286 = vmatpush.msra.mxu0 %v237
    %2287 = vmatpush.msra.mxu0 %v229
    %2288 = vmatpush.msra.mxu0 %v221
    %2289 = vmatpush.msra.mxu0 %v213
    %2290 = vmatpush.msra.mxu0 %v205
    %2291 = vmatpush.msra.mxu0 %v197
    %2292 = vmatpush.msra.mxu0 %v189
    %2293 = vmatpush.msra.mxu0 %v181
    %2294 = vmatpush.msra.mxu0 %v173
    %2295 = vmatpush.msra.mxu0 %v165
    %2296 = vmatpush.msra.mxu0 %v157
    %2297 = vmatpush.msra.mxu0 %v149
    %2298 = vmatpush.msra.mxu0 %v141
    %2299 = vmatpush.msra.mxu0 %v133
    %2300 = vmatpush.msra.mxu0 %v125
    %2301 = vmatmul.f32.gmra.mxu0 %v2163
    %v2302 = vpop.f32.mrf.mxu0
    %v2303 = vadd.f32 0.0, %v2302
    %2304 = vdwg.mxu0
    %2305 = vmatpush.msra.mxu0 %v373
    %2306 = vmatpush.msra.mxu0 %v365
    %2307 = vmatpush.msra.mxu0 %v357
    %2308 = vmatpush.msra.mxu0 %v349
    %2309 = vmatpush.msra.mxu0 %v341
    %2310 = vmatpush.msra.mxu0 %v333
    %2311 = vmatpush.msra.mxu0 %v325
    %2312 = vmatpush.msra.mxu0 %v317
    %2313 = vmatpush.msra.mxu0 %v309
    %2314 = vmatpush.msra.mxu0 %v301
    %2315 = vmatpush.msra.mxu0 %v293
    %2316 = vmatpush.msra.mxu0 %v285
    %2317 = vmatpush.msra.mxu0 %v277
    %2318 = vmatpush.msra.mxu0 %v269
    %2319 = vmatpush.msra.mxu0 %v261
    %2320 = vmatpush.msra.mxu0 %v253
    %2321 = vmatmul.f32.gmra.mxu0 %v2164
    %v2322 = vpop.f32.mrf.mxu0
    %v2323 = vadd.f32 %v2303, %v2322
    %2324 = vdwg.mxu0
    %2325 = vmatpush.msra.mxu0 %v246
    %2326 = vmatpush.msra.mxu0 %v238
    %2327 = vmatpush.msra.mxu0 %v230
    %2328 = vmatpush.msra.mxu0 %v222
    %2329 = vmatpush.msra.mxu0 %v214
    %2330 = vmatpush.msra.mxu0 %v206
    %2331 = vmatpush.msra.mxu0 %v198
    %2332 = vmatpush.msra.mxu0 %v190
    %2333 = vmatpush.msra.mxu0 %v182
    %2334 = vmatpush.msra.mxu0 %v174
    %2335 = vmatpush.msra.mxu0 %v166
    %2336 = vmatpush.msra.mxu0 %v158
    %2337 = vmatpush.msra.mxu0 %v150
    %2338 = vmatpush.msra.mxu0 %v142
    %2339 = vmatpush.msra.mxu0 %v134
    %2340 = vmatpush.msra.mxu0 %v126
    %2341 = vmatmul.f32.gmra.mxu0 %v2163
    %v2342 = vpop.f32.mrf.mxu0
    %v2343 = vadd.f32 0.0, %v2342
    %2344 = vdwg.mxu0
    %2345 = vmatpush.msra.mxu0 %v374
    %2346 = vmatpush.msra.mxu0 %v366
    %2347 = vmatpush.msra.mxu0 %v358
    %2348 = vmatpush.msra.mxu0 %v350
    %2349 = vmatpush.msra.mxu0 %v342
    %2350 = vmatpush.msra.mxu0 %v334
    %2351 = vmatpush.msra.mxu0 %v326
    %2352 = vmatpush.msra.mxu0 %v318
    %2353 = vmatpush.msra.mxu0 %v310
    %2354 = vmatpush.msra.mxu0 %v302
    %2355 = vmatpush.msra.mxu0 %v294
    %2356 = vmatpush.msra.mxu0 %v286
    %2357 = vmatpush.msra.mxu0 %v278
    %2358 = vmatpush.msra.mxu0 %v270
    %2359 = vmatpush.msra.mxu0 %v262
    %2360 = vmatpush.msra.mxu0 %v254
    %2361 = vmatmul.f32.gmra.mxu0 %v2164
    %v2362 = vpop.f32.mrf.mxu0
    %v2363 = vadd.f32 %v2343, %v2362
    %2364 = vdwg.mxu0
    %2365 = vmatpush.msra.mxu0 %v247
    %2366 = vmatpush.msra.mxu0 %v239
    %2367 = vmatpush.msra.mxu0 %v231
    %2368 = vmatpush.msra.mxu0 %v223
    %2369 = vmatpush.msra.mxu0 %v215
    %2370 = vmatpush.msra.mxu0 %v207
    %2371 = vmatpush.msra.mxu0 %v199
    %2372 = vmatpush.msra.mxu0 %v191
    %2373 = vmatpush.msra.mxu0 %v183
    %2374 = vmatpush.msra.mxu0 %v175
    %2375 = vmatpush.msra.mxu0 %v167
    %2376 = vmatpush.msra.mxu0 %v159
    %2377 = vmatpush.msra.mxu0 %v151
    %2378 = vmatpush.msra.mxu0 %v143
    %2379 = vmatpush.msra.mxu0 %v135
    %2380 = vmatpush.msra.mxu0 %v127
    %2381 = vmatmul.f32.gmra.mxu0 %v2163
    %v2382 = vpop.f32.mrf.mxu0
    %v2383 = vadd.f32 0.0, %v2382
    %2384 = vdwg.mxu0
    %2385 = vmatpush.msra.mxu0 %v375
    %2386 = vmatpush.msra.mxu0 %v367
    %2387 = vmatpush.msra.mxu0 %v359
    %2388 = vmatpush.msra.mxu0 %v351
    %2389 = vmatpush.msra.mxu0 %v343
    %2390 = vmatpush.msra.mxu0 %v335
    %2391 = vmatpush.msra.mxu0 %v327
    %2392 = vmatpush.msra.mxu0 %v319
    %2393 = vmatpush.msra.mxu0 %v311
    %2394 = vmatpush.msra.mxu0 %v303
    %2395 = vmatpush.msra.mxu0 %v295
    %2396 = vmatpush.msra.mxu0 %v287
    %2397 = vmatpush.msra.mxu0 %v279
    %2398 = vmatpush.msra.mxu0 %v271
    %2399 = vmatpush.msra.mxu0 %v263
    %2400 = vmatpush.msra.mxu0 %v255
    %2401 = vmatmul.f32.gmra.mxu0 %v2164
    %v2402 = vpop.f32.mrf.mxu0
    %v2403 = vadd.f32 %v2383, %v2402
    %2404 = vdwg.mxu0
    %2405 = vmatpush.msra.mxu0 %v248
    %2406 = vmatpush.msra.mxu0 %v240
    %2407 = vmatpush.msra.mxu0 %v232
    %2408 = vmatpush.msra.mxu0 %v224
    %2409 = vmatpush.msra.mxu0 %v216
    %2410 = vmatpush.msra.mxu0 %v208
    %2411 = vmatpush.msra.mxu0 %v200
    %2412 = vmatpush.msra.mxu0 %v192
    %2413 = vmatpush.msra.mxu0 %v184
    %2414 = vmatpush.msra.mxu0 %v176
    %2415 = vmatpush.msra.mxu0 %v168
    %2416 = vmatpush.msra.mxu0 %v160
    %2417 = vmatpush.msra.mxu0 %v152
    %2418 = vmatpush.msra.mxu0 %v144
    %2419 = vmatpush.msra.mxu0 %v136
    %2420 = vmatpush.msra.mxu0 %v128
    %2421 = vmatmul.f32.gmra.mxu0 %v2163
    %v2422 = vpop.f32.mrf.mxu0
    %v2423 = vadd.f32 0.0, %v2422
    %2424 = vdwg.mxu0
    %2425 = vmatpush.msra.mxu0 %v376
    %2426 = vmatpush.msra.mxu0 %v368
    %2427 = vmatpush.msra.mxu0 %v360
    %2428 = vmatpush.msra.mxu0 %v352
    %2429 = vmatpush.msra.mxu0 %v344
    %2430 = vmatpush.msra.mxu0 %v336
    %2431 = vmatpush.msra.mxu0 %v328
    %2432 = vmatpush.msra.mxu0 %v320
    %2433 = vmatpush.msra.mxu0 %v312
    %2434 = vmatpush.msra.mxu0 %v304
    %2435 = vmatpush.msra.mxu0 %v296
    %2436 = vmatpush.msra.mxu0 %v288
    %2437 = vmatpush.msra.mxu0 %v280
    %2438 = vmatpush.msra.mxu0 %v272
    %2439 = vmatpush.msra.mxu0 %v264
    %2440 = vmatpush.msra.mxu0 %v256
    %2441 = vmatmul.f32.gmra.mxu0 %v2164
    %v2442 = vpop.f32.mrf.mxu0
    %v2443 = vadd.f32 %v2423, %v2442
    %2444 = vdwg.mxu0
    %2445 = vmatpush.msra.mxu0 %v249
    %2446 = vmatpush.msra.mxu0 %v241
    %2447 = vmatpush.msra.mxu0 %v233
    %2448 = vmatpush.msra.mxu0 %v225
    %2449 = vmatpush.msra.mxu0 %v217
    %2450 = vmatpush.msra.mxu0 %v209
    %2451 = vmatpush.msra.mxu0 %v201
    %2452 = vmatpush.msra.mxu0 %v193
    %2453 = vmatpush.msra.mxu0 %v185
    %2454 = vmatpush.msra.mxu0 %v177
    %2455 = vmatpush.msra.mxu0 %v169
    %2456 = vmatpush.msra.mxu0 %v161
    %2457 = vmatpush.msra.mxu0 %v153
    %2458 = vmatpush.msra.mxu0 %v145
    %2459 = vmatpush.msra.mxu0 %v137
    %2460 = vmatpush.msra.mxu0 %v129
    %2461 = vmatmul.f32.gmra.mxu0 %v2163
    %v2462 = vpop.f32.mrf.mxu0
    %v2463 = vadd.f32 0.0, %v2462
    %2464 = vdwg.mxu0
    %2465 = vmatpush.msra.mxu0 %v377
    %2466 = vmatpush.msra.mxu0 %v369
    %2467 = vmatpush.msra.mxu0 %v361
    %2468 = vmatpush.msra.mxu0 %v353
    %2469 = vmatpush.msra.mxu0 %v345
    %2470 = vmatpush.msra.mxu0 %v337
    %2471 = vmatpush.msra.mxu0 %v329
    %2472 = vmatpush.msra.mxu0 %v321
    %2473 = vmatpush.msra.mxu0 %v313
    %2474 = vmatpush.msra.mxu0 %v305
    %2475 = vmatpush.msra.mxu0 %v297
    %2476 = vmatpush.msra.mxu0 %v289
    %2477 = vmatpush.msra.mxu0 %v281
    %2478 = vmatpush.msra.mxu0 %v273
    %2479 = vmatpush.msra.mxu0 %v265
    %2480 = vmatpush.msra.mxu0 %v257
    %2481 = vmatmul.f32.gmra.mxu0 %v2164
    %v2482 = vpop.f32.mrf.mxu0
    %v2483 = vadd.f32 %v2463, %v2482
    %2484 = vdwg.mxu0
    %v2485 = vadd.f32 %v2155, %v2203
    %v2486 = vadd.f32 %v2156, %v2243
    %v2487 = vadd.f32 %v2157, %v2283
    %v2488 = vadd.f32 %v2158, %v2323
    %v2489 = vadd.f32 %v2159, %v2363
    %v2490 = vadd.f32 %v2160, %v2403
    %v2491 = vadd.f32 %v2161, %v2443
    %v2492 = vadd.f32 %v2162, %v2483
    %v2493 = vld [vmem:[#allocation3] sm:$0xff]
    %v2494 = vld [vmem:[#allocation3 + $0x8] sm:$0xff]
    %v2495 = vxor.u32 %v2485, 2147483648
    %v2496 = vxor.u32 %v2486, 2147483648
    %v2497 = vmul.f32 %v2495, 1.442695
    %v2498 = vpow.pop %v2497
    %v2499 = vmul.f32 %v2496, 1.442695
    %v2500 = vpow.pop %v2499
    %v2501 = vadd.f32 %v2498, 1.0
    %v2502 = vadd.f32 %v2500, 1.0
    %v2503 = vrcp.pop %v2501
    %v2504 = vmul.f32 %v2501, %v2503
    %v2505 = vsub.f32 1.0, %v2504
    %v2506 = vmul.f32 %v2503, %v2505
    %v2507 = vadd.f32 %v2503, %v2506
    %vm2508 = vweird.f32 %v2501
    %vm2509 = vweird.f32 %v2503
    %vm2510 = vmor %vm2508, %vm2509
    %v2511 = vsel %vm2510, %v2503, %v2507
    %v2512 = vand.u32 2147483647, %v2501
    %vm2513 = vcmp.eq.f32.partialorder %v2512, 8.507059e+37
    %v2514 = vand.u32 %v2501, 2147483648
    %v2515 = vor.u32 1.1754944e-38, %v2514
    %v2516 = vsel %vm2513, %v2515, %v2511
    %v2517 = vmul.f32 1.0, %v2516
    %v2518 = vrcp.pop %v2502
    %v2519 = vmul.f32 %v2502, %v2518
    %v2520 = vsub.f32 1.0, %v2519
    %v2521 = vmul.f32 %v2518, %v2520
    %v2522 = vadd.f32 %v2518, %v2521
    %vm2523 = vweird.f32 %v2502
    %vm2524 = vweird.f32 %v2518
    %vm2525 = vmor %vm2523, %vm2524
    %v2526 = vsel %vm2525, %v2518, %v2522
    %v2527 = vand.u32 2147483647, %v2502
    %vm2528 = vcmp.eq.f32.partialorder %v2527, 8.507059e+37
    %v2529 = vand.u32 %v2502, 2147483648
    %v2530 = vor.u32 1.1754944e-38, %v2529
    %v2531 = vsel %vm2528, %v2530, %v2526
    %v2532 = vmul.f32 1.0, %v2531
    %v2533 = vxor.u32 %v2487, 2147483648
    %v2534 = vxor.u32 %v2488, 2147483648
    %v2535 = vmul.f32 %v2533, 1.442695
    %v2536 = vpow.pop %v2535
    %v2537 = vmul.f32 %v2534, 1.442695
    %v2538 = vpow.pop %v2537
    %v2539 = vadd.f32 %v2536, 1.0
    %v2540 = vadd.f32 %v2538, 1.0
    %v2541 = vrcp.pop %v2539
    %v2542 = vmul.f32 %v2539, %v2541
    %v2543 = vsub.f32 1.0, %v2542
    %v2544 = vmul.f32 %v2541, %v2543
    %v2545 = vadd.f32 %v2541, %v2544
    %vm2546 = vweird.f32 %v2539
    %vm2547 = vweird.f32 %v2541
    %vm2548 = vmor %vm2546, %vm2547
    %v2549 = vsel %vm2548, %v2541, %v2545
    %v2550 = vand.u32 2147483647, %v2539
    %vm2551 = vcmp.eq.f32.partialorder %v2550, 8.507059e+37
    %v2552 = vand.u32 %v2539, 2147483648
    %v2553 = vor.u32 1.1754944e-38, %v2552
    %v2554 = vsel %vm2551, %v2553, %v2549
    %v2555 = vmul.f32 1.0, %v2554
    %v2556 = vrcp.pop %v2540
    %v2557 = vmul.f32 %v2540, %v2556
    %v2558 = vsub.f32 1.0, %v2557
    %v2559 = vmul.f32 %v2556, %v2558
    %v2560 = vadd.f32 %v2556, %v2559
    %vm2561 = vweird.f32 %v2540
    %vm2562 = vweird.f32 %v2556
    %vm2563 = vmor %vm2561, %vm2562
    %v2564 = vsel %vm2563, %v2556, %v2560
    %v2565 = vand.u32 2147483647, %v2540
    %vm2566 = vcmp.eq.f32.partialorder %v2565, 8.507059e+37
    %v2567 = vand.u32 %v2540, 2147483648
    %v2568 = vor.u32 1.1754944e-38, %v2567
    %v2569 = vsel %vm2566, %v2568, %v2564
    %v2570 = vmul.f32 1.0, %v2569
    %v2571 = vtanh.pop %v2489
    %v2572 = vtanh.pop %v2490
    %v2573 = vxor.u32 %v2491, 2147483648
    %v2574 = vxor.u32 %v2492, 2147483648
    %v2575 = vmul.f32 %v2573, 1.442695
    %v2576 = vpow.pop %v2575
    %v2577 = vmul.f32 %v2574, 1.442695
    %v2578 = vpow.pop %v2577
    %v2579 = vadd.f32 %v2576, 1.0
    %v2580 = vadd.f32 %v2578, 1.0
    %v2581 = vrcp.pop %v2579
    %v2582 = vmul.f32 %v2579, %v2581
    %v2583 = vsub.f32 1.0, %v2582
    %v2584 = vmul.f32 %v2581, %v2583
    %v2585 = vadd.f32 %v2581, %v2584
    %vm2586 = vweird.f32 %v2579
    %vm2587 = vweird.f32 %v2581
    %vm2588 = vmor %vm2586, %vm2587
    %v2589 = vsel %vm2588, %v2581, %v2585
    %v2590 = vand.u32 2147483647, %v2579
    %vm2591 = vcmp.eq.f32.partialorder %v2590, 8.507059e+37
    %v2592 = vand.u32 %v2579, 2147483648
    %v2593 = vor.u32 1.1754944e-38, %v2592
    %v2594 = vsel %vm2591, %v2593, %v2589
    %v2595 = vmul.f32 1.0, %v2594
    %v2596 = vrcp.pop %v2580
    %v2597 = vmul.f32 %v2580, %v2596
    %v2598 = vsub.f32 1.0, %v2597
    %v2599 = vmul.f32 %v2596, %v2598
    %v2600 = vadd.f32 %v2596, %v2599
    %vm2601 = vweird.f32 %v2580
    %vm2602 = vweird.f32 %v2596
    %vm2603 = vmor %vm2601, %vm2602
    %v2604 = vsel %vm2603, %v2596, %v2600
    %v2605 = vand.u32 2147483647, %v2580
    %vm2606 = vcmp.eq.f32.partialorder %v2605, 8.507059e+37
    %v2607 = vand.u32 %v2580, 2147483648
    %v2608 = vor.u32 1.1754944e-38, %v2607
    %v2609 = vsel %vm2606, %v2608, %v2604
    %v2610 = vmul.f32 1.0, %v2609
    %v2611 = vmul.f32 %v2555, %v2493
    %v2612 = vmul.f32 %v2570, %v2494
    %v2613 = vmul.f32 %v2517, %v2571
    %v2614 = vmul.f32 %v2532, %v2572
    %v2615 = vadd.f32 %v2611, %v2613
    %v2616 = vadd.f32 %v2612, %v2614
    %v2617 = vtanh.pop %v2615
    %v2618 = vtanh.pop %v2616
    %v2619 = vmul.f32 %v2595, %v2617
    %v2620 = vmul.f32 %v2610, %v2618
    %2621 = vst [vmem:[#allocation3] sm:$0xff] %v2615
    %2622 = vst [vmem:[#allocation3 + $0x8] sm:$0xff] %v2616
    %2623 = vst [vmem:[#allocation2] sm:$0xff] %v2619
    %2624 = vst [vmem:[#allocation2 + $0x8] sm:$0xff] %v2620
    %v2625 = vld [vmem:[#allocation2] sm:$0xff]
    %v2626 = vld [vmem:[#allocation2 + $0x8] sm:$0xff]
    %v2627 = vld [vmem:[#allocation2 + $0x10] sm:$0xff]
    %v2628 = vld [vmem:[#allocation2 + $0x18] sm:$0xff]
    %2629 = vmatpush.msra.mxu0 %v498
    %2630 = vmatpush.msra.mxu0 %v490
    %2631 = vmatpush.msra.mxu0 %v482
    %2632 = vmatpush.msra.mxu0 %v474
    %2633 = vmatpush.msra.mxu0 %v466
    %2634 = vmatpush.msra.mxu0 %v458
    %2635 = vmatpush.msra.mxu0 %v450
    %2636 = vmatpush.msra.mxu0 %v442
    %2637 = vmatpush.msra.mxu0 %v434
    %2638 = vmatpush.msra.mxu0 %v426
    %2639 = vmatpush.msra.mxu0 %v418
    %2640 = vmatpush.msra.mxu0 %v410
    %2641 = vmatpush.msra.mxu0 %v402
    %2642 = vmatpush.msra.mxu0 %v394
    %2643 = vmatpush.msra.mxu0 %v386
    %2644 = vmatpush.msra.mxu0 %v378
    %2645 = vmatmul.f32.gmra.mxu0 %v2625
    %v2646 = vpop.f32.mrf.mxu0
    %v2647 = vadd.f32 %v1366, %v2646
    %2648 = vdwg.mxu0
    %2649 = vmatpush.msra.mxu0 %v626
    %2650 = vmatpush.msra.mxu0 %v618
    %2651 = vmatpush.msra.mxu0 %v610
    %2652 = vmatpush.msra.mxu0 %v602
    %2653 = vmatpush.msra.mxu0 %v594
    %2654 = vmatpush.msra.mxu0 %v586
    %2655 = vmatpush.msra.mxu0 %v578
    %2656 = vmatpush.msra.mxu0 %v570
    %2657 = vmatpush.msra.mxu0 %v562
    %2658 = vmatpush.msra.mxu0 %v554
    %2659 = vmatpush.msra.mxu0 %v546
    %2660 = vmatpush.msra.mxu0 %v538
    %2661 = vmatpush.msra.mxu0 %v530
    %2662 = vmatpush.msra.mxu0 %v522
    %2663 = vmatpush.msra.mxu0 %v514
    %2664 = vmatpush.msra.mxu0 %v506
    %2665 = vmatmul.f32.gmra.mxu0 %v2626
    %v2666 = vpop.f32.mrf.mxu0
    %v2667 = vadd.f32 %v2647, %v2666
    %2668 = vdwg.mxu0
    %2669 = vmatpush.msra.mxu0 %v754
    %2670 = vmatpush.msra.mxu0 %v746
    %2671 = vmatpush.msra.mxu0 %v738
    %2672 = vmatpush.msra.mxu0 %v730
    %2673 = vmatpush.msra.mxu0 %v722
    %2674 = vmatpush.msra.mxu0 %v714
    %2675 = vmatpush.msra.mxu0 %v706
    %2676 = vmatpush.msra.mxu0 %v698
    %2677 = vmatpush.msra.mxu0 %v690
    %2678 = vmatpush.msra.mxu0 %v682
    %2679 = vmatpush.msra.mxu0 %v674
    %2680 = vmatpush.msra.mxu0 %v666
    %2681 = vmatpush.msra.mxu0 %v658
    %2682 = vmatpush.msra.mxu0 %v650
    %2683 = vmatpush.msra.mxu0 %v642
    %2684 = vmatpush.msra.mxu0 %v634
    %2685 = vmatmul.f32.gmra.mxu0 %v2627
    %v2686 = vpop.f32.mrf.mxu0
    %v2687 = vadd.f32 %v2667, %v2686
    %2688 = vdwg.mxu0
    %2689 = vmatpush.msra.mxu0 %v882
    %2690 = vmatpush.msra.mxu0 %v874
    %2691 = vmatpush.msra.mxu0 %v866
    %2692 = vmatpush.msra.mxu0 %v858
    %2693 = vmatpush.msra.mxu0 %v850
    %2694 = vmatpush.msra.mxu0 %v842
    %2695 = vmatpush.msra.mxu0 %v834
    %2696 = vmatpush.msra.mxu0 %v826
    %2697 = vmatpush.msra.mxu0 %v818
    %2698 = vmatpush.msra.mxu0 %v810
    %2699 = vmatpush.msra.mxu0 %v802
    %2700 = vmatpush.msra.mxu0 %v794
    %2701 = vmatpush.msra.mxu0 %v786
    %2702 = vmatpush.msra.mxu0 %v778
    %2703 = vmatpush.msra.mxu0 %v770
    %2704 = vmatpush.msra.mxu0 %v762
    %2705 = vmatmul.f32.gmra.mxu0 %v2628
    %v2706 = vpop.f32.mrf.mxu0
    %v2707 = vadd.f32 %v2687, %v2706
    %2708 = vdwg.mxu0
    %2709 = vmatpush.msra.mxu0 %v499
    %2710 = vmatpush.msra.mxu0 %v491
    %2711 = vmatpush.msra.mxu0 %v483
    %2712 = vmatpush.msra.mxu0 %v475
    %2713 = vmatpush.msra.mxu0 %v467
    %2714 = vmatpush.msra.mxu0 %v459
    %2715 = vmatpush.msra.mxu0 %v451
    %2716 = vmatpush.msra.mxu0 %v443
    %2717 = vmatpush.msra.mxu0 %v435
    %2718 = vmatpush.msra.mxu0 %v427
    %2719 = vmatpush.msra.mxu0 %v419
    %2720 = vmatpush.msra.mxu0 %v411
    %2721 = vmatpush.msra.mxu0 %v403
    %2722 = vmatpush.msra.mxu0 %v395
    %2723 = vmatpush.msra.mxu0 %v387
    %2724 = vmatpush.msra.mxu0 %v379
    %2725 = vmatmul.f32.gmra.mxu0 %v2625
    %v2726 = vpop.f32.mrf.mxu0
    %v2727 = vadd.f32 %v1367, %v2726
    %2728 = vdwg.mxu0
    %2729 = vmatpush.msra.mxu0 %v627
    %2730 = vmatpush.msra.mxu0 %v619
    %2731 = vmatpush.msra.mxu0 %v611
    %2732 = vmatpush.msra.mxu0 %v603
    %2733 = vmatpush.msra.mxu0 %v595
    %2734 = vmatpush.msra.mxu0 %v587
    %2735 = vmatpush.msra.mxu0 %v579
    %2736 = vmatpush.msra.mxu0 %v571
    %2737 = vmatpush.msra.mxu0 %v563
    %2738 = vmatpush.msra.mxu0 %v555
    %2739 = vmatpush.msra.mxu0 %v547
    %2740 = vmatpush.msra.mxu0 %v539
    %2741 = vmatpush.msra.mxu0 %v531
    %2742 = vmatpush.msra.mxu0 %v523
    %2743 = vmatpush.msra.mxu0 %v515
    %2744 = vmatpush.msra.mxu0 %v507
    %2745 = vmatmul.f32.gmra.mxu0 %v2626
    %v2746 = vpop.f32.mrf.mxu0
    %v2747 = vadd.f32 %v2727, %v2746
    %2748 = vdwg.mxu0
    %2749 = vmatpush.msra.mxu0 %v755
    %2750 = vmatpush.msra.mxu0 %v747
    %2751 = vmatpush.msra.mxu0 %v739
    %2752 = vmatpush.msra.mxu0 %v731
    %2753 = vmatpush.msra.mxu0 %v723
    %2754 = vmatpush.msra.mxu0 %v715
    %2755 = vmatpush.msra.mxu0 %v707
    %2756 = vmatpush.msra.mxu0 %v699
    %2757 = vmatpush.msra.mxu0 %v691
    %2758 = vmatpush.msra.mxu0 %v683
    %2759 = vmatpush.msra.mxu0 %v675
    %2760 = vmatpush.msra.mxu0 %v667
    %2761 = vmatpush.msra.mxu0 %v659
    %2762 = vmatpush.msra.mxu0 %v651
    %2763 = vmatpush.msra.mxu0 %v643
    %2764 = vmatpush.msra.mxu0 %v635
    %2765 = vmatmul.f32.gmra.mxu0 %v2627
    %v2766 = vpop.f32.mrf.mxu0
    %v2767 = vadd.f32 %v2747, %v2766
    %2768 = vdwg.mxu0
    %2769 = vmatpush.msra.mxu0 %v883
    %2770 = vmatpush.msra.mxu0 %v875
    %2771 = vmatpush.msra.mxu0 %v867
    %2772 = vmatpush.msra.mxu0 %v859
    %2773 = vmatpush.msra.mxu0 %v851
    %2774 = vmatpush.msra.mxu0 %v843
    %2775 = vmatpush.msra.mxu0 %v835
    %2776 = vmatpush.msra.mxu0 %v827
    %2777 = vmatpush.msra.mxu0 %v819
    %2778 = vmatpush.msra.mxu0 %v811
    %2779 = vmatpush.msra.mxu0 %v803
    %2780 = vmatpush.msra.mxu0 %v795
    %2781 = vmatpush.msra.mxu0 %v787
    %2782 = vmatpush.msra.mxu0 %v779
    %2783 = vmatpush.msra.mxu0 %v771
    %2784 = vmatpush.msra.mxu0 %v763
    %2785 = vmatmul.f32.gmra.mxu0 %v2628
    %v2786 = vpop.f32.mrf.mxu0
    %v2787 = vadd.f32 %v2767, %v2786
    %2788 = vdwg.mxu0
    %2789 = vmatpush.msra.mxu0 %v500
    %2790 = vmatpush.msra.mxu0 %v492
    %2791 = vmatpush.msra.mxu0 %v484
    %2792 = vmatpush.msra.mxu0 %v476
    %2793 = vmatpush.msra.mxu0 %v468
    %2794 = vmatpush.msra.mxu0 %v460
    %2795 = vmatpush.msra.mxu0 %v452
    %2796 = vmatpush.msra.mxu0 %v444
    %2797 = vmatpush.msra.mxu0 %v436
    %2798 = vmatpush.msra.mxu0 %v428
    %2799 = vmatpush.msra.mxu0 %v420
    %2800 = vmatpush.msra.mxu0 %v412
    %2801 = vmatpush.msra.mxu0 %v404
    %2802 = vmatpush.msra.mxu0 %v396
    %2803 = vmatpush.msra.mxu0 %v388
    %2804 = vmatpush.msra.mxu0 %v380
    %2805 = vmatmul.f32.gmra.mxu0 %v2625
    %v2806 = vpop.f32.mrf.mxu0
    %v2807 = vadd.f32 %v1368, %v2806
    %2808 = vdwg.mxu0
    %2809 = vmatpush.msra.mxu0 %v628
    %2810 = vmatpush.msra.mxu0 %v620
    %2811 = vmatpush.msra.mxu0 %v612
    %2812 = vmatpush.msra.mxu0 %v604
    %2813 = vmatpush.msra.mxu0 %v596
    %2814 = vmatpush.msra.mxu0 %v588
    %2815 = vmatpush.msra.mxu0 %v580
    %2816 = vmatpush.msra.mxu0 %v572
    %2817 = vmatpush.msra.mxu0 %v564
    %2818 = vmatpush.msra.mxu0 %v556
    %2819 = vmatpush.msra.mxu0 %v548
    %2820 = vmatpush.msra.mxu0 %v540
    %2821 = vmatpush.msra.mxu0 %v532
    %2822 = vmatpush.msra.mxu0 %v524
    %2823 = vmatpush.msra.mxu0 %v516
    %2824 = vmatpush.msra.mxu0 %v508
    %2825 = vmatmul.f32.gmra.mxu0 %v2626
    %v2826 = vpop.f32.mrf.mxu0
    %v2827 = vadd.f32 %v2807, %v2826
    %2828 = vdwg.mxu0
    %2829 = vmatpush.msra.mxu0 %v756
    %2830 = vmatpush.msra.mxu0 %v748
    %2831 = vmatpush.msra.mxu0 %v740
    %2832 = vmatpush.msra.mxu0 %v732
    %2833 = vmatpush.msra.mxu0 %v724
    %2834 = vmatpush.msra.mxu0 %v716
    %2835 = vmatpush.msra.mxu0 %v708
    %2836 = vmatpush.msra.mxu0 %v700
    %2837 = vmatpush.msra.mxu0 %v692
    %2838 = vmatpush.msra.mxu0 %v684
    %2839 = vmatpush.msra.mxu0 %v676
    %2840 = vmatpush.msra.mxu0 %v668
    %2841 = vmatpush.msra.mxu0 %v660
    %2842 = vmatpush.msra.mxu0 %v652
    %2843 = vmatpush.msra.mxu0 %v644
    %2844 = vmatpush.msra.mxu0 %v636
    %2845 = vmatmul.f32.gmra.mxu0 %v2627
    %v2846 = vpop.f32.mrf.mxu0
    %v2847 = vadd.f32 %v2827, %v2846
    %2848 = vdwg.mxu0
    %2849 = vmatpush.msra.mxu0 %v884
    %2850 = vmatpush.msra.mxu0 %v876
    %2851 = vmatpush.msra.mxu0 %v868
    %2852 = vmatpush.msra.mxu0 %v860
    %2853 = vmatpush.msra.mxu0 %v852
    %2854 = vmatpush.msra.mxu0 %v844
    %2855 = vmatpush.msra.mxu0 %v836
    %2856 = vmatpush.msra.mxu0 %v828
    %2857 = vmatpush.msra.mxu0 %v820
    %2858 = vmatpush.msra.mxu0 %v812
    %2859 = vmatpush.msra.mxu0 %v804
    %2860 = vmatpush.msra.mxu0 %v796
    %2861 = vmatpush.msra.mxu0 %v788
    %2862 = vmatpush.msra.mxu0 %v780
    %2863 = vmatpush.msra.mxu0 %v772
    %2864 = vmatpush.msra.mxu0 %v764
    %2865 = vmatmul.f32.gmra.mxu0 %v2628
    %v2866 = vpop.f32.mrf.mxu0
    %v2867 = vadd.f32 %v2847, %v2866
    %2868 = vdwg.mxu0
    %2869 = vmatpush.msra.mxu0 %v501
    %2870 = vmatpush.msra.mxu0 %v493
    %2871 = vmatpush.msra.mxu0 %v485
    %2872 = vmatpush.msra.mxu0 %v477
    %2873 = vmatpush.msra.mxu0 %v469
    %2874 = vmatpush.msra.mxu0 %v461
    %2875 = vmatpush.msra.mxu0 %v453
    %2876 = vmatpush.msra.mxu0 %v445
    %2877 = vmatpush.msra.mxu0 %v437
    %2878 = vmatpush.msra.mxu0 %v429
    %2879 = vmatpush.msra.mxu0 %v421
    %2880 = vmatpush.msra.mxu0 %v413
    %2881 = vmatpush.msra.mxu0 %v405
    %2882 = vmatpush.msra.mxu0 %v397
    %2883 = vmatpush.msra.mxu0 %v389
    %2884 = vmatpush.msra.mxu0 %v381
    %2885 = vmatmul.f32.gmra.mxu0 %v2625
    %v2886 = vpop.f32.mrf.mxu0
    %v2887 = vadd.f32 %v1369, %v2886
    %2888 = vdwg.mxu0
    %2889 = vmatpush.msra.mxu0 %v629
    %2890 = vmatpush.msra.mxu0 %v621
    %2891 = vmatpush.msra.mxu0 %v613
    %2892 = vmatpush.msra.mxu0 %v605
    %2893 = vmatpush.msra.mxu0 %v597
    %2894 = vmatpush.msra.mxu0 %v589
    %2895 = vmatpush.msra.mxu0 %v581
    %2896 = vmatpush.msra.mxu0 %v573
    %2897 = vmatpush.msra.mxu0 %v565
    %2898 = vmatpush.msra.mxu0 %v557
    %2899 = vmatpush.msra.mxu0 %v549
    %2900 = vmatpush.msra.mxu0 %v541
    %2901 = vmatpush.msra.mxu0 %v533
    %2902 = vmatpush.msra.mxu0 %v525
    %2903 = vmatpush.msra.mxu0 %v517
    %2904 = vmatpush.msra.mxu0 %v509
    %2905 = vmatmul.f32.gmra.mxu0 %v2626
    %v2906 = vpop.f32.mrf.mxu0
    %v2907 = vadd.f32 %v2887, %v2906
    %2908 = vdwg.mxu0
    %2909 = vmatpush.msra.mxu0 %v757
    %2910 = vmatpush.msra.mxu0 %v749
    %2911 = vmatpush.msra.mxu0 %v741
    %2912 = vmatpush.msra.mxu0 %v733
    %2913 = vmatpush.msra.mxu0 %v725
    %2914 = vmatpush.msra.mxu0 %v717
    %2915 = vmatpush.msra.mxu0 %v709
    %2916 = vmatpush.msra.mxu0 %v701
    %2917 = vmatpush.msra.mxu0 %v693
    %2918 = vmatpush.msra.mxu0 %v685
    %2919 = vmatpush.msra.mxu0 %v677
    %2920 = vmatpush.msra.mxu0 %v669
    %2921 = vmatpush.msra.mxu0 %v661
    %2922 = vmatpush.msra.mxu0 %v653
    %2923 = vmatpush.msra.mxu0 %v645
    %2924 = vmatpush.msra.mxu0 %v637
    %2925 = vmatmul.f32.gmra.mxu0 %v2627
    %v2926 = vpop.f32.mrf.mxu0
    %v2927 = vadd.f32 %v2907, %v2926
    %2928 = vdwg.mxu0
    %2929 = vmatpush.msra.mxu0 %v885
    %2930 = vmatpush.msra.mxu0 %v877
    %2931 = vmatpush.msra.mxu0 %v869
    %2932 = vmatpush.msra.mxu0 %v861
    %2933 = vmatpush.msra.mxu0 %v853
    %2934 = vmatpush.msra.mxu0 %v845
    %2935 = vmatpush.msra.mxu0 %v837
    %2936 = vmatpush.msra.mxu0 %v829
    %2937 = vmatpush.msra.mxu0 %v821
    %2938 = vmatpush.msra.mxu0 %v813
    %2939 = vmatpush.msra.mxu0 %v805
    %2940 = vmatpush.msra.mxu0 %v797
    %2941 = vmatpush.msra.mxu0 %v789
    %2942 = vmatpush.msra.mxu0 %v781
    %2943 = vmatpush.msra.mxu0 %v773
    %2944 = vmatpush.msra.mxu0 %v765
    %2945 = vmatmul.f32.gmra.mxu0 %v2628
    %v2946 = vpop.f32.mrf.mxu0
    %v2947 = vadd.f32 %v2927, %v2946
    %2948 = vdwg.mxu0
    %2949 = vmatpush.msra.mxu0 %v502
    %2950 = vmatpush.msra.mxu0 %v494
    %2951 = vmatpush.msra.mxu0 %v486
    %2952 = vmatpush.msra.mxu0 %v478
    %2953 = vmatpush.msra.mxu0 %v470
    %2954 = vmatpush.msra.mxu0 %v462
    %2955 = vmatpush.msra.mxu0 %v454
    %2956 = vmatpush.msra.mxu0 %v446
    %2957 = vmatpush.msra.mxu0 %v438
    %2958 = vmatpush.msra.mxu0 %v430
    %2959 = vmatpush.msra.mxu0 %v422
    %2960 = vmatpush.msra.mxu0 %v414
    %2961 = vmatpush.msra.mxu0 %v406
    %2962 = vmatpush.msra.mxu0 %v398
    %2963 = vmatpush.msra.mxu0 %v390
    %2964 = vmatpush.msra.mxu0 %v382
    %2965 = vmatmul.f32.gmra.mxu0 %v2625
    %v2966 = vpop.f32.mrf.mxu0
    %v2967 = vadd.f32 %v1370, %v2966
    %2968 = vdwg.mxu0
    %2969 = vmatpush.msra.mxu0 %v630
    %2970 = vmatpush.msra.mxu0 %v622
    %2971 = vmatpush.msra.mxu0 %v614
    %2972 = vmatpush.msra.mxu0 %v606
    %2973 = vmatpush.msra.mxu0 %v598
    %2974 = vmatpush.msra.mxu0 %v590
    %2975 = vmatpush.msra.mxu0 %v582
    %2976 = vmatpush.msra.mxu0 %v574
    %2977 = vmatpush.msra.mxu0 %v566
    %2978 = vmatpush.msra.mxu0 %v558
    %2979 = vmatpush.msra.mxu0 %v550
    %2980 = vmatpush.msra.mxu0 %v542
    %2981 = vmatpush.msra.mxu0 %v534
    %2982 = vmatpush.msra.mxu0 %v526
    %2983 = vmatpush.msra.mxu0 %v518
    %2984 = vmatpush.msra.mxu0 %v510
    %2985 = vmatmul.f32.gmra.mxu0 %v2626
    %v2986 = vpop.f32.mrf.mxu0
    %v2987 = vadd.f32 %v2967, %v2986
    %2988 = vdwg.mxu0
    %2989 = vmatpush.msra.mxu0 %v758
    %2990 = vmatpush.msra.mxu0 %v750
    %2991 = vmatpush.msra.mxu0 %v742
    %2992 = vmatpush.msra.mxu0 %v734
    %2993 = vmatpush.msra.mxu0 %v726
    %2994 = vmatpush.msra.mxu0 %v718
    %2995 = vmatpush.msra.mxu0 %v710
    %2996 = vmatpush.msra.mxu0 %v702
    %2997 = vmatpush.msra.mxu0 %v694
    %2998 = vmatpush.msra.mxu0 %v686
    %2999 = vmatpush.msra.mxu0 %v678
    %3000 = vmatpush.msra.mxu0 %v670
    %3001 = vmatpush.msra.mxu0 %v662
    %3002 = vmatpush.msra.mxu0 %v654
    %3003 = vmatpush.msra.mxu0 %v646
    %3004 = vmatpush.msra.mxu0 %v638
    %3005 = vmatmul.f32.gmra.mxu0 %v2627
    %v3006 = vpop.f32.mrf.mxu0
    %v3007 = vadd.f32 %v2987, %v3006
    %3008 = vdwg.mxu0
    %3009 = vmatpush.msra.mxu0 %v886
    %3010 = vmatpush.msra.mxu0 %v878
    %3011 = vmatpush.msra.mxu0 %v870
    %3012 = vmatpush.msra.mxu0 %v862
    %3013 = vmatpush.msra.mxu0 %v854
    %3014 = vmatpush.msra.mxu0 %v846
    %3015 = vmatpush.msra.mxu0 %v838
    %3016 = vmatpush.msra.mxu0 %v830
    %3017 = vmatpush.msra.mxu0 %v822
    %3018 = vmatpush.msra.mxu0 %v814
    %3019 = vmatpush.msra.mxu0 %v806
    %3020 = vmatpush.msra.mxu0 %v798
    %3021 = vmatpush.msra.mxu0 %v790
    %3022 = vmatpush.msra.mxu0 %v782
    %3023 = vmatpush.msra.mxu0 %v774
    %3024 = vmatpush.msra.mxu0 %v766
    %3025 = vmatmul.f32.gmra.mxu0 %v2628
    %v3026 = vpop.f32.mrf.mxu0
    %v3027 = vadd.f32 %v3007, %v3026
    %3028 = vdwg.mxu0
    %3029 = vmatpush.msra.mxu0 %v503
    %3030 = vmatpush.msra.mxu0 %v495
    %3031 = vmatpush.msra.mxu0 %v487
    %3032 = vmatpush.msra.mxu0 %v479
    %3033 = vmatpush.msra.mxu0 %v471
    %3034 = vmatpush.msra.mxu0 %v463
    %3035 = vmatpush.msra.mxu0 %v455
    %3036 = vmatpush.msra.mxu0 %v447
    %3037 = vmatpush.msra.mxu0 %v439
    %3038 = vmatpush.msra.mxu0 %v431
    %3039 = vmatpush.msra.mxu0 %v423
    %3040 = vmatpush.msra.mxu0 %v415
    %3041 = vmatpush.msra.mxu0 %v407
    %3042 = vmatpush.msra.mxu0 %v399
    %3043 = vmatpush.msra.mxu0 %v391
    %3044 = vmatpush.msra.mxu0 %v383
    %3045 = vmatmul.f32.gmra.mxu0 %v2625
    %v3046 = vpop.f32.mrf.mxu0
    %v3047 = vadd.f32 %v1371, %v3046
    %3048 = vdwg.mxu0
    %3049 = vmatpush.msra.mxu0 %v631
    %3050 = vmatpush.msra.mxu0 %v623
    %3051 = vmatpush.msra.mxu0 %v615
    %3052 = vmatpush.msra.mxu0 %v607
    %3053 = vmatpush.msra.mxu0 %v599
    %3054 = vmatpush.msra.mxu0 %v591
    %3055 = vmatpush.msra.mxu0 %v583
    %3056 = vmatpush.msra.mxu0 %v575
    %3057 = vmatpush.msra.mxu0 %v567
    %3058 = vmatpush.msra.mxu0 %v559
    %3059 = vmatpush.msra.mxu0 %v551
    %3060 = vmatpush.msra.mxu0 %v543
    %3061 = vmatpush.msra.mxu0 %v535
    %3062 = vmatpush.msra.mxu0 %v527
    %3063 = vmatpush.msra.mxu0 %v519
    %3064 = vmatpush.msra.mxu0 %v511
    %3065 = vmatmul.f32.gmra.mxu0 %v2626
    %v3066 = vpop.f32.mrf.mxu0
    %v3067 = vadd.f32 %v3047, %v3066
    %3068 = vdwg.mxu0
    %3069 = vmatpush.msra.mxu0 %v759
    %3070 = vmatpush.msra.mxu0 %v751
    %3071 = vmatpush.msra.mxu0 %v743
    %3072 = vmatpush.msra.mxu0 %v735
    %3073 = vmatpush.msra.mxu0 %v727
    %3074 = vmatpush.msra.mxu0 %v719
    %3075 = vmatpush.msra.mxu0 %v711
    %3076 = vmatpush.msra.mxu0 %v703
    %3077 = vmatpush.msra.mxu0 %v695
    %3078 = vmatpush.msra.mxu0 %v687
    %3079 = vmatpush.msra.mxu0 %v679
    %3080 = vmatpush.msra.mxu0 %v671
    %3081 = vmatpush.msra.mxu0 %v663
    %3082 = vmatpush.msra.mxu0 %v655
    %3083 = vmatpush.msra.mxu0 %v647
    %3084 = vmatpush.msra.mxu0 %v639
    %3085 = vmatmul.f32.gmra.mxu0 %v2627
    %v3086 = vpop.f32.mrf.mxu0
    %v3087 = vadd.f32 %v3067, %v3086
    %3088 = vdwg.mxu0
    %3089 = vmatpush.msra.mxu0 %v887
    %3090 = vmatpush.msra.mxu0 %v879
    %3091 = vmatpush.msra.mxu0 %v871
    %3092 = vmatpush.msra.mxu0 %v863
    %3093 = vmatpush.msra.mxu0 %v855
    %3094 = vmatpush.msra.mxu0 %v847
    %3095 = vmatpush.msra.mxu0 %v839
    %3096 = vmatpush.msra.mxu0 %v831
    %3097 = vmatpush.msra.mxu0 %v823
    %3098 = vmatpush.msra.mxu0 %v815
    %3099 = vmatpush.msra.mxu0 %v807
    %3100 = vmatpush.msra.mxu0 %v799
    %3101 = vmatpush.msra.mxu0 %v791
    %3102 = vmatpush.msra.mxu0 %v783
    %3103 = vmatpush.msra.mxu0 %v775
    %3104 = vmatpush.msra.mxu0 %v767
    %3105 = vmatmul.f32.gmra.mxu0 %v2628
    %v3106 = vpop.f32.mrf.mxu0
    %v3107 = vadd.f32 %v3087, %v3106
    %3108 = vdwg.mxu0
    %3109 = vmatpush.msra.mxu0 %v504
    %3110 = vmatpush.msra.mxu0 %v496
    %3111 = vmatpush.msra.mxu0 %v488
    %3112 = vmatpush.msra.mxu0 %v480
    %3113 = vmatpush.msra.mxu0 %v472
    %3114 = vmatpush.msra.mxu0 %v464
    %3115 = vmatpush.msra.mxu0 %v456
    %3116 = vmatpush.msra.mxu0 %v448
    %3117 = vmatpush.msra.mxu0 %v440
    %3118 = vmatpush.msra.mxu0 %v432
    %3119 = vmatpush.msra.mxu0 %v424
    %3120 = vmatpush.msra.mxu0 %v416
    %3121 = vmatpush.msra.mxu0 %v408
    %3122 = vmatpush.msra.mxu0 %v400
    %3123 = vmatpush.msra.mxu0 %v392
    %3124 = vmatpush.msra.mxu0 %v384
    %3125 = vmatmul.f32.gmra.mxu0 %v2625
    %v3126 = vpop.f32.mrf.mxu0
    %v3127 = vadd.f32 %v1372, %v3126
    %3128 = vdwg.mxu0
    %3129 = vmatpush.msra.mxu0 %v632
    %3130 = vmatpush.msra.mxu0 %v624
    %3131 = vmatpush.msra.mxu0 %v616
    %3132 = vmatpush.msra.mxu0 %v608
    %3133 = vmatpush.msra.mxu0 %v600
    %3134 = vmatpush.msra.mxu0 %v592
    %3135 = vmatpush.msra.mxu0 %v584
    %3136 = vmatpush.msra.mxu0 %v576
    %3137 = vmatpush.msra.mxu0 %v568
    %3138 = vmatpush.msra.mxu0 %v560
    %3139 = vmatpush.msra.mxu0 %v552
    %3140 = vmatpush.msra.mxu0 %v544
    %3141 = vmatpush.msra.mxu0 %v536
    %3142 = vmatpush.msra.mxu0 %v528
    %3143 = vmatpush.msra.mxu0 %v520
    %3144 = vmatpush.msra.mxu0 %v512
    %3145 = vmatmul.f32.gmra.mxu0 %v2626
    %v3146 = vpop.f32.mrf.mxu0
    %v3147 = vadd.f32 %v3127, %v3146
    %3148 = vdwg.mxu0
    %3149 = vmatpush.msra.mxu0 %v760
    %3150 = vmatpush.msra.mxu0 %v752
    %3151 = vmatpush.msra.mxu0 %v744
    %3152 = vmatpush.msra.mxu0 %v736
    %3153 = vmatpush.msra.mxu0 %v728
    %3154 = vmatpush.msra.mxu0 %v720
    %3155 = vmatpush.msra.mxu0 %v712
    %3156 = vmatpush.msra.mxu0 %v704
    %3157 = vmatpush.msra.mxu0 %v696
    %3158 = vmatpush.msra.mxu0 %v688
    %3159 = vmatpush.msra.mxu0 %v680
    %3160 = vmatpush.msra.mxu0 %v672
    %3161 = vmatpush.msra.mxu0 %v664
    %3162 = vmatpush.msra.mxu0 %v656
    %3163 = vmatpush.msra.mxu0 %v648
    %3164 = vmatpush.msra.mxu0 %v640
    %3165 = vmatmul.f32.gmra.mxu0 %v2627
    %v3166 = vpop.f32.mrf.mxu0
    %v3167 = vadd.f32 %v3147, %v3166
    %3168 = vdwg.mxu0
    %3169 = vmatpush.msra.mxu0 %v888
    %3170 = vmatpush.msra.mxu0 %v880
    %3171 = vmatpush.msra.mxu0 %v872
    %3172 = vmatpush.msra.mxu0 %v864
    %3173 = vmatpush.msra.mxu0 %v856
    %3174 = vmatpush.msra.mxu0 %v848
    %3175 = vmatpush.msra.mxu0 %v840
    %3176 = vmatpush.msra.mxu0 %v832
    %3177 = vmatpush.msra.mxu0 %v824
    %3178 = vmatpush.msra.mxu0 %v816
    %3179 = vmatpush.msra.mxu0 %v808
    %3180 = vmatpush.msra.mxu0 %v800
    %3181 = vmatpush.msra.mxu0 %v792
    %3182 = vmatpush.msra.mxu0 %v784
    %3183 = vmatpush.msra.mxu0 %v776
    %3184 = vmatpush.msra.mxu0 %v768
    %3185 = vmatmul.f32.gmra.mxu0 %v2628
    %v3186 = vpop.f32.mrf.mxu0
    %v3187 = vadd.f32 %v3167, %v3186
    %3188 = vdwg.mxu0
    %3189 = vmatpush.msra.mxu0 %v505
    %3190 = vmatpush.msra.mxu0 %v497
    %3191 = vmatpush.msra.mxu0 %v489
    %3192 = vmatpush.msra.mxu0 %v481
    %3193 = vmatpush.msra.mxu0 %v473
    %3194 = vmatpush.msra.mxu0 %v465
    %3195 = vmatpush.msra.mxu0 %v457
    %3196 = vmatpush.msra.mxu0 %v449
    %3197 = vmatpush.msra.mxu0 %v441
    %3198 = vmatpush.msra.mxu0 %v433
    %3199 = vmatpush.msra.mxu0 %v425
    %3200 = vmatpush.msra.mxu0 %v417
    %3201 = vmatpush.msra.mxu0 %v409
    %3202 = vmatpush.msra.mxu0 %v401
    %3203 = vmatpush.msra.mxu0 %v393
    %3204 = vmatpush.msra.mxu0 %v385
    %3205 = vmatmul.f32.gmra.mxu0 %v2625
    %v3206 = vpop.f32.mrf.mxu0
    %v3207 = vadd.f32 %v1373, %v3206
    %3208 = vdwg.mxu0
    %3209 = vmatpush.msra.mxu0 %v633
    %3210 = vmatpush.msra.mxu0 %v625
    %3211 = vmatpush.msra.mxu0 %v617
    %3212 = vmatpush.msra.mxu0 %v609
    %3213 = vmatpush.msra.mxu0 %v601
    %3214 = vmatpush.msra.mxu0 %v593
    %3215 = vmatpush.msra.mxu0 %v585
    %3216 = vmatpush.msra.mxu0 %v577
    %3217 = vmatpush.msra.mxu0 %v569
    %3218 = vmatpush.msra.mxu0 %v561
    %3219 = vmatpush.msra.mxu0 %v553
    %3220 = vmatpush.msra.mxu0 %v545
    %3221 = vmatpush.msra.mxu0 %v537
    %3222 = vmatpush.msra.mxu0 %v529
    %3223 = vmatpush.msra.mxu0 %v521
    %3224 = vmatpush.msra.mxu0 %v513
    %3225 = vmatmul.f32.gmra.mxu0 %v2626
    %v3226 = vpop.f32.mrf.mxu0
    %v3227 = vadd.f32 %v3207, %v3226
    %3228 = vdwg.mxu0
    %3229 = vmatpush.msra.mxu0 %v761
    %3230 = vmatpush.msra.mxu0 %v753
    %3231 = vmatpush.msra.mxu0 %v745
    %3232 = vmatpush.msra.mxu0 %v737
    %3233 = vmatpush.msra.mxu0 %v729
    %3234 = vmatpush.msra.mxu0 %v721
    %3235 = vmatpush.msra.mxu0 %v713
    %3236 = vmatpush.msra.mxu0 %v705
    %3237 = vmatpush.msra.mxu0 %v697
    %3238 = vmatpush.msra.mxu0 %v689
    %3239 = vmatpush.msra.mxu0 %v681
    %3240 = vmatpush.msra.mxu0 %v673
    %3241 = vmatpush.msra.mxu0 %v665
    %3242 = vmatpush.msra.mxu0 %v657
    %3243 = vmatpush.msra.mxu0 %v649
    %3244 = vmatpush.msra.mxu0 %v641
    %3245 = vmatmul.f32.gmra.mxu0 %v2627
    %v3246 = vpop.f32.mrf.mxu0
    %v3247 = vadd.f32 %v3227, %v3246
    %3248 = vdwg.mxu0
    %3249 = vmatpush.msra.mxu0 %v889
    %3250 = vmatpush.msra.mxu0 %v881
    %3251 = vmatpush.msra.mxu0 %v873
    %3252 = vmatpush.msra.mxu0 %v865
    %3253 = vmatpush.msra.mxu0 %v857
    %3254 = vmatpush.msra.mxu0 %v849
    %3255 = vmatpush.msra.mxu0 %v841
    %3256 = vmatpush.msra.mxu0 %v833
    %3257 = vmatpush.msra.mxu0 %v825
    %3258 = vmatpush.msra.mxu0 %v817
    %3259 = vmatpush.msra.mxu0 %v809
    %3260 = vmatpush.msra.mxu0 %v801
    %3261 = vmatpush.msra.mxu0 %v793
    %3262 = vmatpush.msra.mxu0 %v785
    %3263 = vmatpush.msra.mxu0 %v777
    %3264 = vmatpush.msra.mxu0 %v769
    %3265 = vmatmul.f32.gmra.mxu0 %v2628
    %v3266 = vpop.f32.mrf.mxu0
    %v3267 = vadd.f32 %v3247, %v3266
    %3268 = vdwg.mxu0
    %v3269 = vld [vmem:[#allocation4] sm:$0xff]
    %v3270 = vld [vmem:[#allocation4 + $0x8] sm:$0xff]
    %v3271 = vxor.u32 %v2707, 2147483648
    %v3272 = vxor.u32 %v2787, 2147483648
    %v3273 = vmul.f32 %v3271, 1.442695
    %v3274 = vpow.pop %v3273
    %v3275 = vmul.f32 %v3272, 1.442695
    %v3276 = vpow.pop %v3275
    %v3277 = vadd.f32 %v3274, 1.0
    %v3278 = vadd.f32 %v3276, 1.0
    %v3279 = vrcp.pop %v3277
    %v3280 = vmul.f32 %v3277, %v3279
    %v3281 = vsub.f32 1.0, %v3280
    %v3282 = vmul.f32 %v3279, %v3281
    %v3283 = vadd.f32 %v3279, %v3282
    %vm3284 = vweird.f32 %v3277
    %vm3285 = vweird.f32 %v3279
    %vm3286 = vmor %vm3284, %vm3285
    %v3287 = vsel %vm3286, %v3279, %v3283
    %v3288 = vand.u32 2147483647, %v3277
    %vm3289 = vcmp.eq.f32.partialorder %v3288, 8.507059e+37
    %v3290 = vand.u32 %v3277, 2147483648
    %v3291 = vor.u32 1.1754944e-38, %v3290
    %v3292 = vsel %vm3289, %v3291, %v3287
    %v3293 = vmul.f32 1.0, %v3292
    %v3294 = vrcp.pop %v3278
    %v3295 = vmul.f32 %v3278, %v3294
    %v3296 = vsub.f32 1.0, %v3295
    %v3297 = vmul.f32 %v3294, %v3296
    %v3298 = vadd.f32 %v3294, %v3297
    %vm3299 = vweird.f32 %v3278
    %vm3300 = vweird.f32 %v3294
    %vm3301 = vmor %vm3299, %vm3300
    %v3302 = vsel %vm3301, %v3294, %v3298
    %v3303 = vand.u32 2147483647, %v3278
    %vm3304 = vcmp.eq.f32.partialorder %v3303, 8.507059e+37
    %v3305 = vand.u32 %v3278, 2147483648
    %v3306 = vor.u32 1.1754944e-38, %v3305
    %v3307 = vsel %vm3304, %v3306, %v3302
    %v3308 = vmul.f32 1.0, %v3307
    %v3309 = vxor.u32 %v2867, 2147483648
    %v3310 = vxor.u32 %v2947, 2147483648
    %v3311 = vmul.f32 %v3309, 1.442695
    %v3312 = vpow.pop %v3311
    %v3313 = vmul.f32 %v3310, 1.442695
    %v3314 = vpow.pop %v3313
    %v3315 = vadd.f32 %v3312, 1.0
    %v3316 = vadd.f32 %v3314, 1.0
    %v3317 = vrcp.pop %v3315
    %v3318 = vmul.f32 %v3315, %v3317
    %v3319 = vsub.f32 1.0, %v3318
    %v3320 = vmul.f32 %v3317, %v3319
    %v3321 = vadd.f32 %v3317, %v3320
    %vm3322 = vweird.f32 %v3315
    %vm3323 = vweird.f32 %v3317
    %vm3324 = vmor %vm3322, %vm3323
    %v3325 = vsel %vm3324, %v3317, %v3321
    %v3326 = vand.u32 2147483647, %v3315
    %vm3327 = vcmp.eq.f32.partialorder %v3326, 8.507059e+37
    %v3328 = vand.u32 %v3315, 2147483648
    %v3329 = vor.u32 1.1754944e-38, %v3328
    %v3330 = vsel %vm3327, %v3329, %v3325
    %v3331 = vmul.f32 1.0, %v3330
    %v3332 = vrcp.pop %v3316
    %v3333 = vmul.f32 %v3316, %v3332
    %v3334 = vsub.f32 1.0, %v3333
    %v3335 = vmul.f32 %v3332, %v3334
    %v3336 = vadd.f32 %v3332, %v3335
    %vm3337 = vweird.f32 %v3316
    %vm3338 = vweird.f32 %v3332
    %vm3339 = vmor %vm3337, %vm3338
    %v3340 = vsel %vm3339, %v3332, %v3336
    %v3341 = vand.u32 2147483647, %v3316
    %vm3342 = vcmp.eq.f32.partialorder %v3341, 8.507059e+37
    %v3343 = vand.u32 %v3316, 2147483648
    %v3344 = vor.u32 1.1754944e-38, %v3343
    %v3345 = vsel %vm3342, %v3344, %v3340
    %v3346 = vmul.f32 1.0, %v3345
    %v3347 = vtanh.pop %v3027
    %v3348 = vtanh.pop %v3107
    %v3349 = vxor.u32 %v3187, 2147483648
    %v3350 = vxor.u32 %v3267, 2147483648
    %v3351 = vmul.f32 %v3349, 1.442695
    %v3352 = vpow.pop %v3351
    %v3353 = vmul.f32 %v3350, 1.442695
    %v3354 = vpow.pop %v3353
    %v3355 = vadd.f32 %v3352, 1.0
    %v3356 = vadd.f32 %v3354, 1.0
    %v3357 = vrcp.pop %v3355
    %v3358 = vmul.f32 %v3355, %v3357
    %v3359 = vsub.f32 1.0, %v3358
    %v3360 = vmul.f32 %v3357, %v3359
    %v3361 = vadd.f32 %v3357, %v3360
    %vm3362 = vweird.f32 %v3355
    %vm3363 = vweird.f32 %v3357
    %vm3364 = vmor %vm3362, %vm3363
    %v3365 = vsel %vm3364, %v3357, %v3361
    %v3366 = vand.u32 2147483647, %v3355
    %vm3367 = vcmp.eq.f32.partialorder %v3366, 8.507059e+37
    %v3368 = vand.u32 %v3355, 2147483648
    %v3369 = vor.u32 1.1754944e-38, %v3368
    %v3370 = vsel %vm3367, %v3369, %v3365
    %v3371 = vmul.f32 1.0, %v3370
    %v3372 = vrcp.pop %v3356
    %v3373 = vmul.f32 %v3356, %v3372
    %v3374 = vsub.f32 1.0, %v3373
    %v3375 = vmul.f32 %v3372, %v3374
    %v3376 = vadd.f32 %v3372, %v3375
    %vm3377 = vweird.f32 %v3356
    %vm3378 = vweird.f32 %v3372
    %vm3379 = vmor %vm3377, %vm3378
    %v3380 = vsel %vm3379, %v3372, %v3376
    %v3381 = vand.u32 2147483647, %v3356
    %vm3382 = vcmp.eq.f32.partialorder %v3381, 8.507059e+37
    %v3383 = vand.u32 %v3356, 2147483648
    %v3384 = vor.u32 1.1754944e-38, %v3383
    %v3385 = vsel %vm3382, %v3384, %v3380
    %v3386 = vmul.f32 1.0, %v3385
    %v3387 = vmul.f32 %v3331, %v3269
    %v3388 = vmul.f32 %v3346, %v3270
    %v3389 = vmul.f32 %v3293, %v3347
    %v3390 = vmul.f32 %v3308, %v3348
    %v3391 = vadd.f32 %v3387, %v3389
    %v3392 = vadd.f32 %v3388, %v3390
    %v3393 = vtanh.pop %v3391
    %v3394 = vtanh.pop %v3392
    %v3395 = vmul.f32 %v3371, %v3393
    %v3396 = vmul.f32 %v3386, %v3394
    %3397 = vst [vmem:[#allocation4] sm:$0xff] %v3391
    %3398 = vst [vmem:[#allocation4 + $0x8] sm:$0xff] %v3392
    %3399 = vst [vmem:[#allocation2 + $0x10] sm:$0xff] %v3395
    %3400 = vst [vmem:[#allocation2 + $0x18] sm:$0xff] %v3396
    %s3401 = scalar_lea.vmem [#allocation5], 128
    %v3402 = vld [vmem:[%s3401] sm:$0xff]
    %v3403 = vld [vmem:[%s3401 + $0x8] sm:$0xff]
    %v3404 = vld [vmem:[%s3401 + $0x10] sm:$0xff]
    %v3405 = vld [vmem:[%s3401 + $0x18] sm:$0xff]
    %v3406 = vld [vmem:[%s3401 + $0x20] sm:$0xff]
    %v3407 = vld [vmem:[%s3401 + $0x28] sm:$0xff]
    %v3408 = vld [vmem:[%s3401 + $0x30] sm:$0xff]
    %v3409 = vld [vmem:[%s3401 + $0x38] sm:$0xff]
    %v3410 = vld [vmem:[#allocation2] sm:$0xff]
    %v3411 = vld [vmem:[#allocation2 + $0x8] sm:$0xff]
    %3412 = vmatpush.msra.mxu0 %v242
    %3413 = vmatpush.msra.mxu0 %v234
    %3414 = vmatpush.msra.mxu0 %v226
    %3415 = vmatpush.msra.mxu0 %v218
    %3416 = vmatpush.msra.mxu0 %v210
    %3417 = vmatpush.msra.mxu0 %v202
    %3418 = vmatpush.msra.mxu0 %v194
    %3419 = vmatpush.msra.mxu0 %v186
    %3420 = vmatpush.msra.mxu0 %v178
    %3421 = vmatpush.msra.mxu0 %v170
    %3422 = vmatpush.msra.mxu0 %v162
    %3423 = vmatpush.msra.mxu0 %v154
    %3424 = vmatpush.msra.mxu0 %v146
    %3425 = vmatpush.msra.mxu0 %v138
    %3426 = vmatpush.msra.mxu0 %v130
    %3427 = vmatpush.msra.mxu0 %v122
    %3428 = vmatmul.f32.gmra.mxu0 %v3410
    %v3429 = vpop.f32.mrf.mxu0
    %v3430 = vadd.f32 0.0, %v3429
    %3431 = vdwg.mxu0
    %3432 = vmatpush.msra.mxu0 %v370
    %3433 = vmatpush.msra.mxu0 %v362
    %3434 = vmatpush.msra.mxu0 %v354
    %3435 = vmatpush.msra.mxu0 %v346
    %3436 = vmatpush.msra.mxu0 %v338
    %3437 = vmatpush.msra.mxu0 %v330
    %3438 = vmatpush.msra.mxu0 %v322
    %3439 = vmatpush.msra.mxu0 %v314
    %3440 = vmatpush.msra.mxu0 %v306
    %3441 = vmatpush.msra.mxu0 %v298
    %3442 = vmatpush.msra.mxu0 %v290
    %3443 = vmatpush.msra.mxu0 %v282
    %3444 = vmatpush.msra.mxu0 %v274
    %3445 = vmatpush.msra.mxu0 %v266
    %3446 = vmatpush.msra.mxu0 %v258
    %3447 = vmatpush.msra.mxu0 %v250
    %3448 = vmatmul.f32.gmra.mxu0 %v3411
    %v3449 = vpop.f32.mrf.mxu0
    %v3450 = vadd.f32 %v3430, %v3449
    %3451 = vdwg.mxu0
    %3452 = vmatpush.msra.mxu0 %v243
    %3453 = vmatpush.msra.mxu0 %v235
    %3454 = vmatpush.msra.mxu0 %v227
    %3455 = vmatpush.msra.mxu0 %v219
    %3456 = vmatpush.msra.mxu0 %v211
    %3457 = vmatpush.msra.mxu0 %v203
    %3458 = vmatpush.msra.mxu0 %v195
    %3459 = vmatpush.msra.mxu0 %v187
    %3460 = vmatpush.msra.mxu0 %v179
    %3461 = vmatpush.msra.mxu0 %v171
    %3462 = vmatpush.msra.mxu0 %v163
    %3463 = vmatpush.msra.mxu0 %v155
    %3464 = vmatpush.msra.mxu0 %v147
    %3465 = vmatpush.msra.mxu0 %v139
    %3466 = vmatpush.msra.mxu0 %v131
    %3467 = vmatpush.msra.mxu0 %v123
    %3468 = vmatmul.f32.gmra.mxu0 %v3410
    %v3469 = vpop.f32.mrf.mxu0
    %v3470 = vadd.f32 0.0, %v3469
    %3471 = vdwg.mxu0
    %3472 = vmatpush.msra.mxu0 %v371
    %3473 = vmatpush.msra.mxu0 %v363
    %3474 = vmatpush.msra.mxu0 %v355
    %3475 = vmatpush.msra.mxu0 %v347
    %3476 = vmatpush.msra.mxu0 %v339
    %3477 = vmatpush.msra.mxu0 %v331
    %3478 = vmatpush.msra.mxu0 %v323
    %3479 = vmatpush.msra.mxu0 %v315
    %3480 = vmatpush.msra.mxu0 %v307
    %3481 = vmatpush.msra.mxu0 %v299
    %3482 = vmatpush.msra.mxu0 %v291
    %3483 = vmatpush.msra.mxu0 %v283
    %3484 = vmatpush.msra.mxu0 %v275
    %3485 = vmatpush.msra.mxu0 %v267
    %3486 = vmatpush.msra.mxu0 %v259
    %3487 = vmatpush.msra.mxu0 %v251
    %3488 = vmatmul.f32.gmra.mxu0 %v3411
    %v3489 = vpop.f32.mrf.mxu0
    %v3490 = vadd.f32 %v3470, %v3489
    %3491 = vdwg.mxu0
    %3492 = vmatpush.msra.mxu0 %v244
    %3493 = vmatpush.msra.mxu0 %v236
    %3494 = vmatpush.msra.mxu0 %v228
    %3495 = vmatpush.msra.mxu0 %v220
    %3496 = vmatpush.msra.mxu0 %v212
    %3497 = vmatpush.msra.mxu0 %v204
    %3498 = vmatpush.msra.mxu0 %v196
    %3499 = vmatpush.msra.mxu0 %v188
    %3500 = vmatpush.msra.mxu0 %v180
    %3501 = vmatpush.msra.mxu0 %v172
    %3502 = vmatpush.msra.mxu0 %v164
    %3503 = vmatpush.msra.mxu0 %v156
    %3504 = vmatpush.msra.mxu0 %v148
    %3505 = vmatpush.msra.mxu0 %v140
    %3506 = vmatpush.msra.mxu0 %v132
    %3507 = vmatpush.msra.mxu0 %v124
    %3508 = vmatmul.f32.gmra.mxu0 %v3410
    %v3509 = vpop.f32.mrf.mxu0
    %v3510 = vadd.f32 0.0, %v3509
    %3511 = vdwg.mxu0
    %3512 = vmatpush.msra.mxu0 %v372
    %3513 = vmatpush.msra.mxu0 %v364
    %3514 = vmatpush.msra.mxu0 %v356
    %3515 = vmatpush.msra.mxu0 %v348
    %3516 = vmatpush.msra.mxu0 %v340
    %3517 = vmatpush.msra.mxu0 %v332
    %3518 = vmatpush.msra.mxu0 %v324
    %3519 = vmatpush.msra.mxu0 %v316
    %3520 = vmatpush.msra.mxu0 %v308
    %3521 = vmatpush.msra.mxu0 %v300
    %3522 = vmatpush.msra.mxu0 %v292
    %3523 = vmatpush.msra.mxu0 %v284
    %3524 = vmatpush.msra.mxu0 %v276
    %3525 = vmatpush.msra.mxu0 %v268
    %3526 = vmatpush.msra.mxu0 %v260
    %3527 = vmatpush.msra.mxu0 %v252
    %3528 = vmatmul.f32.gmra.mxu0 %v3411
    %v3529 = vpop.f32.mrf.mxu0
    %v3530 = vadd.f32 %v3510, %v3529
    %3531 = vdwg.mxu0
    %3532 = vmatpush.msra.mxu0 %v245
    %3533 = vmatpush.msra.mxu0 %v237
    %3534 = vmatpush.msra.mxu0 %v229
    %3535 = vmatpush.msra.mxu0 %v221
    %3536 = vmatpush.msra.mxu0 %v213
    %3537 = vmatpush.msra.mxu0 %v205
    %3538 = vmatpush.msra.mxu0 %v197
    %3539 = vmatpush.msra.mxu0 %v189
    %3540 = vmatpush.msra.mxu0 %v181
    %3541 = vmatpush.msra.mxu0 %v173
    %3542 = vmatpush.msra.mxu0 %v165
    %3543 = vmatpush.msra.mxu0 %v157
    %3544 = vmatpush.msra.mxu0 %v149
    %3545 = vmatpush.msra.mxu0 %v141
    %3546 = vmatpush.msra.mxu0 %v133
    %3547 = vmatpush.msra.mxu0 %v125
    %3548 = vmatmul.f32.gmra.mxu0 %v3410
    %v3549 = vpop.f32.mrf.mxu0
    %v3550 = vadd.f32 0.0, %v3549
    %3551 = vdwg.mxu0
    %3552 = vmatpush.msra.mxu0 %v373
    %3553 = vmatpush.msra.mxu0 %v365
    %3554 = vmatpush.msra.mxu0 %v357
    %3555 = vmatpush.msra.mxu0 %v349
    %3556 = vmatpush.msra.mxu0 %v341
    %3557 = vmatpush.msra.mxu0 %v333
    %3558 = vmatpush.msra.mxu0 %v325
    %3559 = vmatpush.msra.mxu0 %v317
    %3560 = vmatpush.msra.mxu0 %v309
    %3561 = vmatpush.msra.mxu0 %v301
    %3562 = vmatpush.msra.mxu0 %v293
    %3563 = vmatpush.msra.mxu0 %v285
    %3564 = vmatpush.msra.mxu0 %v277
    %3565 = vmatpush.msra.mxu0 %v269
    %3566 = vmatpush.msra.mxu0 %v261
    %3567 = vmatpush.msra.mxu0 %v253
    %3568 = vmatmul.f32.gmra.mxu0 %v3411
    %v3569 = vpop.f32.mrf.mxu0
    %v3570 = vadd.f32 %v3550, %v3569
    %3571 = vdwg.mxu0
    %3572 = vmatpush.msra.mxu0 %v246
    %3573 = vmatpush.msra.mxu0 %v238
    %3574 = vmatpush.msra.mxu0 %v230
    %3575 = vmatpush.msra.mxu0 %v222
    %3576 = vmatpush.msra.mxu0 %v214
    %3577 = vmatpush.msra.mxu0 %v206
    %3578 = vmatpush.msra.mxu0 %v198
    %3579 = vmatpush.msra.mxu0 %v190
    %3580 = vmatpush.msra.mxu0 %v182
    %3581 = vmatpush.msra.mxu0 %v174
    %3582 = vmatpush.msra.mxu0 %v166
    %3583 = vmatpush.msra.mxu0 %v158
    %3584 = vmatpush.msra.mxu0 %v150
    %3585 = vmatpush.msra.mxu0 %v142
    %3586 = vmatpush.msra.mxu0 %v134
    %3587 = vmatpush.msra.mxu0 %v126
    %3588 = vmatmul.f32.gmra.mxu0 %v3410
    %v3589 = vpop.f32.mrf.mxu0
    %v3590 = vadd.f32 0.0, %v3589
    %3591 = vdwg.mxu0
    %3592 = vmatpush.msra.mxu0 %v374
    %3593 = vmatpush.msra.mxu0 %v366
    %3594 = vmatpush.msra.mxu0 %v358
    %3595 = vmatpush.msra.mxu0 %v350
    %3596 = vmatpush.msra.mxu0 %v342
    %3597 = vmatpush.msra.mxu0 %v334
    %3598 = vmatpush.msra.mxu0 %v326
    %3599 = vmatpush.msra.mxu0 %v318
    %3600 = vmatpush.msra.mxu0 %v310
    %3601 = vmatpush.msra.mxu0 %v302
    %3602 = vmatpush.msra.mxu0 %v294
    %3603 = vmatpush.msra.mxu0 %v286
    %3604 = vmatpush.msra.mxu0 %v278
    %3605 = vmatpush.msra.mxu0 %v270
    %3606 = vmatpush.msra.mxu0 %v262
    %3607 = vmatpush.msra.mxu0 %v254
    %3608 = vmatmul.f32.gmra.mxu0 %v3411
    %v3609 = vpop.f32.mrf.mxu0
    %v3610 = vadd.f32 %v3590, %v3609
    %3611 = vdwg.mxu0
    %3612 = vmatpush.msra.mxu0 %v247
    %3613 = vmatpush.msra.mxu0 %v239
    %3614 = vmatpush.msra.mxu0 %v231
    %3615 = vmatpush.msra.mxu0 %v223
    %3616 = vmatpush.msra.mxu0 %v215
    %3617 = vmatpush.msra.mxu0 %v207
    %3618 = vmatpush.msra.mxu0 %v199
    %3619 = vmatpush.msra.mxu0 %v191
    %3620 = vmatpush.msra.mxu0 %v183
    %3621 = vmatpush.msra.mxu0 %v175
    %3622 = vmatpush.msra.mxu0 %v167
    %3623 = vmatpush.msra.mxu0 %v159
    %3624 = vmatpush.msra.mxu0 %v151
    %3625 = vmatpush.msra.mxu0 %v143
    %3626 = vmatpush.msra.mxu0 %v135
    %3627 = vmatpush.msra.mxu0 %v127
    %3628 = vmatmul.f32.gmra.mxu0 %v3410
    %v3629 = vpop.f32.mrf.mxu0
    %v3630 = vadd.f32 0.0, %v3629
    %3631 = vdwg.mxu0
    %3632 = vmatpush.msra.mxu0 %v375
    %3633 = vmatpush.msra.mxu0 %v367
    %3634 = vmatpush.msra.mxu0 %v359
    %3635 = vmatpush.msra.mxu0 %v351
    %3636 = vmatpush.msra.mxu0 %v343
    %3637 = vmatpush.msra.mxu0 %v335
    %3638 = vmatpush.msra.mxu0 %v327
    %3639 = vmatpush.msra.mxu0 %v319
    %3640 = vmatpush.msra.mxu0 %v311
    %3641 = vmatpush.msra.mxu0 %v303
    %3642 = vmatpush.msra.mxu0 %v295
    %3643 = vmatpush.msra.mxu0 %v287
    %3644 = vmatpush.msra.mxu0 %v279
    %3645 = vmatpush.msra.mxu0 %v271
    %3646 = vmatpush.msra.mxu0 %v263
    %3647 = vmatpush.msra.mxu0 %v255
    %3648 = vmatmul.f32.gmra.mxu0 %v3411
    %v3649 = vpop.f32.mrf.mxu0
    %v3650 = vadd.f32 %v3630, %v3649
    %3651 = vdwg.mxu0
    %3652 = vmatpush.msra.mxu0 %v248
    %3653 = vmatpush.msra.mxu0 %v240
    %3654 = vmatpush.msra.mxu0 %v232
    %3655 = vmatpush.msra.mxu0 %v224
    %3656 = vmatpush.msra.mxu0 %v216
    %3657 = vmatpush.msra.mxu0 %v208
    %3658 = vmatpush.msra.mxu0 %v200
    %3659 = vmatpush.msra.mxu0 %v192
    %3660 = vmatpush.msra.mxu0 %v184
    %3661 = vmatpush.msra.mxu0 %v176
    %3662 = vmatpush.msra.mxu0 %v168
    %3663 = vmatpush.msra.mxu0 %v160
    %3664 = vmatpush.msra.mxu0 %v152
    %3665 = vmatpush.msra.mxu0 %v144
    %3666 = vmatpush.msra.mxu0 %v136
    %3667 = vmatpush.msra.mxu0 %v128
    %3668 = vmatmul.f32.gmra.mxu0 %v3410
    %v3669 = vpop.f32.mrf.mxu0
    %v3670 = vadd.f32 0.0, %v3669
    %3671 = vdwg.mxu0
    %3672 = vmatpush.msra.mxu0 %v376
    %3673 = vmatpush.msra.mxu0 %v368
    %3674 = vmatpush.msra.mxu0 %v360
    %3675 = vmatpush.msra.mxu0 %v352
    %3676 = vmatpush.msra.mxu0 %v344
    %3677 = vmatpush.msra.mxu0 %v336
    %3678 = vmatpush.msra.mxu0 %v328
    %3679 = vmatpush.msra.mxu0 %v320
    %3680 = vmatpush.msra.mxu0 %v312
    %3681 = vmatpush.msra.mxu0 %v304
    %3682 = vmatpush.msra.mxu0 %v296
    %3683 = vmatpush.msra.mxu0 %v288
    %3684 = vmatpush.msra.mxu0 %v280
    %3685 = vmatpush.msra.mxu0 %v272
    %3686 = vmatpush.msra.mxu0 %v264
    %3687 = vmatpush.msra.mxu0 %v256
    %3688 = vmatmul.f32.gmra.mxu0 %v3411
    %v3689 = vpop.f32.mrf.mxu0
    %v3690 = vadd.f32 %v3670, %v3689
    %3691 = vdwg.mxu0
    %3692 = vmatpush.msra.mxu0 %v249
    %3693 = vmatpush.msra.mxu0 %v241
    %3694 = vmatpush.msra.mxu0 %v233
    %3695 = vmatpush.msra.mxu0 %v225
    %3696 = vmatpush.msra.mxu0 %v217
    %3697 = vmatpush.msra.mxu0 %v209
    %3698 = vmatpush.msra.mxu0 %v201
    %3699 = vmatpush.msra.mxu0 %v193
    %3700 = vmatpush.msra.mxu0 %v185
    %3701 = vmatpush.msra.mxu0 %v177
    %3702 = vmatpush.msra.mxu0 %v169
    %3703 = vmatpush.msra.mxu0 %v161
    %3704 = vmatpush.msra.mxu0 %v153
    %3705 = vmatpush.msra.mxu0 %v145
    %3706 = vmatpush.msra.mxu0 %v137
    %3707 = vmatpush.msra.mxu0 %v129
    %3708 = vmatmul.f32.gmra.mxu0 %v3410
    %v3709 = vpop.f32.mrf.mxu0
    %v3710 = vadd.f32 0.0, %v3709
    %3711 = vdwg.mxu0
    %3712 = vmatpush.msra.mxu0 %v377
    %3713 = vmatpush.msra.mxu0 %v369
    %3714 = vmatpush.msra.mxu0 %v361
    %3715 = vmatpush.msra.mxu0 %v353
    %3716 = vmatpush.msra.mxu0 %v345
    %3717 = vmatpush.msra.mxu0 %v337
    %3718 = vmatpush.msra.mxu0 %v329
    %3719 = vmatpush.msra.mxu0 %v321
    %3720 = vmatpush.msra.mxu0 %v313
    %3721 = vmatpush.msra.mxu0 %v305
    %3722 = vmatpush.msra.mxu0 %v297
    %3723 = vmatpush.msra.mxu0 %v289
    %3724 = vmatpush.msra.mxu0 %v281
    %3725 = vmatpush.msra.mxu0 %v273
    %3726 = vmatpush.msra.mxu0 %v265
    %3727 = vmatpush.msra.mxu0 %v257
    %3728 = vmatmul.f32.gmra.mxu0 %v3411
    %v3729 = vpop.f32.mrf.mxu0
    %v3730 = vadd.f32 %v3710, %v3729
    %3731 = vdwg.mxu0
    %v3732 = vadd.f32 %v3402, %v3450
    %v3733 = vadd.f32 %v3403, %v3490
    %v3734 = vadd.f32 %v3404, %v3530
    %v3735 = vadd.f32 %v3405, %v3570
    %v3736 = vadd.f32 %v3406, %v3610
    %v3737 = vadd.f32 %v3407, %v3650
    %v3738 = vadd.f32 %v3408, %v3690
    %v3739 = vadd.f32 %v3409, %v3730
    %v3740 = vld [vmem:[#allocation3] sm:$0xff]
    %v3741 = vld [vmem:[#allocation3 + $0x8] sm:$0xff]
    %v3742 = vxor.u32 %v3732, 2147483648
    %v3743 = vxor.u32 %v3733, 2147483648
    %v3744 = vmul.f32 %v3742, 1.442695
    %v3745 = vpow.pop %v3744
    %v3746 = vmul.f32 %v3743, 1.442695
    %v3747 = vpow.pop %v3746
    %v3748 = vadd.f32 %v3745, 1.0
    %v3749 = vadd.f32 %v3747, 1.0
    %v3750 = vrcp.pop %v3748
    %v3751 = vmul.f32 %v3748, %v3750
    %v3752 = vsub.f32 1.0, %v3751
    %v3753 = vmul.f32 %v3750, %v3752
    %v3754 = vadd.f32 %v3750, %v3753
    %vm3755 = vweird.f32 %v3748
    %vm3756 = vweird.f32 %v3750
    %vm3757 = vmor %vm3755, %vm3756
    %v3758 = vsel %vm3757, %v3750, %v3754
    %v3759 = vand.u32 2147483647, %v3748
    %vm3760 = vcmp.eq.f32.partialorder %v3759, 8.507059e+37
    %v3761 = vand.u32 %v3748, 2147483648
    %v3762 = vor.u32 1.1754944e-38, %v3761
    %v3763 = vsel %vm3760, %v3762, %v3758
    %v3764 = vmul.f32 1.0, %v3763
    %v3765 = vrcp.pop %v3749
    %v3766 = vmul.f32 %v3749, %v3765
    %v3767 = vsub.f32 1.0, %v3766
    %v3768 = vmul.f32 %v3765, %v3767
    %v3769 = vadd.f32 %v3765, %v3768
    %vm3770 = vweird.f32 %v3749
    %vm3771 = vweird.f32 %v3765
    %vm3772 = vmor %vm3770, %vm3771
    %v3773 = vsel %vm3772, %v3765, %v3769
    %v3774 = vand.u32 2147483647, %v3749
    %vm3775 = vcmp.eq.f32.partialorder %v3774, 8.507059e+37
    %v3776 = vand.u32 %v3749, 2147483648
    %v3777 = vor.u32 1.1754944e-38, %v3776
    %v3778 = vsel %vm3775, %v3777, %v3773
    %v3779 = vmul.f32 1.0, %v3778
    %v3780 = vxor.u32 %v3734, 2147483648
    %v3781 = vxor.u32 %v3735, 2147483648
    %v3782 = vmul.f32 %v3780, 1.442695
    %v3783 = vpow.pop %v3782
    %v3784 = vmul.f32 %v3781, 1.442695
    %v3785 = vpow.pop %v3784
    %v3786 = vadd.f32 %v3783, 1.0
    %v3787 = vadd.f32 %v3785, 1.0
    %v3788 = vrcp.pop %v3786
    %v3789 = vmul.f32 %v3786, %v3788
    %v3790 = vsub.f32 1.0, %v3789
    %v3791 = vmul.f32 %v3788, %v3790
    %v3792 = vadd.f32 %v3788, %v3791
    %vm3793 = vweird.f32 %v3786
    %vm3794 = vweird.f32 %v3788
    %vm3795 = vmor %vm3793, %vm3794
    %v3796 = vsel %vm3795, %v3788, %v3792
    %v3797 = vand.u32 2147483647, %v3786
    %vm3798 = vcmp.eq.f32.partialorder %v3797, 8.507059e+37
    %v3799 = vand.u32 %v3786, 2147483648
    %v3800 = vor.u32 1.1754944e-38, %v3799
    %v3801 = vsel %vm3798, %v3800, %v3796
    %v3802 = vmul.f32 1.0, %v3801
    %v3803 = vrcp.pop %v3787
    %v3804 = vmul.f32 %v3787, %v3803
    %v3805 = vsub.f32 1.0, %v3804
    %v3806 = vmul.f32 %v3803, %v3805
    %v3807 = vadd.f32 %v3803, %v3806
    %vm3808 = vweird.f32 %v3787
    %vm3809 = vweird.f32 %v3803
    %vm3810 = vmor %vm3808, %vm3809
    %v3811 = vsel %vm3810, %v3803, %v3807
    %v3812 = vand.u32 2147483647, %v3787
    %vm3813 = vcmp.eq.f32.partialorder %v3812, 8.507059e+37
    %v3814 = vand.u32 %v3787, 2147483648
    %v3815 = vor.u32 1.1754944e-38, %v3814
    %v3816 = vsel %vm3813, %v3815, %v3811
    %v3817 = vmul.f32 1.0, %v3816
    %v3818 = vtanh.pop %v3736
    %v3819 = vtanh.pop %v3737
    %v3820 = vxor.u32 %v3738, 2147483648
    %v3821 = vxor.u32 %v3739, 2147483648
    %v3822 = vmul.f32 %v3820, 1.442695
    %v3823 = vpow.pop %v3822
    %v3824 = vmul.f32 %v3821, 1.442695
    %v3825 = vpow.pop %v3824
    %v3826 = vadd.f32 %v3823, 1.0
    %v3827 = vadd.f32 %v3825, 1.0
    %v3828 = vrcp.pop %v3826
    %v3829 = vmul.f32 %v3826, %v3828
    %v3830 = vsub.f32 1.0, %v3829
    %v3831 = vmul.f32 %v3828, %v3830
    %v3832 = vadd.f32 %v3828, %v3831
    %vm3833 = vweird.f32 %v3826
    %vm3834 = vweird.f32 %v3828
    %vm3835 = vmor %vm3833, %vm3834
    %v3836 = vsel %vm3835, %v3828, %v3832
    %v3837 = vand.u32 2147483647, %v3826
    %vm3838 = vcmp.eq.f32.partialorder %v3837, 8.507059e+37
    %v3839 = vand.u32 %v3826, 2147483648
    %v3840 = vor.u32 1.1754944e-38, %v3839
    %v3841 = vsel %vm3838, %v3840, %v3836
    %v3842 = vmul.f32 1.0, %v3841
    %v3843 = vrcp.pop %v3827
    %v3844 = vmul.f32 %v3827, %v3843
    %v3845 = vsub.f32 1.0, %v3844
    %v3846 = vmul.f32 %v3843, %v3845
    %v3847 = vadd.f32 %v3843, %v3846
    %vm3848 = vweird.f32 %v3827
    %vm3849 = vweird.f32 %v3843
    %vm3850 = vmor %vm3848, %vm3849
    %v3851 = vsel %vm3850, %v3843, %v3847
    %v3852 = vand.u32 2147483647, %v3827
    %vm3853 = vcmp.eq.f32.partialorder %v3852, 8.507059e+37
    %v3854 = vand.u32 %v3827, 2147483648
    %v3855 = vor.u32 1.1754944e-38, %v3854
    %v3856 = vsel %vm3853, %v3855, %v3851
    %v3857 = vmul.f32 1.0, %v3856
    %v3858 = vmul.f32 %v3802, %v3740
    %v3859 = vmul.f32 %v3817, %v3741
    %v3860 = vmul.f32 %v3764, %v3818
    %v3861 = vmul.f32 %v3779, %v3819
    %v3862 = vadd.f32 %v3858, %v3860
    %v3863 = vadd.f32 %v3859, %v3861
    %v3864 = vtanh.pop %v3862
    %v3865 = vtanh.pop %v3863
    %v3866 = vmul.f32 %v3842, %v3864
    %v3867 = vmul.f32 %v3857, %v3865
    %3868 = vst [vmem:[#allocation3] sm:$0xff] %v3862
    %3869 = vst [vmem:[#allocation3 + $0x8] sm:$0xff] %v3863
    %3870 = vst [vmem:[#allocation2] sm:$0xff] %v3866
    %3871 = vst [vmem:[#allocation2 + $0x8] sm:$0xff] %v3867
    %v3872 = vld [vmem:[#allocation2] sm:$0xff]
    %v3873 = vld [vmem:[#allocation2 + $0x8] sm:$0xff]
    %v3874 = vld [vmem:[#allocation2 + $0x10] sm:$0xff]
    %v3875 = vld [vmem:[#allocation2 + $0x18] sm:$0xff]
    %3876 = vmatpush.msra.mxu0 %v498
    %3877 = vmatpush.msra.mxu0 %v490
    %3878 = vmatpush.msra.mxu0 %v482
    %3879 = vmatpush.msra.mxu0 %v474
    %3880 = vmatpush.msra.mxu0 %v466
    %3881 = vmatpush.msra.mxu0 %v458
    %3882 = vmatpush.msra.mxu0 %v450
    %3883 = vmatpush.msra.mxu0 %v442
    %3884 = vmatpush.msra.mxu0 %v434
    %3885 = vmatpush.msra.mxu0 %v426
    %3886 = vmatpush.msra.mxu0 %v418
    %3887 = vmatpush.msra.mxu0 %v410
    %3888 = vmatpush.msra.mxu0 %v402
    %3889 = vmatpush.msra.mxu0 %v394
    %3890 = vmatpush.msra.mxu0 %v386
    %3891 = vmatpush.msra.mxu0 %v378
    %3892 = vmatmul.f32.gmra.mxu0 %v3872
    %v3893 = vpop.f32.mrf.mxu0
    %v3894 = vadd.f32 %v1366, %v3893
    %3895 = vdwg.mxu0
    %3896 = vmatpush.msra.mxu0 %v626
    %3897 = vmatpush.msra.mxu0 %v618
    %3898 = vmatpush.msra.mxu0 %v610
    %3899 = vmatpush.msra.mxu0 %v602
    %3900 = vmatpush.msra.mxu0 %v594
    %3901 = vmatpush.msra.mxu0 %v586
    %3902 = vmatpush.msra.mxu0 %v578
    %3903 = vmatpush.msra.mxu0 %v570
    %3904 = vmatpush.msra.mxu0 %v562
    %3905 = vmatpush.msra.mxu0 %v554
    %3906 = vmatpush.msra.mxu0 %v546
    %3907 = vmatpush.msra.mxu0 %v538
    %3908 = vmatpush.msra.mxu0 %v530
    %3909 = vmatpush.msra.mxu0 %v522
    %3910 = vmatpush.msra.mxu0 %v514
    %3911 = vmatpush.msra.mxu0 %v506
    %3912 = vmatmul.f32.gmra.mxu0 %v3873
    %v3913 = vpop.f32.mrf.mxu0
    %v3914 = vadd.f32 %v3894, %v3913
    %3915 = vdwg.mxu0
    %3916 = vmatpush.msra.mxu0 %v754
    %3917 = vmatpush.msra.mxu0 %v746
    %3918 = vmatpush.msra.mxu0 %v738
    %3919 = vmatpush.msra.mxu0 %v730
    %3920 = vmatpush.msra.mxu0 %v722
    %3921 = vmatpush.msra.mxu0 %v714
    %3922 = vmatpush.msra.mxu0 %v706
    %3923 = vmatpush.msra.mxu0 %v698
    %3924 = vmatpush.msra.mxu0 %v690
    %3925 = vmatpush.msra.mxu0 %v682
    %3926 = vmatpush.msra.mxu0 %v674
    %3927 = vmatpush.msra.mxu0 %v666
    %3928 = vmatpush.msra.mxu0 %v658
    %3929 = vmatpush.msra.mxu0 %v650
    %3930 = vmatpush.msra.mxu0 %v642
    %3931 = vmatpush.msra.mxu0 %v634
    %3932 = vmatmul.f32.gmra.mxu0 %v3874
    %v3933 = vpop.f32.mrf.mxu0
    %v3934 = vadd.f32 %v3914, %v3933
    %3935 = vdwg.mxu0
    %3936 = vmatpush.msra.mxu0 %v882
    %3937 = vmatpush.msra.mxu0 %v874
    %3938 = vmatpush.msra.mxu0 %v866
    %3939 = vmatpush.msra.mxu0 %v858
    %3940 = vmatpush.msra.mxu0 %v850
    %3941 = vmatpush.msra.mxu0 %v842
    %3942 = vmatpush.msra.mxu0 %v834
    %3943 = vmatpush.msra.mxu0 %v826
    %3944 = vmatpush.msra.mxu0 %v818
    %3945 = vmatpush.msra.mxu0 %v810
    %3946 = vmatpush.msra.mxu0 %v802
    %3947 = vmatpush.msra.mxu0 %v794
    %3948 = vmatpush.msra.mxu0 %v786
    %3949 = vmatpush.msra.mxu0 %v778
    %3950 = vmatpush.msra.mxu0 %v770
    %3951 = vmatpush.msra.mxu0 %v762
    %3952 = vmatmul.f32.gmra.mxu0 %v3875
    %v3953 = vpop.f32.mrf.mxu0
    %v3954 = vadd.f32 %v3934, %v3953
    %3955 = vdwg.mxu0
    %3956 = vmatpush.msra.mxu0 %v499
    %3957 = vmatpush.msra.mxu0 %v491
    %3958 = vmatpush.msra.mxu0 %v483
    %3959 = vmatpush.msra.mxu0 %v475
    %3960 = vmatpush.msra.mxu0 %v467
    %3961 = vmatpush.msra.mxu0 %v459
    %3962 = vmatpush.msra.mxu0 %v451
    %3963 = vmatpush.msra.mxu0 %v443
    %3964 = vmatpush.msra.mxu0 %v435
    %3965 = vmatpush.msra.mxu0 %v427
    %3966 = vmatpush.msra.mxu0 %v419
    %3967 = vmatpush.msra.mxu0 %v411
    %3968 = vmatpush.msra.mxu0 %v403
    %3969 = vmatpush.msra.mxu0 %v395
    %3970 = vmatpush.msra.mxu0 %v387
    %3971 = vmatpush.msra.mxu0 %v379
    %3972 = vmatmul.f32.gmra.mxu0 %v3872
    %v3973 = vpop.f32.mrf.mxu0
    %v3974 = vadd.f32 %v1367, %v3973
    %3975 = vdwg.mxu0
    %3976 = vmatpush.msra.mxu0 %v627
    %3977 = vmatpush.msra.mxu0 %v619
    %3978 = vmatpush.msra.mxu0 %v611
    %3979 = vmatpush.msra.mxu0 %v603
    %3980 = vmatpush.msra.mxu0 %v595
    %3981 = vmatpush.msra.mxu0 %v587
    %3982 = vmatpush.msra.mxu0 %v579
    %3983 = vmatpush.msra.mxu0 %v571
    %3984 = vmatpush.msra.mxu0 %v563
    %3985 = vmatpush.msra.mxu0 %v555
    %3986 = vmatpush.msra.mxu0 %v547
    %3987 = vmatpush.msra.mxu0 %v539
    %3988 = vmatpush.msra.mxu0 %v531
    %3989 = vmatpush.msra.mxu0 %v523
    %3990 = vmatpush.msra.mxu0 %v515
    %3991 = vmatpush.msra.mxu0 %v507
    %3992 = vmatmul.f32.gmra.mxu0 %v3873
    %v3993 = vpop.f32.mrf.mxu0
    %v3994 = vadd.f32 %v3974, %v3993
    %3995 = vdwg.mxu0
    %3996 = vmatpush.msra.mxu0 %v755
    %3997 = vmatpush.msra.mxu0 %v747
    %3998 = vmatpush.msra.mxu0 %v739
    %3999 = vmatpush.msra.mxu0 %v731
    %4000 = vmatpush.msra.mxu0 %v723
    %4001 = vmatpush.msra.mxu0 %v715
    %4002 = vmatpush.msra.mxu0 %v707
    %4003 = vmatpush.msra.mxu0 %v699
    %4004 = vmatpush.msra.mxu0 %v691
    %4005 = vmatpush.msra.mxu0 %v683
    %4006 = vmatpush.msra.mxu0 %v675
    %4007 = vmatpush.msra.mxu0 %v667
    %4008 = vmatpush.msra.mxu0 %v659
    %4009 = vmatpush.msra.mxu0 %v651
    %4010 = vmatpush.msra.mxu0 %v643
    %4011 = vmatpush.msra.mxu0 %v635
    %4012 = vmatmul.f32.gmra.mxu0 %v3874
    %v4013 = vpop.f32.mrf.mxu0
    %v4014 = vadd.f32 %v3994, %v4013
    %4015 = vdwg.mxu0
    %4016 = vmatpush.msra.mxu0 %v883
    %4017 = vmatpush.msra.mxu0 %v875
    %4018 = vmatpush.msra.mxu0 %v867
    %4019 = vmatpush.msra.mxu0 %v859
    %4020 = vmatpush.msra.mxu0 %v851
    %4021 = vmatpush.msra.mxu0 %v843
    %4022 = vmatpush.msra.mxu0 %v835
    %4023 = vmatpush.msra.mxu0 %v827
    %4024 = vmatpush.msra.mxu0 %v819
    %4025 = vmatpush.msra.mxu0 %v811
    %4026 = vmatpush.msra.mxu0 %v803
    %4027 = vmatpush.msra.mxu0 %v795
    %4028 = vmatpush.msra.mxu0 %v787
    %4029 = vmatpush.msra.mxu0 %v779
    %4030 = vmatpush.msra.mxu0 %v771
    %4031 = vmatpush.msra.mxu0 %v763
    %4032 = vmatmul.f32.gmra.mxu0 %v3875
    %v4033 = vpop.f32.mrf.mxu0
    %v4034 = vadd.f32 %v4014, %v4033
    %4035 = vdwg.mxu0
    %4036 = vmatpush.msra.mxu0 %v500
    %4037 = vmatpush.msra.mxu0 %v492
    %4038 = vmatpush.msra.mxu0 %v484
    %4039 = vmatpush.msra.mxu0 %v476
    %4040 = vmatpush.msra.mxu0 %v468
    %4041 = vmatpush.msra.mxu0 %v460
    %4042 = vmatpush.msra.mxu0 %v452
    %4043 = vmatpush.msra.mxu0 %v444
    %4044 = vmatpush.msra.mxu0 %v436
    %4045 = vmatpush.msra.mxu0 %v428
    %4046 = vmatpush.msra.mxu0 %v420
    %4047 = vmatpush.msra.mxu0 %v412
    %4048 = vmatpush.msra.mxu0 %v404
    %4049 = vmatpush.msra.mxu0 %v396
    %4050 = vmatpush.msra.mxu0 %v388
    %4051 = vmatpush.msra.mxu0 %v380
    %4052 = vmatmul.f32.gmra.mxu0 %v3872
    %v4053 = vpop.f32.mrf.mxu0
    %v4054 = vadd.f32 %v1368, %v4053
    %4055 = vdwg.mxu0
    %4056 = vmatpush.msra.mxu0 %v628
    %4057 = vmatpush.msra.mxu0 %v620
    %4058 = vmatpush.msra.mxu0 %v612
    %4059 = vmatpush.msra.mxu0 %v604
    %4060 = vmatpush.msra.mxu0 %v596
    %4061 = vmatpush.msra.mxu0 %v588
    %4062 = vmatpush.msra.mxu0 %v580
    %4063 = vmatpush.msra.mxu0 %v572
    %4064 = vmatpush.msra.mxu0 %v564
    %4065 = vmatpush.msra.mxu0 %v556
    %4066 = vmatpush.msra.mxu0 %v548
    %4067 = vmatpush.msra.mxu0 %v540
    %4068 = vmatpush.msra.mxu0 %v532
    %4069 = vmatpush.msra.mxu0 %v524
    %4070 = vmatpush.msra.mxu0 %v516
    %4071 = vmatpush.msra.mxu0 %v508
    %4072 = vmatmul.f32.gmra.mxu0 %v3873
    %v4073 = vpop.f32.mrf.mxu0
    %v4074 = vadd.f32 %v4054, %v4073
    %4075 = vdwg.mxu0
    %4076 = vmatpush.msra.mxu0 %v756
    %4077 = vmatpush.msra.mxu0 %v748
    %4078 = vmatpush.msra.mxu0 %v740
    %4079 = vmatpush.msra.mxu0 %v732
    %4080 = vmatpush.msra.mxu0 %v724
    %4081 = vmatpush.msra.mxu0 %v716
    %4082 = vmatpush.msra.mxu0 %v708
    %4083 = vmatpush.msra.mxu0 %v700
    %4084 = vmatpush.msra.mxu0 %v692
    %4085 = vmatpush.msra.mxu0 %v684
    %4086 = vmatpush.msra.mxu0 %v676
    %4087 = vmatpush.msra.mxu0 %v668
    %4088 = vmatpush.msra.mxu0 %v660
    %4089 = vmatpush.msra.mxu0 %v652
    %4090 = vmatpush.msra.mxu0 %v644
    %4091 = vmatpush.msra.mxu0 %v636
    %4092 = vmatmul.f32.gmra.mxu0 %v3874
    %v4093 = vpop.f32.mrf.mxu0
    %v4094 = vadd.f32 %v4074, %v4093
    %4095 = vdwg.mxu0
    %4096 = vmatpush.msra.mxu0 %v884
    %4097 = vmatpush.msra.mxu0 %v876
    %4098 = vmatpush.msra.mxu0 %v868
    %4099 = vmatpush.msra.mxu0 %v860
    %4100 = vmatpush.msra.mxu0 %v852
    %4101 = vmatpush.msra.mxu0 %v844
    %4102 = vmatpush.msra.mxu0 %v836
    %4103 = vmatpush.msra.mxu0 %v828
    %4104 = vmatpush.msra.mxu0 %v820
    %4105 = vmatpush.msra.mxu0 %v812
    %4106 = vmatpush.msra.mxu0 %v804
    %4107 = vmatpush.msra.mxu0 %v796
    %4108 = vmatpush.msra.mxu0 %v788
    %4109 = vmatpush.msra.mxu0 %v780
    %4110 = vmatpush.msra.mxu0 %v772
    %4111 = vmatpush.msra.mxu0 %v764
    %4112 = vmatmul.f32.gmra.mxu0 %v3875
    %v4113 = vpop.f32.mrf.mxu0
    %v4114 = vadd.f32 %v4094, %v4113
    %4115 = vdwg.mxu0
    %4116 = vmatpush.msra.mxu0 %v501
    %4117 = vmatpush.msra.mxu0 %v493
    %4118 = vmatpush.msra.mxu0 %v485
    %4119 = vmatpush.msra.mxu0 %v477
    %4120 = vmatpush.msra.mxu0 %v469
    %4121 = vmatpush.msra.mxu0 %v461
    %4122 = vmatpush.msra.mxu0 %v453
    %4123 = vmatpush.msra.mxu0 %v445
    %4124 = vmatpush.msra.mxu0 %v437
    %4125 = vmatpush.msra.mxu0 %v429
    %4126 = vmatpush.msra.mxu0 %v421
    %4127 = vmatpush.msra.mxu0 %v413
    %4128 = vmatpush.msra.mxu0 %v405
    %4129 = vmatpush.msra.mxu0 %v397
    %4130 = vmatpush.msra.mxu0 %v389
    %4131 = vmatpush.msra.mxu0 %v381
    %4132 = vmatmul.f32.gmra.mxu0 %v3872
    %v4133 = vpop.f32.mrf.mxu0
    %v4134 = vadd.f32 %v1369, %v4133
    %4135 = vdwg.mxu0
    %4136 = vmatpush.msra.mxu0 %v629
    %4137 = vmatpush.msra.mxu0 %v621
    %4138 = vmatpush.msra.mxu0 %v613
    %4139 = vmatpush.msra.mxu0 %v605
    %4140 = vmatpush.msra.mxu0 %v597
    %4141 = vmatpush.msra.mxu0 %v589
    %4142 = vmatpush.msra.mxu0 %v581
    %4143 = vmatpush.msra.mxu0 %v573
    %4144 = vmatpush.msra.mxu0 %v565
    %4145 = vmatpush.msra.mxu0 %v557
    %4146 = vmatpush.msra.mxu0 %v549
    %4147 = vmatpush.msra.mxu0 %v541
    %4148 = vmatpush.msra.mxu0 %v533
    %4149 = vmatpush.msra.mxu0 %v525
    %4150 = vmatpush.msra.mxu0 %v517
    %4151 = vmatpush.msra.mxu0 %v509
    %4152 = vmatmul.f32.gmra.mxu0 %v3873
    %v4153 = vpop.f32.mrf.mxu0
    %v4154 = vadd.f32 %v4134, %v4153
    %4155 = vdwg.mxu0
    %4156 = vmatpush.msra.mxu0 %v757
    %4157 = vmatpush.msra.mxu0 %v749
    %4158 = vmatpush.msra.mxu0 %v741
    %4159 = vmatpush.msra.mxu0 %v733
    %4160 = vmatpush.msra.mxu0 %v725
    %4161 = vmatpush.msra.mxu0 %v717
    %4162 = vmatpush.msra.mxu0 %v709
    %4163 = vmatpush.msra.mxu0 %v701
    %4164 = vmatpush.msra.mxu0 %v693
    %4165 = vmatpush.msra.mxu0 %v685
    %4166 = vmatpush.msra.mxu0 %v677
    %4167 = vmatpush.msra.mxu0 %v669
    %4168 = vmatpush.msra.mxu0 %v661
    %4169 = vmatpush.msra.mxu0 %v653
    %4170 = vmatpush.msra.mxu0 %v645
    %4171 = vmatpush.msra.mxu0 %v637
    %4172 = vmatmul.f32.gmra.mxu0 %v3874
    %v4173 = vpop.f32.mrf.mxu0
    %v4174 = vadd.f32 %v4154, %v4173
    %4175 = vdwg.mxu0
    %4176 = vmatpush.msra.mxu0 %v885
    %4177 = vmatpush.msra.mxu0 %v877
    %4178 = vmatpush.msra.mxu0 %v869
    %4179 = vmatpush.msra.mxu0 %v861
    %4180 = vmatpush.msra.mxu0 %v853
    %4181 = vmatpush.msra.mxu0 %v845
    %4182 = vmatpush.msra.mxu0 %v837
    %4183 = vmatpush.msra.mxu0 %v829
    %4184 = vmatpush.msra.mxu0 %v821
    %4185 = vmatpush.msra.mxu0 %v813
    %4186 = vmatpush.msra.mxu0 %v805
    %4187 = vmatpush.msra.mxu0 %v797
    %4188 = vmatpush.msra.mxu0 %v789
    %4189 = vmatpush.msra.mxu0 %v781
    %4190 = vmatpush.msra.mxu0 %v773
    %4191 = vmatpush.msra.mxu0 %v765
    %4192 = vmatmul.f32.gmra.mxu0 %v3875
    %v4193 = vpop.f32.mrf.mxu0
    %v4194 = vadd.f32 %v4174, %v4193
    %4195 = vdwg.mxu0
    %4196 = vmatpush.msra.mxu0 %v502
    %4197 = vmatpush.msra.mxu0 %v494
    %4198 = vmatpush.msra.mxu0 %v486
    %4199 = vmatpush.msra.mxu0 %v478
    %4200 = vmatpush.msra.mxu0 %v470
    %4201 = vmatpush.msra.mxu0 %v462
    %4202 = vmatpush.msra.mxu0 %v454
    %4203 = vmatpush.msra.mxu0 %v446
    %4204 = vmatpush.msra.mxu0 %v438
    %4205 = vmatpush.msra.mxu0 %v430
    %4206 = vmatpush.msra.mxu0 %v422
    %4207 = vmatpush.msra.mxu0 %v414
    %4208 = vmatpush.msra.mxu0 %v406
    %4209 = vmatpush.msra.mxu0 %v398
    %4210 = vmatpush.msra.mxu0 %v390
    %4211 = vmatpush.msra.mxu0 %v382
    %4212 = vmatmul.f32.gmra.mxu0 %v3872
    %v4213 = vpop.f32.mrf.mxu0
    %v4214 = vadd.f32 %v1370, %v4213
    %4215 = vdwg.mxu0
    %4216 = vmatpush.msra.mxu0 %v630
    %4217 = vmatpush.msra.mxu0 %v622
    %4218 = vmatpush.msra.mxu0 %v614
    %4219 = vmatpush.msra.mxu0 %v606
    %4220 = vmatpush.msra.mxu0 %v598
    %4221 = vmatpush.msra.mxu0 %v590
    %4222 = vmatpush.msra.mxu0 %v582
    %4223 = vmatpush.msra.mxu0 %v574
    %4224 = vmatpush.msra.mxu0 %v566
    %4225 = vmatpush.msra.mxu0 %v558
    %4226 = vmatpush.msra.mxu0 %v550
    %4227 = vmatpush.msra.mxu0 %v542
    %4228 = vmatpush.msra.mxu0 %v534
    %4229 = vmatpush.msra.mxu0 %v526
    %4230 = vmatpush.msra.mxu0 %v518
    %4231 = vmatpush.msra.mxu0 %v510
    %4232 = vmatmul.f32.gmra.mxu0 %v3873
    %v4233 = vpop.f32.mrf.mxu0
    %v4234 = vadd.f32 %v4214, %v4233
    %4235 = vdwg.mxu0
    %4236 = vmatpush.msra.mxu0 %v758
    %4237 = vmatpush.msra.mxu0 %v750
    %4238 = vmatpush.msra.mxu0 %v742
    %4239 = vmatpush.msra.mxu0 %v734
    %4240 = vmatpush.msra.mxu0 %v726
    %4241 = vmatpush.msra.mxu0 %v718
    %4242 = vmatpush.msra.mxu0 %v710
    %4243 = vmatpush.msra.mxu0 %v702
    %4244 = vmatpush.msra.mxu0 %v694
    %4245 = vmatpush.msra.mxu0 %v686
    %4246 = vmatpush.msra.mxu0 %v678
    %4247 = vmatpush.msra.mxu0 %v670
    %4248 = vmatpush.msra.mxu0 %v662
    %4249 = vmatpush.msra.mxu0 %v654
    %4250 = vmatpush.msra.mxu0 %v646
    %4251 = vmatpush.msra.mxu0 %v638
    %4252 = vmatmul.f32.gmra.mxu0 %v3874
    %v4253 = vpop.f32.mrf.mxu0
    %v4254 = vadd.f32 %v4234, %v4253
    %4255 = vdwg.mxu0
    %4256 = vmatpush.msra.mxu0 %v886
    %4257 = vmatpush.msra.mxu0 %v878
    %4258 = vmatpush.msra.mxu0 %v870
    %4259 = vmatpush.msra.mxu0 %v862
    %4260 = vmatpush.msra.mxu0 %v854
    %4261 = vmatpush.msra.mxu0 %v846
    %4262 = vmatpush.msra.mxu0 %v838
    %4263 = vmatpush.msra.mxu0 %v830
    %4264 = vmatpush.msra.mxu0 %v822
    %4265 = vmatpush.msra.mxu0 %v814
    %4266 = vmatpush.msra.mxu0 %v806
    %4267 = vmatpush.msra.mxu0 %v798
    %4268 = vmatpush.msra.mxu0 %v790
    %4269 = vmatpush.msra.mxu0 %v782
    %4270 = vmatpush.msra.mxu0 %v774
    %4271 = vmatpush.msra.mxu0 %v766
    %4272 = vmatmul.f32.gmra.mxu0 %v3875
    %v4273 = vpop.f32.mrf.mxu0
    %v4274 = vadd.f32 %v4254, %v4273
    %4275 = vdwg.mxu0
    %4276 = vmatpush.msra.mxu0 %v503
    %4277 = vmatpush.msra.mxu0 %v495
    %4278 = vmatpush.msra.mxu0 %v487
    %4279 = vmatpush.msra.mxu0 %v479
    %4280 = vmatpush.msra.mxu0 %v471
    %4281 = vmatpush.msra.mxu0 %v463
    %4282 = vmatpush.msra.mxu0 %v455
    %4283 = vmatpush.msra.mxu0 %v447
    %4284 = vmatpush.msra.mxu0 %v439
    %4285 = vmatpush.msra.mxu0 %v431
    %4286 = vmatpush.msra.mxu0 %v423
    %4287 = vmatpush.msra.mxu0 %v415
    %4288 = vmatpush.msra.mxu0 %v407
    %4289 = vmatpush.msra.mxu0 %v399
    %4290 = vmatpush.msra.mxu0 %v391
    %4291 = vmatpush.msra.mxu0 %v383
    %4292 = vmatmul.f32.gmra.mxu0 %v3872
    %v4293 = vpop.f32.mrf.mxu0
    %v4294 = vadd.f32 %v1371, %v4293
    %4295 = vdwg.mxu0
    %4296 = vmatpush.msra.mxu0 %v631
    %4297 = vmatpush.msra.mxu0 %v623
    %4298 = vmatpush.msra.mxu0 %v615
    %4299 = vmatpush.msra.mxu0 %v607
    %4300 = vmatpush.msra.mxu0 %v599
    %4301 = vmatpush.msra.mxu0 %v591
    %4302 = vmatpush.msra.mxu0 %v583
    %4303 = vmatpush.msra.mxu0 %v575
    %4304 = vmatpush.msra.mxu0 %v567
    %4305 = vmatpush.msra.mxu0 %v559
    %4306 = vmatpush.msra.mxu0 %v551
    %4307 = vmatpush.msra.mxu0 %v543
    %4308 = vmatpush.msra.mxu0 %v535
    %4309 = vmatpush.msra.mxu0 %v527
    %4310 = vmatpush.msra.mxu0 %v519
    %4311 = vmatpush.msra.mxu0 %v511
    %4312 = vmatmul.f32.gmra.mxu0 %v3873
    %v4313 = vpop.f32.mrf.mxu0
    %v4314 = vadd.f32 %v4294, %v4313
    %4315 = vdwg.mxu0
    %4316 = vmatpush.msra.mxu0 %v759
    %4317 = vmatpush.msra.mxu0 %v751
    %4318 = vmatpush.msra.mxu0 %v743
    %4319 = vmatpush.msra.mxu0 %v735
    %4320 = vmatpush.msra.mxu0 %v727
    %4321 = vmatpush.msra.mxu0 %v719
    %4322 = vmatpush.msra.mxu0 %v711
    %4323 = vmatpush.msra.mxu0 %v703
    %4324 = vmatpush.msra.mxu0 %v695
    %4325 = vmatpush.msra.mxu0 %v687
    %4326 = vmatpush.msra.mxu0 %v679
    %4327 = vmatpush.msra.mxu0 %v671
    %4328 = vmatpush.msra.mxu0 %v663
    %4329 = vmatpush.msra.mxu0 %v655
    %4330 = vmatpush.msra.mxu0 %v647
    %4331 = vmatpush.msra.mxu0 %v639
    %4332 = vmatmul.f32.gmra.mxu0 %v3874
    %v4333 = vpop.f32.mrf.mxu0
    %v4334 = vadd.f32 %v4314, %v4333
    %4335 = vdwg.mxu0
    %4336 = vmatpush.msra.mxu0 %v887
    %4337 = vmatpush.msra.mxu0 %v879
    %4338 = vmatpush.msra.mxu0 %v871
    %4339 = vmatpush.msra.mxu0 %v863
    %4340 = vmatpush.msra.mxu0 %v855
    %4341 = vmatpush.msra.mxu0 %v847
    %4342 = vmatpush.msra.mxu0 %v839
    %4343 = vmatpush.msra.mxu0 %v831
    %4344 = vmatpush.msra.mxu0 %v823
    %4345 = vmatpush.msra.mxu0 %v815
    %4346 = vmatpush.msra.mxu0 %v807
    %4347 = vmatpush.msra.mxu0 %v799
    %4348 = vmatpush.msra.mxu0 %v791
    %4349 = vmatpush.msra.mxu0 %v783
    %4350 = vmatpush.msra.mxu0 %v775
    %4351 = vmatpush.msra.mxu0 %v767
    %4352 = vmatmul.f32.gmra.mxu0 %v3875
    %v4353 = vpop.f32.mrf.mxu0
    %v4354 = vadd.f32 %v4334, %v4353
    %4355 = vdwg.mxu0
    %4356 = vmatpush.msra.mxu0 %v504
    %4357 = vmatpush.msra.mxu0 %v496
    %4358 = vmatpush.msra.mxu0 %v488
    %4359 = vmatpush.msra.mxu0 %v480
    %4360 = vmatpush.msra.mxu0 %v472
    %4361 = vmatpush.msra.mxu0 %v464
    %4362 = vmatpush.msra.mxu0 %v456
    %4363 = vmatpush.msra.mxu0 %v448
    %4364 = vmatpush.msra.mxu0 %v440
    %4365 = vmatpush.msra.mxu0 %v432
    %4366 = vmatpush.msra.mxu0 %v424
    %4367 = vmatpush.msra.mxu0 %v416
    %4368 = vmatpush.msra.mxu0 %v408
    %4369 = vmatpush.msra.mxu0 %v400
    %4370 = vmatpush.msra.mxu0 %v392
    %4371 = vmatpush.msra.mxu0 %v384
    %4372 = vmatmul.f32.gmra.mxu0 %v3872
    %v4373 = vpop.f32.mrf.mxu0
    %v4374 = vadd.f32 %v1372, %v4373
    %4375 = vdwg.mxu0
    %4376 = vmatpush.msra.mxu0 %v632
    %4377 = vmatpush.msra.mxu0 %v624
    %4378 = vmatpush.msra.mxu0 %v616
    %4379 = vmatpush.msra.mxu0 %v608
    %4380 = vmatpush.msra.mxu0 %v600
    %4381 = vmatpush.msra.mxu0 %v592
    %4382 = vmatpush.msra.mxu0 %v584
    %4383 = vmatpush.msra.mxu0 %v576
    %4384 = vmatpush.msra.mxu0 %v568
    %4385 = vmatpush.msra.mxu0 %v560
    %4386 = vmatpush.msra.mxu0 %v552
    %4387 = vmatpush.msra.mxu0 %v544
    %4388 = vmatpush.msra.mxu0 %v536
    %4389 = vmatpush.msra.mxu0 %v528
    %4390 = vmatpush.msra.mxu0 %v520
    %4391 = vmatpush.msra.mxu0 %v512
    %4392 = vmatmul.f32.gmra.mxu0 %v3873
    %v4393 = vpop.f32.mrf.mxu0
    %v4394 = vadd.f32 %v4374, %v4393
    %4395 = vdwg.mxu0
    %4396 = vmatpush.msra.mxu0 %v760
    %4397 = vmatpush.msra.mxu0 %v752
    %4398 = vmatpush.msra.mxu0 %v744
    %4399 = vmatpush.msra.mxu0 %v736
    %4400 = vmatpush.msra.mxu0 %v728
    %4401 = vmatpush.msra.mxu0 %v720
    %4402 = vmatpush.msra.mxu0 %v712
    %4403 = vmatpush.msra.mxu0 %v704
    %4404 = vmatpush.msra.mxu0 %v696
    %4405 = vmatpush.msra.mxu0 %v688
    %4406 = vmatpush.msra.mxu0 %v680
    %4407 = vmatpush.msra.mxu0 %v672
    %4408 = vmatpush.msra.mxu0 %v664
    %4409 = vmatpush.msra.mxu0 %v656
    %4410 = vmatpush.msra.mxu0 %v648
    %4411 = vmatpush.msra.mxu0 %v640
    %4412 = vmatmul.f32.gmra.mxu0 %v3874
    %v4413 = vpop.f32.mrf.mxu0
    %v4414 = vadd.f32 %v4394, %v4413
    %4415 = vdwg.mxu0
    %4416 = vmatpush.msra.mxu0 %v888
    %4417 = vmatpush.msra.mxu0 %v880
    %4418 = vmatpush.msra.mxu0 %v872
    %4419 = vmatpush.msra.mxu0 %v864
    %4420 = vmatpush.msra.mxu0 %v856
    %4421 = vmatpush.msra.mxu0 %v848
    %4422 = vmatpush.msra.mxu0 %v840
    %4423 = vmatpush.msra.mxu0 %v832
    %4424 = vmatpush.msra.mxu0 %v824
    %4425 = vmatpush.msra.mxu0 %v816
    %4426 = vmatpush.msra.mxu0 %v808
    %4427 = vmatpush.msra.mxu0 %v800
    %4428 = vmatpush.msra.mxu0 %v792
    %4429 = vmatpush.msra.mxu0 %v784
    %4430 = vmatpush.msra.mxu0 %v776
    %4431 = vmatpush.msra.mxu0 %v768
    %4432 = vmatmul.f32.gmra.mxu0 %v3875
    %v4433 = vpop.f32.mrf.mxu0
    %v4434 = vadd.f32 %v4414, %v4433
    %4435 = vdwg.mxu0
    %4436 = vmatpush.msra.mxu0 %v505
    %4437 = vmatpush.msra.mxu0 %v497
    %4438 = vmatpush.msra.mxu0 %v489
    %4439 = vmatpush.msra.mxu0 %v481
    %4440 = vmatpush.msra.mxu0 %v473
    %4441 = vmatpush.msra.mxu0 %v465
    %4442 = vmatpush.msra.mxu0 %v457
    %4443 = vmatpush.msra.mxu0 %v449
    %4444 = vmatpush.msra.mxu0 %v441
    %4445 = vmatpush.msra.mxu0 %v433
    %4446 = vmatpush.msra.mxu0 %v425
    %4447 = vmatpush.msra.mxu0 %v417
    %4448 = vmatpush.msra.mxu0 %v409
    %4449 = vmatpush.msra.mxu0 %v401
    %4450 = vmatpush.msra.mxu0 %v393
    %4451 = vmatpush.msra.mxu0 %v385
    %4452 = vmatmul.f32.gmra.mxu0 %v3872
    %v4453 = vpop.f32.mrf.mxu0
    %v4454 = vadd.f32 %v1373, %v4453
    %4455 = vdwg.mxu0
    %4456 = vmatpush.msra.mxu0 %v633
    %4457 = vmatpush.msra.mxu0 %v625
    %4458 = vmatpush.msra.mxu0 %v617
    %4459 = vmatpush.msra.mxu0 %v609
    %4460 = vmatpush.msra.mxu0 %v601
    %4461 = vmatpush.msra.mxu0 %v593
    %4462 = vmatpush.msra.mxu0 %v585
    %4463 = vmatpush.msra.mxu0 %v577
    %4464 = vmatpush.msra.mxu0 %v569
    %4465 = vmatpush.msra.mxu0 %v561
    %4466 = vmatpush.msra.mxu0 %v553
    %4467 = vmatpush.msra.mxu0 %v545
    %4468 = vmatpush.msra.mxu0 %v537
    %4469 = vmatpush.msra.mxu0 %v529
    %4470 = vmatpush.msra.mxu0 %v521
    %4471 = vmatpush.msra.mxu0 %v513
    %4472 = vmatmul.f32.gmra.mxu0 %v3873
    %v4473 = vpop.f32.mrf.mxu0
    %v4474 = vadd.f32 %v4454, %v4473
    %4475 = vdwg.mxu0
    %4476 = vmatpush.msra.mxu0 %v761
    %4477 = vmatpush.msra.mxu0 %v753
    %4478 = vmatpush.msra.mxu0 %v745
    %4479 = vmatpush.msra.mxu0 %v737
    %4480 = vmatpush.msra.mxu0 %v729
    %4481 = vmatpush.msra.mxu0 %v721
    %4482 = vmatpush.msra.mxu0 %v713
    %4483 = vmatpush.msra.mxu0 %v705
    %4484 = vmatpush.msra.mxu0 %v697
    %4485 = vmatpush.msra.mxu0 %v689
    %4486 = vmatpush.msra.mxu0 %v681
    %4487 = vmatpush.msra.mxu0 %v673
    %4488 = vmatpush.msra.mxu0 %v665
    %4489 = vmatpush.msra.mxu0 %v657
    %4490 = vmatpush.msra.mxu0 %v649
    %4491 = vmatpush.msra.mxu0 %v641
    %4492 = vmatmul.f32.gmra.mxu0 %v3874
    %v4493 = vpop.f32.mrf.mxu0
    %v4494 = vadd.f32 %v4474, %v4493
    %4495 = vdwg.mxu0
    %4496 = vmatpush.msra.mxu0 %v889
    %4497 = vmatpush.msra.mxu0 %v881
    %4498 = vmatpush.msra.mxu0 %v873
    %4499 = vmatpush.msra.mxu0 %v865
    %4500 = vmatpush.msra.mxu0 %v857
    %4501 = vmatpush.msra.mxu0 %v849
    %4502 = vmatpush.msra.mxu0 %v841
    %4503 = vmatpush.msra.mxu0 %v833
    %4504 = vmatpush.msra.mxu0 %v825
    %4505 = vmatpush.msra.mxu0 %v817
    %4506 = vmatpush.msra.mxu0 %v809
    %4507 = vmatpush.msra.mxu0 %v801
    %4508 = vmatpush.msra.mxu0 %v793
    %4509 = vmatpush.msra.mxu0 %v785
    %4510 = vmatpush.msra.mxu0 %v777
    %4511 = vmatpush.msra.mxu0 %v769
    %4512 = vmatmul.f32.gmra.mxu0 %v3875
    %v4513 = vpop.f32.mrf.mxu0
    %v4514 = vadd.f32 %v4494, %v4513
    %4515 = vdwg.mxu0
    %v4516 = vld [vmem:[#allocation4] sm:$0xff]
    %v4517 = vld [vmem:[#allocation4 + $0x8] sm:$0xff]
    %v4518 = vxor.u32 %v3954, 2147483648
    %v4519 = vxor.u32 %v4034, 2147483648
    %v4520 = vmul.f32 %v4518, 1.442695
    %v4521 = vpow.pop %v4520
    %v4522 = vmul.f32 %v4519, 1.442695
    %v4523 = vpow.pop %v4522
    %v4524 = vadd.f32 %v4521, 1.0
    %v4525 = vadd.f32 %v4523, 1.0
    %v4526 = vrcp.pop %v4524
    %v4527 = vmul.f32 %v4524, %v4526
    %v4528 = vsub.f32 1.0, %v4527
    %v4529 = vmul.f32 %v4526, %v4528
    %v4530 = vadd.f32 %v4526, %v4529
    %vm4531 = vweird.f32 %v4524
    %vm4532 = vweird.f32 %v4526
    %vm4533 = vmor %vm4531, %vm4532
    %v4534 = vsel %vm4533, %v4526, %v4530
    %v4535 = vand.u32 2147483647, %v4524
    %vm4536 = vcmp.eq.f32.partialorder %v4535, 8.507059e+37
    %v4537 = vand.u32 %v4524, 2147483648
    %v4538 = vor.u32 1.1754944e-38, %v4537
    %v4539 = vsel %vm4536, %v4538, %v4534
    %v4540 = vmul.f32 1.0, %v4539
    %v4541 = vrcp.pop %v4525
    %v4542 = vmul.f32 %v4525, %v4541
    %v4543 = vsub.f32 1.0, %v4542
    %v4544 = vmul.f32 %v4541, %v4543
    %v4545 = vadd.f32 %v4541, %v4544
    %vm4546 = vweird.f32 %v4525
    %vm4547 = vweird.f32 %v4541
    %vm4548 = vmor %vm4546, %vm4547
    %v4549 = vsel %vm4548, %v4541, %v4545
    %v4550 = vand.u32 2147483647, %v4525
    %vm4551 = vcmp.eq.f32.partialorder %v4550, 8.507059e+37
    %v4552 = vand.u32 %v4525, 2147483648
    %v4553 = vor.u32 1.1754944e-38, %v4552
    %v4554 = vsel %vm4551, %v4553, %v4549
    %v4555 = vmul.f32 1.0, %v4554
    %v4556 = vxor.u32 %v4114, 2147483648
    %v4557 = vxor.u32 %v4194, 2147483648
    %v4558 = vmul.f32 %v4556, 1.442695
    %v4559 = vpow.pop %v4558
    %v4560 = vmul.f32 %v4557, 1.442695
    %v4561 = vpow.pop %v4560
    %v4562 = vadd.f32 %v4559, 1.0
    %v4563 = vadd.f32 %v4561, 1.0
    %v4564 = vrcp.pop %v4562
    %v4565 = vmul.f32 %v4562, %v4564
    %v4566 = vsub.f32 1.0, %v4565
    %v4567 = vmul.f32 %v4564, %v4566
    %v4568 = vadd.f32 %v4564, %v4567
    %vm4569 = vweird.f32 %v4562
    %vm4570 = vweird.f32 %v4564
    %vm4571 = vmor %vm4569, %vm4570
    %v4572 = vsel %vm4571, %v4564, %v4568
    %v4573 = vand.u32 2147483647, %v4562
    %vm4574 = vcmp.eq.f32.partialorder %v4573, 8.507059e+37
    %v4575 = vand.u32 %v4562, 2147483648
    %v4576 = vor.u32 1.1754944e-38, %v4575
    %v4577 = vsel %vm4574, %v4576, %v4572
    %v4578 = vmul.f32 1.0, %v4577
    %v4579 = vrcp.pop %v4563
    %v4580 = vmul.f32 %v4563, %v4579
    %v4581 = vsub.f32 1.0, %v4580
    %v4582 = vmul.f32 %v4579, %v4581
    %v4583 = vadd.f32 %v4579, %v4582
    %vm4584 = vweird.f32 %v4563
    %vm4585 = vweird.f32 %v4579
    %vm4586 = vmor %vm4584, %vm4585
    %v4587 = vsel %vm4586, %v4579, %v4583
    %v4588 = vand.u32 2147483647, %v4563
    %vm4589 = vcmp.eq.f32.partialorder %v4588, 8.507059e+37
    %v4590 = vand.u32 %v4563, 2147483648
    %v4591 = vor.u32 1.1754944e-38, %v4590
    %v4592 = vsel %vm4589, %v4591, %v4587
    %v4593 = vmul.f32 1.0, %v4592
    %v4594 = vtanh.pop %v4274
    %v4595 = vtanh.pop %v4354
    %v4596 = vxor.u32 %v4434, 2147483648
    %v4597 = vxor.u32 %v4514, 2147483648
    %v4598 = vmul.f32 %v4596, 1.442695
    %v4599 = vpow.pop %v4598
    %v4600 = vmul.f32 %v4597, 1.442695
    %v4601 = vpow.pop %v4600
    %v4602 = vadd.f32 %v4599, 1.0
    %v4603 = vadd.f32 %v4601, 1.0
    %v4604 = vrcp.pop %v4602
    %v4605 = vmul.f32 %v4602, %v4604
    %v4606 = vsub.f32 1.0, %v4605
    %v4607 = vmul.f32 %v4604, %v4606
    %v4608 = vadd.f32 %v4604, %v4607
    %vm4609 = vweird.f32 %v4602
    %vm4610 = vweird.f32 %v4604
    %vm4611 = vmor %vm4609, %vm4610
    %v4612 = vsel %vm4611, %v4604, %v4608
    %v4613 = vand.u32 2147483647, %v4602
    %vm4614 = vcmp.eq.f32.partialorder %v4613, 8.507059e+37
    %v4615 = vand.u32 %v4602, 2147483648
    %v4616 = vor.u32 1.1754944e-38, %v4615
    %v4617 = vsel %vm4614, %v4616, %v4612
    %v4618 = vmul.f32 1.0, %v4617
    %v4619 = vrcp.pop %v4603
    %v4620 = vmul.f32 %v4603, %v4619
    %v4621 = vsub.f32 1.0, %v4620
    %v4622 = vmul.f32 %v4619, %v4621
    %v4623 = vadd.f32 %v4619, %v4622
    %vm4624 = vweird.f32 %v4603
    %vm4625 = vweird.f32 %v4619
    %vm4626 = vmor %vm4624, %vm4625
    %v4627 = vsel %vm4626, %v4619, %v4623
    %v4628 = vand.u32 2147483647, %v4603
    %vm4629 = vcmp.eq.f32.partialorder %v4628, 8.507059e+37
    %v4630 = vand.u32 %v4603, 2147483648
    %v4631 = vor.u32 1.1754944e-38, %v4630
    %v4632 = vsel %vm4629, %v4631, %v4627
    %v4633 = vmul.f32 1.0, %v4632
    %v4634 = vmul.f32 %v4578, %v4516
    %v4635 = vmul.f32 %v4593, %v4517
    %v4636 = vmul.f32 %v4540, %v4594
    %v4637 = vmul.f32 %v4555, %v4595
    %v4638 = vadd.f32 %v4634, %v4636
    %v4639 = vadd.f32 %v4635, %v4637
    %v4640 = vtanh.pop %v4638
    %v4641 = vtanh.pop %v4639
    %v4642 = vmul.f32 %v4618, %v4640
    %v4643 = vmul.f32 %v4633, %v4641
    %4644 = vst [vmem:[#allocation4] sm:$0xff] %v4638
    %4645 = vst [vmem:[#allocation4 + $0x8] sm:$0xff] %v4639
    %4646 = vst [vmem:[#allocation2 + $0x10] sm:$0xff] %v4642
    %4647 = vst [vmem:[#allocation2 + $0x18] sm:$0xff] %v4643
    %s4648 = scalar_lea.vmem [#allocation5], 192
    %v4649 = vld [vmem:[%s4648] sm:$0xff]
    %v4650 = vld [vmem:[%s4648 + $0x8] sm:$0xff]
    %v4651 = vld [vmem:[%s4648 + $0x10] sm:$0xff]
    %v4652 = vld [vmem:[%s4648 + $0x18] sm:$0xff]
    %v4653 = vld [vmem:[%s4648 + $0x20] sm:$0xff]
    %v4654 = vld [vmem:[%s4648 + $0x28] sm:$0xff]
    %v4655 = vld [vmem:[%s4648 + $0x30] sm:$0xff]
    %v4656 = vld [vmem:[%s4648 + $0x38] sm:$0xff]
    %v4657 = vld [vmem:[#allocation2] sm:$0xff]
    %v4658 = vld [vmem:[#allocation2 + $0x8] sm:$0xff]
    %4659 = vmatpush.msra.mxu0 %v242
    %4660 = vmatpush.msra.mxu0 %v234
    %4661 = vmatpush.msra.mxu0 %v226
    %4662 = vmatpush.msra.mxu0 %v218
    %4663 = vmatpush.msra.mxu0 %v210
    %4664 = vmatpush.msra.mxu0 %v202
    %4665 = vmatpush.msra.mxu0 %v194
    %4666 = vmatpush.msra.mxu0 %v186
    %4667 = vmatpush.msra.mxu0 %v178
    %4668 = vmatpush.msra.mxu0 %v170
    %4669 = vmatpush.msra.mxu0 %v162
    %4670 = vmatpush.msra.mxu0 %v154
    %4671 = vmatpush.msra.mxu0 %v146
    %4672 = vmatpush.msra.mxu0 %v138
    %4673 = vmatpush.msra.mxu0 %v130
    %4674 = vmatpush.msra.mxu0 %v122
    %4675 = vmatmul.f32.gmra.mxu0 %v4657
    %v4676 = vpop.f32.mrf.mxu0
    %v4677 = vadd.f32 0.0, %v4676
    %4678 = vdwg.mxu0
    %4679 = vmatpush.msra.mxu0 %v370
    %4680 = vmatpush.msra.mxu0 %v362
    %4681 = vmatpush.msra.mxu0 %v354
    %4682 = vmatpush.msra.mxu0 %v346
    %4683 = vmatpush.msra.mxu0 %v338
    %4684 = vmatpush.msra.mxu0 %v330
    %4685 = vmatpush.msra.mxu0 %v322
    %4686 = vmatpush.msra.mxu0 %v314
    %4687 = vmatpush.msra.mxu0 %v306
    %4688 = vmatpush.msra.mxu0 %v298
    %4689 = vmatpush.msra.mxu0 %v290
    %4690 = vmatpush.msra.mxu0 %v282
    %4691 = vmatpush.msra.mxu0 %v274
    %4692 = vmatpush.msra.mxu0 %v266
    %4693 = vmatpush.msra.mxu0 %v258
    %4694 = vmatpush.msra.mxu0 %v250
    %4695 = vmatmul.f32.gmra.mxu0 %v4658
    %v4696 = vpop.f32.mrf.mxu0
    %v4697 = vadd.f32 %v4677, %v4696
    %4698 = vdwg.mxu0
    %4699 = vmatpush.msra.mxu0 %v243
    %4700 = vmatpush.msra.mxu0 %v235
    %4701 = vmatpush.msra.mxu0 %v227
    %4702 = vmatpush.msra.mxu0 %v219
    %4703 = vmatpush.msra.mxu0 %v211
    %4704 = vmatpush.msra.mxu0 %v203
    %4705 = vmatpush.msra.mxu0 %v195
    %4706 = vmatpush.msra.mxu0 %v187
    %4707 = vmatpush.msra.mxu0 %v179
    %4708 = vmatpush.msra.mxu0 %v171
    %4709 = vmatpush.msra.mxu0 %v163
    %4710 = vmatpush.msra.mxu0 %v155
    %4711 = vmatpush.msra.mxu0 %v147
    %4712 = vmatpush.msra.mxu0 %v139
    %4713 = vmatpush.msra.mxu0 %v131
    %4714 = vmatpush.msra.mxu0 %v123
    %4715 = vmatmul.f32.gmra.mxu0 %v4657
    %v4716 = vpop.f32.mrf.mxu0
    %v4717 = vadd.f32 0.0, %v4716
    %4718 = vdwg.mxu0
    %4719 = vmatpush.msra.mxu0 %v371
    %4720 = vmatpush.msra.mxu0 %v363
    %4721 = vmatpush.msra.mxu0 %v355
    %4722 = vmatpush.msra.mxu0 %v347
    %4723 = vmatpush.msra.mxu0 %v339
    %4724 = vmatpush.msra.mxu0 %v331
    %4725 = vmatpush.msra.mxu0 %v323
    %4726 = vmatpush.msra.mxu0 %v315
    %4727 = vmatpush.msra.mxu0 %v307
    %4728 = vmatpush.msra.mxu0 %v299
    %4729 = vmatpush.msra.mxu0 %v291
    %4730 = vmatpush.msra.mxu0 %v283
    %4731 = vmatpush.msra.mxu0 %v275
    %4732 = vmatpush.msra.mxu0 %v267
    %4733 = vmatpush.msra.mxu0 %v259
    %4734 = vmatpush.msra.mxu0 %v251
    %4735 = vmatmul.f32.gmra.mxu0 %v4658
    %v4736 = vpop.f32.mrf.mxu0
    %v4737 = vadd.f32 %v4717, %v4736
    %4738 = vdwg.mxu0
    %4739 = vmatpush.msra.mxu0 %v244
    %4740 = vmatpush.msra.mxu0 %v236
    %4741 = vmatpush.msra.mxu0 %v228
    %4742 = vmatpush.msra.mxu0 %v220
    %4743 = vmatpush.msra.mxu0 %v212
    %4744 = vmatpush.msra.mxu0 %v204
    %4745 = vmatpush.msra.mxu0 %v196
    %4746 = vmatpush.msra.mxu0 %v188
    %4747 = vmatpush.msra.mxu0 %v180
    %4748 = vmatpush.msra.mxu0 %v172
    %4749 = vmatpush.msra.mxu0 %v164
    %4750 = vmatpush.msra.mxu0 %v156
    %4751 = vmatpush.msra.mxu0 %v148
    %4752 = vmatpush.msra.mxu0 %v140
    %4753 = vmatpush.msra.mxu0 %v132
    %4754 = vmatpush.msra.mxu0 %v124
    %4755 = vmatmul.f32.gmra.mxu0 %v4657
    %v4756 = vpop.f32.mrf.mxu0
    %v4757 = vadd.f32 0.0, %v4756
    %4758 = vdwg.mxu0
    %4759 = vmatpush.msra.mxu0 %v372
    %4760 = vmatpush.msra.mxu0 %v364
    %4761 = vmatpush.msra.mxu0 %v356
    %4762 = vmatpush.msra.mxu0 %v348
    %4763 = vmatpush.msra.mxu0 %v340
    %4764 = vmatpush.msra.mxu0 %v332
    %4765 = vmatpush.msra.mxu0 %v324
    %4766 = vmatpush.msra.mxu0 %v316
    %4767 = vmatpush.msra.mxu0 %v308
    %4768 = vmatpush.msra.mxu0 %v300
    %4769 = vmatpush.msra.mxu0 %v292
    %4770 = vmatpush.msra.mxu0 %v284
    %4771 = vmatpush.msra.mxu0 %v276
    %4772 = vmatpush.msra.mxu0 %v268
    %4773 = vmatpush.msra.mxu0 %v260
    %4774 = vmatpush.msra.mxu0 %v252
    %4775 = vmatmul.f32.gmra.mxu0 %v4658
    %v4776 = vpop.f32.mrf.mxu0
    %v4777 = vadd.f32 %v4757, %v4776
    %4778 = vdwg.mxu0
    %4779 = vmatpush.msra.mxu0 %v245
    %4780 = vmatpush.msra.mxu0 %v237
    %4781 = vmatpush.msra.mxu0 %v229
    %4782 = vmatpush.msra.mxu0 %v221
    %4783 = vmatpush.msra.mxu0 %v213
    %4784 = vmatpush.msra.mxu0 %v205
    %4785 = vmatpush.msra.mxu0 %v197
    %4786 = vmatpush.msra.mxu0 %v189
    %4787 = vmatpush.msra.mxu0 %v181
    %4788 = vmatpush.msra.mxu0 %v173
    %4789 = vmatpush.msra.mxu0 %v165
    %4790 = vmatpush.msra.mxu0 %v157
    %4791 = vmatpush.msra.mxu0 %v149
    %4792 = vmatpush.msra.mxu0 %v141
    %4793 = vmatpush.msra.mxu0 %v133
    %4794 = vmatpush.msra.mxu0 %v125
    %4795 = vmatmul.f32.gmra.mxu0 %v4657
    %v4796 = vpop.f32.mrf.mxu0
    %v4797 = vadd.f32 0.0, %v4796
    %4798 = vdwg.mxu0
    %4799 = vmatpush.msra.mxu0 %v373
    %4800 = vmatpush.msra.mxu0 %v365
    %4801 = vmatpush.msra.mxu0 %v357
    %4802 = vmatpush.msra.mxu0 %v349
    %4803 = vmatpush.msra.mxu0 %v341
    %4804 = vmatpush.msra.mxu0 %v333
    %4805 = vmatpush.msra.mxu0 %v325
    %4806 = vmatpush.msra.mxu0 %v317
    %4807 = vmatpush.msra.mxu0 %v309
    %4808 = vmatpush.msra.mxu0 %v301
    %4809 = vmatpush.msra.mxu0 %v293
    %4810 = vmatpush.msra.mxu0 %v285
    %4811 = vmatpush.msra.mxu0 %v277
    %4812 = vmatpush.msra.mxu0 %v269
    %4813 = vmatpush.msra.mxu0 %v261
    %4814 = vmatpush.msra.mxu0 %v253
    %4815 = vmatmul.f32.gmra.mxu0 %v4658
    %v4816 = vpop.f32.mrf.mxu0
    %v4817 = vadd.f32 %v4797, %v4816
    %4818 = vdwg.mxu0
    %4819 = vmatpush.msra.mxu0 %v246
    %4820 = vmatpush.msra.mxu0 %v238
    %4821 = vmatpush.msra.mxu0 %v230
    %4822 = vmatpush.msra.mxu0 %v222
    %4823 = vmatpush.msra.mxu0 %v214
    %4824 = vmatpush.msra.mxu0 %v206
    %4825 = vmatpush.msra.mxu0 %v198
    %4826 = vmatpush.msra.mxu0 %v190
    %4827 = vmatpush.msra.mxu0 %v182
    %4828 = vmatpush.msra.mxu0 %v174
    %4829 = vmatpush.msra.mxu0 %v166
    %4830 = vmatpush.msra.mxu0 %v158
    %4831 = vmatpush.msra.mxu0 %v150
    %4832 = vmatpush.msra.mxu0 %v142
    %4833 = vmatpush.msra.mxu0 %v134
    %4834 = vmatpush.msra.mxu0 %v126
    %4835 = vmatmul.f32.gmra.mxu0 %v4657
    %v4836 = vpop.f32.mrf.mxu0
    %v4837 = vadd.f32 0.0, %v4836
    %4838 = vdwg.mxu0
    %4839 = vmatpush.msra.mxu0 %v374
    %4840 = vmatpush.msra.mxu0 %v366
    %4841 = vmatpush.msra.mxu0 %v358
    %4842 = vmatpush.msra.mxu0 %v350
    %4843 = vmatpush.msra.mxu0 %v342
    %4844 = vmatpush.msra.mxu0 %v334
    %4845 = vmatpush.msra.mxu0 %v326
    %4846 = vmatpush.msra.mxu0 %v318
    %4847 = vmatpush.msra.mxu0 %v310
    %4848 = vmatpush.msra.mxu0 %v302
    %4849 = vmatpush.msra.mxu0 %v294
    %4850 = vmatpush.msra.mxu0 %v286
    %4851 = vmatpush.msra.mxu0 %v278
    %4852 = vmatpush.msra.mxu0 %v270
    %4853 = vmatpush.msra.mxu0 %v262
    %4854 = vmatpush.msra.mxu0 %v254
    %4855 = vmatmul.f32.gmra.mxu0 %v4658
    %v4856 = vpop.f32.mrf.mxu0
    %v4857 = vadd.f32 %v4837, %v4856
    %4858 = vdwg.mxu0
    %4859 = vmatpush.msra.mxu0 %v247
    %4860 = vmatpush.msra.mxu0 %v239
    %4861 = vmatpush.msra.mxu0 %v231
    %4862 = vmatpush.msra.mxu0 %v223
    %4863 = vmatpush.msra.mxu0 %v215
    %4864 = vmatpush.msra.mxu0 %v207
    %4865 = vmatpush.msra.mxu0 %v199
    %4866 = vmatpush.msra.mxu0 %v191
    %4867 = vmatpush.msra.mxu0 %v183
    %4868 = vmatpush.msra.mxu0 %v175
    %4869 = vmatpush.msra.mxu0 %v167
    %4870 = vmatpush.msra.mxu0 %v159
    %4871 = vmatpush.msra.mxu0 %v151
    %4872 = vmatpush.msra.mxu0 %v143
    %4873 = vmatpush.msra.mxu0 %v135
    %4874 = vmatpush.msra.mxu0 %v127
    %4875 = vmatmul.f32.gmra.mxu0 %v4657
    %v4876 = vpop.f32.mrf.mxu0
    %v4877 = vadd.f32 0.0, %v4876
    %4878 = vdwg.mxu0
    %4879 = vmatpush.msra.mxu0 %v375
    %4880 = vmatpush.msra.mxu0 %v367
    %4881 = vmatpush.msra.mxu0 %v359
    %4882 = vmatpush.msra.mxu0 %v351
    %4883 = vmatpush.msra.mxu0 %v343
    %4884 = vmatpush.msra.mxu0 %v335
    %4885 = vmatpush.msra.mxu0 %v327
    %4886 = vmatpush.msra.mxu0 %v319
    %4887 = vmatpush.msra.mxu0 %v311
    %4888 = vmatpush.msra.mxu0 %v303
    %4889 = vmatpush.msra.mxu0 %v295
    %4890 = vmatpush.msra.mxu0 %v287
    %4891 = vmatpush.msra.mxu0 %v279
    %4892 = vmatpush.msra.mxu0 %v271
    %4893 = vmatpush.msra.mxu0 %v263
    %4894 = vmatpush.msra.mxu0 %v255
    %4895 = vmatmul.f32.gmra.mxu0 %v4658
    %v4896 = vpop.f32.mrf.mxu0
    %v4897 = vadd.f32 %v4877, %v4896
    %4898 = vdwg.mxu0
    %4899 = vmatpush.msra.mxu0 %v248
    %4900 = vmatpush.msra.mxu0 %v240
    %4901 = vmatpush.msra.mxu0 %v232
    %4902 = vmatpush.msra.mxu0 %v224
    %4903 = vmatpush.msra.mxu0 %v216
    %4904 = vmatpush.msra.mxu0 %v208
    %4905 = vmatpush.msra.mxu0 %v200
    %4906 = vmatpush.msra.mxu0 %v192
    %4907 = vmatpush.msra.mxu0 %v184
    %4908 = vmatpush.msra.mxu0 %v176
    %4909 = vmatpush.msra.mxu0 %v168
    %4910 = vmatpush.msra.mxu0 %v160
    %4911 = vmatpush.msra.mxu0 %v152
    %4912 = vmatpush.msra.mxu0 %v144
    %4913 = vmatpush.msra.mxu0 %v136
    %4914 = vmatpush.msra.mxu0 %v128
    %4915 = vmatmul.f32.gmra.mxu0 %v4657
    %v4916 = vpop.f32.mrf.mxu0
    %v4917 = vadd.f32 0.0, %v4916
    %4918 = vdwg.mxu0
    %4919 = vmatpush.msra.mxu0 %v376
    %4920 = vmatpush.msra.mxu0 %v368
    %4921 = vmatpush.msra.mxu0 %v360
    %4922 = vmatpush.msra.mxu0 %v352
    %4923 = vmatpush.msra.mxu0 %v344
    %4924 = vmatpush.msra.mxu0 %v336
    %4925 = vmatpush.msra.mxu0 %v328
    %4926 = vmatpush.msra.mxu0 %v320
    %4927 = vmatpush.msra.mxu0 %v312
    %4928 = vmatpush.msra.mxu0 %v304
    %4929 = vmatpush.msra.mxu0 %v296
    %4930 = vmatpush.msra.mxu0 %v288
    %4931 = vmatpush.msra.mxu0 %v280
    %4932 = vmatpush.msra.mxu0 %v272
    %4933 = vmatpush.msra.mxu0 %v264
    %4934 = vmatpush.msra.mxu0 %v256
    %4935 = vmatmul.f32.gmra.mxu0 %v4658
    %v4936 = vpop.f32.mrf.mxu0
    %v4937 = vadd.f32 %v4917, %v4936
    %4938 = vdwg.mxu0
    %4939 = vmatpush.msra.mxu0 %v249
    %4940 = vmatpush.msra.mxu0 %v241
    %4941 = vmatpush.msra.mxu0 %v233
    %4942 = vmatpush.msra.mxu0 %v225
    %4943 = vmatpush.msra.mxu0 %v217
    %4944 = vmatpush.msra.mxu0 %v209
    %4945 = vmatpush.msra.mxu0 %v201
    %4946 = vmatpush.msra.mxu0 %v193
    %4947 = vmatpush.msra.mxu0 %v185
    %4948 = vmatpush.msra.mxu0 %v177
    %4949 = vmatpush.msra.mxu0 %v169
    %4950 = vmatpush.msra.mxu0 %v161
    %4951 = vmatpush.msra.mxu0 %v153
    %4952 = vmatpush.msra.mxu0 %v145
    %4953 = vmatpush.msra.mxu0 %v137
    %4954 = vmatpush.msra.mxu0 %v129
    %4955 = vmatmul.f32.gmra.mxu0 %v4657
    %v4956 = vpop.f32.mrf.mxu0
    %v4957 = vadd.f32 0.0, %v4956
    %4958 = vdwg.mxu0
    %4959 = vmatpush.msra.mxu0 %v377
    %4960 = vmatpush.msra.mxu0 %v369
    %4961 = vmatpush.msra.mxu0 %v361
    %4962 = vmatpush.msra.mxu0 %v353
    %4963 = vmatpush.msra.mxu0 %v345
    %4964 = vmatpush.msra.mxu0 %v337
    %4965 = vmatpush.msra.mxu0 %v329
    %4966 = vmatpush.msra.mxu0 %v321
    %4967 = vmatpush.msra.mxu0 %v313
    %4968 = vmatpush.msra.mxu0 %v305
    %4969 = vmatpush.msra.mxu0 %v297
    %4970 = vmatpush.msra.mxu0 %v289
    %4971 = vmatpush.msra.mxu0 %v281
    %4972 = vmatpush.msra.mxu0 %v273
    %4973 = vmatpush.msra.mxu0 %v265
    %4974 = vmatpush.msra.mxu0 %v257
    %4975 = vmatmul.f32.gmra.mxu0 %v4658
    %v4976 = vpop.f32.mrf.mxu0
    %v4977 = vadd.f32 %v4957, %v4976
    %4978 = vdwg.mxu0
    %v4979 = vadd.f32 %v4649, %v4697
    %v4980 = vadd.f32 %v4650, %v4737
    %v4981 = vadd.f32 %v4651, %v4777
    %v4982 = vadd.f32 %v4652, %v4817
    %v4983 = vadd.f32 %v4653, %v4857
    %v4984 = vadd.f32 %v4654, %v4897
    %v4985 = vadd.f32 %v4655, %v4937
    %v4986 = vadd.f32 %v4656, %v4977
    %v4987 = vld [vmem:[#allocation3] sm:$0xff]
    %v4988 = vld [vmem:[#allocation3 + $0x8] sm:$0xff]
    %v4989 = vxor.u32 %v4979, 2147483648
    %v4990 = vxor.u32 %v4980, 2147483648
    %v4991 = vmul.f32 %v4989, 1.442695
    %v4992 = vpow.pop %v4991
    %v4993 = vmul.f32 %v4990, 1.442695
    %v4994 = vpow.pop %v4993
    %v4995 = vadd.f32 %v4992, 1.0
    %v4996 = vadd.f32 %v4994, 1.0
    %v4997 = vrcp.pop %v4995
    %v4998 = vmul.f32 %v4995, %v4997
    %v4999 = vsub.f32 1.0, %v4998
    %v5000 = vmul.f32 %v4997, %v4999
    %v5001 = vadd.f32 %v4997, %v5000
    %vm5002 = vweird.f32 %v4995
    %vm5003 = vweird.f32 %v4997
    %vm5004 = vmor %vm5002, %vm5003
    %v5005 = vsel %vm5004, %v4997, %v5001
    %v5006 = vand.u32 2147483647, %v4995
    %vm5007 = vcmp.eq.f32.partialorder %v5006, 8.507059e+37
    %v5008 = vand.u32 %v4995, 2147483648
    %v5009 = vor.u32 1.1754944e-38, %v5008
    %v5010 = vsel %vm5007, %v5009, %v5005
    %v5011 = vmul.f32 1.0, %v5010
    %v5012 = vrcp.pop %v4996
    %v5013 = vmul.f32 %v4996, %v5012
    %v5014 = vsub.f32 1.0, %v5013
    %v5015 = vmul.f32 %v5012, %v5014
    %v5016 = vadd.f32 %v5012, %v5015
    %vm5017 = vweird.f32 %v4996
    %vm5018 = vweird.f32 %v5012
    %vm5019 = vmor %vm5017, %vm5018
    %v5020 = vsel %vm5019, %v5012, %v5016
    %v5021 = vand.u32 2147483647, %v4996
    %vm5022 = vcmp.eq.f32.partialorder %v5021, 8.507059e+37
    %v5023 = vand.u32 %v4996, 2147483648
    %v5024 = vor.u32 1.1754944e-38, %v5023
    %v5025 = vsel %vm5022, %v5024, %v5020
    %v5026 = vmul.f32 1.0, %v5025
    %v5027 = vxor.u32 %v4981, 2147483648
    %v5028 = vxor.u32 %v4982, 2147483648
    %v5029 = vmul.f32 %v5027, 1.442695
    %v5030 = vpow.pop %v5029
    %v5031 = vmul.f32 %v5028, 1.442695
    %v5032 = vpow.pop %v5031
    %v5033 = vadd.f32 %v5030, 1.0
    %v5034 = vadd.f32 %v5032, 1.0
    %v5035 = vrcp.pop %v5033
    %v5036 = vmul.f32 %v5033, %v5035
    %v5037 = vsub.f32 1.0, %v5036
    %v5038 = vmul.f32 %v5035, %v5037
    %v5039 = vadd.f32 %v5035, %v5038
    %vm5040 = vweird.f32 %v5033
    %vm5041 = vweird.f32 %v5035
    %vm5042 = vmor %vm5040, %vm5041
    %v5043 = vsel %vm5042, %v5035, %v5039
    %v5044 = vand.u32 2147483647, %v5033
    %vm5045 = vcmp.eq.f32.partialorder %v5044, 8.507059e+37
    %v5046 = vand.u32 %v5033, 2147483648
    %v5047 = vor.u32 1.1754944e-38, %v5046
    %v5048 = vsel %vm5045, %v5047, %v5043
    %v5049 = vmul.f32 1.0, %v5048
    %v5050 = vrcp.pop %v5034
    %v5051 = vmul.f32 %v5034, %v5050
    %v5052 = vsub.f32 1.0, %v5051
    %v5053 = vmul.f32 %v5050, %v5052
    %v5054 = vadd.f32 %v5050, %v5053
    %vm5055 = vweird.f32 %v5034
    %vm5056 = vweird.f32 %v5050
    %vm5057 = vmor %vm5055, %vm5056
    %v5058 = vsel %vm5057, %v5050, %v5054
    %v5059 = vand.u32 2147483647, %v5034
    %vm5060 = vcmp.eq.f32.partialorder %v5059, 8.507059e+37
    %v5061 = vand.u32 %v5034, 2147483648
    %v5062 = vor.u32 1.1754944e-38, %v5061
    %v5063 = vsel %vm5060, %v5062, %v5058
    %v5064 = vmul.f32 1.0, %v5063
    %v5065 = vtanh.pop %v4983
    %v5066 = vtanh.pop %v4984
    %v5067 = vxor.u32 %v4985, 2147483648
    %v5068 = vxor.u32 %v4986, 2147483648
    %v5069 = vmul.f32 %v5067, 1.442695
    %v5070 = vpow.pop %v5069
    %v5071 = vmul.f32 %v5068, 1.442695
    %v5072 = vpow.pop %v5071
    %v5073 = vadd.f32 %v5070, 1.0
    %v5074 = vadd.f32 %v5072, 1.0
    %v5075 = vrcp.pop %v5073
    %v5076 = vmul.f32 %v5073, %v5075
    %v5077 = vsub.f32 1.0, %v5076
    %v5078 = vmul.f32 %v5075, %v5077
    %v5079 = vadd.f32 %v5075, %v5078
    %vm5080 = vweird.f32 %v5073
    %vm5081 = vweird.f32 %v5075
    %vm5082 = vmor %vm5080, %vm5081
    %v5083 = vsel %vm5082, %v5075, %v5079
    %v5084 = vand.u32 2147483647, %v5073
    %vm5085 = vcmp.eq.f32.partialorder %v5084, 8.507059e+37
    %v5086 = vand.u32 %v5073, 2147483648
    %v5087 = vor.u32 1.1754944e-38, %v5086
    %v5088 = vsel %vm5085, %v5087, %v5083
    %v5089 = vmul.f32 1.0, %v5088
    %v5090 = vrcp.pop %v5074
    %v5091 = vmul.f32 %v5074, %v5090
    %v5092 = vsub.f32 1.0, %v5091
    %v5093 = vmul.f32 %v5090, %v5092
    %v5094 = vadd.f32 %v5090, %v5093
    %vm5095 = vweird.f32 %v5074
    %vm5096 = vweird.f32 %v5090
    %vm5097 = vmor %vm5095, %vm5096
    %v5098 = vsel %vm5097, %v5090, %v5094
    %v5099 = vand.u32 2147483647, %v5074
    %vm5100 = vcmp.eq.f32.partialorder %v5099, 8.507059e+37
    %v5101 = vand.u32 %v5074, 2147483648
    %v5102 = vor.u32 1.1754944e-38, %v5101
    %v5103 = vsel %vm5100, %v5102, %v5098
    %v5104 = vmul.f32 1.0, %v5103
    %v5105 = vmul.f32 %v5049, %v4987
    %v5106 = vmul.f32 %v5064, %v4988
    %v5107 = vmul.f32 %v5011, %v5065
    %v5108 = vmul.f32 %v5026, %v5066
    %v5109 = vadd.f32 %v5105, %v5107
    %v5110 = vadd.f32 %v5106, %v5108
    %v5111 = vtanh.pop %v5109
    %v5112 = vtanh.pop %v5110
    %v5113 = vmul.f32 %v5089, %v5111
    %v5114 = vmul.f32 %v5104, %v5112
    %5115 = vst [vmem:[#allocation3] sm:$0xff] %v5109
    %5116 = vst [vmem:[#allocation3 + $0x8] sm:$0xff] %v5110
    %5117 = vst [vmem:[#allocation2] sm:$0xff] %v5113
    %5118 = vst [vmem:[#allocation2 + $0x8] sm:$0xff] %v5114
    %v5119 = vld [vmem:[#allocation2] sm:$0xff]
    %v5120 = vld [vmem:[#allocation2 + $0x8] sm:$0xff]
    %v5121 = vld [vmem:[#allocation2 + $0x10] sm:$0xff]
    %v5122 = vld [vmem:[#allocation2 + $0x18] sm:$0xff]
    %5123 = vmatpush.msra.mxu0 %v498
    %5124 = vmatpush.msra.mxu0 %v490
    %5125 = vmatpush.msra.mxu0 %v482
    %5126 = vmatpush.msra.mxu0 %v474
    %5127 = vmatpush.msra.mxu0 %v466
    %5128 = vmatpush.msra.mxu0 %v458
    %5129 = vmatpush.msra.mxu0 %v450
    %5130 = vmatpush.msra.mxu0 %v442
    %5131 = vmatpush.msra.mxu0 %v434
    %5132 = vmatpush.msra.mxu0 %v426
    %5133 = vmatpush.msra.mxu0 %v418
    %5134 = vmatpush.msra.mxu0 %v410
    %5135 = vmatpush.msra.mxu0 %v402
    %5136 = vmatpush.msra.mxu0 %v394
    %5137 = vmatpush.msra.mxu0 %v386
    %5138 = vmatpush.msra.mxu0 %v378
    %5139 = vmatmul.f32.gmra.mxu0 %v5119
    %v5140 = vpop.f32.mrf.mxu0
    %v5141 = vadd.f32 %v1366, %v5140
    %5142 = vdwg.mxu0
    %5143 = vmatpush.msra.mxu0 %v626
    %5144 = vmatpush.msra.mxu0 %v618
    %5145 = vmatpush.msra.mxu0 %v610
    %5146 = vmatpush.msra.mxu0 %v602
    %5147 = vmatpush.msra.mxu0 %v594
    %5148 = vmatpush.msra.mxu0 %v586
    %5149 = vmatpush.msra.mxu0 %v578
    %5150 = vmatpush.msra.mxu0 %v570
    %5151 = vmatpush.msra.mxu0 %v562
    %5152 = vmatpush.msra.mxu0 %v554
    %5153 = vmatpush.msra.mxu0 %v546
    %5154 = vmatpush.msra.mxu0 %v538
    %5155 = vmatpush.msra.mxu0 %v530
    %5156 = vmatpush.msra.mxu0 %v522
    %5157 = vmatpush.msra.mxu0 %v514
    %5158 = vmatpush.msra.mxu0 %v506
    %5159 = vmatmul.f32.gmra.mxu0 %v5120
    %v5160 = vpop.f32.mrf.mxu0
    %v5161 = vadd.f32 %v5141, %v5160
    %5162 = vdwg.mxu0
    %5163 = vmatpush.msra.mxu0 %v754
    %5164 = vmatpush.msra.mxu0 %v746
    %5165 = vmatpush.msra.mxu0 %v738
    %5166 = vmatpush.msra.mxu0 %v730
    %5167 = vmatpush.msra.mxu0 %v722
    %5168 = vmatpush.msra.mxu0 %v714
    %5169 = vmatpush.msra.mxu0 %v706
    %5170 = vmatpush.msra.mxu0 %v698
    %5171 = vmatpush.msra.mxu0 %v690
    %5172 = vmatpush.msra.mxu0 %v682
    %5173 = vmatpush.msra.mxu0 %v674
    %5174 = vmatpush.msra.mxu0 %v666
    %5175 = vmatpush.msra.mxu0 %v658
    %5176 = vmatpush.msra.mxu0 %v650
    %5177 = vmatpush.msra.mxu0 %v642
    %5178 = vmatpush.msra.mxu0 %v634
    %5179 = vmatmul.f32.gmra.mxu0 %v5121
    %v5180 = vpop.f32.mrf.mxu0
    %v5181 = vadd.f32 %v5161, %v5180
    %5182 = vdwg.mxu0
    %5183 = vmatpush.msra.mxu0 %v882
    %5184 = vmatpush.msra.mxu0 %v874
    %5185 = vmatpush.msra.mxu0 %v866
    %5186 = vmatpush.msra.mxu0 %v858
    %5187 = vmatpush.msra.mxu0 %v850
    %5188 = vmatpush.msra.mxu0 %v842
    %5189 = vmatpush.msra.mxu0 %v834
    %5190 = vmatpush.msra.mxu0 %v826
    %5191 = vmatpush.msra.mxu0 %v818
    %5192 = vmatpush.msra.mxu0 %v810
    %5193 = vmatpush.msra.mxu0 %v802
    %5194 = vmatpush.msra.mxu0 %v794
    %5195 = vmatpush.msra.mxu0 %v786
    %5196 = vmatpush.msra.mxu0 %v778
    %5197 = vmatpush.msra.mxu0 %v770
    %5198 = vmatpush.msra.mxu0 %v762
    %5199 = vmatmul.f32.gmra.mxu0 %v5122
    %v5200 = vpop.f32.mrf.mxu0
    %v5201 = vadd.f32 %v5181, %v5200
    %5202 = vdwg.mxu0
    %5203 = vmatpush.msra.mxu0 %v499
    %5204 = vmatpush.msra.mxu0 %v491
    %5205 = vmatpush.msra.mxu0 %v483
    %5206 = vmatpush.msra.mxu0 %v475
    %5207 = vmatpush.msra.mxu0 %v467
    %5208 = vmatpush.msra.mxu0 %v459
    %5209 = vmatpush.msra.mxu0 %v451
    %5210 = vmatpush.msra.mxu0 %v443
    %5211 = vmatpush.msra.mxu0 %v435
    %5212 = vmatpush.msra.mxu0 %v427
    %5213 = vmatpush.msra.mxu0 %v419
    %5214 = vmatpush.msra.mxu0 %v411
    %5215 = vmatpush.msra.mxu0 %v403
    %5216 = vmatpush.msra.mxu0 %v395
    %5217 = vmatpush.msra.mxu0 %v387
    %5218 = vmatpush.msra.mxu0 %v379
    %5219 = vmatmul.f32.gmra.mxu0 %v5119
    %v5220 = vpop.f32.mrf.mxu0
    %v5221 = vadd.f32 %v1367, %v5220
    %5222 = vdwg.mxu0
    %5223 = vmatpush.msra.mxu0 %v627
    %5224 = vmatpush.msra.mxu0 %v619
    %5225 = vmatpush.msra.mxu0 %v611
    %5226 = vmatpush.msra.mxu0 %v603
    %5227 = vmatpush.msra.mxu0 %v595
    %5228 = vmatpush.msra.mxu0 %v587
    %5229 = vmatpush.msra.mxu0 %v579
    %5230 = vmatpush.msra.mxu0 %v571
    %5231 = vmatpush.msra.mxu0 %v563
    %5232 = vmatpush.msra.mxu0 %v555
    %5233 = vmatpush.msra.mxu0 %v547
    %5234 = vmatpush.msra.mxu0 %v539
    %5235 = vmatpush.msra.mxu0 %v531
    %5236 = vmatpush.msra.mxu0 %v523
    %5237 = vmatpush.msra.mxu0 %v515
    %5238 = vmatpush.msra.mxu0 %v507
    %5239 = vmatmul.f32.gmra.mxu0 %v5120
    %v5240 = vpop.f32.mrf.mxu0
    %v5241 = vadd.f32 %v5221, %v5240
    %5242 = vdwg.mxu0
    %5243 = vmatpush.msra.mxu0 %v755
    %5244 = vmatpush.msra.mxu0 %v747
    %5245 = vmatpush.msra.mxu0 %v739
    %5246 = vmatpush.msra.mxu0 %v731
    %5247 = vmatpush.msra.mxu0 %v723
    %5248 = vmatpush.msra.mxu0 %v715
    %5249 = vmatpush.msra.mxu0 %v707
    %5250 = vmatpush.msra.mxu0 %v699
    %5251 = vmatpush.msra.mxu0 %v691
    %5252 = vmatpush.msra.mxu0 %v683
    %5253 = vmatpush.msra.mxu0 %v675
    %5254 = vmatpush.msra.mxu0 %v667
    %5255 = vmatpush.msra.mxu0 %v659
    %5256 = vmatpush.msra.mxu0 %v651
    %5257 = vmatpush.msra.mxu0 %v643
    %5258 = vmatpush.msra.mxu0 %v635
    %5259 = vmatmul.f32.gmra.mxu0 %v5121
    %v5260 = vpop.f32.mrf.mxu0
    %v5261 = vadd.f32 %v5241, %v5260
    %5262 = vdwg.mxu0
    %5263 = vmatpush.msra.mxu0 %v883
    %5264 = vmatpush.msra.mxu0 %v875
    %5265 = vmatpush.msra.mxu0 %v867
    %5266 = vmatpush.msra.mxu0 %v859
    %5267 = vmatpush.msra.mxu0 %v851
    %5268 = vmatpush.msra.mxu0 %v843
    %5269 = vmatpush.msra.mxu0 %v835
    %5270 = vmatpush.msra.mxu0 %v827
    %5271 = vmatpush.msra.mxu0 %v819
    %5272 = vmatpush.msra.mxu0 %v811
    %5273 = vmatpush.msra.mxu0 %v803
    %5274 = vmatpush.msra.mxu0 %v795
    %5275 = vmatpush.msra.mxu0 %v787
    %5276 = vmatpush.msra.mxu0 %v779
    %5277 = vmatpush.msra.mxu0 %v771
    %5278 = vmatpush.msra.mxu0 %v763
    %5279 = vmatmul.f32.gmra.mxu0 %v5122
    %v5280 = vpop.f32.mrf.mxu0
    %v5281 = vadd.f32 %v5261, %v5280
    %5282 = vdwg.mxu0
    %5283 = vmatpush.msra.mxu0 %v500
    %5284 = vmatpush.msra.mxu0 %v492
    %5285 = vmatpush.msra.mxu0 %v484
    %5286 = vmatpush.msra.mxu0 %v476
    %5287 = vmatpush.msra.mxu0 %v468
    %5288 = vmatpush.msra.mxu0 %v460
    %5289 = vmatpush.msra.mxu0 %v452
    %5290 = vmatpush.msra.mxu0 %v444
    %5291 = vmatpush.msra.mxu0 %v436
    %5292 = vmatpush.msra.mxu0 %v428
    %5293 = vmatpush.msra.mxu0 %v420
    %5294 = vmatpush.msra.mxu0 %v412
    %5295 = vmatpush.msra.mxu0 %v404
    %5296 = vmatpush.msra.mxu0 %v396
    %5297 = vmatpush.msra.mxu0 %v388
    %5298 = vmatpush.msra.mxu0 %v380
    %5299 = vmatmul.f32.gmra.mxu0 %v5119
    %v5300 = vpop.f32.mrf.mxu0
    %v5301 = vadd.f32 %v1368, %v5300
    %5302 = vdwg.mxu0
    %5303 = vmatpush.msra.mxu0 %v628
    %5304 = vmatpush.msra.mxu0 %v620
    %5305 = vmatpush.msra.mxu0 %v612
    %5306 = vmatpush.msra.mxu0 %v604
    %5307 = vmatpush.msra.mxu0 %v596
    %5308 = vmatpush.msra.mxu0 %v588
    %5309 = vmatpush.msra.mxu0 %v580
    %5310 = vmatpush.msra.mxu0 %v572
    %5311 = vmatpush.msra.mxu0 %v564
    %5312 = vmatpush.msra.mxu0 %v556
    %5313 = vmatpush.msra.mxu0 %v548
    %5314 = vmatpush.msra.mxu0 %v540
    %5315 = vmatpush.msra.mxu0 %v532
    %5316 = vmatpush.msra.mxu0 %v524
    %5317 = vmatpush.msra.mxu0 %v516
    %5318 = vmatpush.msra.mxu0 %v508
    %5319 = vmatmul.f32.gmra.mxu0 %v5120
    %v5320 = vpop.f32.mrf.mxu0
    %v5321 = vadd.f32 %v5301, %v5320
    %5322 = vdwg.mxu0
    %5323 = vmatpush.msra.mxu0 %v756
    %5324 = vmatpush.msra.mxu0 %v748
    %5325 = vmatpush.msra.mxu0 %v740
    %5326 = vmatpush.msra.mxu0 %v732
    %5327 = vmatpush.msra.mxu0 %v724
    %5328 = vmatpush.msra.mxu0 %v716
    %5329 = vmatpush.msra.mxu0 %v708
    %5330 = vmatpush.msra.mxu0 %v700
    %5331 = vmatpush.msra.mxu0 %v692
    %5332 = vmatpush.msra.mxu0 %v684
    %5333 = vmatpush.msra.mxu0 %v676
    %5334 = vmatpush.msra.mxu0 %v668
    %5335 = vmatpush.msra.mxu0 %v660
    %5336 = vmatpush.msra.mxu0 %v652
    %5337 = vmatpush.msra.mxu0 %v644
    %5338 = vmatpush.msra.mxu0 %v636
    %5339 = vmatmul.f32.gmra.mxu0 %v5121
    %v5340 = vpop.f32.mrf.mxu0
    %v5341 = vadd.f32 %v5321, %v5340
    %5342 = vdwg.mxu0
    %5343 = vmatpush.msra.mxu0 %v884
    %5344 = vmatpush.msra.mxu0 %v876
    %5345 = vmatpush.msra.mxu0 %v868
    %5346 = vmatpush.msra.mxu0 %v860
    %5347 = vmatpush.msra.mxu0 %v852
    %5348 = vmatpush.msra.mxu0 %v844
    %5349 = vmatpush.msra.mxu0 %v836
    %5350 = vmatpush.msra.mxu0 %v828
    %5351 = vmatpush.msra.mxu0 %v820
    %5352 = vmatpush.msra.mxu0 %v812
    %5353 = vmatpush.msra.mxu0 %v804
    %5354 = vmatpush.msra.mxu0 %v796
    %5355 = vmatpush.msra.mxu0 %v788
    %5356 = vmatpush.msra.mxu0 %v780
    %5357 = vmatpush.msra.mxu0 %v772
    %5358 = vmatpush.msra.mxu0 %v764
    %5359 = vmatmul.f32.gmra.mxu0 %v5122
    %v5360 = vpop.f32.mrf.mxu0
    %v5361 = vadd.f32 %v5341, %v5360
    %5362 = vdwg.mxu0
    %5363 = vmatpush.msra.mxu0 %v501
    %5364 = vmatpush.msra.mxu0 %v493
    %5365 = vmatpush.msra.mxu0 %v485
    %5366 = vmatpush.msra.mxu0 %v477
    %5367 = vmatpush.msra.mxu0 %v469
    %5368 = vmatpush.msra.mxu0 %v461
    %5369 = vmatpush.msra.mxu0 %v453
    %5370 = vmatpush.msra.mxu0 %v445
    %5371 = vmatpush.msra.mxu0 %v437
    %5372 = vmatpush.msra.mxu0 %v429
    %5373 = vmatpush.msra.mxu0 %v421
    %5374 = vmatpush.msra.mxu0 %v413
    %5375 = vmatpush.msra.mxu0 %v405
    %5376 = vmatpush.msra.mxu0 %v397
    %5377 = vmatpush.msra.mxu0 %v389
    %5378 = vmatpush.msra.mxu0 %v381
    %5379 = vmatmul.f32.gmra.mxu0 %v5119
    %v5380 = vpop.f32.mrf.mxu0
    %v5381 = vadd.f32 %v1369, %v5380
    %5382 = vdwg.mxu0
    %5383 = vmatpush.msra.mxu0 %v629
    %5384 = vmatpush.msra.mxu0 %v621
    %5385 = vmatpush.msra.mxu0 %v613
    %5386 = vmatpush.msra.mxu0 %v605
    %5387 = vmatpush.msra.mxu0 %v597
    %5388 = vmatpush.msra.mxu0 %v589
    %5389 = vmatpush.msra.mxu0 %v581
    %5390 = vmatpush.msra.mxu0 %v573
    %5391 = vmatpush.msra.mxu0 %v565
    %5392 = vmatpush.msra.mxu0 %v557
    %5393 = vmatpush.msra.mxu0 %v549
    %5394 = vmatpush.msra.mxu0 %v541
    %5395 = vmatpush.msra.mxu0 %v533
    %5396 = vmatpush.msra.mxu0 %v525
    %5397 = vmatpush.msra.mxu0 %v517
    %5398 = vmatpush.msra.mxu0 %v509
    %5399 = vmatmul.f32.gmra.mxu0 %v5120
    %v5400 = vpop.f32.mrf.mxu0
    %v5401 = vadd.f32 %v5381, %v5400
    %5402 = vdwg.mxu0
    %5403 = vmatpush.msra.mxu0 %v757
    %5404 = vmatpush.msra.mxu0 %v749
    %5405 = vmatpush.msra.mxu0 %v741
    %5406 = vmatpush.msra.mxu0 %v733
    %5407 = vmatpush.msra.mxu0 %v725
    %5408 = vmatpush.msra.mxu0 %v717
    %5409 = vmatpush.msra.mxu0 %v709
    %5410 = vmatpush.msra.mxu0 %v701
    %5411 = vmatpush.msra.mxu0 %v693
    %5412 = vmatpush.msra.mxu0 %v685
    %5413 = vmatpush.msra.mxu0 %v677
    %5414 = vmatpush.msra.mxu0 %v669
    %5415 = vmatpush.msra.mxu0 %v661
    %5416 = vmatpush.msra.mxu0 %v653
    %5417 = vmatpush.msra.mxu0 %v645
    %5418 = vmatpush.msra.mxu0 %v637
    %5419 = vmatmul.f32.gmra.mxu0 %v5121
    %v5420 = vpop.f32.mrf.mxu0
    %v5421 = vadd.f32 %v5401, %v5420
    %5422 = vdwg.mxu0
    %5423 = vmatpush.msra.mxu0 %v885
    %5424 = vmatpush.msra.mxu0 %v877
    %5425 = vmatpush.msra.mxu0 %v869
    %5426 = vmatpush.msra.mxu0 %v861
    %5427 = vmatpush.msra.mxu0 %v853
    %5428 = vmatpush.msra.mxu0 %v845
    %5429 = vmatpush.msra.mxu0 %v837
    %5430 = vmatpush.msra.mxu0 %v829
    %5431 = vmatpush.msra.mxu0 %v821
    %5432 = vmatpush.msra.mxu0 %v813
    %5433 = vmatpush.msra.mxu0 %v805
    %5434 = vmatpush.msra.mxu0 %v797
    %5435 = vmatpush.msra.mxu0 %v789
    %5436 = vmatpush.msra.mxu0 %v781
    %5437 = vmatpush.msra.mxu0 %v773
    %5438 = vmatpush.msra.mxu0 %v765
    %5439 = vmatmul.f32.gmra.mxu0 %v5122
    %v5440 = vpop.f32.mrf.mxu0
    %v5441 = vadd.f32 %v5421, %v5440
    %5442 = vdwg.mxu0
    %5443 = vmatpush.msra.mxu0 %v502
    %5444 = vmatpush.msra.mxu0 %v494
    %5445 = vmatpush.msra.mxu0 %v486
    %5446 = vmatpush.msra.mxu0 %v478
    %5447 = vmatpush.msra.mxu0 %v470
    %5448 = vmatpush.msra.mxu0 %v462
    %5449 = vmatpush.msra.mxu0 %v454
    %5450 = vmatpush.msra.mxu0 %v446
    %5451 = vmatpush.msra.mxu0 %v438
    %5452 = vmatpush.msra.mxu0 %v430
    %5453 = vmatpush.msra.mxu0 %v422
    %5454 = vmatpush.msra.mxu0 %v414
    %5455 = vmatpush.msra.mxu0 %v406
    %5456 = vmatpush.msra.mxu0 %v398
    %5457 = vmatpush.msra.mxu0 %v390
    %5458 = vmatpush.msra.mxu0 %v382
    %5459 = vmatmul.f32.gmra.mxu0 %v5119
    %v5460 = vpop.f32.mrf.mxu0
    %v5461 = vadd.f32 %v1370, %v5460
    %5462 = vdwg.mxu0
    %5463 = vmatpush.msra.mxu0 %v630
    %5464 = vmatpush.msra.mxu0 %v622
    %5465 = vmatpush.msra.mxu0 %v614
    %5466 = vmatpush.msra.mxu0 %v606
    %5467 = vmatpush.msra.mxu0 %v598
    %5468 = vmatpush.msra.mxu0 %v590
    %5469 = vmatpush.msra.mxu0 %v582
    %5470 = vmatpush.msra.mxu0 %v574
    %5471 = vmatpush.msra.mxu0 %v566
    %5472 = vmatpush.msra.mxu0 %v558
    %5473 = vmatpush.msra.mxu0 %v550
    %5474 = vmatpush.msra.mxu0 %v542
    %5475 = vmatpush.msra.mxu0 %v534
    %5476 = vmatpush.msra.mxu0 %v526
    %5477 = vmatpush.msra.mxu0 %v518
    %5478 = vmatpush.msra.mxu0 %v510
    %5479 = vmatmul.f32.gmra.mxu0 %v5120
    %v5480 = vpop.f32.mrf.mxu0
    %v5481 = vadd.f32 %v5461, %v5480
    %5482 = vdwg.mxu0
    %5483 = vmatpush.msra.mxu0 %v758
    %5484 = vmatpush.msra.mxu0 %v750
    %5485 = vmatpush.msra.mxu0 %v742
    %5486 = vmatpush.msra.mxu0 %v734
    %5487 = vmatpush.msra.mxu0 %v726
    %5488 = vmatpush.msra.mxu0 %v718
    %5489 = vmatpush.msra.mxu0 %v710
    %5490 = vmatpush.msra.mxu0 %v702
    %5491 = vmatpush.msra.mxu0 %v694
    %5492 = vmatpush.msra.mxu0 %v686
    %5493 = vmatpush.msra.mxu0 %v678
    %5494 = vmatpush.msra.mxu0 %v670
    %5495 = vmatpush.msra.mxu0 %v662
    %5496 = vmatpush.msra.mxu0 %v654
    %5497 = vmatpush.msra.mxu0 %v646
    %5498 = vmatpush.msra.mxu0 %v638
    %5499 = vmatmul.f32.gmra.mxu0 %v5121
    %v5500 = vpop.f32.mrf.mxu0
    %v5501 = vadd.f32 %v5481, %v5500
    %5502 = vdwg.mxu0
    %5503 = vmatpush.msra.mxu0 %v886
    %5504 = vmatpush.msra.mxu0 %v878
    %5505 = vmatpush.msra.mxu0 %v870
    %5506 = vmatpush.msra.mxu0 %v862
    %5507 = vmatpush.msra.mxu0 %v854
    %5508 = vmatpush.msra.mxu0 %v846
    %5509 = vmatpush.msra.mxu0 %v838
    %5510 = vmatpush.msra.mxu0 %v830
    %5511 = vmatpush.msra.mxu0 %v822
    %5512 = vmatpush.msra.mxu0 %v814
    %5513 = vmatpush.msra.mxu0 %v806
    %5514 = vmatpush.msra.mxu0 %v798
    %5515 = vmatpush.msra.mxu0 %v790
    %5516 = vmatpush.msra.mxu0 %v782
    %5517 = vmatpush.msra.mxu0 %v774
    %5518 = vmatpush.msra.mxu0 %v766
    %5519 = vmatmul.f32.gmra.mxu0 %v5122
    %v5520 = vpop.f32.mrf.mxu0
    %v5521 = vadd.f32 %v5501, %v5520
    %5522 = vdwg.mxu0
    %5523 = vmatpush.msra.mxu0 %v503
    %5524 = vmatpush.msra.mxu0 %v495
    %5525 = vmatpush.msra.mxu0 %v487
    %5526 = vmatpush.msra.mxu0 %v479
    %5527 = vmatpush.msra.mxu0 %v471
    %5528 = vmatpush.msra.mxu0 %v463
    %5529 = vmatpush.msra.mxu0 %v455
    %5530 = vmatpush.msra.mxu0 %v447
    %5531 = vmatpush.msra.mxu0 %v439
    %5532 = vmatpush.msra.mxu0 %v431
    %5533 = vmatpush.msra.mxu0 %v423
    %5534 = vmatpush.msra.mxu0 %v415
    %5535 = vmatpush.msra.mxu0 %v407
    %5536 = vmatpush.msra.mxu0 %v399
    %5537 = vmatpush.msra.mxu0 %v391
    %5538 = vmatpush.msra.mxu0 %v383
    %5539 = vmatmul.f32.gmra.mxu0 %v5119
    %v5540 = vpop.f32.mrf.mxu0
    %v5541 = vadd.f32 %v1371, %v5540
    %5542 = vdwg.mxu0
    %5543 = vmatpush.msra.mxu0 %v631
    %5544 = vmatpush.msra.mxu0 %v623
    %5545 = vmatpush.msra.mxu0 %v615
    %5546 = vmatpush.msra.mxu0 %v607
    %5547 = vmatpush.msra.mxu0 %v599
    %5548 = vmatpush.msra.mxu0 %v591
    %5549 = vmatpush.msra.mxu0 %v583
    %5550 = vmatpush.msra.mxu0 %v575
    %5551 = vmatpush.msra.mxu0 %v567
    %5552 = vmatpush.msra.mxu0 %v559
    %5553 = vmatpush.msra.mxu0 %v551
    %5554 = vmatpush.msra.mxu0 %v543
    %5555 = vmatpush.msra.mxu0 %v535
    %5556 = vmatpush.msra.mxu0 %v527
    %5557 = vmatpush.msra.mxu0 %v519
    %5558 = vmatpush.msra.mxu0 %v511
    %5559 = vmatmul.f32.gmra.mxu0 %v5120
    %v5560 = vpop.f32.mrf.mxu0
    %v5561 = vadd.f32 %v5541, %v5560
    %5562 = vdwg.mxu0
    %5563 = vmatpush.msra.mxu0 %v759
    %5564 = vmatpush.msra.mxu0 %v751
    %5565 = vmatpush.msra.mxu0 %v743
    %5566 = vmatpush.msra.mxu0 %v735
    %5567 = vmatpush.msra.mxu0 %v727
    %5568 = vmatpush.msra.mxu0 %v719
    %5569 = vmatpush.msra.mxu0 %v711
    %5570 = vmatpush.msra.mxu0 %v703
    %5571 = vmatpush.msra.mxu0 %v695
    %5572 = vmatpush.msra.mxu0 %v687
    %5573 = vmatpush.msra.mxu0 %v679
    %5574 = vmatpush.msra.mxu0 %v671
    %5575 = vmatpush.msra.mxu0 %v663
    %5576 = vmatpush.msra.mxu0 %v655
    %5577 = vmatpush.msra.mxu0 %v647
    %5578 = vmatpush.msra.mxu0 %v639
    %5579 = vmatmul.f32.gmra.mxu0 %v5121
    %v5580 = vpop.f32.mrf.mxu0
    %v5581 = vadd.f32 %v5561, %v5580
    %5582 = vdwg.mxu0
    %5583 = vmatpush.msra.mxu0 %v887
    %5584 = vmatpush.msra.mxu0 %v879
    %5585 = vmatpush.msra.mxu0 %v871
    %5586 = vmatpush.msra.mxu0 %v863
    %5587 = vmatpush.msra.mxu0 %v855
    %5588 = vmatpush.msra.mxu0 %v847
    %5589 = vmatpush.msra.mxu0 %v839
    %5590 = vmatpush.msra.mxu0 %v831
    %5591 = vmatpush.msra.mxu0 %v823
    %5592 = vmatpush.msra.mxu0 %v815
    %5593 = vmatpush.msra.mxu0 %v807
    %5594 = vmatpush.msra.mxu0 %v799
    %5595 = vmatpush.msra.mxu0 %v791
    %5596 = vmatpush.msra.mxu0 %v783
    %5597 = vmatpush.msra.mxu0 %v775
    %5598 = vmatpush.msra.mxu0 %v767
    %5599 = vmatmul.f32.gmra.mxu0 %v5122
    %v5600 = vpop.f32.mrf.mxu0
    %v5601 = vadd.f32 %v5581, %v5600
    %5602 = vdwg.mxu0
    %5603 = vmatpush.msra.mxu0 %v504
    %5604 = vmatpush.msra.mxu0 %v496
    %5605 = vmatpush.msra.mxu0 %v488
    %5606 = vmatpush.msra.mxu0 %v480
    %5607 = vmatpush.msra.mxu0 %v472
    %5608 = vmatpush.msra.mxu0 %v464
    %5609 = vmatpush.msra.mxu0 %v456
    %5610 = vmatpush.msra.mxu0 %v448
    %5611 = vmatpush.msra.mxu0 %v440
    %5612 = vmatpush.msra.mxu0 %v432
    %5613 = vmatpush.msra.mxu0 %v424
    %5614 = vmatpush.msra.mxu0 %v416
    %5615 = vmatpush.msra.mxu0 %v408
    %5616 = vmatpush.msra.mxu0 %v400
    %5617 = vmatpush.msra.mxu0 %v392
    %5618 = vmatpush.msra.mxu0 %v384
    %5619 = vmatmul.f32.gmra.mxu0 %v5119
    %v5620 = vpop.f32.mrf.mxu0
    %v5621 = vadd.f32 %v1372, %v5620
    %5622 = vdwg.mxu0
    %5623 = vmatpush.msra.mxu0 %v632
    %5624 = vmatpush.msra.mxu0 %v624
    %5625 = vmatpush.msra.mxu0 %v616
    %5626 = vmatpush.msra.mxu0 %v608
    %5627 = vmatpush.msra.mxu0 %v600
    %5628 = vmatpush.msra.mxu0 %v592
    %5629 = vmatpush.msra.mxu0 %v584
    %5630 = vmatpush.msra.mxu0 %v576
    %5631 = vmatpush.msra.mxu0 %v568
    %5632 = vmatpush.msra.mxu0 %v560
    %5633 = vmatpush.msra.mxu0 %v552
    %5634 = vmatpush.msra.mxu0 %v544
    %5635 = vmatpush.msra.mxu0 %v536
    %5636 = vmatpush.msra.mxu0 %v528
    %5637 = vmatpush.msra.mxu0 %v520
    %5638 = vmatpush.msra.mxu0 %v512
    %5639 = vmatmul.f32.gmra.mxu0 %v5120
    %v5640 = vpop.f32.mrf.mxu0
    %v5641 = vadd.f32 %v5621, %v5640
    %5642 = vdwg.mxu0
    %5643 = vmatpush.msra.mxu0 %v760
    %5644 = vmatpush.msra.mxu0 %v752
    %5645 = vmatpush.msra.mxu0 %v744
    %5646 = vmatpush.msra.mxu0 %v736
    %5647 = vmatpush.msra.mxu0 %v728
    %5648 = vmatpush.msra.mxu0 %v720
    %5649 = vmatpush.msra.mxu0 %v712
    %5650 = vmatpush.msra.mxu0 %v704
    %5651 = vmatpush.msra.mxu0 %v696
    %5652 = vmatpush.msra.mxu0 %v688
    %5653 = vmatpush.msra.mxu0 %v680
    %5654 = vmatpush.msra.mxu0 %v672
    %5655 = vmatpush.msra.mxu0 %v664
    %5656 = vmatpush.msra.mxu0 %v656
    %5657 = vmatpush.msra.mxu0 %v648
    %5658 = vmatpush.msra.mxu0 %v640
    %5659 = vmatmul.f32.gmra.mxu0 %v5121
    %v5660 = vpop.f32.mrf.mxu0
    %v5661 = vadd.f32 %v5641, %v5660
    %5662 = vdwg.mxu0
    %5663 = vmatpush.msra.mxu0 %v888
    %5664 = vmatpush.msra.mxu0 %v880
    %5665 = vmatpush.msra.mxu0 %v872
    %5666 = vmatpush.msra.mxu0 %v864
    %5667 = vmatpush.msra.mxu0 %v856
    %5668 = vmatpush.msra.mxu0 %v848
    %5669 = vmatpush.msra.mxu0 %v840
    %5670 = vmatpush.msra.mxu0 %v832
    %5671 = vmatpush.msra.mxu0 %v824
    %5672 = vmatpush.msra.mxu0 %v816
    %5673 = vmatpush.msra.mxu0 %v808
    %5674 = vmatpush.msra.mxu0 %v800
    %5675 = vmatpush.msra.mxu0 %v792
    %5676 = vmatpush.msra.mxu0 %v784
    %5677 = vmatpush.msra.mxu0 %v776
    %5678 = vmatpush.msra.mxu0 %v768
    %5679 = vmatmul.f32.gmra.mxu0 %v5122
    %v5680 = vpop.f32.mrf.mxu0
    %v5681 = vadd.f32 %v5661, %v5680
    %5682 = vdwg.mxu0
    %5683 = vmatpush.msra.mxu0 %v505
    %5684 = vmatpush.msra.mxu0 %v497
    %5685 = vmatpush.msra.mxu0 %v489
    %5686 = vmatpush.msra.mxu0 %v481
    %5687 = vmatpush.msra.mxu0 %v473
    %5688 = vmatpush.msra.mxu0 %v465
    %5689 = vmatpush.msra.mxu0 %v457
    %5690 = vmatpush.msra.mxu0 %v449
    %5691 = vmatpush.msra.mxu0 %v441
    %5692 = vmatpush.msra.mxu0 %v433
    %5693 = vmatpush.msra.mxu0 %v425
    %5694 = vmatpush.msra.mxu0 %v417
    %5695 = vmatpush.msra.mxu0 %v409
    %5696 = vmatpush.msra.mxu0 %v401
    %5697 = vmatpush.msra.mxu0 %v393
    %5698 = vmatpush.msra.mxu0 %v385
    %5699 = vmatmul.f32.gmra.mxu0 %v5119
    %v5700 = vpop.f32.mrf.mxu0
    %v5701 = vadd.f32 %v1373, %v5700
    %5702 = vdwg.mxu0
    %5703 = vmatpush.msra.mxu0 %v633
    %5704 = vmatpush.msra.mxu0 %v625
    %5705 = vmatpush.msra.mxu0 %v617
    %5706 = vmatpush.msra.mxu0 %v609
    %5707 = vmatpush.msra.mxu0 %v601
    %5708 = vmatpush.msra.mxu0 %v593
    %5709 = vmatpush.msra.mxu0 %v585
    %5710 = vmatpush.msra.mxu0 %v577
    %5711 = vmatpush.msra.mxu0 %v569
    %5712 = vmatpush.msra.mxu0 %v561
    %5713 = vmatpush.msra.mxu0 %v553
    %5714 = vmatpush.msra.mxu0 %v545
    %5715 = vmatpush.msra.mxu0 %v537
    %5716 = vmatpush.msra.mxu0 %v529
    %5717 = vmatpush.msra.mxu0 %v521
    %5718 = vmatpush.msra.mxu0 %v513
    %5719 = vmatmul.f32.gmra.mxu0 %v5120
    %v5720 = vpop.f32.mrf.mxu0
    %v5721 = vadd.f32 %v5701, %v5720
    %5722 = vdwg.mxu0
    %5723 = vmatpush.msra.mxu0 %v761
    %5724 = vmatpush.msra.mxu0 %v753
    %5725 = vmatpush.msra.mxu0 %v745
    %5726 = vmatpush.msra.mxu0 %v737
    %5727 = vmatpush.msra.mxu0 %v729
    %5728 = vmatpush.msra.mxu0 %v721
    %5729 = vmatpush.msra.mxu0 %v713
    %5730 = vmatpush.msra.mxu0 %v705
    %5731 = vmatpush.msra.mxu0 %v697
    %5732 = vmatpush.msra.mxu0 %v689
    %5733 = vmatpush.msra.mxu0 %v681
    %5734 = vmatpush.msra.mxu0 %v673
    %5735 = vmatpush.msra.mxu0 %v665
    %5736 = vmatpush.msra.mxu0 %v657
    %5737 = vmatpush.msra.mxu0 %v649
    %5738 = vmatpush.msra.mxu0 %v641
    %5739 = vmatmul.f32.gmra.mxu0 %v5121
    %v5740 = vpop.f32.mrf.mxu0
    %v5741 = vadd.f32 %v5721, %v5740
    %5742 = vdwg.mxu0
    %5743 = vmatpush.msra.mxu0 %v889
    %5744 = vmatpush.msra.mxu0 %v881
    %5745 = vmatpush.msra.mxu0 %v873
    %5746 = vmatpush.msra.mxu0 %v865
    %5747 = vmatpush.msra.mxu0 %v857
    %5748 = vmatpush.msra.mxu0 %v849
    %5749 = vmatpush.msra.mxu0 %v841
    %5750 = vmatpush.msra.mxu0 %v833
    %5751 = vmatpush.msra.mxu0 %v825
    %5752 = vmatpush.msra.mxu0 %v817
    %5753 = vmatpush.msra.mxu0 %v809
    %5754 = vmatpush.msra.mxu0 %v801
    %5755 = vmatpush.msra.mxu0 %v793
    %5756 = vmatpush.msra.mxu0 %v785
    %5757 = vmatpush.msra.mxu0 %v777
    %5758 = vmatpush.msra.mxu0 %v769
    %5759 = vmatmul.f32.gmra.mxu0 %v5122
    %v5760 = vpop.f32.mrf.mxu0
    %v5761 = vadd.f32 %v5741, %v5760
    %5762 = vdwg.mxu0
    %v5763 = vld [vmem:[#allocation4] sm:$0xff]
    %v5764 = vld [vmem:[#allocation4 + $0x8] sm:$0xff]
    %v5765 = vxor.u32 %v5201, 2147483648
    %v5766 = vxor.u32 %v5281, 2147483648
    %v5767 = vmul.f32 %v5765, 1.442695
    %v5768 = vpow.pop %v5767
    %v5769 = vmul.f32 %v5766, 1.442695
    %v5770 = vpow.pop %v5769
    %v5771 = vadd.f32 %v5768, 1.0
    %v5772 = vadd.f32 %v5770, 1.0
    %v5773 = vrcp.pop %v5771
    %v5774 = vmul.f32 %v5771, %v5773
    %v5775 = vsub.f32 1.0, %v5774
    %v5776 = vmul.f32 %v5773, %v5775
    %v5777 = vadd.f32 %v5773, %v5776
    %vm5778 = vweird.f32 %v5771
    %vm5779 = vweird.f32 %v5773
    %vm5780 = vmor %vm5778, %vm5779
    %v5781 = vsel %vm5780, %v5773, %v5777
    %v5782 = vand.u32 2147483647, %v5771
    %vm5783 = vcmp.eq.f32.partialorder %v5782, 8.507059e+37
    %v5784 = vand.u32 %v5771, 2147483648
    %v5785 = vor.u32 1.1754944e-38, %v5784
    %v5786 = vsel %vm5783, %v5785, %v5781
    %v5787 = vmul.f32 1.0, %v5786
    %v5788 = vrcp.pop %v5772
    %v5789 = vmul.f32 %v5772, %v5788
    %v5790 = vsub.f32 1.0, %v5789
    %v5791 = vmul.f32 %v5788, %v5790
    %v5792 = vadd.f32 %v5788, %v5791
    %vm5793 = vweird.f32 %v5772
    %vm5794 = vweird.f32 %v5788
    %vm5795 = vmor %vm5793, %vm5794
    %v5796 = vsel %vm5795, %v5788, %v5792
    %v5797 = vand.u32 2147483647, %v5772
    %vm5798 = vcmp.eq.f32.partialorder %v5797, 8.507059e+37
    %v5799 = vand.u32 %v5772, 2147483648
    %v5800 = vor.u32 1.1754944e-38, %v5799
    %v5801 = vsel %vm5798, %v5800, %v5796
    %v5802 = vmul.f32 1.0, %v5801
    %v5803 = vxor.u32 %v5361, 2147483648
    %v5804 = vxor.u32 %v5441, 2147483648
    %v5805 = vmul.f32 %v5803, 1.442695
    %v5806 = vpow.pop %v5805
    %v5807 = vmul.f32 %v5804, 1.442695
    %v5808 = vpow.pop %v5807
    %v5809 = vadd.f32 %v5806, 1.0
    %v5810 = vadd.f32 %v5808, 1.0
    %v5811 = vrcp.pop %v5809
    %v5812 = vmul.f32 %v5809, %v5811
    %v5813 = vsub.f32 1.0, %v5812
    %v5814 = vmul.f32 %v5811, %v5813
    %v5815 = vadd.f32 %v5811, %v5814
    %vm5816 = vweird.f32 %v5809
    %vm5817 = vweird.f32 %v5811
    %vm5818 = vmor %vm5816, %vm5817
    %v5819 = vsel %vm5818, %v5811, %v5815
    %v5820 = vand.u32 2147483647, %v5809
    %vm5821 = vcmp.eq.f32.partialorder %v5820, 8.507059e+37
    %v5822 = vand.u32 %v5809, 2147483648
    %v5823 = vor.u32 1.1754944e-38, %v5822
    %v5824 = vsel %vm5821, %v5823, %v5819
    %v5825 = vmul.f32 1.0, %v5824
    %v5826 = vrcp.pop %v5810
    %v5827 = vmul.f32 %v5810, %v5826
    %v5828 = vsub.f32 1.0, %v5827
    %v5829 = vmul.f32 %v5826, %v5828
    %v5830 = vadd.f32 %v5826, %v5829
    %vm5831 = vweird.f32 %v5810
    %vm5832 = vweird.f32 %v5826
    %vm5833 = vmor %vm5831, %vm5832
    %v5834 = vsel %vm5833, %v5826, %v5830
    %v5835 = vand.u32 2147483647, %v5810
    %vm5836 = vcmp.eq.f32.partialorder %v5835, 8.507059e+37
    %v5837 = vand.u32 %v5810, 2147483648
    %v5838 = vor.u32 1.1754944e-38, %v5837
    %v5839 = vsel %vm5836, %v5838, %v5834
    %v5840 = vmul.f32 1.0, %v5839
    %v5841 = vtanh.pop %v5521
    %v5842 = vtanh.pop %v5601
    %v5843 = vxor.u32 %v5681, 2147483648
    %v5844 = vxor.u32 %v5761, 2147483648
    %v5845 = vmul.f32 %v5843, 1.442695
    %v5846 = vpow.pop %v5845
    %v5847 = vmul.f32 %v5844, 1.442695
    %v5848 = vpow.pop %v5847
    %v5849 = vadd.f32 %v5846, 1.0
    %v5850 = vadd.f32 %v5848, 1.0
    %v5851 = vrcp.pop %v5849
    %v5852 = vmul.f32 %v5849, %v5851
    %v5853 = vsub.f32 1.0, %v5852
    %v5854 = vmul.f32 %v5851, %v5853
    %v5855 = vadd.f32 %v5851, %v5854
    %vm5856 = vweird.f32 %v5849
    %vm5857 = vweird.f32 %v5851
    %vm5858 = vmor %vm5856, %vm5857
    %v5859 = vsel %vm5858, %v5851, %v5855
    %v5860 = vand.u32 2147483647, %v5849
    %vm5861 = vcmp.eq.f32.partialorder %v5860, 8.507059e+37
    %v5862 = vand.u32 %v5849, 2147483648
    %v5863 = vor.u32 1.1754944e-38, %v5862
    %v5864 = vsel %vm5861, %v5863, %v5859
    %v5865 = vmul.f32 1.0, %v5864
    %v5866 = vrcp.pop %v5850
    %v5867 = vmul.f32 %v5850, %v5866
    %v5868 = vsub.f32 1.0, %v5867
    %v5869 = vmul.f32 %v5866, %v5868
    %v5870 = vadd.f32 %v5866, %v5869
    %vm5871 = vweird.f32 %v5850
    %vm5872 = vweird.f32 %v5866
    %vm5873 = vmor %vm5871, %vm5872
    %v5874 = vsel %vm5873, %v5866, %v5870
    %v5875 = vand.u32 2147483647, %v5850
    %vm5876 = vcmp.eq.f32.partialorder %v5875, 8.507059e+37
    %v5877 = vand.u32 %v5850, 2147483648
    %v5878 = vor.u32 1.1754944e-38, %v5877
    %v5879 = vsel %vm5876, %v5878, %v5874
    %v5880 = vmul.f32 1.0, %v5879
    %v5881 = vmul.f32 %v5825, %v5763
    %v5882 = vmul.f32 %v5840, %v5764
    %v5883 = vmul.f32 %v5787, %v5841
    %v5884 = vmul.f32 %v5802, %v5842
    %v5885 = vadd.f32 %v5881, %v5883
    %v5886 = vadd.f32 %v5882, %v5884
    %v5887 = vtanh.pop %v5885
    %v5888 = vtanh.pop %v5886
    %v5889 = vmul.f32 %v5865, %v5887
    %v5890 = vmul.f32 %v5880, %v5888
    %5891 = vst [vmem:[#allocation4] sm:$0xff] %v5885
    %5892 = vst [vmem:[#allocation4 + $0x8] sm:$0xff] %v5886
    %5893 = vst [vmem:[#allocation2 + $0x10] sm:$0xff] %v5889
    %5894 = vst [vmem:[#allocation2 + $0x18] sm:$0xff] %v5890
    %s5895 = scalar_lea.vmem [#allocation5], 256
    %v5896 = vld [vmem:[%s5895] sm:$0xff]
    %v5897 = vld [vmem:[%s5895 + $0x8] sm:$0xff]
    %v5898 = vld [vmem:[%s5895 + $0x10] sm:$0xff]
    %v5899 = vld [vmem:[%s5895 + $0x18] sm:$0xff]
    %v5900 = vld [vmem:[%s5895 + $0x20] sm:$0xff]
    %v5901 = vld [vmem:[%s5895 + $0x28] sm:$0xff]
    %v5902 = vld [vmem:[%s5895 + $0x30] sm:$0xff]
    %v5903 = vld [vmem:[%s5895 + $0x38] sm:$0xff]
    %v5904 = vld [vmem:[#allocation2] sm:$0xff]
    %v5905 = vld [vmem:[#allocation2 + $0x8] sm:$0xff]
    %5906 = vmatpush.msra.mxu0 %v242
    %5907 = vmatpush.msra.mxu0 %v234
    %5908 = vmatpush.msra.mxu0 %v226
    %5909 = vmatpush.msra.mxu0 %v218
    %5910 = vmatpush.msra.mxu0 %v210
    %5911 = vmatpush.msra.mxu0 %v202
    %5912 = vmatpush.msra.mxu0 %v194
    %5913 = vmatpush.msra.mxu0 %v186
    %5914 = vmatpush.msra.mxu0 %v178
    %5915 = vmatpush.msra.mxu0 %v170
    %5916 = vmatpush.msra.mxu0 %v162
    %5917 = vmatpush.msra.mxu0 %v154
    %5918 = vmatpush.msra.mxu0 %v146
    %5919 = vmatpush.msra.mxu0 %v138
    %5920 = vmatpush.msra.mxu0 %v130
    %5921 = vmatpush.msra.mxu0 %v122
    %5922 = vmatmul.f32.gmra.mxu0 %v5904
    %v5923 = vpop.f32.mrf.mxu0
    %v5924 = vadd.f32 0.0, %v5923
    %5925 = vdwg.mxu0
    %5926 = vmatpush.msra.mxu0 %v370
    %5927 = vmatpush.msra.mxu0 %v362
    %5928 = vmatpush.msra.mxu0 %v354
    %5929 = vmatpush.msra.mxu0 %v346
    %5930 = vmatpush.msra.mxu0 %v338
    %5931 = vmatpush.msra.mxu0 %v330
    %5932 = vmatpush.msra.mxu0 %v322
    %5933 = vmatpush.msra.mxu0 %v314
    %5934 = vmatpush.msra.mxu0 %v306
    %5935 = vmatpush.msra.mxu0 %v298
    %5936 = vmatpush.msra.mxu0 %v290
    %5937 = vmatpush.msra.mxu0 %v282
    %5938 = vmatpush.msra.mxu0 %v274
    %5939 = vmatpush.msra.mxu0 %v266
    %5940 = vmatpush.msra.mxu0 %v258
    %5941 = vmatpush.msra.mxu0 %v250
    %5942 = vmatmul.f32.gmra.mxu0 %v5905
    %v5943 = vpop.f32.mrf.mxu0
    %v5944 = vadd.f32 %v5924, %v5943
    %5945 = vdwg.mxu0
    %5946 = vmatpush.msra.mxu0 %v243
    %5947 = vmatpush.msra.mxu0 %v235
    %5948 = vmatpush.msra.mxu0 %v227
    %5949 = vmatpush.msra.mxu0 %v219
    %5950 = vmatpush.msra.mxu0 %v211
    %5951 = vmatpush.msra.mxu0 %v203
    %5952 = vmatpush.msra.mxu0 %v195
    %5953 = vmatpush.msra.mxu0 %v187
    %5954 = vmatpush.msra.mxu0 %v179
    %5955 = vmatpush.msra.mxu0 %v171
    %5956 = vmatpush.msra.mxu0 %v163
    %5957 = vmatpush.msra.mxu0 %v155
    %5958 = vmatpush.msra.mxu0 %v147
    %5959 = vmatpush.msra.mxu0 %v139
    %5960 = vmatpush.msra.mxu0 %v131
    %5961 = vmatpush.msra.mxu0 %v123
    %5962 = vmatmul.f32.gmra.mxu0 %v5904
    %v5963 = vpop.f32.mrf.mxu0
    %v5964 = vadd.f32 0.0, %v5963
    %5965 = vdwg.mxu0
    %5966 = vmatpush.msra.mxu0 %v371
    %5967 = vmatpush.msra.mxu0 %v363
    %5968 = vmatpush.msra.mxu0 %v355
    %5969 = vmatpush.msra.mxu0 %v347
    %5970 = vmatpush.msra.mxu0 %v339
    %5971 = vmatpush.msra.mxu0 %v331
    %5972 = vmatpush.msra.mxu0 %v323
    %5973 = vmatpush.msra.mxu0 %v315
    %5974 = vmatpush.msra.mxu0 %v307
    %5975 = vmatpush.msra.mxu0 %v299
    %5976 = vmatpush.msra.mxu0 %v291
    %5977 = vmatpush.msra.mxu0 %v283
    %5978 = vmatpush.msra.mxu0 %v275
    %5979 = vmatpush.msra.mxu0 %v267
    %5980 = vmatpush.msra.mxu0 %v259
    %5981 = vmatpush.msra.mxu0 %v251
    %5982 = vmatmul.f32.gmra.mxu0 %v5905
    %v5983 = vpop.f32.mrf.mxu0
    %v5984 = vadd.f32 %v5964, %v5983
    %5985 = vdwg.mxu0
    %5986 = vmatpush.msra.mxu0 %v244
    %5987 = vmatpush.msra.mxu0 %v236
    %5988 = vmatpush.msra.mxu0 %v228
    %5989 = vmatpush.msra.mxu0 %v220
    %5990 = vmatpush.msra.mxu0 %v212
    %5991 = vmatpush.msra.mxu0 %v204
    %5992 = vmatpush.msra.mxu0 %v196
    %5993 = vmatpush.msra.mxu0 %v188
    %5994 = vmatpush.msra.mxu0 %v180
    %5995 = vmatpush.msra.mxu0 %v172
    %5996 = vmatpush.msra.mxu0 %v164
    %5997 = vmatpush.msra.mxu0 %v156
    %5998 = vmatpush.msra.mxu0 %v148
    %5999 = vmatpush.msra.mxu0 %v140
    %6000 = vmatpush.msra.mxu0 %v132
    %6001 = vmatpush.msra.mxu0 %v124
    %6002 = vmatmul.f32.gmra.mxu0 %v5904
    %v6003 = vpop.f32.mrf.mxu0
    %v6004 = vadd.f32 0.0, %v6003
    %6005 = vdwg.mxu0
    %6006 = vmatpush.msra.mxu0 %v372
    %6007 = vmatpush.msra.mxu0 %v364
    %6008 = vmatpush.msra.mxu0 %v356
    %6009 = vmatpush.msra.mxu0 %v348
    %6010 = vmatpush.msra.mxu0 %v340
    %6011 = vmatpush.msra.mxu0 %v332
    %6012 = vmatpush.msra.mxu0 %v324
    %6013 = vmatpush.msra.mxu0 %v316
    %6014 = vmatpush.msra.mxu0 %v308
    %6015 = vmatpush.msra.mxu0 %v300
    %6016 = vmatpush.msra.mxu0 %v292
    %6017 = vmatpush.msra.mxu0 %v284
    %6018 = vmatpush.msra.mxu0 %v276
    %6019 = vmatpush.msra.mxu0 %v268
    %6020 = vmatpush.msra.mxu0 %v260
    %6021 = vmatpush.msra.mxu0 %v252
    %6022 = vmatmul.f32.gmra.mxu0 %v5905
    %v6023 = vpop.f32.mrf.mxu0
    %v6024 = vadd.f32 %v6004, %v6023
    %6025 = vdwg.mxu0
    %6026 = vmatpush.msra.mxu0 %v245
    %6027 = vmatpush.msra.mxu0 %v237
    %6028 = vmatpush.msra.mxu0 %v229
    %6029 = vmatpush.msra.mxu0 %v221
    %6030 = vmatpush.msra.mxu0 %v213
    %6031 = vmatpush.msra.mxu0 %v205
    %6032 = vmatpush.msra.mxu0 %v197
    %6033 = vmatpush.msra.mxu0 %v189
    %6034 = vmatpush.msra.mxu0 %v181
    %6035 = vmatpush.msra.mxu0 %v173
    %6036 = vmatpush.msra.mxu0 %v165
    %6037 = vmatpush.msra.mxu0 %v157
    %6038 = vmatpush.msra.mxu0 %v149
    %6039 = vmatpush.msra.mxu0 %v141
    %6040 = vmatpush.msra.mxu0 %v133
    %6041 = vmatpush.msra.mxu0 %v125
    %6042 = vmatmul.f32.gmra.mxu0 %v5904
    %v6043 = vpop.f32.mrf.mxu0
    %v6044 = vadd.f32 0.0, %v6043
    %6045 = vdwg.mxu0
    %6046 = vmatpush.msra.mxu0 %v373
    %6047 = vmatpush.msra.mxu0 %v365
    %6048 = vmatpush.msra.mxu0 %v357
    %6049 = vmatpush.msra.mxu0 %v349
    %6050 = vmatpush.msra.mxu0 %v341
    %6051 = vmatpush.msra.mxu0 %v333
    %6052 = vmatpush.msra.mxu0 %v325
    %6053 = vmatpush.msra.mxu0 %v317
    %6054 = vmatpush.msra.mxu0 %v309
    %6055 = vmatpush.msra.mxu0 %v301
    %6056 = vmatpush.msra.mxu0 %v293
    %6057 = vmatpush.msra.mxu0 %v285
    %6058 = vmatpush.msra.mxu0 %v277
    %6059 = vmatpush.msra.mxu0 %v269
    %6060 = vmatpush.msra.mxu0 %v261
    %6061 = vmatpush.msra.mxu0 %v253
    %6062 = vmatmul.f32.gmra.mxu0 %v5905
    %v6063 = vpop.f32.mrf.mxu0
    %v6064 = vadd.f32 %v6044, %v6063
    %6065 = vdwg.mxu0
    %6066 = vmatpush.msra.mxu0 %v246
    %6067 = vmatpush.msra.mxu0 %v238
    %6068 = vmatpush.msra.mxu0 %v230
    %6069 = vmatpush.msra.mxu0 %v222
    %6070 = vmatpush.msra.mxu0 %v214
    %6071 = vmatpush.msra.mxu0 %v206
    %6072 = vmatpush.msra.mxu0 %v198
    %6073 = vmatpush.msra.mxu0 %v190
    %6074 = vmatpush.msra.mxu0 %v182
    %6075 = vmatpush.msra.mxu0 %v174
    %6076 = vmatpush.msra.mxu0 %v166
    %6077 = vmatpush.msra.mxu0 %v158
    %6078 = vmatpush.msra.mxu0 %v150
    %6079 = vmatpush.msra.mxu0 %v142
    %6080 = vmatpush.msra.mxu0 %v134
    %6081 = vmatpush.msra.mxu0 %v126
    %6082 = vmatmul.f32.gmra.mxu0 %v5904
    %v6083 = vpop.f32.mrf.mxu0
    %v6084 = vadd.f32 0.0, %v6083
    %6085 = vdwg.mxu0
    %6086 = vmatpush.msra.mxu0 %v374
    %6087 = vmatpush.msra.mxu0 %v366
    %6088 = vmatpush.msra.mxu0 %v358
    %6089 = vmatpush.msra.mxu0 %v350
    %6090 = vmatpush.msra.mxu0 %v342
    %6091 = vmatpush.msra.mxu0 %v334
    %6092 = vmatpush.msra.mxu0 %v326
    %6093 = vmatpush.msra.mxu0 %v318
    %6094 = vmatpush.msra.mxu0 %v310
    %6095 = vmatpush.msra.mxu0 %v302
    %6096 = vmatpush.msra.mxu0 %v294
    %6097 = vmatpush.msra.mxu0 %v286
    %6098 = vmatpush.msra.mxu0 %v278
    %6099 = vmatpush.msra.mxu0 %v270
    %6100 = vmatpush.msra.mxu0 %v262
    %6101 = vmatpush.msra.mxu0 %v254
    %6102 = vmatmul.f32.gmra.mxu0 %v5905
    %v6103 = vpop.f32.mrf.mxu0
    %v6104 = vadd.f32 %v6084, %v6103
    %6105 = vdwg.mxu0
    %6106 = vmatpush.msra.mxu0 %v247
    %6107 = vmatpush.msra.mxu0 %v239
    %6108 = vmatpush.msra.mxu0 %v231
    %6109 = vmatpush.msra.mxu0 %v223
    %6110 = vmatpush.msra.mxu0 %v215
    %6111 = vmatpush.msra.mxu0 %v207
    %6112 = vmatpush.msra.mxu0 %v199
    %6113 = vmatpush.msra.mxu0 %v191
    %6114 = vmatpush.msra.mxu0 %v183
    %6115 = vmatpush.msra.mxu0 %v175
    %6116 = vmatpush.msra.mxu0 %v167
    %6117 = vmatpush.msra.mxu0 %v159
    %6118 = vmatpush.msra.mxu0 %v151
    %6119 = vmatpush.msra.mxu0 %v143
    %6120 = vmatpush.msra.mxu0 %v135
    %6121 = vmatpush.msra.mxu0 %v127
    %6122 = vmatmul.f32.gmra.mxu0 %v5904
    %v6123 = vpop.f32.mrf.mxu0
    %v6124 = vadd.f32 0.0, %v6123
    %6125 = vdwg.mxu0
    %6126 = vmatpush.msra.mxu0 %v375
    %6127 = vmatpush.msra.mxu0 %v367
    %6128 = vmatpush.msra.mxu0 %v359
    %6129 = vmatpush.msra.mxu0 %v351
    %6130 = vmatpush.msra.mxu0 %v343
    %6131 = vmatpush.msra.mxu0 %v335
    %6132 = vmatpush.msra.mxu0 %v327
    %6133 = vmatpush.msra.mxu0 %v319
    %6134 = vmatpush.msra.mxu0 %v311
    %6135 = vmatpush.msra.mxu0 %v303
    %6136 = vmatpush.msra.mxu0 %v295
    %6137 = vmatpush.msra.mxu0 %v287
    %6138 = vmatpush.msra.mxu0 %v279
    %6139 = vmatpush.msra.mxu0 %v271
    %6140 = vmatpush.msra.mxu0 %v263
    %6141 = vmatpush.msra.mxu0 %v255
    %6142 = vmatmul.f32.gmra.mxu0 %v5905
    %v6143 = vpop.f32.mrf.mxu0
    %v6144 = vadd.f32 %v6124, %v6143
    %6145 = vdwg.mxu0
    %6146 = vmatpush.msra.mxu0 %v248
    %6147 = vmatpush.msra.mxu0 %v240
    %6148 = vmatpush.msra.mxu0 %v232
    %6149 = vmatpush.msra.mxu0 %v224
    %6150 = vmatpush.msra.mxu0 %v216
    %6151 = vmatpush.msra.mxu0 %v208
    %6152 = vmatpush.msra.mxu0 %v200
    %6153 = vmatpush.msra.mxu0 %v192
    %6154 = vmatpush.msra.mxu0 %v184
    %6155 = vmatpush.msra.mxu0 %v176
    %6156 = vmatpush.msra.mxu0 %v168
    %6157 = vmatpush.msra.mxu0 %v160
    %6158 = vmatpush.msra.mxu0 %v152
    %6159 = vmatpush.msra.mxu0 %v144
    %6160 = vmatpush.msra.mxu0 %v136
    %6161 = vmatpush.msra.mxu0 %v128
    %6162 = vmatmul.f32.gmra.mxu0 %v5904
    %v6163 = vpop.f32.mrf.mxu0
    %v6164 = vadd.f32 0.0, %v6163
    %6165 = vdwg.mxu0
    %6166 = vmatpush.msra.mxu0 %v376
    %6167 = vmatpush.msra.mxu0 %v368
    %6168 = vmatpush.msra.mxu0 %v360
    %6169 = vmatpush.msra.mxu0 %v352
    %6170 = vmatpush.msra.mxu0 %v344
    %6171 = vmatpush.msra.mxu0 %v336
    %6172 = vmatpush.msra.mxu0 %v328
    %6173 = vmatpush.msra.mxu0 %v320
    %6174 = vmatpush.msra.mxu0 %v312
    %6175 = vmatpush.msra.mxu0 %v304
    %6176 = vmatpush.msra.mxu0 %v296
    %6177 = vmatpush.msra.mxu0 %v288
    %6178 = vmatpush.msra.mxu0 %v280
    %6179 = vmatpush.msra.mxu0 %v272
    %6180 = vmatpush.msra.mxu0 %v264
    %6181 = vmatpush.msra.mxu0 %v256
    %6182 = vmatmul.f32.gmra.mxu0 %v5905
    %v6183 = vpop.f32.mrf.mxu0
    %v6184 = vadd.f32 %v6164, %v6183
    %6185 = vdwg.mxu0
    %6186 = vmatpush.msra.mxu0 %v249
    %6187 = vmatpush.msra.mxu0 %v241
    %6188 = vmatpush.msra.mxu0 %v233
    %6189 = vmatpush.msra.mxu0 %v225
    %6190 = vmatpush.msra.mxu0 %v217
    %6191 = vmatpush.msra.mxu0 %v209
    %6192 = vmatpush.msra.mxu0 %v201
    %6193 = vmatpush.msra.mxu0 %v193
    %6194 = vmatpush.msra.mxu0 %v185
    %6195 = vmatpush.msra.mxu0 %v177
    %6196 = vmatpush.msra.mxu0 %v169
    %6197 = vmatpush.msra.mxu0 %v161
    %6198 = vmatpush.msra.mxu0 %v153
    %6199 = vmatpush.msra.mxu0 %v145
    %6200 = vmatpush.msra.mxu0 %v137
    %6201 = vmatpush.msra.mxu0 %v129
    %6202 = vmatmul.f32.gmra.mxu0 %v5904
    %v6203 = vpop.f32.mrf.mxu0
    %v6204 = vadd.f32 0.0, %v6203
    %6205 = vdwg.mxu0
    %6206 = vmatpush.msra.mxu0 %v377
    %6207 = vmatpush.msra.mxu0 %v369
    %6208 = vmatpush.msra.mxu0 %v361
    %6209 = vmatpush.msra.mxu0 %v353
    %6210 = vmatpush.msra.mxu0 %v345
    %6211 = vmatpush.msra.mxu0 %v337
    %6212 = vmatpush.msra.mxu0 %v329
    %6213 = vmatpush.msra.mxu0 %v321
    %6214 = vmatpush.msra.mxu0 %v313
    %6215 = vmatpush.msra.mxu0 %v305
    %6216 = vmatpush.msra.mxu0 %v297
    %6217 = vmatpush.msra.mxu0 %v289
    %6218 = vmatpush.msra.mxu0 %v281
    %6219 = vmatpush.msra.mxu0 %v273
    %6220 = vmatpush.msra.mxu0 %v265
    %6221 = vmatpush.msra.mxu0 %v257
    %6222 = vmatmul.f32.gmra.mxu0 %v5905
    %v6223 = vpop.f32.mrf.mxu0
    %v6224 = vadd.f32 %v6204, %v6223
    %6225 = vdwg.mxu0
    %v6226 = vadd.f32 %v5896, %v5944
    %v6227 = vadd.f32 %v5897, %v5984
    %v6228 = vadd.f32 %v5898, %v6024
    %v6229 = vadd.f32 %v5899, %v6064
    %v6230 = vadd.f32 %v5900, %v6104
    %v6231 = vadd.f32 %v5901, %v6144
    %v6232 = vadd.f32 %v5902, %v6184
    %v6233 = vadd.f32 %v5903, %v6224
    %v6234 = vld [vmem:[#allocation3] sm:$0xff]
    %v6235 = vld [vmem:[#allocation3 + $0x8] sm:$0xff]
    %v6236 = vxor.u32 %v6226, 2147483648
    %v6237 = vxor.u32 %v6227, 2147483648
    %v6238 = vmul.f32 %v6236, 1.442695
    %v6239 = vpow.pop %v6238
    %v6240 = vmul.f32 %v6237, 1.442695
    %v6241 = vpow.pop %v6240
    %v6242 = vadd.f32 %v6239, 1.0
    %v6243 = vadd.f32 %v6241, 1.0
    %v6244 = vrcp.pop %v6242
    %v6245 = vmul.f32 %v6242, %v6244
    %v6246 = vsub.f32 1.0, %v6245
    %v6247 = vmul.f32 %v6244, %v6246
    %v6248 = vadd.f32 %v6244, %v6247
    %vm6249 = vweird.f32 %v6242
    %vm6250 = vweird.f32 %v6244
    %vm6251 = vmor %vm6249, %vm6250
    %v6252 = vsel %vm6251, %v6244, %v6248
    %v6253 = vand.u32 2147483647, %v6242
    %vm6254 = vcmp.eq.f32.partialorder %v6253, 8.507059e+37
    %v6255 = vand.u32 %v6242, 2147483648
    %v6256 = vor.u32 1.1754944e-38, %v6255
    %v6257 = vsel %vm6254, %v6256, %v6252
    %v6258 = vmul.f32 1.0, %v6257
    %v6259 = vrcp.pop %v6243
    %v6260 = vmul.f32 %v6243, %v6259
    %v6261 = vsub.f32 1.0, %v6260
    %v6262 = vmul.f32 %v6259, %v6261
    %v6263 = vadd.f32 %v6259, %v6262
    %vm6264 = vweird.f32 %v6243
    %vm6265 = vweird.f32 %v6259
    %vm6266 = vmor %vm6264, %vm6265
    %v6267 = vsel %vm6266, %v6259, %v6263
    %v6268 = vand.u32 2147483647, %v6243
    %vm6269 = vcmp.eq.f32.partialorder %v6268, 8.507059e+37
    %v6270 = vand.u32 %v6243, 2147483648
    %v6271 = vor.u32 1.1754944e-38, %v6270
    %v6272 = vsel %vm6269, %v6271, %v6267
    %v6273 = vmul.f32 1.0, %v6272
    %v6274 = vxor.u32 %v6228, 2147483648
    %v6275 = vxor.u32 %v6229, 2147483648
    %v6276 = vmul.f32 %v6274, 1.442695
    %v6277 = vpow.pop %v6276
    %v6278 = vmul.f32 %v6275, 1.442695
    %v6279 = vpow.pop %v6278
    %v6280 = vadd.f32 %v6277, 1.0
    %v6281 = vadd.f32 %v6279, 1.0
    %v6282 = vrcp.pop %v6280
    %v6283 = vmul.f32 %v6280, %v6282
    %v6284 = vsub.f32 1.0, %v6283
    %v6285 = vmul.f32 %v6282, %v6284
    %v6286 = vadd.f32 %v6282, %v6285
    %vm6287 = vweird.f32 %v6280
    %vm6288 = vweird.f32 %v6282
    %vm6289 = vmor %vm6287, %vm6288
    %v6290 = vsel %vm6289, %v6282, %v6286
    %v6291 = vand.u32 2147483647, %v6280
    %vm6292 = vcmp.eq.f32.partialorder %v6291, 8.507059e+37
    %v6293 = vand.u32 %v6280, 2147483648
    %v6294 = vor.u32 1.1754944e-38, %v6293
    %v6295 = vsel %vm6292, %v6294, %v6290
    %v6296 = vmul.f32 1.0, %v6295
    %v6297 = vrcp.pop %v6281
    %v6298 = vmul.f32 %v6281, %v6297
    %v6299 = vsub.f32 1.0, %v6298
    %v6300 = vmul.f32 %v6297, %v6299
    %v6301 = vadd.f32 %v6297, %v6300
    %vm6302 = vweird.f32 %v6281
    %vm6303 = vweird.f32 %v6297
    %vm6304 = vmor %vm6302, %vm6303
    %v6305 = vsel %vm6304, %v6297, %v6301
    %v6306 = vand.u32 2147483647, %v6281
    %vm6307 = vcmp.eq.f32.partialorder %v6306, 8.507059e+37
    %v6308 = vand.u32 %v6281, 2147483648
    %v6309 = vor.u32 1.1754944e-38, %v6308
    %v6310 = vsel %vm6307, %v6309, %v6305
    %v6311 = vmul.f32 1.0, %v6310
    %v6312 = vtanh.pop %v6230
    %v6313 = vtanh.pop %v6231
    %v6314 = vxor.u32 %v6232, 2147483648
    %v6315 = vxor.u32 %v6233, 2147483648
    %v6316 = vmul.f32 %v6314, 1.442695
    %v6317 = vpow.pop %v6316
    %v6318 = vmul.f32 %v6315, 1.442695
    %v6319 = vpow.pop %v6318
    %v6320 = vadd.f32 %v6317, 1.0
    %v6321 = vadd.f32 %v6319, 1.0
    %v6322 = vrcp.pop %v6320
    %v6323 = vmul.f32 %v6320, %v6322
    %v6324 = vsub.f32 1.0, %v6323
    %v6325 = vmul.f32 %v6322, %v6324
    %v6326 = vadd.f32 %v6322, %v6325
    %vm6327 = vweird.f32 %v6320
    %vm6328 = vweird.f32 %v6322
    %vm6329 = vmor %vm6327, %vm6328
    %v6330 = vsel %vm6329, %v6322, %v6326
    %v6331 = vand.u32 2147483647, %v6320
    %vm6332 = vcmp.eq.f32.partialorder %v6331, 8.507059e+37
    %v6333 = vand.u32 %v6320, 2147483648
    %v6334 = vor.u32 1.1754944e-38, %v6333
    %v6335 = vsel %vm6332, %v6334, %v6330
    %v6336 = vmul.f32 1.0, %v6335
    %v6337 = vrcp.pop %v6321
    %v6338 = vmul.f32 %v6321, %v6337
    %v6339 = vsub.f32 1.0, %v6338
    %v6340 = vmul.f32 %v6337, %v6339
    %v6341 = vadd.f32 %v6337, %v6340
    %vm6342 = vweird.f32 %v6321
    %vm6343 = vweird.f32 %v6337
    %vm6344 = vmor %vm6342, %vm6343
    %v6345 = vsel %vm6344, %v6337, %v6341
    %v6346 = vand.u32 2147483647, %v6321
    %vm6347 = vcmp.eq.f32.partialorder %v6346, 8.507059e+37
    %v6348 = vand.u32 %v6321, 2147483648
    %v6349 = vor.u32 1.1754944e-38, %v6348
    %v6350 = vsel %vm6347, %v6349, %v6345
    %v6351 = vmul.f32 1.0, %v6350
    %v6352 = vmul.f32 %v6296, %v6234
    %v6353 = vmul.f32 %v6311, %v6235
    %v6354 = vmul.f32 %v6258, %v6312
    %v6355 = vmul.f32 %v6273, %v6313
    %v6356 = vadd.f32 %v6352, %v6354
    %v6357 = vadd.f32 %v6353, %v6355
    %v6358 = vtanh.pop %v6356
    %v6359 = vtanh.pop %v6357
    %v6360 = vmul.f32 %v6336, %v6358
    %v6361 = vmul.f32 %v6351, %v6359
    %6362 = vst [vmem:[#allocation3] sm:$0xff] %v6356
    %6363 = vst [vmem:[#allocation3 + $0x8] sm:$0xff] %v6357
    %6364 = vst [vmem:[#allocation2] sm:$0xff] %v6360
    %6365 = vst [vmem:[#allocation2 + $0x8] sm:$0xff] %v6361
    %v6366 = vld [vmem:[#allocation2] sm:$0xff]
    %v6367 = vld [vmem:[#allocation2 + $0x8] sm:$0xff]
    %v6368 = vld [vmem:[#allocation2 + $0x10] sm:$0xff]
    %v6369 = vld [vmem:[#allocation2 + $0x18] sm:$0xff]
    %6370 = vmatpush.msra.mxu0 %v498
    %6371 = vmatpush.msra.mxu0 %v490
    %6372 = vmatpush.msra.mxu0 %v482
    %6373 = vmatpush.msra.mxu0 %v474
    %6374 = vmatpush.msra.mxu0 %v466
    %6375 = vmatpush.msra.mxu0 %v458
    %6376 = vmatpush.msra.mxu0 %v450
    %6377 = vmatpush.msra.mxu0 %v442
    %6378 = vmatpush.msra.mxu0 %v434
    %6379 = vmatpush.msra.mxu0 %v426
    %6380 = vmatpush.msra.mxu0 %v418
    %6381 = vmatpush.msra.mxu0 %v410
    %6382 = vmatpush.msra.mxu0 %v402
    %6383 = vmatpush.msra.mxu0 %v394
    %6384 = vmatpush.msra.mxu0 %v386
    %6385 = vmatpush.msra.mxu0 %v378
    %6386 = vmatmul.f32.gmra.mxu0 %v6366
    %v6387 = vpop.f32.mrf.mxu0
    %v6388 = vadd.f32 %v1366, %v6387
    %6389 = vdwg.mxu0
    %6390 = vmatpush.msra.mxu0 %v626
    %6391 = vmatpush.msra.mxu0 %v618
    %6392 = vmatpush.msra.mxu0 %v610
    %6393 = vmatpush.msra.mxu0 %v602
    %6394 = vmatpush.msra.mxu0 %v594
    %6395 = vmatpush.msra.mxu0 %v586
    %6396 = vmatpush.msra.mxu0 %v578
    %6397 = vmatpush.msra.mxu0 %v570
    %6398 = vmatpush.msra.mxu0 %v562
    %6399 = vmatpush.msra.mxu0 %v554
    %6400 = vmatpush.msra.mxu0 %v546
    %6401 = vmatpush.msra.mxu0 %v538
    %6402 = vmatpush.msra.mxu0 %v530
    %6403 = vmatpush.msra.mxu0 %v522
    %6404 = vmatpush.msra.mxu0 %v514
    %6405 = vmatpush.msra.mxu0 %v506
    %6406 = vmatmul.f32.gmra.mxu0 %v6367
    %v6407 = vpop.f32.mrf.mxu0
    %v6408 = vadd.f32 %v6388, %v6407
    %6409 = vdwg.mxu0
    %6410 = vmatpush.msra.mxu0 %v754
    %6411 = vmatpush.msra.mxu0 %v746
    %6412 = vmatpush.msra.mxu0 %v738
    %6413 = vmatpush.msra.mxu0 %v730
    %6414 = vmatpush.msra.mxu0 %v722
    %6415 = vmatpush.msra.mxu0 %v714
    %6416 = vmatpush.msra.mxu0 %v706
    %6417 = vmatpush.msra.mxu0 %v698
    %6418 = vmatpush.msra.mxu0 %v690
    %6419 = vmatpush.msra.mxu0 %v682
    %6420 = vmatpush.msra.mxu0 %v674
    %6421 = vmatpush.msra.mxu0 %v666
    %6422 = vmatpush.msra.mxu0 %v658
    %6423 = vmatpush.msra.mxu0 %v650
    %6424 = vmatpush.msra.mxu0 %v642
    %6425 = vmatpush.msra.mxu0 %v634
    %6426 = vmatmul.f32.gmra.mxu0 %v6368
    %v6427 = vpop.f32.mrf.mxu0
    %v6428 = vadd.f32 %v6408, %v6427
    %6429 = vdwg.mxu0
    %6430 = vmatpush.msra.mxu0 %v882
    %6431 = vmatpush.msra.mxu0 %v874
    %6432 = vmatpush.msra.mxu0 %v866
    %6433 = vmatpush.msra.mxu0 %v858
    %6434 = vmatpush.msra.mxu0 %v850
    %6435 = vmatpush.msra.mxu0 %v842
    %6436 = vmatpush.msra.mxu0 %v834
    %6437 = vmatpush.msra.mxu0 %v826
    %6438 = vmatpush.msra.mxu0 %v818
    %6439 = vmatpush.msra.mxu0 %v810
    %6440 = vmatpush.msra.mxu0 %v802
    %6441 = vmatpush.msra.mxu0 %v794
    %6442 = vmatpush.msra.mxu0 %v786
    %6443 = vmatpush.msra.mxu0 %v778
    %6444 = vmatpush.msra.mxu0 %v770
    %6445 = vmatpush.msra.mxu0 %v762
    %6446 = vmatmul.f32.gmra.mxu0 %v6369
    %v6447 = vpop.f32.mrf.mxu0
    %v6448 = vadd.f32 %v6428, %v6447
    %6449 = vdwg.mxu0
    %6450 = vmatpush.msra.mxu0 %v499
    %6451 = vmatpush.msra.mxu0 %v491
    %6452 = vmatpush.msra.mxu0 %v483
    %6453 = vmatpush.msra.mxu0 %v475
    %6454 = vmatpush.msra.mxu0 %v467
    %6455 = vmatpush.msra.mxu0 %v459
    %6456 = vmatpush.msra.mxu0 %v451
    %6457 = vmatpush.msra.mxu0 %v443
    %6458 = vmatpush.msra.mxu0 %v435
    %6459 = vmatpush.msra.mxu0 %v427
    %6460 = vmatpush.msra.mxu0 %v419
    %6461 = vmatpush.msra.mxu0 %v411
    %6462 = vmatpush.msra.mxu0 %v403
    %6463 = vmatpush.msra.mxu0 %v395
    %6464 = vmatpush.msra.mxu0 %v387
    %6465 = vmatpush.msra.mxu0 %v379
    %6466 = vmatmul.f32.gmra.mxu0 %v6366
    %v6467 = vpop.f32.mrf.mxu0
    %v6468 = vadd.f32 %v1367, %v6467
    %6469 = vdwg.mxu0
    %6470 = vmatpush.msra.mxu0 %v627
    %6471 = vmatpush.msra.mxu0 %v619
    %6472 = vmatpush.msra.mxu0 %v611
    %6473 = vmatpush.msra.mxu0 %v603
    %6474 = vmatpush.msra.mxu0 %v595
    %6475 = vmatpush.msra.mxu0 %v587
    %6476 = vmatpush.msra.mxu0 %v579
    %6477 = vmatpush.msra.mxu0 %v571
    %6478 = vmatpush.msra.mxu0 %v563
    %6479 = vmatpush.msra.mxu0 %v555
    %6480 = vmatpush.msra.mxu0 %v547
    %6481 = vmatpush.msra.mxu0 %v539
    %6482 = vmatpush.msra.mxu0 %v531
    %6483 = vmatpush.msra.mxu0 %v523
    %6484 = vmatpush.msra.mxu0 %v515
    %6485 = vmatpush.msra.mxu0 %v507
    %6486 = vmatmul.f32.gmra.mxu0 %v6367
    %v6487 = vpop.f32.mrf.mxu0
    %v6488 = vadd.f32 %v6468, %v6487
    %6489 = vdwg.mxu0
    %6490 = vmatpush.msra.mxu0 %v755
    %6491 = vmatpush.msra.mxu0 %v747
    %6492 = vmatpush.msra.mxu0 %v739
    %6493 = vmatpush.msra.mxu0 %v731
    %6494 = vmatpush.msra.mxu0 %v723
    %6495 = vmatpush.msra.mxu0 %v715
    %6496 = vmatpush.msra.mxu0 %v707
    %6497 = vmatpush.msra.mxu0 %v699
    %6498 = vmatpush.msra.mxu0 %v691
    %6499 = vmatpush.msra.mxu0 %v683
    %6500 = vmatpush.msra.mxu0 %v675
    %6501 = vmatpush.msra.mxu0 %v667
    %6502 = vmatpush.msra.mxu0 %v659
    %6503 = vmatpush.msra.mxu0 %v651
    %6504 = vmatpush.msra.mxu0 %v643
    %6505 = vmatpush.msra.mxu0 %v635
    %6506 = vmatmul.f32.gmra.mxu0 %v6368
    %v6507 = vpop.f32.mrf.mxu0
    %v6508 = vadd.f32 %v6488, %v6507
    %6509 = vdwg.mxu0
    %6510 = vmatpush.msra.mxu0 %v883
    %6511 = vmatpush.msra.mxu0 %v875
    %6512 = vmatpush.msra.mxu0 %v867
    %6513 = vmatpush.msra.mxu0 %v859
    %6514 = vmatpush.msra.mxu0 %v851
    %6515 = vmatpush.msra.mxu0 %v843
    %6516 = vmatpush.msra.mxu0 %v835
    %6517 = vmatpush.msra.mxu0 %v827
    %6518 = vmatpush.msra.mxu0 %v819
    %6519 = vmatpush.msra.mxu0 %v811
    %6520 = vmatpush.msra.mxu0 %v803
    %6521 = vmatpush.msra.mxu0 %v795
    %6522 = vmatpush.msra.mxu0 %v787
    %6523 = vmatpush.msra.mxu0 %v779
    %6524 = vmatpush.msra.mxu0 %v771
    %6525 = vmatpush.msra.mxu0 %v763
    %6526 = vmatmul.f32.gmra.mxu0 %v6369
    %v6527 = vpop.f32.mrf.mxu0
    %v6528 = vadd.f32 %v6508, %v6527
    %6529 = vdwg.mxu0
    %6530 = vmatpush.msra.mxu0 %v500
    %6531 = vmatpush.msra.mxu0 %v492
    %6532 = vmatpush.msra.mxu0 %v484
    %6533 = vmatpush.msra.mxu0 %v476
    %6534 = vmatpush.msra.mxu0 %v468
    %6535 = vmatpush.msra.mxu0 %v460
    %6536 = vmatpush.msra.mxu0 %v452
    %6537 = vmatpush.msra.mxu0 %v444
    %6538 = vmatpush.msra.mxu0 %v436
    %6539 = vmatpush.msra.mxu0 %v428
    %6540 = vmatpush.msra.mxu0 %v420
    %6541 = vmatpush.msra.mxu0 %v412
    %6542 = vmatpush.msra.mxu0 %v404
    %6543 = vmatpush.msra.mxu0 %v396
    %6544 = vmatpush.msra.mxu0 %v388
    %6545 = vmatpush.msra.mxu0 %v380
    %6546 = vmatmul.f32.gmra.mxu0 %v6366
    %v6547 = vpop.f32.mrf.mxu0
    %v6548 = vadd.f32 %v1368, %v6547
    %6549 = vdwg.mxu0
    %6550 = vmatpush.msra.mxu0 %v628
    %6551 = vmatpush.msra.mxu0 %v620
    %6552 = vmatpush.msra.mxu0 %v612
    %6553 = vmatpush.msra.mxu0 %v604
    %6554 = vmatpush.msra.mxu0 %v596
    %6555 = vmatpush.msra.mxu0 %v588
    %6556 = vmatpush.msra.mxu0 %v580
    %6557 = vmatpush.msra.mxu0 %v572
    %6558 = vmatpush.msra.mxu0 %v564
    %6559 = vmatpush.msra.mxu0 %v556
    %6560 = vmatpush.msra.mxu0 %v548
    %6561 = vmatpush.msra.mxu0 %v540
    %6562 = vmatpush.msra.mxu0 %v532
    %6563 = vmatpush.msra.mxu0 %v524
    %6564 = vmatpush.msra.mxu0 %v516
    %6565 = vmatpush.msra.mxu0 %v508
    %6566 = vmatmul.f32.gmra.mxu0 %v6367
    %v6567 = vpop.f32.mrf.mxu0
    %v6568 = vadd.f32 %v6548, %v6567
    %6569 = vdwg.mxu0
    %6570 = vmatpush.msra.mxu0 %v756
    %6571 = vmatpush.msra.mxu0 %v748
    %6572 = vmatpush.msra.mxu0 %v740
    %6573 = vmatpush.msra.mxu0 %v732
    %6574 = vmatpush.msra.mxu0 %v724
    %6575 = vmatpush.msra.mxu0 %v716
    %6576 = vmatpush.msra.mxu0 %v708
    %6577 = vmatpush.msra.mxu0 %v700
    %6578 = vmatpush.msra.mxu0 %v692
    %6579 = vmatpush.msra.mxu0 %v684
    %6580 = vmatpush.msra.mxu0 %v676
    %6581 = vmatpush.msra.mxu0 %v668
    %6582 = vmatpush.msra.mxu0 %v660
    %6583 = vmatpush.msra.mxu0 %v652
    %6584 = vmatpush.msra.mxu0 %v644
    %6585 = vmatpush.msra.mxu0 %v636
    %6586 = vmatmul.f32.gmra.mxu0 %v6368
    %v6587 = vpop.f32.mrf.mxu0
    %v6588 = vadd.f32 %v6568, %v6587
    %6589 = vdwg.mxu0
    %6590 = vmatpush.msra.mxu0 %v884
    %6591 = vmatpush.msra.mxu0 %v876
    %6592 = vmatpush.msra.mxu0 %v868
    %6593 = vmatpush.msra.mxu0 %v860
    %6594 = vmatpush.msra.mxu0 %v852
    %6595 = vmatpush.msra.mxu0 %v844
    %6596 = vmatpush.msra.mxu0 %v836
    %6597 = vmatpush.msra.mxu0 %v828
    %6598 = vmatpush.msra.mxu0 %v820
    %6599 = vmatpush.msra.mxu0 %v812
    %6600 = vmatpush.msra.mxu0 %v804
    %6601 = vmatpush.msra.mxu0 %v796
    %6602 = vmatpush.msra.mxu0 %v788
    %6603 = vmatpush.msra.mxu0 %v780
    %6604 = vmatpush.msra.mxu0 %v772
    %6605 = vmatpush.msra.mxu0 %v764
    %6606 = vmatmul.f32.gmra.mxu0 %v6369
    %v6607 = vpop.f32.mrf.mxu0
    %v6608 = vadd.f32 %v6588, %v6607
    %6609 = vdwg.mxu0
    %6610 = vmatpush.msra.mxu0 %v501
    %6611 = vmatpush.msra.mxu0 %v493
    %6612 = vmatpush.msra.mxu0 %v485
    %6613 = vmatpush.msra.mxu0 %v477
    %6614 = vmatpush.msra.mxu0 %v469
    %6615 = vmatpush.msra.mxu0 %v461
    %6616 = vmatpush.msra.mxu0 %v453
    %6617 = vmatpush.msra.mxu0 %v445
    %6618 = vmatpush.msra.mxu0 %v437
    %6619 = vmatpush.msra.mxu0 %v429
    %6620 = vmatpush.msra.mxu0 %v421
    %6621 = vmatpush.msra.mxu0 %v413
    %6622 = vmatpush.msra.mxu0 %v405
    %6623 = vmatpush.msra.mxu0 %v397
    %6624 = vmatpush.msra.mxu0 %v389
    %6625 = vmatpush.msra.mxu0 %v381
    %6626 = vmatmul.f32.gmra.mxu0 %v6366
    %v6627 = vpop.f32.mrf.mxu0
    %v6628 = vadd.f32 %v1369, %v6627
    %6629 = vdwg.mxu0
    %6630 = vmatpush.msra.mxu0 %v629
    %6631 = vmatpush.msra.mxu0 %v621
    %6632 = vmatpush.msra.mxu0 %v613
    %6633 = vmatpush.msra.mxu0 %v605
    %6634 = vmatpush.msra.mxu0 %v597
    %6635 = vmatpush.msra.mxu0 %v589
    %6636 = vmatpush.msra.mxu0 %v581
    %6637 = vmatpush.msra.mxu0 %v573
    %6638 = vmatpush.msra.mxu0 %v565
    %6639 = vmatpush.msra.mxu0 %v557
    %6640 = vmatpush.msra.mxu0 %v549
    %6641 = vmatpush.msra.mxu0 %v541
    %6642 = vmatpush.msra.mxu0 %v533
    %6643 = vmatpush.msra.mxu0 %v525
    %6644 = vmatpush.msra.mxu0 %v517
    %6645 = vmatpush.msra.mxu0 %v509
    %6646 = vmatmul.f32.gmra.mxu0 %v6367
    %v6647 = vpop.f32.mrf.mxu0
    %v6648 = vadd.f32 %v6628, %v6647
    %6649 = vdwg.mxu0
    %6650 = vmatpush.msra.mxu0 %v757
    %6651 = vmatpush.msra.mxu0 %v749
    %6652 = vmatpush.msra.mxu0 %v741
    %6653 = vmatpush.msra.mxu0 %v733
    %6654 = vmatpush.msra.mxu0 %v725
    %6655 = vmatpush.msra.mxu0 %v717
    %6656 = vmatpush.msra.mxu0 %v709
    %6657 = vmatpush.msra.mxu0 %v701
    %6658 = vmatpush.msra.mxu0 %v693
    %6659 = vmatpush.msra.mxu0 %v685
    %6660 = vmatpush.msra.mxu0 %v677
    %6661 = vmatpush.msra.mxu0 %v669
    %6662 = vmatpush.msra.mxu0 %v661
    %6663 = vmatpush.msra.mxu0 %v653
    %6664 = vmatpush.msra.mxu0 %v645
    %6665 = vmatpush.msra.mxu0 %v637
    %6666 = vmatmul.f32.gmra.mxu0 %v6368
    %v6667 = vpop.f32.mrf.mxu0
    %v6668 = vadd.f32 %v6648, %v6667
    %6669 = vdwg.mxu0
    %6670 = vmatpush.msra.mxu0 %v885
    %6671 = vmatpush.msra.mxu0 %v877
    %6672 = vmatpush.msra.mxu0 %v869
    %6673 = vmatpush.msra.mxu0 %v861
    %6674 = vmatpush.msra.mxu0 %v853
    %6675 = vmatpush.msra.mxu0 %v845
    %6676 = vmatpush.msra.mxu0 %v837
    %6677 = vmatpush.msra.mxu0 %v829
    %6678 = vmatpush.msra.mxu0 %v821
    %6679 = vmatpush.msra.mxu0 %v813
    %6680 = vmatpush.msra.mxu0 %v805
    %6681 = vmatpush.msra.mxu0 %v797
    %6682 = vmatpush.msra.mxu0 %v789
    %6683 = vmatpush.msra.mxu0 %v781
    %6684 = vmatpush.msra.mxu0 %v773
    %6685 = vmatpush.msra.mxu0 %v765
    %6686 = vmatmul.f32.gmra.mxu0 %v6369
    %v6687 = vpop.f32.mrf.mxu0
    %v6688 = vadd.f32 %v6668, %v6687
    %6689 = vdwg.mxu0
    %6690 = vmatpush.msra.mxu0 %v502
    %6691 = vmatpush.msra.mxu0 %v494
    %6692 = vmatpush.msra.mxu0 %v486
    %6693 = vmatpush.msra.mxu0 %v478
    %6694 = vmatpush.msra.mxu0 %v470
    %6695 = vmatpush.msra.mxu0 %v462
    %6696 = vmatpush.msra.mxu0 %v454
    %6697 = vmatpush.msra.mxu0 %v446
    %6698 = vmatpush.msra.mxu0 %v438
    %6699 = vmatpush.msra.mxu0 %v430
    %6700 = vmatpush.msra.mxu0 %v422
    %6701 = vmatpush.msra.mxu0 %v414
    %6702 = vmatpush.msra.mxu0 %v406
    %6703 = vmatpush.msra.mxu0 %v398
    %6704 = vmatpush.msra.mxu0 %v390
    %6705 = vmatpush.msra.mxu0 %v382
    %6706 = vmatmul.f32.gmra.mxu0 %v6366
    %v6707 = vpop.f32.mrf.mxu0
    %v6708 = vadd.f32 %v1370, %v6707
    %6709 = vdwg.mxu0
    %6710 = vmatpush.msra.mxu0 %v630
    %6711 = vmatpush.msra.mxu0 %v622
    %6712 = vmatpush.msra.mxu0 %v614
    %6713 = vmatpush.msra.mxu0 %v606
    %6714 = vmatpush.msra.mxu0 %v598
    %6715 = vmatpush.msra.mxu0 %v590
    %6716 = vmatpush.msra.mxu0 %v582
    %6717 = vmatpush.msra.mxu0 %v574
    %6718 = vmatpush.msra.mxu0 %v566
    %6719 = vmatpush.msra.mxu0 %v558
    %6720 = vmatpush.msra.mxu0 %v550
    %6721 = vmatpush.msra.mxu0 %v542
    %6722 = vmatpush.msra.mxu0 %v534
    %6723 = vmatpush.msra.mxu0 %v526
    %6724 = vmatpush.msra.mxu0 %v518
    %6725 = vmatpush.msra.mxu0 %v510
    %6726 = vmatmul.f32.gmra.mxu0 %v6367
    %v6727 = vpop.f32.mrf.mxu0
    %v6728 = vadd.f32 %v6708, %v6727
    %6729 = vdwg.mxu0
    %6730 = vmatpush.msra.mxu0 %v758
    %6731 = vmatpush.msra.mxu0 %v750
    %6732 = vmatpush.msra.mxu0 %v742
    %6733 = vmatpush.msra.mxu0 %v734
    %6734 = vmatpush.msra.mxu0 %v726
    %6735 = vmatpush.msra.mxu0 %v718
    %6736 = vmatpush.msra.mxu0 %v710
    %6737 = vmatpush.msra.mxu0 %v702
    %6738 = vmatpush.msra.mxu0 %v694
    %6739 = vmatpush.msra.mxu0 %v686
    %6740 = vmatpush.msra.mxu0 %v678
    %6741 = vmatpush.msra.mxu0 %v670
    %6742 = vmatpush.msra.mxu0 %v662
    %6743 = vmatpush.msra.mxu0 %v654
    %6744 = vmatpush.msra.mxu0 %v646
    %6745 = vmatpush.msra.mxu0 %v638
    %6746 = vmatmul.f32.gmra.mxu0 %v6368
    %v6747 = vpop.f32.mrf.mxu0
    %v6748 = vadd.f32 %v6728, %v6747
    %6749 = vdwg.mxu0
    %6750 = vmatpush.msra.mxu0 %v886
    %6751 = vmatpush.msra.mxu0 %v878
    %6752 = vmatpush.msra.mxu0 %v870
    %6753 = vmatpush.msra.mxu0 %v862
    %6754 = vmatpush.msra.mxu0 %v854
    %6755 = vmatpush.msra.mxu0 %v846
    %6756 = vmatpush.msra.mxu0 %v838
    %6757 = vmatpush.msra.mxu0 %v830
    %6758 = vmatpush.msra.mxu0 %v822
    %6759 = vmatpush.msra.mxu0 %v814
    %6760 = vmatpush.msra.mxu0 %v806
    %6761 = vmatpush.msra.mxu0 %v798
    %6762 = vmatpush.msra.mxu0 %v790
    %6763 = vmatpush.msra.mxu0 %v782
    %6764 = vmatpush.msra.mxu0 %v774
    %6765 = vmatpush.msra.mxu0 %v766
    %6766 = vmatmul.f32.gmra.mxu0 %v6369
    %v6767 = vpop.f32.mrf.mxu0
    %v6768 = vadd.f32 %v6748, %v6767
    %6769 = vdwg.mxu0
    %6770 = vmatpush.msra.mxu0 %v503
    %6771 = vmatpush.msra.mxu0 %v495
    %6772 = vmatpush.msra.mxu0 %v487
    %6773 = vmatpush.msra.mxu0 %v479
    %6774 = vmatpush.msra.mxu0 %v471
    %6775 = vmatpush.msra.mxu0 %v463
    %6776 = vmatpush.msra.mxu0 %v455
    %6777 = vmatpush.msra.mxu0 %v447
    %6778 = vmatpush.msra.mxu0 %v439
    %6779 = vmatpush.msra.mxu0 %v431
    %6780 = vmatpush.msra.mxu0 %v423
    %6781 = vmatpush.msra.mxu0 %v415
    %6782 = vmatpush.msra.mxu0 %v407
    %6783 = vmatpush.msra.mxu0 %v399
    %6784 = vmatpush.msra.mxu0 %v391
    %6785 = vmatpush.msra.mxu0 %v383
    %6786 = vmatmul.f32.gmra.mxu0 %v6366
    %v6787 = vpop.f32.mrf.mxu0
    %v6788 = vadd.f32 %v1371, %v6787
    %6789 = vdwg.mxu0
    %6790 = vmatpush.msra.mxu0 %v631
    %6791 = vmatpush.msra.mxu0 %v623
    %6792 = vmatpush.msra.mxu0 %v615
    %6793 = vmatpush.msra.mxu0 %v607
    %6794 = vmatpush.msra.mxu0 %v599
    %6795 = vmatpush.msra.mxu0 %v591
    %6796 = vmatpush.msra.mxu0 %v583
    %6797 = vmatpush.msra.mxu0 %v575
    %6798 = vmatpush.msra.mxu0 %v567
    %6799 = vmatpush.msra.mxu0 %v559
    %6800 = vmatpush.msra.mxu0 %v551
    %6801 = vmatpush.msra.mxu0 %v543
    %6802 = vmatpush.msra.mxu0 %v535
    %6803 = vmatpush.msra.mxu0 %v527
    %6804 = vmatpush.msra.mxu0 %v519
    %6805 = vmatpush.msra.mxu0 %v511
    %6806 = vmatmul.f32.gmra.mxu0 %v6367
    %v6807 = vpop.f32.mrf.mxu0
    %v6808 = vadd.f32 %v6788, %v6807
    %6809 = vdwg.mxu0
    %6810 = vmatpush.msra.mxu0 %v759
    %6811 = vmatpush.msra.mxu0 %v751
    %6812 = vmatpush.msra.mxu0 %v743
    %6813 = vmatpush.msra.mxu0 %v735
    %6814 = vmatpush.msra.mxu0 %v727
    %6815 = vmatpush.msra.mxu0 %v719
    %6816 = vmatpush.msra.mxu0 %v711
    %6817 = vmatpush.msra.mxu0 %v703
    %6818 = vmatpush.msra.mxu0 %v695
    %6819 = vmatpush.msra.mxu0 %v687
    %6820 = vmatpush.msra.mxu0 %v679
    %6821 = vmatpush.msra.mxu0 %v671
    %6822 = vmatpush.msra.mxu0 %v663
    %6823 = vmatpush.msra.mxu0 %v655
    %6824 = vmatpush.msra.mxu0 %v647
    %6825 = vmatpush.msra.mxu0 %v639
    %6826 = vmatmul.f32.gmra.mxu0 %v6368
    %v6827 = vpop.f32.mrf.mxu0
    %v6828 = vadd.f32 %v6808, %v6827
    %6829 = vdwg.mxu0
    %6830 = vmatpush.msra.mxu0 %v887
    %6831 = vmatpush.msra.mxu0 %v879
    %6832 = vmatpush.msra.mxu0 %v871
    %6833 = vmatpush.msra.mxu0 %v863
    %6834 = vmatpush.msra.mxu0 %v855
    %6835 = vmatpush.msra.mxu0 %v847
    %6836 = vmatpush.msra.mxu0 %v839
    %6837 = vmatpush.msra.mxu0 %v831
    %6838 = vmatpush.msra.mxu0 %v823
    %6839 = vmatpush.msra.mxu0 %v815
    %6840 = vmatpush.msra.mxu0 %v807
    %6841 = vmatpush.msra.mxu0 %v799
    %6842 = vmatpush.msra.mxu0 %v791
    %6843 = vmatpush.msra.mxu0 %v783
    %6844 = vmatpush.msra.mxu0 %v775
    %6845 = vmatpush.msra.mxu0 %v767
    %6846 = vmatmul.f32.gmra.mxu0 %v6369
    %v6847 = vpop.f32.mrf.mxu0
    %v6848 = vadd.f32 %v6828, %v6847
    %6849 = vdwg.mxu0
    %6850 = vmatpush.msra.mxu0 %v504
    %6851 = vmatpush.msra.mxu0 %v496
    %6852 = vmatpush.msra.mxu0 %v488
    %6853 = vmatpush.msra.mxu0 %v480
    %6854 = vmatpush.msra.mxu0 %v472
    %6855 = vmatpush.msra.mxu0 %v464
    %6856 = vmatpush.msra.mxu0 %v456
    %6857 = vmatpush.msra.mxu0 %v448
    %6858 = vmatpush.msra.mxu0 %v440
    %6859 = vmatpush.msra.mxu0 %v432
    %6860 = vmatpush.msra.mxu0 %v424
    %6861 = vmatpush.msra.mxu0 %v416
    %6862 = vmatpush.msra.mxu0 %v408
    %6863 = vmatpush.msra.mxu0 %v400
    %6864 = vmatpush.msra.mxu0 %v392
    %6865 = vmatpush.msra.mxu0 %v384
    %6866 = vmatmul.f32.gmra.mxu0 %v6366
    %v6867 = vpop.f32.mrf.mxu0
    %v6868 = vadd.f32 %v1372, %v6867
    %6869 = vdwg.mxu0
    %6870 = vmatpush.msra.mxu0 %v632
    %6871 = vmatpush.msra.mxu0 %v624
    %6872 = vmatpush.msra.mxu0 %v616
    %6873 = vmatpush.msra.mxu0 %v608
    %6874 = vmatpush.msra.mxu0 %v600
    %6875 = vmatpush.msra.mxu0 %v592
    %6876 = vmatpush.msra.mxu0 %v584
    %6877 = vmatpush.msra.mxu0 %v576
    %6878 = vmatpush.msra.mxu0 %v568
    %6879 = vmatpush.msra.mxu0 %v560
    %6880 = vmatpush.msra.mxu0 %v552
    %6881 = vmatpush.msra.mxu0 %v544
    %6882 = vmatpush.msra.mxu0 %v536
    %6883 = vmatpush.msra.mxu0 %v528
    %6884 = vmatpush.msra.mxu0 %v520
    %6885 = vmatpush.msra.mxu0 %v512
    %6886 = vmatmul.f32.gmra.mxu0 %v6367
    %v6887 = vpop.f32.mrf.mxu0
    %v6888 = vadd.f32 %v6868, %v6887
    %6889 = vdwg.mxu0
    %6890 = vmatpush.msra.mxu0 %v760
    %6891 = vmatpush.msra.mxu0 %v752
    %6892 = vmatpush.msra.mxu0 %v744
    %6893 = vmatpush.msra.mxu0 %v736
    %6894 = vmatpush.msra.mxu0 %v728
    %6895 = vmatpush.msra.mxu0 %v720
    %6896 = vmatpush.msra.mxu0 %v712
    %6897 = vmatpush.msra.mxu0 %v704
    %6898 = vmatpush.msra.mxu0 %v696
    %6899 = vmatpush.msra.mxu0 %v688
    %6900 = vmatpush.msra.mxu0 %v680
    %6901 = vmatpush.msra.mxu0 %v672
    %6902 = vmatpush.msra.mxu0 %v664
    %6903 = vmatpush.msra.mxu0 %v656
    %6904 = vmatpush.msra.mxu0 %v648
    %6905 = vmatpush.msra.mxu0 %v640
    %6906 = vmatmul.f32.gmra.mxu0 %v6368
    %v6907 = vpop.f32.mrf.mxu0
    %v6908 = vadd.f32 %v6888, %v6907
    %6909 = vdwg.mxu0
    %6910 = vmatpush.msra.mxu0 %v888
    %6911 = vmatpush.msra.mxu0 %v880
    %6912 = vmatpush.msra.mxu0 %v872
    %6913 = vmatpush.msra.mxu0 %v864
    %6914 = vmatpush.msra.mxu0 %v856
    %6915 = vmatpush.msra.mxu0 %v848
    %6916 = vmatpush.msra.mxu0 %v840
    %6917 = vmatpush.msra.mxu0 %v832
    %6918 = vmatpush.msra.mxu0 %v824
    %6919 = vmatpush.msra.mxu0 %v816
    %6920 = vmatpush.msra.mxu0 %v808
    %6921 = vmatpush.msra.mxu0 %v800
    %6922 = vmatpush.msra.mxu0 %v792
    %6923 = vmatpush.msra.mxu0 %v784
    %6924 = vmatpush.msra.mxu0 %v776
    %6925 = vmatpush.msra.mxu0 %v768
    %6926 = vmatmul.f32.gmra.mxu0 %v6369
    %v6927 = vpop.f32.mrf.mxu0
    %v6928 = vadd.f32 %v6908, %v6927
    %6929 = vdwg.mxu0
    %6930 = vmatpush.msra.mxu0 %v505
    %6931 = vmatpush.msra.mxu0 %v497
    %6932 = vmatpush.msra.mxu0 %v489
    %6933 = vmatpush.msra.mxu0 %v481
    %6934 = vmatpush.msra.mxu0 %v473
    %6935 = vmatpush.msra.mxu0 %v465
    %6936 = vmatpush.msra.mxu0 %v457
    %6937 = vmatpush.msra.mxu0 %v449
    %6938 = vmatpush.msra.mxu0 %v441
    %6939 = vmatpush.msra.mxu0 %v433
    %6940 = vmatpush.msra.mxu0 %v425
    %6941 = vmatpush.msra.mxu0 %v417
    %6942 = vmatpush.msra.mxu0 %v409
    %6943 = vmatpush.msra.mxu0 %v401
    %6944 = vmatpush.msra.mxu0 %v393
    %6945 = vmatpush.msra.mxu0 %v385
    %6946 = vmatmul.f32.gmra.mxu0 %v6366
    %v6947 = vpop.f32.mrf.mxu0
    %v6948 = vadd.f32 %v1373, %v6947
    %6949 = vdwg.mxu0
    %6950 = vmatpush.msra.mxu0 %v633
    %6951 = vmatpush.msra.mxu0 %v625
    %6952 = vmatpush.msra.mxu0 %v617
    %6953 = vmatpush.msra.mxu0 %v609
    %6954 = vmatpush.msra.mxu0 %v601
    %6955 = vmatpush.msra.mxu0 %v593
    %6956 = vmatpush.msra.mxu0 %v585
    %6957 = vmatpush.msra.mxu0 %v577
    %6958 = vmatpush.msra.mxu0 %v569
    %6959 = vmatpush.msra.mxu0 %v561
    %6960 = vmatpush.msra.mxu0 %v553
    %6961 = vmatpush.msra.mxu0 %v545
    %6962 = vmatpush.msra.mxu0 %v537
    %6963 = vmatpush.msra.mxu0 %v529
    %6964 = vmatpush.msra.mxu0 %v521
    %6965 = vmatpush.msra.mxu0 %v513
    %6966 = vmatmul.f32.gmra.mxu0 %v6367
    %v6967 = vpop.f32.mrf.mxu0
    %v6968 = vadd.f32 %v6948, %v6967
    %6969 = vdwg.mxu0
    %6970 = vmatpush.msra.mxu0 %v761
    %6971 = vmatpush.msra.mxu0 %v753
    %6972 = vmatpush.msra.mxu0 %v745
    %6973 = vmatpush.msra.mxu0 %v737
    %6974 = vmatpush.msra.mxu0 %v729
    %6975 = vmatpush.msra.mxu0 %v721
    %6976 = vmatpush.msra.mxu0 %v713
    %6977 = vmatpush.msra.mxu0 %v705
    %6978 = vmatpush.msra.mxu0 %v697
    %6979 = vmatpush.msra.mxu0 %v689
    %6980 = vmatpush.msra.mxu0 %v681
    %6981 = vmatpush.msra.mxu0 %v673
    %6982 = vmatpush.msra.mxu0 %v665
    %6983 = vmatpush.msra.mxu0 %v657
    %6984 = vmatpush.msra.mxu0 %v649
    %6985 = vmatpush.msra.mxu0 %v641
    %6986 = vmatmul.f32.gmra.mxu0 %v6368
    %v6987 = vpop.f32.mrf.mxu0
    %v6988 = vadd.f32 %v6968, %v6987
    %6989 = vdwg.mxu0
    %6990 = vmatpush.msra.mxu0 %v889
    %6991 = vmatpush.msra.mxu0 %v881
    %6992 = vmatpush.msra.mxu0 %v873
    %6993 = vmatpush.msra.mxu0 %v865
    %6994 = vmatpush.msra.mxu0 %v857
    %6995 = vmatpush.msra.mxu0 %v849
    %6996 = vmatpush.msra.mxu0 %v841
    %6997 = vmatpush.msra.mxu0 %v833
    %6998 = vmatpush.msra.mxu0 %v825
    %6999 = vmatpush.msra.mxu0 %v817
    %7000 = vmatpush.msra.mxu0 %v809
    %7001 = vmatpush.msra.mxu0 %v801
    %7002 = vmatpush.msra.mxu0 %v793
    %7003 = vmatpush.msra.mxu0 %v785
    %7004 = vmatpush.msra.mxu0 %v777
    %7005 = vmatpush.msra.mxu0 %v769
    %7006 = vmatmul.f32.gmra.mxu0 %v6369
    %v7007 = vpop.f32.mrf.mxu0
    %v7008 = vadd.f32 %v6988, %v7007
    %7009 = vdwg.mxu0
    %v7010 = vld [vmem:[#allocation4] sm:$0xff]
    %v7011 = vld [vmem:[#allocation4 + $0x8] sm:$0xff]
    %v7012 = vxor.u32 %v6448, 2147483648
    %v7013 = vxor.u32 %v6528, 2147483648
    %v7014 = vmul.f32 %v7012, 1.442695
    %v7015 = vpow.pop %v7014
    %v7016 = vmul.f32 %v7013, 1.442695
    %v7017 = vpow.pop %v7016
    %v7018 = vadd.f32 %v7015, 1.0
    %v7019 = vadd.f32 %v7017, 1.0
    %v7020 = vrcp.pop %v7018
    %v7021 = vmul.f32 %v7018, %v7020
    %v7022 = vsub.f32 1.0, %v7021
    %v7023 = vmul.f32 %v7020, %v7022
    %v7024 = vadd.f32 %v7020, %v7023
    %vm7025 = vweird.f32 %v7018
    %vm7026 = vweird.f32 %v7020
    %vm7027 = vmor %vm7025, %vm7026
    %v7028 = vsel %vm7027, %v7020, %v7024
    %v7029 = vand.u32 2147483647, %v7018
    %vm7030 = vcmp.eq.f32.partialorder %v7029, 8.507059e+37
    %v7031 = vand.u32 %v7018, 2147483648
    %v7032 = vor.u32 1.1754944e-38, %v7031
    %v7033 = vsel %vm7030, %v7032, %v7028
    %v7034 = vmul.f32 1.0, %v7033
    %v7035 = vrcp.pop %v7019
    %v7036 = vmul.f32 %v7019, %v7035
    %v7037 = vsub.f32 1.0, %v7036
    %v7038 = vmul.f32 %v7035, %v7037
    %v7039 = vadd.f32 %v7035, %v7038
    %vm7040 = vweird.f32 %v7019
    %vm7041 = vweird.f32 %v7035
    %vm7042 = vmor %vm7040, %vm7041
    %v7043 = vsel %vm7042, %v7035, %v7039
    %v7044 = vand.u32 2147483647, %v7019
    %vm7045 = vcmp.eq.f32.partialorder %v7044, 8.507059e+37
    %v7046 = vand.u32 %v7019, 2147483648
    %v7047 = vor.u32 1.1754944e-38, %v7046
    %v7048 = vsel %vm7045, %v7047, %v7043
    %v7049 = vmul.f32 1.0, %v7048
    %v7050 = vxor.u32 %v6608, 2147483648
    %v7051 = vxor.u32 %v6688, 2147483648
    %v7052 = vmul.f32 %v7050, 1.442695
    %v7053 = vpow.pop %v7052
    %v7054 = vmul.f32 %v7051, 1.442695
    %v7055 = vpow.pop %v7054
    %v7056 = vadd.f32 %v7053, 1.0
    %v7057 = vadd.f32 %v7055, 1.0
    %v7058 = vrcp.pop %v7056
    %v7059 = vmul.f32 %v7056, %v7058
    %v7060 = vsub.f32 1.0, %v7059
    %v7061 = vmul.f32 %v7058, %v7060
    %v7062 = vadd.f32 %v7058, %v7061
    %vm7063 = vweird.f32 %v7056
    %vm7064 = vweird.f32 %v7058
    %vm7065 = vmor %vm7063, %vm7064
    %v7066 = vsel %vm7065, %v7058, %v7062
    %v7067 = vand.u32 2147483647, %v7056
    %vm7068 = vcmp.eq.f32.partialorder %v7067, 8.507059e+37
    %v7069 = vand.u32 %v7056, 2147483648
    %v7070 = vor.u32 1.1754944e-38, %v7069
    %v7071 = vsel %vm7068, %v7070, %v7066
    %v7072 = vmul.f32 1.0, %v7071
    %v7073 = vrcp.pop %v7057
    %v7074 = vmul.f32 %v7057, %v7073
    %v7075 = vsub.f32 1.0, %v7074
    %v7076 = vmul.f32 %v7073, %v7075
    %v7077 = vadd.f32 %v7073, %v7076
    %vm7078 = vweird.f32 %v7057
    %vm7079 = vweird.f32 %v7073
    %vm7080 = vmor %vm7078, %vm7079
    %v7081 = vsel %vm7080, %v7073, %v7077
    %v7082 = vand.u32 2147483647, %v7057
    %vm7083 = vcmp.eq.f32.partialorder %v7082, 8.507059e+37
    %v7084 = vand.u32 %v7057, 2147483648
    %v7085 = vor.u32 1.1754944e-38, %v7084
    %v7086 = vsel %vm7083, %v7085, %v7081
    %v7087 = vmul.f32 1.0, %v7086
    %v7088 = vtanh.pop %v6768
    %v7089 = vtanh.pop %v6848
    %v7090 = vxor.u32 %v6928, 2147483648
    %v7091 = vxor.u32 %v7008, 2147483648
    %v7092 = vmul.f32 %v7090, 1.442695
    %v7093 = vpow.pop %v7092
    %v7094 = vmul.f32 %v7091, 1.442695
    %v7095 = vpow.pop %v7094
    %v7096 = vadd.f32 %v7093, 1.0
    %v7097 = vadd.f32 %v7095, 1.0
    %v7098 = vrcp.pop %v7096
    %v7099 = vmul.f32 %v7096, %v7098
    %v7100 = vsub.f32 1.0, %v7099
    %v7101 = vmul.f32 %v7098, %v7100
    %v7102 = vadd.f32 %v7098, %v7101
    %vm7103 = vweird.f32 %v7096
    %vm7104 = vweird.f32 %v7098
    %vm7105 = vmor %vm7103, %vm7104
    %v7106 = vsel %vm7105, %v7098, %v7102
    %v7107 = vand.u32 2147483647, %v7096
    %vm7108 = vcmp.eq.f32.partialorder %v7107, 8.507059e+37
    %v7109 = vand.u32 %v7096, 2147483648
    %v7110 = vor.u32 1.1754944e-38, %v7109
    %v7111 = vsel %vm7108, %v7110, %v7106
    %v7112 = vmul.f32 1.0, %v7111
    %v7113 = vrcp.pop %v7097
    %v7114 = vmul.f32 %v7097, %v7113
    %v7115 = vsub.f32 1.0, %v7114
    %v7116 = vmul.f32 %v7113, %v7115
    %v7117 = vadd.f32 %v7113, %v7116
    %vm7118 = vweird.f32 %v7097
    %vm7119 = vweird.f32 %v7113
    %vm7120 = vmor %vm7118, %vm7119
    %v7121 = vsel %vm7120, %v7113, %v7117
    %v7122 = vand.u32 2147483647, %v7097
    %vm7123 = vcmp.eq.f32.partialorder %v7122, 8.507059e+37
    %v7124 = vand.u32 %v7097, 2147483648
    %v7125 = vor.u32 1.1754944e-38, %v7124
    %v7126 = vsel %vm7123, %v7125, %v7121
    %v7127 = vmul.f32 1.0, %v7126
    %v7128 = vmul.f32 %v7072, %v7010
    %v7129 = vmul.f32 %v7087, %v7011
    %v7130 = vmul.f32 %v7034, %v7088
    %v7131 = vmul.f32 %v7049, %v7089
    %v7132 = vadd.f32 %v7128, %v7130
    %v7133 = vadd.f32 %v7129, %v7131
    %v7134 = vtanh.pop %v7132
    %v7135 = vtanh.pop %v7133
    %v7136 = vmul.f32 %v7112, %v7134
    %v7137 = vmul.f32 %v7127, %v7135
    %7138 = vst [vmem:[#allocation4] sm:$0xff] %v7132
    %7139 = vst [vmem:[#allocation4 + $0x8] sm:$0xff] %v7133
    %7140 = vst [vmem:[#allocation2 + $0x10] sm:$0xff] %v7136
    %7141 = vst [vmem:[#allocation2 + $0x18] sm:$0xff] %v7137
    %s7142 = scalar_lea.vmem [#allocation5], 320
    %v7143 = vld [vmem:[%s7142] sm:$0xff]
    %v7144 = vld [vmem:[%s7142 + $0x8] sm:$0xff]
    %v7145 = vld [vmem:[%s7142 + $0x10] sm:$0xff]
    %v7146 = vld [vmem:[%s7142 + $0x18] sm:$0xff]
    %v7147 = vld [vmem:[%s7142 + $0x20] sm:$0xff]
    %v7148 = vld [vmem:[%s7142 + $0x28] sm:$0xff]
    %v7149 = vld [vmem:[%s7142 + $0x30] sm:$0xff]
    %v7150 = vld [vmem:[%s7142 + $0x38] sm:$0xff]
    %v7151 = vld [vmem:[#allocation2] sm:$0xff]
    %v7152 = vld [vmem:[#allocation2 + $0x8] sm:$0xff]
    %7153 = vmatpush.msra.mxu0 %v242
    %7154 = vmatpush.msra.mxu0 %v234
    %7155 = vmatpush.msra.mxu0 %v226
    %7156 = vmatpush.msra.mxu0 %v218
    %7157 = vmatpush.msra.mxu0 %v210
    %7158 = vmatpush.msra.mxu0 %v202
    %7159 = vmatpush.msra.mxu0 %v194
    %7160 = vmatpush.msra.mxu0 %v186
    %7161 = vmatpush.msra.mxu0 %v178
    %7162 = vmatpush.msra.mxu0 %v170
    %7163 = vmatpush.msra.mxu0 %v162
    %7164 = vmatpush.msra.mxu0 %v154
    %7165 = vmatpush.msra.mxu0 %v146
    %7166 = vmatpush.msra.mxu0 %v138
    %7167 = vmatpush.msra.mxu0 %v130
    %7168 = vmatpush.msra.mxu0 %v122
    %7169 = vmatmul.f32.gmra.mxu0 %v7151
    %v7170 = vpop.f32.mrf.mxu0
    %v7171 = vadd.f32 0.0, %v7170
    %7172 = vdwg.mxu0
    %7173 = vmatpush.msra.mxu0 %v370
    %7174 = vmatpush.msra.mxu0 %v362
    %7175 = vmatpush.msra.mxu0 %v354
    %7176 = vmatpush.msra.mxu0 %v346
    %7177 = vmatpush.msra.mxu0 %v338
    %7178 = vmatpush.msra.mxu0 %v330
    %7179 = vmatpush.msra.mxu0 %v322
    %7180 = vmatpush.msra.mxu0 %v314
    %7181 = vmatpush.msra.mxu0 %v306
    %7182 = vmatpush.msra.mxu0 %v298
    %7183 = vmatpush.msra.mxu0 %v290
    %7184 = vmatpush.msra.mxu0 %v282
    %7185 = vmatpush.msra.mxu0 %v274
    %7186 = vmatpush.msra.mxu0 %v266
    %7187 = vmatpush.msra.mxu0 %v258
    %7188 = vmatpush.msra.mxu0 %v250
    %7189 = vmatmul.f32.gmra.mxu0 %v7152
    %v7190 = vpop.f32.mrf.mxu0
    %v7191 = vadd.f32 %v7171, %v7190
    %7192 = vdwg.mxu0
    %7193 = vmatpush.msra.mxu0 %v243
    %7194 = vmatpush.msra.mxu0 %v235
    %7195 = vmatpush.msra.mxu0 %v227
    %7196 = vmatpush.msra.mxu0 %v219
    %7197 = vmatpush.msra.mxu0 %v211
    %7198 = vmatpush.msra.mxu0 %v203
    %7199 = vmatpush.msra.mxu0 %v195
    %7200 = vmatpush.msra.mxu0 %v187
    %7201 = vmatpush.msra.mxu0 %v179
    %7202 = vmatpush.msra.mxu0 %v171
    %7203 = vmatpush.msra.mxu0 %v163
    %7204 = vmatpush.msra.mxu0 %v155
    %7205 = vmatpush.msra.mxu0 %v147
    %7206 = vmatpush.msra.mxu0 %v139
    %7207 = vmatpush.msra.mxu0 %v131
    %7208 = vmatpush.msra.mxu0 %v123
    %7209 = vmatmul.f32.gmra.mxu0 %v7151
    %v7210 = vpop.f32.mrf.mxu0
    %v7211 = vadd.f32 0.0, %v7210
    %7212 = vdwg.mxu0
    %7213 = vmatpush.msra.mxu0 %v371
    %7214 = vmatpush.msra.mxu0 %v363
    %7215 = vmatpush.msra.mxu0 %v355
    %7216 = vmatpush.msra.mxu0 %v347
    %7217 = vmatpush.msra.mxu0 %v339
    %7218 = vmatpush.msra.mxu0 %v331
    %7219 = vmatpush.msra.mxu0 %v323
    %7220 = vmatpush.msra.mxu0 %v315
    %7221 = vmatpush.msra.mxu0 %v307
    %7222 = vmatpush.msra.mxu0 %v299
    %7223 = vmatpush.msra.mxu0 %v291
    %7224 = vmatpush.msra.mxu0 %v283
    %7225 = vmatpush.msra.mxu0 %v275
    %7226 = vmatpush.msra.mxu0 %v267
    %7227 = vmatpush.msra.mxu0 %v259
    %7228 = vmatpush.msra.mxu0 %v251
    %7229 = vmatmul.f32.gmra.mxu0 %v7152
    %v7230 = vpop.f32.mrf.mxu0
    %v7231 = vadd.f32 %v7211, %v7230
    %7232 = vdwg.mxu0
    %7233 = vmatpush.msra.mxu0 %v244
    %7234 = vmatpush.msra.mxu0 %v236
    %7235 = vmatpush.msra.mxu0 %v228
    %7236 = vmatpush.msra.mxu0 %v220
    %7237 = vmatpush.msra.mxu0 %v212
    %7238 = vmatpush.msra.mxu0 %v204
    %7239 = vmatpush.msra.mxu0 %v196
    %7240 = vmatpush.msra.mxu0 %v188
    %7241 = vmatpush.msra.mxu0 %v180
    %7242 = vmatpush.msra.mxu0 %v172
    %7243 = vmatpush.msra.mxu0 %v164
    %7244 = vmatpush.msra.mxu0 %v156
    %7245 = vmatpush.msra.mxu0 %v148
    %7246 = vmatpush.msra.mxu0 %v140
    %7247 = vmatpush.msra.mxu0 %v132
    %7248 = vmatpush.msra.mxu0 %v124
    %7249 = vmatmul.f32.gmra.mxu0 %v7151
    %v7250 = vpop.f32.mrf.mxu0
    %v7251 = vadd.f32 0.0, %v7250
    %7252 = vdwg.mxu0
    %7253 = vmatpush.msra.mxu0 %v372
    %7254 = vmatpush.msra.mxu0 %v364
    %7255 = vmatpush.msra.mxu0 %v356
    %7256 = vmatpush.msra.mxu0 %v348
    %7257 = vmatpush.msra.mxu0 %v340
    %7258 = vmatpush.msra.mxu0 %v332
    %7259 = vmatpush.msra.mxu0 %v324
    %7260 = vmatpush.msra.mxu0 %v316
    %7261 = vmatpush.msra.mxu0 %v308
    %7262 = vmatpush.msra.mxu0 %v300
    %7263 = vmatpush.msra.mxu0 %v292
    %7264 = vmatpush.msra.mxu0 %v284
    %7265 = vmatpush.msra.mxu0 %v276
    %7266 = vmatpush.msra.mxu0 %v268
    %7267 = vmatpush.msra.mxu0 %v260
    %7268 = vmatpush.msra.mxu0 %v252
    %7269 = vmatmul.f32.gmra.mxu0 %v7152
    %v7270 = vpop.f32.mrf.mxu0
    %v7271 = vadd.f32 %v7251, %v7270
    %7272 = vdwg.mxu0
    %7273 = vmatpush.msra.mxu0 %v245
    %7274 = vmatpush.msra.mxu0 %v237
    %7275 = vmatpush.msra.mxu0 %v229
    %7276 = vmatpush.msra.mxu0 %v221
    %7277 = vmatpush.msra.mxu0 %v213
    %7278 = vmatpush.msra.mxu0 %v205
    %7279 = vmatpush.msra.mxu0 %v197
    %7280 = vmatpush.msra.mxu0 %v189
    %7281 = vmatpush.msra.mxu0 %v181
    %7282 = vmatpush.msra.mxu0 %v173
    %7283 = vmatpush.msra.mxu0 %v165
    %7284 = vmatpush.msra.mxu0 %v157
    %7285 = vmatpush.msra.mxu0 %v149
    %7286 = vmatpush.msra.mxu0 %v141
    %7287 = vmatpush.msra.mxu0 %v133
    %7288 = vmatpush.msra.mxu0 %v125
    %7289 = vmatmul.f32.gmra.mxu0 %v7151
    %v7290 = vpop.f32.mrf.mxu0
    %v7291 = vadd.f32 0.0, %v7290
    %7292 = vdwg.mxu0
    %7293 = vmatpush.msra.mxu0 %v373
    %7294 = vmatpush.msra.mxu0 %v365
    %7295 = vmatpush.msra.mxu0 %v357
    %7296 = vmatpush.msra.mxu0 %v349
    %7297 = vmatpush.msra.mxu0 %v341
    %7298 = vmatpush.msra.mxu0 %v333
    %7299 = vmatpush.msra.mxu0 %v325
    %7300 = vmatpush.msra.mxu0 %v317
    %7301 = vmatpush.msra.mxu0 %v309
    %7302 = vmatpush.msra.mxu0 %v301
    %7303 = vmatpush.msra.mxu0 %v293
    %7304 = vmatpush.msra.mxu0 %v285
    %7305 = vmatpush.msra.mxu0 %v277
    %7306 = vmatpush.msra.mxu0 %v269
    %7307 = vmatpush.msra.mxu0 %v261
    %7308 = vmatpush.msra.mxu0 %v253
    %7309 = vmatmul.f32.gmra.mxu0 %v7152
    %v7310 = vpop.f32.mrf.mxu0
    %v7311 = vadd.f32 %v7291, %v7310
    %7312 = vdwg.mxu0
    %7313 = vmatpush.msra.mxu0 %v246
    %7314 = vmatpush.msra.mxu0 %v238
    %7315 = vmatpush.msra.mxu0 %v230
    %7316 = vmatpush.msra.mxu0 %v222
    %7317 = vmatpush.msra.mxu0 %v214
    %7318 = vmatpush.msra.mxu0 %v206
    %7319 = vmatpush.msra.mxu0 %v198
    %7320 = vmatpush.msra.mxu0 %v190
    %7321 = vmatpush.msra.mxu0 %v182
    %7322 = vmatpush.msra.mxu0 %v174
    %7323 = vmatpush.msra.mxu0 %v166
    %7324 = vmatpush.msra.mxu0 %v158
    %7325 = vmatpush.msra.mxu0 %v150
    %7326 = vmatpush.msra.mxu0 %v142
    %7327 = vmatpush.msra.mxu0 %v134
    %7328 = vmatpush.msra.mxu0 %v126
    %7329 = vmatmul.f32.gmra.mxu0 %v7151
    %v7330 = vpop.f32.mrf.mxu0
    %v7331 = vadd.f32 0.0, %v7330
    %7332 = vdwg.mxu0
    %7333 = vmatpush.msra.mxu0 %v374
    %7334 = vmatpush.msra.mxu0 %v366
    %7335 = vmatpush.msra.mxu0 %v358
    %7336 = vmatpush.msra.mxu0 %v350
    %7337 = vmatpush.msra.mxu0 %v342
    %7338 = vmatpush.msra.mxu0 %v334
    %7339 = vmatpush.msra.mxu0 %v326
    %7340 = vmatpush.msra.mxu0 %v318
    %7341 = vmatpush.msra.mxu0 %v310
    %7342 = vmatpush.msra.mxu0 %v302
    %7343 = vmatpush.msra.mxu0 %v294
    %7344 = vmatpush.msra.mxu0 %v286
    %7345 = vmatpush.msra.mxu0 %v278
    %7346 = vmatpush.msra.mxu0 %v270
    %7347 = vmatpush.msra.mxu0 %v262
    %7348 = vmatpush.msra.mxu0 %v254
    %7349 = vmatmul.f32.gmra.mxu0 %v7152
    %v7350 = vpop.f32.mrf.mxu0
    %v7351 = vadd.f32 %v7331, %v7350
    %7352 = vdwg.mxu0
    %7353 = vmatpush.msra.mxu0 %v247
    %7354 = vmatpush.msra.mxu0 %v239
    %7355 = vmatpush.msra.mxu0 %v231
    %7356 = vmatpush.msra.mxu0 %v223
    %7357 = vmatpush.msra.mxu0 %v215
    %7358 = vmatpush.msra.mxu0 %v207
    %7359 = vmatpush.msra.mxu0 %v199
    %7360 = vmatpush.msra.mxu0 %v191
    %7361 = vmatpush.msra.mxu0 %v183
    %7362 = vmatpush.msra.mxu0 %v175
    %7363 = vmatpush.msra.mxu0 %v167
    %7364 = vmatpush.msra.mxu0 %v159
    %7365 = vmatpush.msra.mxu0 %v151
    %7366 = vmatpush.msra.mxu0 %v143
    %7367 = vmatpush.msra.mxu0 %v135
    %7368 = vmatpush.msra.mxu0 %v127
    %7369 = vmatmul.f32.gmra.mxu0 %v7151
    %v7370 = vpop.f32.mrf.mxu0
    %v7371 = vadd.f32 0.0, %v7370
    %7372 = vdwg.mxu0
    %7373 = vmatpush.msra.mxu0 %v375
    %7374 = vmatpush.msra.mxu0 %v367
    %7375 = vmatpush.msra.mxu0 %v359
    %7376 = vmatpush.msra.mxu0 %v351
    %7377 = vmatpush.msra.mxu0 %v343
    %7378 = vmatpush.msra.mxu0 %v335
    %7379 = vmatpush.msra.mxu0 %v327
    %7380 = vmatpush.msra.mxu0 %v319
    %7381 = vmatpush.msra.mxu0 %v311
    %7382 = vmatpush.msra.mxu0 %v303
    %7383 = vmatpush.msra.mxu0 %v295
    %7384 = vmatpush.msra.mxu0 %v287
    %7385 = vmatpush.msra.mxu0 %v279
    %7386 = vmatpush.msra.mxu0 %v271
    %7387 = vmatpush.msra.mxu0 %v263
    %7388 = vmatpush.msra.mxu0 %v255
    %7389 = vmatmul.f32.gmra.mxu0 %v7152
    %v7390 = vpop.f32.mrf.mxu0
    %v7391 = vadd.f32 %v7371, %v7390
    %7392 = vdwg.mxu0
    %7393 = vmatpush.msra.mxu0 %v248
    %7394 = vmatpush.msra.mxu0 %v240
    %7395 = vmatpush.msra.mxu0 %v232
    %7396 = vmatpush.msra.mxu0 %v224
    %7397 = vmatpush.msra.mxu0 %v216
    %7398 = vmatpush.msra.mxu0 %v208
    %7399 = vmatpush.msra.mxu0 %v200
    %7400 = vmatpush.msra.mxu0 %v192
    %7401 = vmatpush.msra.mxu0 %v184
    %7402 = vmatpush.msra.mxu0 %v176
    %7403 = vmatpush.msra.mxu0 %v168
    %7404 = vmatpush.msra.mxu0 %v160
    %7405 = vmatpush.msra.mxu0 %v152
    %7406 = vmatpush.msra.mxu0 %v144
    %7407 = vmatpush.msra.mxu0 %v136
    %7408 = vmatpush.msra.mxu0 %v128
    %7409 = vmatmul.f32.gmra.mxu0 %v7151
    %v7410 = vpop.f32.mrf.mxu0
    %v7411 = vadd.f32 0.0, %v7410
    %7412 = vdwg.mxu0
    %7413 = vmatpush.msra.mxu0 %v376
    %7414 = vmatpush.msra.mxu0 %v368
    %7415 = vmatpush.msra.mxu0 %v360
    %7416 = vmatpush.msra.mxu0 %v352
    %7417 = vmatpush.msra.mxu0 %v344
    %7418 = vmatpush.msra.mxu0 %v336
    %7419 = vmatpush.msra.mxu0 %v328
    %7420 = vmatpush.msra.mxu0 %v320
    %7421 = vmatpush.msra.mxu0 %v312
    %7422 = vmatpush.msra.mxu0 %v304
    %7423 = vmatpush.msra.mxu0 %v296
    %7424 = vmatpush.msra.mxu0 %v288
    %7425 = vmatpush.msra.mxu0 %v280
    %7426 = vmatpush.msra.mxu0 %v272
    %7427 = vmatpush.msra.mxu0 %v264
    %7428 = vmatpush.msra.mxu0 %v256
    %7429 = vmatmul.f32.gmra.mxu0 %v7152
    %v7430 = vpop.f32.mrf.mxu0
    %v7431 = vadd.f32 %v7411, %v7430
    %7432 = vdwg.mxu0
    %7433 = vmatpush.msra.mxu0 %v249
    %7434 = vmatpush.msra.mxu0 %v241
    %7435 = vmatpush.msra.mxu0 %v233
    %7436 = vmatpush.msra.mxu0 %v225
    %7437 = vmatpush.msra.mxu0 %v217
    %7438 = vmatpush.msra.mxu0 %v209
    %7439 = vmatpush.msra.mxu0 %v201
    %7440 = vmatpush.msra.mxu0 %v193
    %7441 = vmatpush.msra.mxu0 %v185
    %7442 = vmatpush.msra.mxu0 %v177
    %7443 = vmatpush.msra.mxu0 %v169
    %7444 = vmatpush.msra.mxu0 %v161
    %7445 = vmatpush.msra.mxu0 %v153
    %7446 = vmatpush.msra.mxu0 %v145
    %7447 = vmatpush.msra.mxu0 %v137
    %7448 = vmatpush.msra.mxu0 %v129
    %7449 = vmatmul.f32.gmra.mxu0 %v7151
    %v7450 = vpop.f32.mrf.mxu0
    %v7451 = vadd.f32 0.0, %v7450
    %7452 = vdwg.mxu0
    %7453 = vmatpush.msra.mxu0 %v377
    %7454 = vmatpush.msra.mxu0 %v369
    %7455 = vmatpush.msra.mxu0 %v361
    %7456 = vmatpush.msra.mxu0 %v353
    %7457 = vmatpush.msra.mxu0 %v345
    %7458 = vmatpush.msra.mxu0 %v337
    %7459 = vmatpush.msra.mxu0 %v329
    %7460 = vmatpush.msra.mxu0 %v321
    %7461 = vmatpush.msra.mxu0 %v313
    %7462 = vmatpush.msra.mxu0 %v305
    %7463 = vmatpush.msra.mxu0 %v297
    %7464 = vmatpush.msra.mxu0 %v289
    %7465 = vmatpush.msra.mxu0 %v281
    %7466 = vmatpush.msra.mxu0 %v273
    %7467 = vmatpush.msra.mxu0 %v265
    %7468 = vmatpush.msra.mxu0 %v257
    %7469 = vmatmul.f32.gmra.mxu0 %v7152
    %v7470 = vpop.f32.mrf.mxu0
    %v7471 = vadd.f32 %v7451, %v7470
    %7472 = vdwg.mxu0
    %v7473 = vadd.f32 %v7143, %v7191
    %v7474 = vadd.f32 %v7144, %v7231
    %v7475 = vadd.f32 %v7145, %v7271
    %v7476 = vadd.f32 %v7146, %v7311
    %v7477 = vadd.f32 %v7147, %v7351
    %v7478 = vadd.f32 %v7148, %v7391
    %v7479 = vadd.f32 %v7149, %v7431
    %v7480 = vadd.f32 %v7150, %v7471
    %v7481 = vld [vmem:[#allocation3] sm:$0xff]
    %v7482 = vld [vmem:[#allocation3 + $0x8] sm:$0xff]
    %v7483 = vxor.u32 %v7473, 2147483648
    %v7484 = vxor.u32 %v7474, 2147483648
    %v7485 = vmul.f32 %v7483, 1.442695
    %v7486 = vpow.pop %v7485
    %v7487 = vmul.f32 %v7484, 1.442695
    %v7488 = vpow.pop %v7487
    %v7489 = vadd.f32 %v7486, 1.0
    %v7490 = vadd.f32 %v7488, 1.0
    %v7491 = vrcp.pop %v7489
    %v7492 = vmul.f32 %v7489, %v7491
    %v7493 = vsub.f32 1.0, %v7492
    %v7494 = vmul.f32 %v7491, %v7493
    %v7495 = vadd.f32 %v7491, %v7494
    %vm7496 = vweird.f32 %v7489
    %vm7497 = vweird.f32 %v7491
    %vm7498 = vmor %vm7496, %vm7497
    %v7499 = vsel %vm7498, %v7491, %v7495
    %v7500 = vand.u32 2147483647, %v7489
    %vm7501 = vcmp.eq.f32.partialorder %v7500, 8.507059e+37
    %v7502 = vand.u32 %v7489, 2147483648
    %v7503 = vor.u32 1.1754944e-38, %v7502
    %v7504 = vsel %vm7501, %v7503, %v7499
    %v7505 = vmul.f32 1.0, %v7504
    %v7506 = vrcp.pop %v7490
    %v7507 = vmul.f32 %v7490, %v7506
    %v7508 = vsub.f32 1.0, %v7507
    %v7509 = vmul.f32 %v7506, %v7508
    %v7510 = vadd.f32 %v7506, %v7509
    %vm7511 = vweird.f32 %v7490
    %vm7512 = vweird.f32 %v7506
    %vm7513 = vmor %vm7511, %vm7512
    %v7514 = vsel %vm7513, %v7506, %v7510
    %v7515 = vand.u32 2147483647, %v7490
    %vm7516 = vcmp.eq.f32.partialorder %v7515, 8.507059e+37
    %v7517 = vand.u32 %v7490, 2147483648
    %v7518 = vor.u32 1.1754944e-38, %v7517
    %v7519 = vsel %vm7516, %v7518, %v7514
    %v7520 = vmul.f32 1.0, %v7519
    %v7521 = vxor.u32 %v7475, 2147483648
    %v7522 = vxor.u32 %v7476, 2147483648
    %v7523 = vmul.f32 %v7521, 1.442695
    %v7524 = vpow.pop %v7523
    %v7525 = vmul.f32 %v7522, 1.442695
    %v7526 = vpow.pop %v7525
    %v7527 = vadd.f32 %v7524, 1.0
    %v7528 = vadd.f32 %v7526, 1.0
    %v7529 = vrcp.pop %v7527
    %v7530 = vmul.f32 %v7527, %v7529
    %v7531 = vsub.f32 1.0, %v7530
    %v7532 = vmul.f32 %v7529, %v7531
    %v7533 = vadd.f32 %v7529, %v7532
    %vm7534 = vweird.f32 %v7527
    %vm7535 = vweird.f32 %v7529
    %vm7536 = vmor %vm7534, %vm7535
    %v7537 = vsel %vm7536, %v7529, %v7533
    %v7538 = vand.u32 2147483647, %v7527
    %vm7539 = vcmp.eq.f32.partialorder %v7538, 8.507059e+37
    %v7540 = vand.u32 %v7527, 2147483648
    %v7541 = vor.u32 1.1754944e-38, %v7540
    %v7542 = vsel %vm7539, %v7541, %v7537
    %v7543 = vmul.f32 1.0, %v7542
    %v7544 = vrcp.pop %v7528
    %v7545 = vmul.f32 %v7528, %v7544
    %v7546 = vsub.f32 1.0, %v7545
    %v7547 = vmul.f32 %v7544, %v7546
    %v7548 = vadd.f32 %v7544, %v7547
    %vm7549 = vweird.f32 %v7528
    %vm7550 = vweird.f32 %v7544
    %vm7551 = vmor %vm7549, %vm7550
    %v7552 = vsel %vm7551, %v7544, %v7548
    %v7553 = vand.u32 2147483647, %v7528
    %vm7554 = vcmp.eq.f32.partialorder %v7553, 8.507059e+37
    %v7555 = vand.u32 %v7528, 2147483648
    %v7556 = vor.u32 1.1754944e-38, %v7555
    %v7557 = vsel %vm7554, %v7556, %v7552
    %v7558 = vmul.f32 1.0, %v7557
    %v7559 = vtanh.pop %v7477
    %v7560 = vtanh.pop %v7478
    %v7561 = vxor.u32 %v7479, 2147483648
    %v7562 = vxor.u32 %v7480, 2147483648
    %v7563 = vmul.f32 %v7561, 1.442695
    %v7564 = vpow.pop %v7563
    %v7565 = vmul.f32 %v7562, 1.442695
    %v7566 = vpow.pop %v7565
    %v7567 = vadd.f32 %v7564, 1.0
    %v7568 = vadd.f32 %v7566, 1.0
    %v7569 = vrcp.pop %v7567
    %v7570 = vmul.f32 %v7567, %v7569
    %v7571 = vsub.f32 1.0, %v7570
    %v7572 = vmul.f32 %v7569, %v7571
    %v7573 = vadd.f32 %v7569, %v7572
    %vm7574 = vweird.f32 %v7567
    %vm7575 = vweird.f32 %v7569
    %vm7576 = vmor %vm7574, %vm7575
    %v7577 = vsel %vm7576, %v7569, %v7573
    %v7578 = vand.u32 2147483647, %v7567
    %vm7579 = vcmp.eq.f32.partialorder %v7578, 8.507059e+37
    %v7580 = vand.u32 %v7567, 2147483648
    %v7581 = vor.u32 1.1754944e-38, %v7580
    %v7582 = vsel %vm7579, %v7581, %v7577
    %v7583 = vmul.f32 1.0, %v7582
    %v7584 = vrcp.pop %v7568
    %v7585 = vmul.f32 %v7568, %v7584
    %v7586 = vsub.f32 1.0, %v7585
    %v7587 = vmul.f32 %v7584, %v7586
    %v7588 = vadd.f32 %v7584, %v7587
    %vm7589 = vweird.f32 %v7568
    %vm7590 = vweird.f32 %v7584
    %vm7591 = vmor %vm7589, %vm7590
    %v7592 = vsel %vm7591, %v7584, %v7588
    %v7593 = vand.u32 2147483647, %v7568
    %vm7594 = vcmp.eq.f32.partialorder %v7593, 8.507059e+37
    %v7595 = vand.u32 %v7568, 2147483648
    %v7596 = vor.u32 1.1754944e-38, %v7595
    %v7597 = vsel %vm7594, %v7596, %v7592
    %v7598 = vmul.f32 1.0, %v7597
    %v7599 = vmul.f32 %v7543, %v7481
    %v7600 = vmul.f32 %v7558, %v7482
    %v7601 = vmul.f32 %v7505, %v7559
    %v7602 = vmul.f32 %v7520, %v7560
    %v7603 = vadd.f32 %v7599, %v7601
    %v7604 = vadd.f32 %v7600, %v7602
    %v7605 = vtanh.pop %v7603
    %v7606 = vtanh.pop %v7604
    %v7607 = vmul.f32 %v7583, %v7605
    %v7608 = vmul.f32 %v7598, %v7606
    %7609 = vst [vmem:[#allocation3] sm:$0xff] %v7603
    %7610 = vst [vmem:[#allocation3 + $0x8] sm:$0xff] %v7604
    %7611 = vst [vmem:[#allocation2] sm:$0xff] %v7607
    %7612 = vst [vmem:[#allocation2 + $0x8] sm:$0xff] %v7608
    %v7613 = vld [vmem:[#allocation2] sm:$0xff]
    %v7614 = vld [vmem:[#allocation2 + $0x8] sm:$0xff]
    %v7615 = vld [vmem:[#allocation2 + $0x10] sm:$0xff]
    %v7616 = vld [vmem:[#allocation2 + $0x18] sm:$0xff]
    %7617 = vmatpush.msra.mxu0 %v498
    %7618 = vmatpush.msra.mxu0 %v490
    %7619 = vmatpush.msra.mxu0 %v482
    %7620 = vmatpush.msra.mxu0 %v474
    %7621 = vmatpush.msra.mxu0 %v466
    %7622 = vmatpush.msra.mxu0 %v458
    %7623 = vmatpush.msra.mxu0 %v450
    %7624 = vmatpush.msra.mxu0 %v442
    %7625 = vmatpush.msra.mxu0 %v434
    %7626 = vmatpush.msra.mxu0 %v426
    %7627 = vmatpush.msra.mxu0 %v418
    %7628 = vmatpush.msra.mxu0 %v410
    %7629 = vmatpush.msra.mxu0 %v402
    %7630 = vmatpush.msra.mxu0 %v394
    %7631 = vmatpush.msra.mxu0 %v386
    %7632 = vmatpush.msra.mxu0 %v378
    %7633 = vmatmul.f32.gmra.mxu0 %v7613
    %v7634 = vpop.f32.mrf.mxu0
    %v7635 = vadd.f32 %v1366, %v7634
    %7636 = vdwg.mxu0
    %7637 = vmatpush.msra.mxu0 %v626
    %7638 = vmatpush.msra.mxu0 %v618
    %7639 = vmatpush.msra.mxu0 %v610
    %7640 = vmatpush.msra.mxu0 %v602
    %7641 = vmatpush.msra.mxu0 %v594
    %7642 = vmatpush.msra.mxu0 %v586
    %7643 = vmatpush.msra.mxu0 %v578
    %7644 = vmatpush.msra.mxu0 %v570
    %7645 = vmatpush.msra.mxu0 %v562
    %7646 = vmatpush.msra.mxu0 %v554
    %7647 = vmatpush.msra.mxu0 %v546
    %7648 = vmatpush.msra.mxu0 %v538
    %7649 = vmatpush.msra.mxu0 %v530
    %7650 = vmatpush.msra.mxu0 %v522
    %7651 = vmatpush.msra.mxu0 %v514
    %7652 = vmatpush.msra.mxu0 %v506
    %7653 = vmatmul.f32.gmra.mxu0 %v7614
    %v7654 = vpop.f32.mrf.mxu0
    %v7655 = vadd.f32 %v7635, %v7654
    %7656 = vdwg.mxu0
    %7657 = vmatpush.msra.mxu0 %v754
    %7658 = vmatpush.msra.mxu0 %v746
    %7659 = vmatpush.msra.mxu0 %v738
    %7660 = vmatpush.msra.mxu0 %v730
    %7661 = vmatpush.msra.mxu0 %v722
    %7662 = vmatpush.msra.mxu0 %v714
    %7663 = vmatpush.msra.mxu0 %v706
    %7664 = vmatpush.msra.mxu0 %v698
    %7665 = vmatpush.msra.mxu0 %v690
    %7666 = vmatpush.msra.mxu0 %v682
    %7667 = vmatpush.msra.mxu0 %v674
    %7668 = vmatpush.msra.mxu0 %v666
    %7669 = vmatpush.msra.mxu0 %v658
    %7670 = vmatpush.msra.mxu0 %v650
    %7671 = vmatpush.msra.mxu0 %v642
    %7672 = vmatpush.msra.mxu0 %v634
    %7673 = vmatmul.f32.gmra.mxu0 %v7615
    %v7674 = vpop.f32.mrf.mxu0
    %v7675 = vadd.f32 %v7655, %v7674
    %7676 = vdwg.mxu0
    %7677 = vmatpush.msra.mxu0 %v882
    %7678 = vmatpush.msra.mxu0 %v874
    %7679 = vmatpush.msra.mxu0 %v866
    %7680 = vmatpush.msra.mxu0 %v858
    %7681 = vmatpush.msra.mxu0 %v850
    %7682 = vmatpush.msra.mxu0 %v842
    %7683 = vmatpush.msra.mxu0 %v834
    %7684 = vmatpush.msra.mxu0 %v826
    %7685 = vmatpush.msra.mxu0 %v818
    %7686 = vmatpush.msra.mxu0 %v810
    %7687 = vmatpush.msra.mxu0 %v802
    %7688 = vmatpush.msra.mxu0 %v794
    %7689 = vmatpush.msra.mxu0 %v786
    %7690 = vmatpush.msra.mxu0 %v778
    %7691 = vmatpush.msra.mxu0 %v770
    %7692 = vmatpush.msra.mxu0 %v762
    %7693 = vmatmul.f32.gmra.mxu0 %v7616
    %v7694 = vpop.f32.mrf.mxu0
    %v7695 = vadd.f32 %v7675, %v7694
    %7696 = vdwg.mxu0
    %7697 = vmatpush.msra.mxu0 %v499
    %7698 = vmatpush.msra.mxu0 %v491
    %7699 = vmatpush.msra.mxu0 %v483
    %7700 = vmatpush.msra.mxu0 %v475
    %7701 = vmatpush.msra.mxu0 %v467
    %7702 = vmatpush.msra.mxu0 %v459
    %7703 = vmatpush.msra.mxu0 %v451
    %7704 = vmatpush.msra.mxu0 %v443
    %7705 = vmatpush.msra.mxu0 %v435
    %7706 = vmatpush.msra.mxu0 %v427
    %7707 = vmatpush.msra.mxu0 %v419
    %7708 = vmatpush.msra.mxu0 %v411
    %7709 = vmatpush.msra.mxu0 %v403
    %7710 = vmatpush.msra.mxu0 %v395
    %7711 = vmatpush.msra.mxu0 %v387
    %7712 = vmatpush.msra.mxu0 %v379
    %7713 = vmatmul.f32.gmra.mxu0 %v7613
    %v7714 = vpop.f32.mrf.mxu0
    %v7715 = vadd.f32 %v1367, %v7714
    %7716 = vdwg.mxu0
    %7717 = vmatpush.msra.mxu0 %v627
    %7718 = vmatpush.msra.mxu0 %v619
    %7719 = vmatpush.msra.mxu0 %v611
    %7720 = vmatpush.msra.mxu0 %v603
    %7721 = vmatpush.msra.mxu0 %v595
    %7722 = vmatpush.msra.mxu0 %v587
    %7723 = vmatpush.msra.mxu0 %v579
    %7724 = vmatpush.msra.mxu0 %v571
    %7725 = vmatpush.msra.mxu0 %v563
    %7726 = vmatpush.msra.mxu0 %v555
    %7727 = vmatpush.msra.mxu0 %v547
    %7728 = vmatpush.msra.mxu0 %v539
    %7729 = vmatpush.msra.mxu0 %v531
    %7730 = vmatpush.msra.mxu0 %v523
    %7731 = vmatpush.msra.mxu0 %v515
    %7732 = vmatpush.msra.mxu0 %v507
    %7733 = vmatmul.f32.gmra.mxu0 %v7614
    %v7734 = vpop.f32.mrf.mxu0
    %v7735 = vadd.f32 %v7715, %v7734
    %7736 = vdwg.mxu0
    %7737 = vmatpush.msra.mxu0 %v755
    %7738 = vmatpush.msra.mxu0 %v747
    %7739 = vmatpush.msra.mxu0 %v739
    %7740 = vmatpush.msra.mxu0 %v731
    %7741 = vmatpush.msra.mxu0 %v723
    %7742 = vmatpush.msra.mxu0 %v715
    %7743 = vmatpush.msra.mxu0 %v707
    %7744 = vmatpush.msra.mxu0 %v699
    %7745 = vmatpush.msra.mxu0 %v691
    %7746 = vmatpush.msra.mxu0 %v683
    %7747 = vmatpush.msra.mxu0 %v675
    %7748 = vmatpush.msra.mxu0 %v667
    %7749 = vmatpush.msra.mxu0 %v659
    %7750 = vmatpush.msra.mxu0 %v651
    %7751 = vmatpush.msra.mxu0 %v643
    %7752 = vmatpush.msra.mxu0 %v635
    %7753 = vmatmul.f32.gmra.mxu0 %v7615
    %v7754 = vpop.f32.mrf.mxu0
    %v7755 = vadd.f32 %v7735, %v7754
    %7756 = vdwg.mxu0
    %7757 = vmatpush.msra.mxu0 %v883
    %7758 = vmatpush.msra.mxu0 %v875
    %7759 = vmatpush.msra.mxu0 %v867
    %7760 = vmatpush.msra.mxu0 %v859
    %7761 = vmatpush.msra.mxu0 %v851
    %7762 = vmatpush.msra.mxu0 %v843
    %7763 = vmatpush.msra.mxu0 %v835
    %7764 = vmatpush.msra.mxu0 %v827
    %7765 = vmatpush.msra.mxu0 %v819
    %7766 = vmatpush.msra.mxu0 %v811
    %7767 = vmatpush.msra.mxu0 %v803
    %7768 = vmatpush.msra.mxu0 %v795
    %7769 = vmatpush.msra.mxu0 %v787
    %7770 = vmatpush.msra.mxu0 %v779
    %7771 = vmatpush.msra.mxu0 %v771
    %7772 = vmatpush.msra.mxu0 %v763
    %7773 = vmatmul.f32.gmra.mxu0 %v7616
    %v7774 = vpop.f32.mrf.mxu0
    %v7775 = vadd.f32 %v7755, %v7774
    %7776 = vdwg.mxu0
    %7777 = vmatpush.msra.mxu0 %v500
    %7778 = vmatpush.msra.mxu0 %v492
    %7779 = vmatpush.msra.mxu0 %v484
    %7780 = vmatpush.msra.mxu0 %v476
    %7781 = vmatpush.msra.mxu0 %v468
    %7782 = vmatpush.msra.mxu0 %v460
    %7783 = vmatpush.msra.mxu0 %v452
    %7784 = vmatpush.msra.mxu0 %v444
    %7785 = vmatpush.msra.mxu0 %v436
    %7786 = vmatpush.msra.mxu0 %v428
    %7787 = vmatpush.msra.mxu0 %v420
    %7788 = vmatpush.msra.mxu0 %v412
    %7789 = vmatpush.msra.mxu0 %v404
    %7790 = vmatpush.msra.mxu0 %v396
    %7791 = vmatpush.msra.mxu0 %v388
    %7792 = vmatpush.msra.mxu0 %v380
    %7793 = vmatmul.f32.gmra.mxu0 %v7613
    %v7794 = vpop.f32.mrf.mxu0
    %v7795 = vadd.f32 %v1368, %v7794
    %7796 = vdwg.mxu0
    %7797 = vmatpush.msra.mxu0 %v628
    %7798 = vmatpush.msra.mxu0 %v620
    %7799 = vmatpush.msra.mxu0 %v612
    %7800 = vmatpush.msra.mxu0 %v604
    %7801 = vmatpush.msra.mxu0 %v596
    %7802 = vmatpush.msra.mxu0 %v588
    %7803 = vmatpush.msra.mxu0 %v580
    %7804 = vmatpush.msra.mxu0 %v572
    %7805 = vmatpush.msra.mxu0 %v564
    %7806 = vmatpush.msra.mxu0 %v556
    %7807 = vmatpush.msra.mxu0 %v548
    %7808 = vmatpush.msra.mxu0 %v540
    %7809 = vmatpush.msra.mxu0 %v532
    %7810 = vmatpush.msra.mxu0 %v524
    %7811 = vmatpush.msra.mxu0 %v516
    %7812 = vmatpush.msra.mxu0 %v508
    %7813 = vmatmul.f32.gmra.mxu0 %v7614
    %v7814 = vpop.f32.mrf.mxu0
    %v7815 = vadd.f32 %v7795, %v7814
    %7816 = vdwg.mxu0
    %7817 = vmatpush.msra.mxu0 %v756
    %7818 = vmatpush.msra.mxu0 %v748
    %7819 = vmatpush.msra.mxu0 %v740
    %7820 = vmatpush.msra.mxu0 %v732
    %7821 = vmatpush.msra.mxu0 %v724
    %7822 = vmatpush.msra.mxu0 %v716
    %7823 = vmatpush.msra.mxu0 %v708
    %7824 = vmatpush.msra.mxu0 %v700
    %7825 = vmatpush.msra.mxu0 %v692
    %7826 = vmatpush.msra.mxu0 %v684
    %7827 = vmatpush.msra.mxu0 %v676
    %7828 = vmatpush.msra.mxu0 %v668
    %7829 = vmatpush.msra.mxu0 %v660
    %7830 = vmatpush.msra.mxu0 %v652
    %7831 = vmatpush.msra.mxu0 %v644
    %7832 = vmatpush.msra.mxu0 %v636
    %7833 = vmatmul.f32.gmra.mxu0 %v7615
    %v7834 = vpop.f32.mrf.mxu0
    %v7835 = vadd.f32 %v7815, %v7834
    %7836 = vdwg.mxu0
    %7837 = vmatpush.msra.mxu0 %v884
    %7838 = vmatpush.msra.mxu0 %v876
    %7839 = vmatpush.msra.mxu0 %v868
    %7840 = vmatpush.msra.mxu0 %v860
    %7841 = vmatpush.msra.mxu0 %v852
    %7842 = vmatpush.msra.mxu0 %v844
    %7843 = vmatpush.msra.mxu0 %v836
    %7844 = vmatpush.msra.mxu0 %v828
    %7845 = vmatpush.msra.mxu0 %v820
    %7846 = vmatpush.msra.mxu0 %v812
    %7847 = vmatpush.msra.mxu0 %v804
    %7848 = vmatpush.msra.mxu0 %v796
    %7849 = vmatpush.msra.mxu0 %v788
    %7850 = vmatpush.msra.mxu0 %v780
    %7851 = vmatpush.msra.mxu0 %v772
    %7852 = vmatpush.msra.mxu0 %v764
    %7853 = vmatmul.f32.gmra.mxu0 %v7616
    %v7854 = vpop.f32.mrf.mxu0
    %v7855 = vadd.f32 %v7835, %v7854
    %7856 = vdwg.mxu0
    %7857 = vmatpush.msra.mxu0 %v501
    %7858 = vmatpush.msra.mxu0 %v493
    %7859 = vmatpush.msra.mxu0 %v485
    %7860 = vmatpush.msra.mxu0 %v477
    %7861 = vmatpush.msra.mxu0 %v469
    %7862 = vmatpush.msra.mxu0 %v461
    %7863 = vmatpush.msra.mxu0 %v453
    %7864 = vmatpush.msra.mxu0 %v445
    %7865 = vmatpush.msra.mxu0 %v437
    %7866 = vmatpush.msra.mxu0 %v429
    %7867 = vmatpush.msra.mxu0 %v421
    %7868 = vmatpush.msra.mxu0 %v413
    %7869 = vmatpush.msra.mxu0 %v405
    %7870 = vmatpush.msra.mxu0 %v397
    %7871 = vmatpush.msra.mxu0 %v389
    %7872 = vmatpush.msra.mxu0 %v381
    %7873 = vmatmul.f32.gmra.mxu0 %v7613
    %v7874 = vpop.f32.mrf.mxu0
    %v7875 = vadd.f32 %v1369, %v7874
    %7876 = vdwg.mxu0
    %7877 = vmatpush.msra.mxu0 %v629
    %7878 = vmatpush.msra.mxu0 %v621
    %7879 = vmatpush.msra.mxu0 %v613
    %7880 = vmatpush.msra.mxu0 %v605
    %7881 = vmatpush.msra.mxu0 %v597
    %7882 = vmatpush.msra.mxu0 %v589
    %7883 = vmatpush.msra.mxu0 %v581
    %7884 = vmatpush.msra.mxu0 %v573
    %7885 = vmatpush.msra.mxu0 %v565
    %7886 = vmatpush.msra.mxu0 %v557
    %7887 = vmatpush.msra.mxu0 %v549
    %7888 = vmatpush.msra.mxu0 %v541
    %7889 = vmatpush.msra.mxu0 %v533
    %7890 = vmatpush.msra.mxu0 %v525
    %7891 = vmatpush.msra.mxu0 %v517
    %7892 = vmatpush.msra.mxu0 %v509
    %7893 = vmatmul.f32.gmra.mxu0 %v7614
    %v7894 = vpop.f32.mrf.mxu0
    %v7895 = vadd.f32 %v7875, %v7894
    %7896 = vdwg.mxu0
    %7897 = vmatpush.msra.mxu0 %v757
    %7898 = vmatpush.msra.mxu0 %v749
    %7899 = vmatpush.msra.mxu0 %v741
    %7900 = vmatpush.msra.mxu0 %v733
    %7901 = vmatpush.msra.mxu0 %v725
    %7902 = vmatpush.msra.mxu0 %v717
    %7903 = vmatpush.msra.mxu0 %v709
    %7904 = vmatpush.msra.mxu0 %v701
    %7905 = vmatpush.msra.mxu0 %v693
    %7906 = vmatpush.msra.mxu0 %v685
    %7907 = vmatpush.msra.mxu0 %v677
    %7908 = vmatpush.msra.mxu0 %v669
    %7909 = vmatpush.msra.mxu0 %v661
    %7910 = vmatpush.msra.mxu0 %v653
    %7911 = vmatpush.msra.mxu0 %v645
    %7912 = vmatpush.msra.mxu0 %v637
    %7913 = vmatmul.f32.gmra.mxu0 %v7615
    %v7914 = vpop.f32.mrf.mxu0
    %v7915 = vadd.f32 %v7895, %v7914
    %7916 = vdwg.mxu0
    %7917 = vmatpush.msra.mxu0 %v885
    %7918 = vmatpush.msra.mxu0 %v877
    %7919 = vmatpush.msra.mxu0 %v869
    %7920 = vmatpush.msra.mxu0 %v861
    %7921 = vmatpush.msra.mxu0 %v853
    %7922 = vmatpush.msra.mxu0 %v845
    %7923 = vmatpush.msra.mxu0 %v837
    %7924 = vmatpush.msra.mxu0 %v829
    %7925 = vmatpush.msra.mxu0 %v821
    %7926 = vmatpush.msra.mxu0 %v813
    %7927 = vmatpush.msra.mxu0 %v805
    %7928 = vmatpush.msra.mxu0 %v797
    %7929 = vmatpush.msra.mxu0 %v789
    %7930 = vmatpush.msra.mxu0 %v781
    %7931 = vmatpush.msra.mxu0 %v773
    %7932 = vmatpush.msra.mxu0 %v765
    %7933 = vmatmul.f32.gmra.mxu0 %v7616
    %v7934 = vpop.f32.mrf.mxu0
    %v7935 = vadd.f32 %v7915, %v7934
    %7936 = vdwg.mxu0
    %7937 = vmatpush.msra.mxu0 %v502
    %7938 = vmatpush.msra.mxu0 %v494
    %7939 = vmatpush.msra.mxu0 %v486
    %7940 = vmatpush.msra.mxu0 %v478
    %7941 = vmatpush.msra.mxu0 %v470
    %7942 = vmatpush.msra.mxu0 %v462
    %7943 = vmatpush.msra.mxu0 %v454
    %7944 = vmatpush.msra.mxu0 %v446
    %7945 = vmatpush.msra.mxu0 %v438
    %7946 = vmatpush.msra.mxu0 %v430
    %7947 = vmatpush.msra.mxu0 %v422
    %7948 = vmatpush.msra.mxu0 %v414
    %7949 = vmatpush.msra.mxu0 %v406
    %7950 = vmatpush.msra.mxu0 %v398
    %7951 = vmatpush.msra.mxu0 %v390
    %7952 = vmatpush.msra.mxu0 %v382
    %7953 = vmatmul.f32.gmra.mxu0 %v7613
    %v7954 = vpop.f32.mrf.mxu0
    %v7955 = vadd.f32 %v1370, %v7954
    %7956 = vdwg.mxu0
    %7957 = vmatpush.msra.mxu0 %v630
    %7958 = vmatpush.msra.mxu0 %v622
    %7959 = vmatpush.msra.mxu0 %v614
    %7960 = vmatpush.msra.mxu0 %v606
    %7961 = vmatpush.msra.mxu0 %v598
    %7962 = vmatpush.msra.mxu0 %v590
    %7963 = vmatpush.msra.mxu0 %v582
    %7964 = vmatpush.msra.mxu0 %v574
    %7965 = vmatpush.msra.mxu0 %v566
    %7966 = vmatpush.msra.mxu0 %v558
    %7967 = vmatpush.msra.mxu0 %v550
    %7968 = vmatpush.msra.mxu0 %v542
    %7969 = vmatpush.msra.mxu0 %v534
    %7970 = vmatpush.msra.mxu0 %v526
    %7971 = vmatpush.msra.mxu0 %v518
    %7972 = vmatpush.msra.mxu0 %v510
    %7973 = vmatmul.f32.gmra.mxu0 %v7614
    %v7974 = vpop.f32.mrf.mxu0
    %v7975 = vadd.f32 %v7955, %v7974
    %7976 = vdwg.mxu0
    %7977 = vmatpush.msra.mxu0 %v758
    %7978 = vmatpush.msra.mxu0 %v750
    %7979 = vmatpush.msra.mxu0 %v742
    %7980 = vmatpush.msra.mxu0 %v734
    %7981 = vmatpush.msra.mxu0 %v726
    %7982 = vmatpush.msra.mxu0 %v718
    %7983 = vmatpush.msra.mxu0 %v710
    %7984 = vmatpush.msra.mxu0 %v702
    %7985 = vmatpush.msra.mxu0 %v694
    %7986 = vmatpush.msra.mxu0 %v686
    %7987 = vmatpush.msra.mxu0 %v678
    %7988 = vmatpush.msra.mxu0 %v670
    %7989 = vmatpush.msra.mxu0 %v662
    %7990 = vmatpush.msra.mxu0 %v654
    %7991 = vmatpush.msra.mxu0 %v646
    %7992 = vmatpush.msra.mxu0 %v638
    %7993 = vmatmul.f32.gmra.mxu0 %v7615
    %v7994 = vpop.f32.mrf.mxu0
    %v7995 = vadd.f32 %v7975, %v7994
    %7996 = vdwg.mxu0
    %7997 = vmatpush.msra.mxu0 %v886
    %7998 = vmatpush.msra.mxu0 %v878
    %7999 = vmatpush.msra.mxu0 %v870
    %8000 = vmatpush.msra.mxu0 %v862
    %8001 = vmatpush.msra.mxu0 %v854
    %8002 = vmatpush.msra.mxu0 %v846
    %8003 = vmatpush.msra.mxu0 %v838
    %8004 = vmatpush.msra.mxu0 %v830
    %8005 = vmatpush.msra.mxu0 %v822
    %8006 = vmatpush.msra.mxu0 %v814
    %8007 = vmatpush.msra.mxu0 %v806
    %8008 = vmatpush.msra.mxu0 %v798
    %8009 = vmatpush.msra.mxu0 %v790
    %8010 = vmatpush.msra.mxu0 %v782
    %8011 = vmatpush.msra.mxu0 %v774
    %8012 = vmatpush.msra.mxu0 %v766
    %8013 = vmatmul.f32.gmra.mxu0 %v7616
    %v8014 = vpop.f32.mrf.mxu0
    %v8015 = vadd.f32 %v7995, %v8014
    %8016 = vdwg.mxu0
    %8017 = vmatpush.msra.mxu0 %v503
    %8018 = vmatpush.msra.mxu0 %v495
    %8019 = vmatpush.msra.mxu0 %v487
    %8020 = vmatpush.msra.mxu0 %v479
    %8021 = vmatpush.msra.mxu0 %v471
    %8022 = vmatpush.msra.mxu0 %v463
    %8023 = vmatpush.msra.mxu0 %v455
    %8024 = vmatpush.msra.mxu0 %v447
    %8025 = vmatpush.msra.mxu0 %v439
    %8026 = vmatpush.msra.mxu0 %v431
    %8027 = vmatpush.msra.mxu0 %v423
    %8028 = vmatpush.msra.mxu0 %v415
    %8029 = vmatpush.msra.mxu0 %v407
    %8030 = vmatpush.msra.mxu0 %v399
    %8031 = vmatpush.msra.mxu0 %v391
    %8032 = vmatpush.msra.mxu0 %v383
    %8033 = vmatmul.f32.gmra.mxu0 %v7613
    %v8034 = vpop.f32.mrf.mxu0
    %v8035 = vadd.f32 %v1371, %v8034
    %8036 = vdwg.mxu0
    %8037 = vmatpush.msra.mxu0 %v631
    %8038 = vmatpush.msra.mxu0 %v623
    %8039 = vmatpush.msra.mxu0 %v615
    %8040 = vmatpush.msra.mxu0 %v607
    %8041 = vmatpush.msra.mxu0 %v599
    %8042 = vmatpush.msra.mxu0 %v591
    %8043 = vmatpush.msra.mxu0 %v583
    %8044 = vmatpush.msra.mxu0 %v575
    %8045 = vmatpush.msra.mxu0 %v567
    %8046 = vmatpush.msra.mxu0 %v559
    %8047 = vmatpush.msra.mxu0 %v551
    %8048 = vmatpush.msra.mxu0 %v543
    %8049 = vmatpush.msra.mxu0 %v535
    %8050 = vmatpush.msra.mxu0 %v527
    %8051 = vmatpush.msra.mxu0 %v519
    %8052 = vmatpush.msra.mxu0 %v511
    %8053 = vmatmul.f32.gmra.mxu0 %v7614
    %v8054 = vpop.f32.mrf.mxu0
    %v8055 = vadd.f32 %v8035, %v8054
    %8056 = vdwg.mxu0
    %8057 = vmatpush.msra.mxu0 %v759
    %8058 = vmatpush.msra.mxu0 %v751
    %8059 = vmatpush.msra.mxu0 %v743
    %8060 = vmatpush.msra.mxu0 %v735
    %8061 = vmatpush.msra.mxu0 %v727
    %8062 = vmatpush.msra.mxu0 %v719
    %8063 = vmatpush.msra.mxu0 %v711
    %8064 = vmatpush.msra.mxu0 %v703
    %8065 = vmatpush.msra.mxu0 %v695
    %8066 = vmatpush.msra.mxu0 %v687
    %8067 = vmatpush.msra.mxu0 %v679
    %8068 = vmatpush.msra.mxu0 %v671
    %8069 = vmatpush.msra.mxu0 %v663
    %8070 = vmatpush.msra.mxu0 %v655
    %8071 = vmatpush.msra.mxu0 %v647
    %8072 = vmatpush.msra.mxu0 %v639
    %8073 = vmatmul.f32.gmra.mxu0 %v7615
    %v8074 = vpop.f32.mrf.mxu0
    %v8075 = vadd.f32 %v8055, %v8074
    %8076 = vdwg.mxu0
    %8077 = vmatpush.msra.mxu0 %v887
    %8078 = vmatpush.msra.mxu0 %v879
    %8079 = vmatpush.msra.mxu0 %v871
    %8080 = vmatpush.msra.mxu0 %v863
    %8081 = vmatpush.msra.mxu0 %v855
    %8082 = vmatpush.msra.mxu0 %v847
    %8083 = vmatpush.msra.mxu0 %v839
    %8084 = vmatpush.msra.mxu0 %v831
    %8085 = vmatpush.msra.mxu0 %v823
    %8086 = vmatpush.msra.mxu0 %v815
    %8087 = vmatpush.msra.mxu0 %v807
    %8088 = vmatpush.msra.mxu0 %v799
    %8089 = vmatpush.msra.mxu0 %v791
    %8090 = vmatpush.msra.mxu0 %v783
    %8091 = vmatpush.msra.mxu0 %v775
    %8092 = vmatpush.msra.mxu0 %v767
    %8093 = vmatmul.f32.gmra.mxu0 %v7616
    %v8094 = vpop.f32.mrf.mxu0
    %v8095 = vadd.f32 %v8075, %v8094
    %8096 = vdwg.mxu0
    %8097 = vmatpush.msra.mxu0 %v504
    %8098 = vmatpush.msra.mxu0 %v496
    %8099 = vmatpush.msra.mxu0 %v488
    %8100 = vmatpush.msra.mxu0 %v480
    %8101 = vmatpush.msra.mxu0 %v472
    %8102 = vmatpush.msra.mxu0 %v464
    %8103 = vmatpush.msra.mxu0 %v456
    %8104 = vmatpush.msra.mxu0 %v448
    %8105 = vmatpush.msra.mxu0 %v440
    %8106 = vmatpush.msra.mxu0 %v432
    %8107 = vmatpush.msra.mxu0 %v424
    %8108 = vmatpush.msra.mxu0 %v416
    %8109 = vmatpush.msra.mxu0 %v408
    %8110 = vmatpush.msra.mxu0 %v400
    %8111 = vmatpush.msra.mxu0 %v392
    %8112 = vmatpush.msra.mxu0 %v384
    %8113 = vmatmul.f32.gmra.mxu0 %v7613
    %v8114 = vpop.f32.mrf.mxu0
    %v8115 = vadd.f32 %v1372, %v8114
    %8116 = vdwg.mxu0
    %8117 = vmatpush.msra.mxu0 %v632
    %8118 = vmatpush.msra.mxu0 %v624
    %8119 = vmatpush.msra.mxu0 %v616
    %8120 = vmatpush.msra.mxu0 %v608
    %8121 = vmatpush.msra.mxu0 %v600
    %8122 = vmatpush.msra.mxu0 %v592
    %8123 = vmatpush.msra.mxu0 %v584
    %8124 = vmatpush.msra.mxu0 %v576
    %8125 = vmatpush.msra.mxu0 %v568
    %8126 = vmatpush.msra.mxu0 %v560
    %8127 = vmatpush.msra.mxu0 %v552
    %8128 = vmatpush.msra.mxu0 %v544
    %8129 = vmatpush.msra.mxu0 %v536
    %8130 = vmatpush.msra.mxu0 %v528
    %8131 = vmatpush.msra.mxu0 %v520
    %8132 = vmatpush.msra.mxu0 %v512
    %8133 = vmatmul.f32.gmra.mxu0 %v7614
    %v8134 = vpop.f32.mrf.mxu0
    %v8135 = vadd.f32 %v8115, %v8134
    %8136 = vdwg.mxu0
    %8137 = vmatpush.msra.mxu0 %v760
    %8138 = vmatpush.msra.mxu0 %v752
    %8139 = vmatpush.msra.mxu0 %v744
    %8140 = vmatpush.msra.mxu0 %v736
    %8141 = vmatpush.msra.mxu0 %v728
    %8142 = vmatpush.msra.mxu0 %v720
    %8143 = vmatpush.msra.mxu0 %v712
    %8144 = vmatpush.msra.mxu0 %v704
    %8145 = vmatpush.msra.mxu0 %v696
    %8146 = vmatpush.msra.mxu0 %v688
    %8147 = vmatpush.msra.mxu0 %v680
    %8148 = vmatpush.msra.mxu0 %v672
    %8149 = vmatpush.msra.mxu0 %v664
    %8150 = vmatpush.msra.mxu0 %v656
    %8151 = vmatpush.msra.mxu0 %v648
    %8152 = vmatpush.msra.mxu0 %v640
    %8153 = vmatmul.f32.gmra.mxu0 %v7615
    %v8154 = vpop.f32.mrf.mxu0
    %v8155 = vadd.f32 %v8135, %v8154
    %8156 = vdwg.mxu0
    %8157 = vmatpush.msra.mxu0 %v888
    %8158 = vmatpush.msra.mxu0 %v880
    %8159 = vmatpush.msra.mxu0 %v872
    %8160 = vmatpush.msra.mxu0 %v864
    %8161 = vmatpush.msra.mxu0 %v856
    %8162 = vmatpush.msra.mxu0 %v848
    %8163 = vmatpush.msra.mxu0 %v840
    %8164 = vmatpush.msra.mxu0 %v832
    %8165 = vmatpush.msra.mxu0 %v824
    %8166 = vmatpush.msra.mxu0 %v816
    %8167 = vmatpush.msra.mxu0 %v808
    %8168 = vmatpush.msra.mxu0 %v800
    %8169 = vmatpush.msra.mxu0 %v792
    %8170 = vmatpush.msra.mxu0 %v784
    %8171 = vmatpush.msra.mxu0 %v776
    %8172 = vmatpush.msra.mxu0 %v768
    %8173 = vmatmul.f32.gmra.mxu0 %v7616
    %v8174 = vpop.f32.mrf.mxu0
    %v8175 = vadd.f32 %v8155, %v8174
    %8176 = vdwg.mxu0
    %8177 = vmatpush.msra.mxu0 %v505
    %8178 = vmatpush.msra.mxu0 %v497
    %8179 = vmatpush.msra.mxu0 %v489
    %8180 = vmatpush.msra.mxu0 %v481
    %8181 = vmatpush.msra.mxu0 %v473
    %8182 = vmatpush.msra.mxu0 %v465
    %8183 = vmatpush.msra.mxu0 %v457
    %8184 = vmatpush.msra.mxu0 %v449
    %8185 = vmatpush.msra.mxu0 %v441
    %8186 = vmatpush.msra.mxu0 %v433
    %8187 = vmatpush.msra.mxu0 %v425
    %8188 = vmatpush.msra.mxu0 %v417
    %8189 = vmatpush.msra.mxu0 %v409
    %8190 = vmatpush.msra.mxu0 %v401
    %8191 = vmatpush.msra.mxu0 %v393
    %8192 = vmatpush.msra.mxu0 %v385
    %8193 = vmatmul.f32.gmra.mxu0 %v7613
    %v8194 = vpop.f32.mrf.mxu0
    %v8195 = vadd.f32 %v1373, %v8194
    %8196 = vdwg.mxu0
    %8197 = vmatpush.msra.mxu0 %v633
    %8198 = vmatpush.msra.mxu0 %v625
    %8199 = vmatpush.msra.mxu0 %v617
    %8200 = vmatpush.msra.mxu0 %v609
    %8201 = vmatpush.msra.mxu0 %v601
    %8202 = vmatpush.msra.mxu0 %v593
    %8203 = vmatpush.msra.mxu0 %v585
    %8204 = vmatpush.msra.mxu0 %v577
    %8205 = vmatpush.msra.mxu0 %v569
    %8206 = vmatpush.msra.mxu0 %v561
    %8207 = vmatpush.msra.mxu0 %v553
    %8208 = vmatpush.msra.mxu0 %v545
    %8209 = vmatpush.msra.mxu0 %v537
    %8210 = vmatpush.msra.mxu0 %v529
    %8211 = vmatpush.msra.mxu0 %v521
    %8212 = vmatpush.msra.mxu0 %v513
    %8213 = vmatmul.f32.gmra.mxu0 %v7614
    %v8214 = vpop.f32.mrf.mxu0
    %v8215 = vadd.f32 %v8195, %v8214
    %8216 = vdwg.mxu0
    %8217 = vmatpush.msra.mxu0 %v761
    %8218 = vmatpush.msra.mxu0 %v753
    %8219 = vmatpush.msra.mxu0 %v745
    %8220 = vmatpush.msra.mxu0 %v737
    %8221 = vmatpush.msra.mxu0 %v729
    %8222 = vmatpush.msra.mxu0 %v721
    %8223 = vmatpush.msra.mxu0 %v713
    %8224 = vmatpush.msra.mxu0 %v705
    %8225 = vmatpush.msra.mxu0 %v697
    %8226 = vmatpush.msra.mxu0 %v689
    %8227 = vmatpush.msra.mxu0 %v681
    %8228 = vmatpush.msra.mxu0 %v673
    %8229 = vmatpush.msra.mxu0 %v665
    %8230 = vmatpush.msra.mxu0 %v657
    %8231 = vmatpush.msra.mxu0 %v649
    %8232 = vmatpush.msra.mxu0 %v641
    %8233 = vmatmul.f32.gmra.mxu0 %v7615
    %v8234 = vpop.f32.mrf.mxu0
    %v8235 = vadd.f32 %v8215, %v8234
    %8236 = vdwg.mxu0
    %8237 = vmatpush.msra.mxu0 %v889
    %8238 = vmatpush.msra.mxu0 %v881
    %8239 = vmatpush.msra.mxu0 %v873
    %8240 = vmatpush.msra.mxu0 %v865
    %8241 = vmatpush.msra.mxu0 %v857
    %8242 = vmatpush.msra.mxu0 %v849
    %8243 = vmatpush.msra.mxu0 %v841
    %8244 = vmatpush.msra.mxu0 %v833
    %8245 = vmatpush.msra.mxu0 %v825
    %8246 = vmatpush.msra.mxu0 %v817
    %8247 = vmatpush.msra.mxu0 %v809
    %8248 = vmatpush.msra.mxu0 %v801
    %8249 = vmatpush.msra.mxu0 %v793
    %8250 = vmatpush.msra.mxu0 %v785
    %8251 = vmatpush.msra.mxu0 %v777
    %8252 = vmatpush.msra.mxu0 %v769
    %8253 = vmatmul.f32.gmra.mxu0 %v7616
    %v8254 = vpop.f32.mrf.mxu0
    %v8255 = vadd.f32 %v8235, %v8254
    %8256 = vdwg.mxu0
    %v8257 = vld [vmem:[#allocation4] sm:$0xff]
    %v8258 = vld [vmem:[#allocation4 + $0x8] sm:$0xff]
    %v8259 = vxor.u32 %v7695, 2147483648
    %v8260 = vxor.u32 %v7775, 2147483648
    %v8261 = vmul.f32 %v8259, 1.442695
    %v8262 = vpow.pop %v8261
    %v8263 = vmul.f32 %v8260, 1.442695
    %v8264 = vpow.pop %v8263
    %v8265 = vadd.f32 %v8262, 1.0
    %v8266 = vadd.f32 %v8264, 1.0
    %v8267 = vrcp.pop %v8265
    %v8268 = vmul.f32 %v8265, %v8267
    %v8269 = vsub.f32 1.0, %v8268
    %v8270 = vmul.f32 %v8267, %v8269
    %v8271 = vadd.f32 %v8267, %v8270
    %vm8272 = vweird.f32 %v8265
    %vm8273 = vweird.f32 %v8267
    %vm8274 = vmor %vm8272, %vm8273
    %v8275 = vsel %vm8274, %v8267, %v8271
    %v8276 = vand.u32 2147483647, %v8265
    %vm8277 = vcmp.eq.f32.partialorder %v8276, 8.507059e+37
    %v8278 = vand.u32 %v8265, 2147483648
    %v8279 = vor.u32 1.1754944e-38, %v8278
    %v8280 = vsel %vm8277, %v8279, %v8275
    %v8281 = vmul.f32 1.0, %v8280
    %v8282 = vrcp.pop %v8266
    %v8283 = vmul.f32 %v8266, %v8282
    %v8284 = vsub.f32 1.0, %v8283
    %v8285 = vmul.f32 %v8282, %v8284
    %v8286 = vadd.f32 %v8282, %v8285
    %vm8287 = vweird.f32 %v8266
    %vm8288 = vweird.f32 %v8282
    %vm8289 = vmor %vm8287, %vm8288
    %v8290 = vsel %vm8289, %v8282, %v8286
    %v8291 = vand.u32 2147483647, %v8266
    %vm8292 = vcmp.eq.f32.partialorder %v8291, 8.507059e+37
    %v8293 = vand.u32 %v8266, 2147483648
    %v8294 = vor.u32 1.1754944e-38, %v8293
    %v8295 = vsel %vm8292, %v8294, %v8290
    %v8296 = vmul.f32 1.0, %v8295
    %v8297 = vxor.u32 %v7855, 2147483648
    %v8298 = vxor.u32 %v7935, 2147483648
    %v8299 = vmul.f32 %v8297, 1.442695
    %v8300 = vpow.pop %v8299
    %v8301 = vmul.f32 %v8298, 1.442695
    %v8302 = vpow.pop %v8301
    %v8303 = vadd.f32 %v8300, 1.0
    %v8304 = vadd.f32 %v8302, 1.0
    %v8305 = vrcp.pop %v8303
    %v8306 = vmul.f32 %v8303, %v8305
    %v8307 = vsub.f32 1.0, %v8306
    %v8308 = vmul.f32 %v8305, %v8307
    %v8309 = vadd.f32 %v8305, %v8308
    %vm8310 = vweird.f32 %v8303
    %vm8311 = vweird.f32 %v8305
    %vm8312 = vmor %vm8310, %vm8311
    %v8313 = vsel %vm8312, %v8305, %v8309
    %v8314 = vand.u32 2147483647, %v8303
    %vm8315 = vcmp.eq.f32.partialorder %v8314, 8.507059e+37
    %v8316 = vand.u32 %v8303, 2147483648
    %v8317 = vor.u32 1.1754944e-38, %v8316
    %v8318 = vsel %vm8315, %v8317, %v8313
    %v8319 = vmul.f32 1.0, %v8318
    %v8320 = vrcp.pop %v8304
    %v8321 = vmul.f32 %v8304, %v8320
    %v8322 = vsub.f32 1.0, %v8321
    %v8323 = vmul.f32 %v8320, %v8322
    %v8324 = vadd.f32 %v8320, %v8323
    %vm8325 = vweird.f32 %v8304
    %vm8326 = vweird.f32 %v8320
    %vm8327 = vmor %vm8325, %vm8326
    %v8328 = vsel %vm8327, %v8320, %v8324
    %v8329 = vand.u32 2147483647, %v8304
    %vm8330 = vcmp.eq.f32.partialorder %v8329, 8.507059e+37
    %v8331 = vand.u32 %v8304, 2147483648
    %v8332 = vor.u32 1.1754944e-38, %v8331
    %v8333 = vsel %vm8330, %v8332, %v8328
    %v8334 = vmul.f32 1.0, %v8333
    %v8335 = vtanh.pop %v8015
    %v8336 = vtanh.pop %v8095
    %v8337 = vxor.u32 %v8175, 2147483648
    %v8338 = vxor.u32 %v8255, 2147483648
    %v8339 = vmul.f32 %v8337, 1.442695
    %v8340 = vpow.pop %v8339
    %v8341 = vmul.f32 %v8338, 1.442695
    %v8342 = vpow.pop %v8341
    %v8343 = vadd.f32 %v8340, 1.0
    %v8344 = vadd.f32 %v8342, 1.0
    %v8345 = vrcp.pop %v8343
    %v8346 = vmul.f32 %v8343, %v8345
    %v8347 = vsub.f32 1.0, %v8346
    %v8348 = vmul.f32 %v8345, %v8347
    %v8349 = vadd.f32 %v8345, %v8348
    %vm8350 = vweird.f32 %v8343
    %vm8351 = vweird.f32 %v8345
    %vm8352 = vmor %vm8350, %vm8351
    %v8353 = vsel %vm8352, %v8345, %v8349
    %v8354 = vand.u32 2147483647, %v8343
    %vm8355 = vcmp.eq.f32.partialorder %v8354, 8.507059e+37
    %v8356 = vand.u32 %v8343, 2147483648
    %v8357 = vor.u32 1.1754944e-38, %v8356
    %v8358 = vsel %vm8355, %v8357, %v8353
    %v8359 = vmul.f32 1.0, %v8358
    %v8360 = vrcp.pop %v8344
    %v8361 = vmul.f32 %v8344, %v8360
    %v8362 = vsub.f32 1.0, %v8361
    %v8363 = vmul.f32 %v8360, %v8362
    %v8364 = vadd.f32 %v8360, %v8363
    %vm8365 = vweird.f32 %v8344
    %vm8366 = vweird.f32 %v8360
    %vm8367 = vmor %vm8365, %vm8366
    %v8368 = vsel %vm8367, %v8360, %v8364
    %v8369 = vand.u32 2147483647, %v8344
    %vm8370 = vcmp.eq.f32.partialorder %v8369, 8.507059e+37
    %v8371 = vand.u32 %v8344, 2147483648
    %v8372 = vor.u32 1.1754944e-38, %v8371
    %v8373 = vsel %vm8370, %v8372, %v8368
    %v8374 = vmul.f32 1.0, %v8373
    %v8375 = vmul.f32 %v8319, %v8257
    %v8376 = vmul.f32 %v8334, %v8258
    %v8377 = vmul.f32 %v8281, %v8335
    %v8378 = vmul.f32 %v8296, %v8336
    %v8379 = vadd.f32 %v8375, %v8377
    %v8380 = vadd.f32 %v8376, %v8378
    %v8381 = vtanh.pop %v8379
    %v8382 = vtanh.pop %v8380
    %v8383 = vmul.f32 %v8359, %v8381
    %v8384 = vmul.f32 %v8374, %v8382
    %8385 = vst [vmem:[#allocation4] sm:$0xff] %v8379
    %8386 = vst [vmem:[#allocation4 + $0x8] sm:$0xff] %v8380
    %8387 = vst [vmem:[#allocation2 + $0x10] sm:$0xff] %v8383
    %8388 = vst [vmem:[#allocation2 + $0x18] sm:$0xff] %v8384
    %s8389 = scalar_lea.vmem [#allocation5], 384
    %v8390 = vld [vmem:[%s8389] sm:$0xff]
    %v8391 = vld [vmem:[%s8389 + $0x8] sm:$0xff]
    %v8392 = vld [vmem:[%s8389 + $0x10] sm:$0xff]
    %v8393 = vld [vmem:[%s8389 + $0x18] sm:$0xff]
    %v8394 = vld [vmem:[%s8389 + $0x20] sm:$0xff]
    %v8395 = vld [vmem:[%s8389 + $0x28] sm:$0xff]
    %v8396 = vld [vmem:[%s8389 + $0x30] sm:$0xff]
    %v8397 = vld [vmem:[%s8389 + $0x38] sm:$0xff]
    %v8398 = vld [vmem:[#allocation2] sm:$0xff]
    %v8399 = vld [vmem:[#allocation2 + $0x8] sm:$0xff]
    %8400 = vmatpush.msra.mxu0 %v242
    %8401 = vmatpush.msra.mxu0 %v234
    %8402 = vmatpush.msra.mxu0 %v226
    %8403 = vmatpush.msra.mxu0 %v218
    %8404 = vmatpush.msra.mxu0 %v210
    %8405 = vmatpush.msra.mxu0 %v202
    %8406 = vmatpush.msra.mxu0 %v194
    %8407 = vmatpush.msra.mxu0 %v186
    %8408 = vmatpush.msra.mxu0 %v178
    %8409 = vmatpush.msra.mxu0 %v170
    %8410 = vmatpush.msra.mxu0 %v162
    %8411 = vmatpush.msra.mxu0 %v154
    %8412 = vmatpush.msra.mxu0 %v146
    %8413 = vmatpush.msra.mxu0 %v138
    %8414 = vmatpush.msra.mxu0 %v130
    %8415 = vmatpush.msra.mxu0 %v122
    %8416 = vmatmul.f32.gmra.mxu0 %v8398
    %v8417 = vpop.f32.mrf.mxu0
    %v8418 = vadd.f32 0.0, %v8417
    %8419 = vdwg.mxu0
    %8420 = vmatpush.msra.mxu0 %v370
    %8421 = vmatpush.msra.mxu0 %v362
    %8422 = vmatpush.msra.mxu0 %v354
    %8423 = vmatpush.msra.mxu0 %v346
    %8424 = vmatpush.msra.mxu0 %v338
    %8425 = vmatpush.msra.mxu0 %v330
    %8426 = vmatpush.msra.mxu0 %v322
    %8427 = vmatpush.msra.mxu0 %v314
    %8428 = vmatpush.msra.mxu0 %v306
    %8429 = vmatpush.msra.mxu0 %v298
    %8430 = vmatpush.msra.mxu0 %v290
    %8431 = vmatpush.msra.mxu0 %v282
    %8432 = vmatpush.msra.mxu0 %v274
    %8433 = vmatpush.msra.mxu0 %v266
    %8434 = vmatpush.msra.mxu0 %v258
    %8435 = vmatpush.msra.mxu0 %v250
    %8436 = vmatmul.f32.gmra.mxu0 %v8399
    %v8437 = vpop.f32.mrf.mxu0
    %v8438 = vadd.f32 %v8418, %v8437
    %8439 = vdwg.mxu0
    %8440 = vmatpush.msra.mxu0 %v243
    %8441 = vmatpush.msra.mxu0 %v235
    %8442 = vmatpush.msra.mxu0 %v227
    %8443 = vmatpush.msra.mxu0 %v219
    %8444 = vmatpush.msra.mxu0 %v211
    %8445 = vmatpush.msra.mxu0 %v203
    %8446 = vmatpush.msra.mxu0 %v195
    %8447 = vmatpush.msra.mxu0 %v187
    %8448 = vmatpush.msra.mxu0 %v179
    %8449 = vmatpush.msra.mxu0 %v171
    %8450 = vmatpush.msra.mxu0 %v163
    %8451 = vmatpush.msra.mxu0 %v155
    %8452 = vmatpush.msra.mxu0 %v147
    %8453 = vmatpush.msra.mxu0 %v139
    %8454 = vmatpush.msra.mxu0 %v131
    %8455 = vmatpush.msra.mxu0 %v123
    %8456 = vmatmul.f32.gmra.mxu0 %v8398
    %v8457 = vpop.f32.mrf.mxu0
    %v8458 = vadd.f32 0.0, %v8457
    %8459 = vdwg.mxu0
    %8460 = vmatpush.msra.mxu0 %v371
    %8461 = vmatpush.msra.mxu0 %v363
    %8462 = vmatpush.msra.mxu0 %v355
    %8463 = vmatpush.msra.mxu0 %v347
    %8464 = vmatpush.msra.mxu0 %v339
    %8465 = vmatpush.msra.mxu0 %v331
    %8466 = vmatpush.msra.mxu0 %v323
    %8467 = vmatpush.msra.mxu0 %v315
    %8468 = vmatpush.msra.mxu0 %v307
    %8469 = vmatpush.msra.mxu0 %v299
    %8470 = vmatpush.msra.mxu0 %v291
    %8471 = vmatpush.msra.mxu0 %v283
    %8472 = vmatpush.msra.mxu0 %v275
    %8473 = vmatpush.msra.mxu0 %v267
    %8474 = vmatpush.msra.mxu0 %v259
    %8475 = vmatpush.msra.mxu0 %v251
    %8476 = vmatmul.f32.gmra.mxu0 %v8399
    %v8477 = vpop.f32.mrf.mxu0
    %v8478 = vadd.f32 %v8458, %v8477
    %8479 = vdwg.mxu0
    %8480 = vmatpush.msra.mxu0 %v244
    %8481 = vmatpush.msra.mxu0 %v236
    %8482 = vmatpush.msra.mxu0 %v228
    %8483 = vmatpush.msra.mxu0 %v220
    %8484 = vmatpush.msra.mxu0 %v212
    %8485 = vmatpush.msra.mxu0 %v204
    %8486 = vmatpush.msra.mxu0 %v196
    %8487 = vmatpush.msra.mxu0 %v188
    %8488 = vmatpush.msra.mxu0 %v180
    %8489 = vmatpush.msra.mxu0 %v172
    %8490 = vmatpush.msra.mxu0 %v164
    %8491 = vmatpush.msra.mxu0 %v156
    %8492 = vmatpush.msra.mxu0 %v148
    %8493 = vmatpush.msra.mxu0 %v140
    %8494 = vmatpush.msra.mxu0 %v132
    %8495 = vmatpush.msra.mxu0 %v124
    %8496 = vmatmul.f32.gmra.mxu0 %v8398
    %v8497 = vpop.f32.mrf.mxu0
    %v8498 = vadd.f32 0.0, %v8497
    %8499 = vdwg.mxu0
    %8500 = vmatpush.msra.mxu0 %v372
    %8501 = vmatpush.msra.mxu0 %v364
    %8502 = vmatpush.msra.mxu0 %v356
    %8503 = vmatpush.msra.mxu0 %v348
    %8504 = vmatpush.msra.mxu0 %v340
    %8505 = vmatpush.msra.mxu0 %v332
    %8506 = vmatpush.msra.mxu0 %v324
    %8507 = vmatpush.msra.mxu0 %v316
    %8508 = vmatpush.msra.mxu0 %v308
    %8509 = vmatpush.msra.mxu0 %v300
    %8510 = vmatpush.msra.mxu0 %v292
    %8511 = vmatpush.msra.mxu0 %v284
    %8512 = vmatpush.msra.mxu0 %v276
    %8513 = vmatpush.msra.mxu0 %v268
    %8514 = vmatpush.msra.mxu0 %v260
    %8515 = vmatpush.msra.mxu0 %v252
    %8516 = vmatmul.f32.gmra.mxu0 %v8399
    %v8517 = vpop.f32.mrf.mxu0
    %v8518 = vadd.f32 %v8498, %v8517
    %8519 = vdwg.mxu0
    %8520 = vmatpush.msra.mxu0 %v245
    %8521 = vmatpush.msra.mxu0 %v237
    %8522 = vmatpush.msra.mxu0 %v229
    %8523 = vmatpush.msra.mxu0 %v221
    %8524 = vmatpush.msra.mxu0 %v213
    %8525 = vmatpush.msra.mxu0 %v205
    %8526 = vmatpush.msra.mxu0 %v197
    %8527 = vmatpush.msra.mxu0 %v189
    %8528 = vmatpush.msra.mxu0 %v181
    %8529 = vmatpush.msra.mxu0 %v173
    %8530 = vmatpush.msra.mxu0 %v165
    %8531 = vmatpush.msra.mxu0 %v157
    %8532 = vmatpush.msra.mxu0 %v149
    %8533 = vmatpush.msra.mxu0 %v141
    %8534 = vmatpush.msra.mxu0 %v133
    %8535 = vmatpush.msra.mxu0 %v125
    %8536 = vmatmul.f32.gmra.mxu0 %v8398
    %v8537 = vpop.f32.mrf.mxu0
    %v8538 = vadd.f32 0.0, %v8537
    %8539 = vdwg.mxu0
    %8540 = vmatpush.msra.mxu0 %v373
    %8541 = vmatpush.msra.mxu0 %v365
    %8542 = vmatpush.msra.mxu0 %v357
    %8543 = vmatpush.msra.mxu0 %v349
    %8544 = vmatpush.msra.mxu0 %v341
    %8545 = vmatpush.msra.mxu0 %v333
    %8546 = vmatpush.msra.mxu0 %v325
    %8547 = vmatpush.msra.mxu0 %v317
    %8548 = vmatpush.msra.mxu0 %v309
    %8549 = vmatpush.msra.mxu0 %v301
    %8550 = vmatpush.msra.mxu0 %v293
    %8551 = vmatpush.msra.mxu0 %v285
    %8552 = vmatpush.msra.mxu0 %v277
    %8553 = vmatpush.msra.mxu0 %v269
    %8554 = vmatpush.msra.mxu0 %v261
    %8555 = vmatpush.msra.mxu0 %v253
    %8556 = vmatmul.f32.gmra.mxu0 %v8399
    %v8557 = vpop.f32.mrf.mxu0
    %v8558 = vadd.f32 %v8538, %v8557
    %8559 = vdwg.mxu0
    %8560 = vmatpush.msra.mxu0 %v246
    %8561 = vmatpush.msra.mxu0 %v238
    %8562 = vmatpush.msra.mxu0 %v230
    %8563 = vmatpush.msra.mxu0 %v222
    %8564 = vmatpush.msra.mxu0 %v214
    %8565 = vmatpush.msra.mxu0 %v206
    %8566 = vmatpush.msra.mxu0 %v198
    %8567 = vmatpush.msra.mxu0 %v190
    %8568 = vmatpush.msra.mxu0 %v182
    %8569 = vmatpush.msra.mxu0 %v174
    %8570 = vmatpush.msra.mxu0 %v166
    %8571 = vmatpush.msra.mxu0 %v158
    %8572 = vmatpush.msra.mxu0 %v150
    %8573 = vmatpush.msra.mxu0 %v142
    %8574 = vmatpush.msra.mxu0 %v134
    %8575 = vmatpush.msra.mxu0 %v126
    %8576 = vmatmul.f32.gmra.mxu0 %v8398
    %v8577 = vpop.f32.mrf.mxu0
    %v8578 = vadd.f32 0.0, %v8577
    %8579 = vdwg.mxu0
    %8580 = vmatpush.msra.mxu0 %v374
    %8581 = vmatpush.msra.mxu0 %v366
    %8582 = vmatpush.msra.mxu0 %v358
    %8583 = vmatpush.msra.mxu0 %v350
    %8584 = vmatpush.msra.mxu0 %v342
    %8585 = vmatpush.msra.mxu0 %v334
    %8586 = vmatpush.msra.mxu0 %v326
    %8587 = vmatpush.msra.mxu0 %v318
    %8588 = vmatpush.msra.mxu0 %v310
    %8589 = vmatpush.msra.mxu0 %v302
    %8590 = vmatpush.msra.mxu0 %v294
    %8591 = vmatpush.msra.mxu0 %v286
    %8592 = vmatpush.msra.mxu0 %v278
    %8593 = vmatpush.msra.mxu0 %v270
    %8594 = vmatpush.msra.mxu0 %v262
    %8595 = vmatpush.msra.mxu0 %v254
    %8596 = vmatmul.f32.gmra.mxu0 %v8399
    %v8597 = vpop.f32.mrf.mxu0
    %v8598 = vadd.f32 %v8578, %v8597
    %8599 = vdwg.mxu0
    %8600 = vmatpush.msra.mxu0 %v247
    %8601 = vmatpush.msra.mxu0 %v239
    %8602 = vmatpush.msra.mxu0 %v231
    %8603 = vmatpush.msra.mxu0 %v223
    %8604 = vmatpush.msra.mxu0 %v215
    %8605 = vmatpush.msra.mxu0 %v207
    %8606 = vmatpush.msra.mxu0 %v199
    %8607 = vmatpush.msra.mxu0 %v191
    %8608 = vmatpush.msra.mxu0 %v183
    %8609 = vmatpush.msra.mxu0 %v175
    %8610 = vmatpush.msra.mxu0 %v167
    %8611 = vmatpush.msra.mxu0 %v159
    %8612 = vmatpush.msra.mxu0 %v151
    %8613 = vmatpush.msra.mxu0 %v143
    %8614 = vmatpush.msra.mxu0 %v135
    %8615 = vmatpush.msra.mxu0 %v127
    %8616 = vmatmul.f32.gmra.mxu0 %v8398
    %v8617 = vpop.f32.mrf.mxu0
    %v8618 = vadd.f32 0.0, %v8617
    %8619 = vdwg.mxu0
    %8620 = vmatpush.msra.mxu0 %v375
    %8621 = vmatpush.msra.mxu0 %v367
    %8622 = vmatpush.msra.mxu0 %v359
    %8623 = vmatpush.msra.mxu0 %v351
    %8624 = vmatpush.msra.mxu0 %v343
    %8625 = vmatpush.msra.mxu0 %v335
    %8626 = vmatpush.msra.mxu0 %v327
    %8627 = vmatpush.msra.mxu0 %v319
    %8628 = vmatpush.msra.mxu0 %v311
    %8629 = vmatpush.msra.mxu0 %v303
    %8630 = vmatpush.msra.mxu0 %v295
    %8631 = vmatpush.msra.mxu0 %v287
    %8632 = vmatpush.msra.mxu0 %v279
    %8633 = vmatpush.msra.mxu0 %v271
    %8634 = vmatpush.msra.mxu0 %v263
    %8635 = vmatpush.msra.mxu0 %v255
    %8636 = vmatmul.f32.gmra.mxu0 %v8399
    %v8637 = vpop.f32.mrf.mxu0
    %v8638 = vadd.f32 %v8618, %v8637
    %8639 = vdwg.mxu0
    %8640 = vmatpush.msra.mxu0 %v248
    %8641 = vmatpush.msra.mxu0 %v240
    %8642 = vmatpush.msra.mxu0 %v232
    %8643 = vmatpush.msra.mxu0 %v224
    %8644 = vmatpush.msra.mxu0 %v216
    %8645 = vmatpush.msra.mxu0 %v208
    %8646 = vmatpush.msra.mxu0 %v200
    %8647 = vmatpush.msra.mxu0 %v192
    %8648 = vmatpush.msra.mxu0 %v184
    %8649 = vmatpush.msra.mxu0 %v176
    %8650 = vmatpush.msra.mxu0 %v168
    %8651 = vmatpush.msra.mxu0 %v160
    %8652 = vmatpush.msra.mxu0 %v152
    %8653 = vmatpush.msra.mxu0 %v144
    %8654 = vmatpush.msra.mxu0 %v136
    %8655 = vmatpush.msra.mxu0 %v128
    %8656 = vmatmul.f32.gmra.mxu0 %v8398
    %v8657 = vpop.f32.mrf.mxu0
    %v8658 = vadd.f32 0.0, %v8657
    %8659 = vdwg.mxu0
    %8660 = vmatpush.msra.mxu0 %v376
    %8661 = vmatpush.msra.mxu0 %v368
    %8662 = vmatpush.msra.mxu0 %v360
    %8663 = vmatpush.msra.mxu0 %v352
    %8664 = vmatpush.msra.mxu0 %v344
    %8665 = vmatpush.msra.mxu0 %v336
    %8666 = vmatpush.msra.mxu0 %v328
    %8667 = vmatpush.msra.mxu0 %v320
    %8668 = vmatpush.msra.mxu0 %v312
    %8669 = vmatpush.msra.mxu0 %v304
    %8670 = vmatpush.msra.mxu0 %v296
    %8671 = vmatpush.msra.mxu0 %v288
    %8672 = vmatpush.msra.mxu0 %v280
    %8673 = vmatpush.msra.mxu0 %v272
    %8674 = vmatpush.msra.mxu0 %v264
    %8675 = vmatpush.msra.mxu0 %v256
    %8676 = vmatmul.f32.gmra.mxu0 %v8399
    %v8677 = vpop.f32.mrf.mxu0
    %v8678 = vadd.f32 %v8658, %v8677
    %8679 = vdwg.mxu0
    %8680 = vmatpush.msra.mxu0 %v249
    %8681 = vmatpush.msra.mxu0 %v241
    %8682 = vmatpush.msra.mxu0 %v233
    %8683 = vmatpush.msra.mxu0 %v225
    %8684 = vmatpush.msra.mxu0 %v217
    %8685 = vmatpush.msra.mxu0 %v209
    %8686 = vmatpush.msra.mxu0 %v201
    %8687 = vmatpush.msra.mxu0 %v193
    %8688 = vmatpush.msra.mxu0 %v185
    %8689 = vmatpush.msra.mxu0 %v177
    %8690 = vmatpush.msra.mxu0 %v169
    %8691 = vmatpush.msra.mxu0 %v161
    %8692 = vmatpush.msra.mxu0 %v153
    %8693 = vmatpush.msra.mxu0 %v145
    %8694 = vmatpush.msra.mxu0 %v137
    %8695 = vmatpush.msra.mxu0 %v129
    %8696 = vmatmul.f32.gmra.mxu0 %v8398
    %v8697 = vpop.f32.mrf.mxu0
    %v8698 = vadd.f32 0.0, %v8697
    %8699 = vdwg.mxu0
    %8700 = vmatpush.msra.mxu0 %v377
    %8701 = vmatpush.msra.mxu0 %v369
    %8702 = vmatpush.msra.mxu0 %v361
    %8703 = vmatpush.msra.mxu0 %v353
    %8704 = vmatpush.msra.mxu0 %v345
    %8705 = vmatpush.msra.mxu0 %v337
    %8706 = vmatpush.msra.mxu0 %v329
    %8707 = vmatpush.msra.mxu0 %v321
    %8708 = vmatpush.msra.mxu0 %v313
    %8709 = vmatpush.msra.mxu0 %v305
    %8710 = vmatpush.msra.mxu0 %v297
    %8711 = vmatpush.msra.mxu0 %v289
    %8712 = vmatpush.msra.mxu0 %v281
    %8713 = vmatpush.msra.mxu0 %v273
    %8714 = vmatpush.msra.mxu0 %v265
    %8715 = vmatpush.msra.mxu0 %v257
    %8716 = vmatmul.f32.gmra.mxu0 %v8399
    %v8717 = vpop.f32.mrf.mxu0
    %v8718 = vadd.f32 %v8698, %v8717
    %8719 = vdwg.mxu0
    %v8720 = vadd.f32 %v8390, %v8438
    %v8721 = vadd.f32 %v8391, %v8478
    %v8722 = vadd.f32 %v8392, %v8518
    %v8723 = vadd.f32 %v8393, %v8558
    %v8724 = vadd.f32 %v8394, %v8598
    %v8725 = vadd.f32 %v8395, %v8638
    %v8726 = vadd.f32 %v8396, %v8678
    %v8727 = vadd.f32 %v8397, %v8718
    %v8728 = vld [vmem:[#allocation3] sm:$0xff]
    %v8729 = vld [vmem:[#allocation3 + $0x8] sm:$0xff]
    %v8730 = vxor.u32 %v8720, 2147483648
    %v8731 = vxor.u32 %v8721, 2147483648
    %v8732 = vmul.f32 %v8730, 1.442695
    %v8733 = vpow.pop %v8732
    %v8734 = vmul.f32 %v8731, 1.442695
    %v8735 = vpow.pop %v8734
    %v8736 = vadd.f32 %v8733, 1.0
    %v8737 = vadd.f32 %v8735, 1.0
    %v8738 = vrcp.pop %v8736
    %v8739 = vmul.f32 %v8736, %v8738
    %v8740 = vsub.f32 1.0, %v8739
    %v8741 = vmul.f32 %v8738, %v8740
    %v8742 = vadd.f32 %v8738, %v8741
    %vm8743 = vweird.f32 %v8736
    %vm8744 = vweird.f32 %v8738
    %vm8745 = vmor %vm8743, %vm8744
    %v8746 = vsel %vm8745, %v8738, %v8742
    %v8747 = vand.u32 2147483647, %v8736
    %vm8748 = vcmp.eq.f32.partialorder %v8747, 8.507059e+37
    %v8749 = vand.u32 %v8736, 2147483648
    %v8750 = vor.u32 1.1754944e-38, %v8749
    %v8751 = vsel %vm8748, %v8750, %v8746
    %v8752 = vmul.f32 1.0, %v8751
    %v8753 = vrcp.pop %v8737
    %v8754 = vmul.f32 %v8737, %v8753
    %v8755 = vsub.f32 1.0, %v8754
    %v8756 = vmul.f32 %v8753, %v8755
    %v8757 = vadd.f32 %v8753, %v8756
    %vm8758 = vweird.f32 %v8737
    %vm8759 = vweird.f32 %v8753
    %vm8760 = vmor %vm8758, %vm8759
    %v8761 = vsel %vm8760, %v8753, %v8757
    %v8762 = vand.u32 2147483647, %v8737
    %vm8763 = vcmp.eq.f32.partialorder %v8762, 8.507059e+37
    %v8764 = vand.u32 %v8737, 2147483648
    %v8765 = vor.u32 1.1754944e-38, %v8764
    %v8766 = vsel %vm8763, %v8765, %v8761
    %v8767 = vmul.f32 1.0, %v8766
    %v8768 = vxor.u32 %v8722, 2147483648
    %v8769 = vxor.u32 %v8723, 2147483648
    %v8770 = vmul.f32 %v8768, 1.442695
    %v8771 = vpow.pop %v8770
    %v8772 = vmul.f32 %v8769, 1.442695
    %v8773 = vpow.pop %v8772
    %v8774 = vadd.f32 %v8771, 1.0
    %v8775 = vadd.f32 %v8773, 1.0
    %v8776 = vrcp.pop %v8774
    %v8777 = vmul.f32 %v8774, %v8776
    %v8778 = vsub.f32 1.0, %v8777
    %v8779 = vmul.f32 %v8776, %v8778
    %v8780 = vadd.f32 %v8776, %v8779
    %vm8781 = vweird.f32 %v8774
    %vm8782 = vweird.f32 %v8776
    %vm8783 = vmor %vm8781, %vm8782
    %v8784 = vsel %vm8783, %v8776, %v8780
    %v8785 = vand.u32 2147483647, %v8774
    %vm8786 = vcmp.eq.f32.partialorder %v8785, 8.507059e+37
    %v8787 = vand.u32 %v8774, 2147483648
    %v8788 = vor.u32 1.1754944e-38, %v8787
    %v8789 = vsel %vm8786, %v8788, %v8784
    %v8790 = vmul.f32 1.0, %v8789
    %v8791 = vrcp.pop %v8775
    %v8792 = vmul.f32 %v8775, %v8791
    %v8793 = vsub.f32 1.0, %v8792
    %v8794 = vmul.f32 %v8791, %v8793
    %v8795 = vadd.f32 %v8791, %v8794
    %vm8796 = vweird.f32 %v8775
    %vm8797 = vweird.f32 %v8791
    %vm8798 = vmor %vm8796, %vm8797
    %v8799 = vsel %vm8798, %v8791, %v8795
    %v8800 = vand.u32 2147483647, %v8775
    %vm8801 = vcmp.eq.f32.partialorder %v8800, 8.507059e+37
    %v8802 = vand.u32 %v8775, 2147483648
    %v8803 = vor.u32 1.1754944e-38, %v8802
    %v8804 = vsel %vm8801, %v8803, %v8799
    %v8805 = vmul.f32 1.0, %v8804
    %v8806 = vtanh.pop %v8724
    %v8807 = vtanh.pop %v8725
    %v8808 = vxor.u32 %v8726, 2147483648
    %v8809 = vxor.u32 %v8727, 2147483648
    %v8810 = vmul.f32 %v8808, 1.442695
    %v8811 = vpow.pop %v8810
    %v8812 = vmul.f32 %v8809, 1.442695
    %v8813 = vpow.pop %v8812
    %v8814 = vadd.f32 %v8811, 1.0
    %v8815 = vadd.f32 %v8813, 1.0
    %v8816 = vrcp.pop %v8814
    %v8817 = vmul.f32 %v8814, %v8816
    %v8818 = vsub.f32 1.0, %v8817
    %v8819 = vmul.f32 %v8816, %v8818
    %v8820 = vadd.f32 %v8816, %v8819
    %vm8821 = vweird.f32 %v8814
    %vm8822 = vweird.f32 %v8816
    %vm8823 = vmor %vm8821, %vm8822
    %v8824 = vsel %vm8823, %v8816, %v8820
    %v8825 = vand.u32 2147483647, %v8814
    %vm8826 = vcmp.eq.f32.partialorder %v8825, 8.507059e+37
    %v8827 = vand.u32 %v8814, 2147483648
    %v8828 = vor.u32 1.1754944e-38, %v8827
    %v8829 = vsel %vm8826, %v8828, %v8824
    %v8830 = vmul.f32 1.0, %v8829
    %v8831 = vrcp.pop %v8815
    %v8832 = vmul.f32 %v8815, %v8831
    %v8833 = vsub.f32 1.0, %v8832
    %v8834 = vmul.f32 %v8831, %v8833
    %v8835 = vadd.f32 %v8831, %v8834
    %vm8836 = vweird.f32 %v8815
    %vm8837 = vweird.f32 %v8831
    %vm8838 = vmor %vm8836, %vm8837
    %v8839 = vsel %vm8838, %v8831, %v8835
    %v8840 = vand.u32 2147483647, %v8815
    %vm8841 = vcmp.eq.f32.partialorder %v8840, 8.507059e+37
    %v8842 = vand.u32 %v8815, 2147483648
    %v8843 = vor.u32 1.1754944e-38, %v8842
    %v8844 = vsel %vm8841, %v8843, %v8839
    %v8845 = vmul.f32 1.0, %v8844
    %v8846 = vmul.f32 %v8790, %v8728
    %v8847 = vmul.f32 %v8805, %v8729
    %v8848 = vmul.f32 %v8752, %v8806
    %v8849 = vmul.f32 %v8767, %v8807
    %v8850 = vadd.f32 %v8846, %v8848
    %v8851 = vadd.f32 %v8847, %v8849
    %v8852 = vtanh.pop %v8850
    %v8853 = vtanh.pop %v8851
    %v8854 = vmul.f32 %v8830, %v8852
    %v8855 = vmul.f32 %v8845, %v8853
    %8856 = vst [vmem:[#allocation3] sm:$0xff] %v8850
    %8857 = vst [vmem:[#allocation3 + $0x8] sm:$0xff] %v8851
    %8858 = vst [vmem:[#allocation2] sm:$0xff] %v8854
    %8859 = vst [vmem:[#allocation2 + $0x8] sm:$0xff] %v8855
    %v8860 = vld [vmem:[#allocation2] sm:$0xff]
    %v8861 = vld [vmem:[#allocation2 + $0x8] sm:$0xff]
    %v8862 = vld [vmem:[#allocation2 + $0x10] sm:$0xff]
    %v8863 = vld [vmem:[#allocation2 + $0x18] sm:$0xff]
    %8864 = vmatpush.msra.mxu0 %v498
    %8865 = vmatpush.msra.mxu0 %v490
    %8866 = vmatpush.msra.mxu0 %v482
    %8867 = vmatpush.msra.mxu0 %v474
    %8868 = vmatpush.msra.mxu0 %v466
    %8869 = vmatpush.msra.mxu0 %v458
    %8870 = vmatpush.msra.mxu0 %v450
    %8871 = vmatpush.msra.mxu0 %v442
    %8872 = vmatpush.msra.mxu0 %v434
    %8873 = vmatpush.msra.mxu0 %v426
    %8874 = vmatpush.msra.mxu0 %v418
    %8875 = vmatpush.msra.mxu0 %v410
    %8876 = vmatpush.msra.mxu0 %v402
    %8877 = vmatpush.msra.mxu0 %v394
    %8878 = vmatpush.msra.mxu0 %v386
    %8879 = vmatpush.msra.mxu0 %v378
    %8880 = vmatmul.f32.gmra.mxu0 %v8860
    %v8881 = vpop.f32.mrf.mxu0
    %v8882 = vadd.f32 %v1366, %v8881
    %8883 = vdwg.mxu0
    %8884 = vmatpush.msra.mxu0 %v626
    %8885 = vmatpush.msra.mxu0 %v618
    %8886 = vmatpush.msra.mxu0 %v610
    %8887 = vmatpush.msra.mxu0 %v602
    %8888 = vmatpush.msra.mxu0 %v594
    %8889 = vmatpush.msra.mxu0 %v586
    %8890 = vmatpush.msra.mxu0 %v578
    %8891 = vmatpush.msra.mxu0 %v570
    %8892 = vmatpush.msra.mxu0 %v562
    %8893 = vmatpush.msra.mxu0 %v554
    %8894 = vmatpush.msra.mxu0 %v546
    %8895 = vmatpush.msra.mxu0 %v538
    %8896 = vmatpush.msra.mxu0 %v530
    %8897 = vmatpush.msra.mxu0 %v522
    %8898 = vmatpush.msra.mxu0 %v514
    %8899 = vmatpush.msra.mxu0 %v506
    %8900 = vmatmul.f32.gmra.mxu0 %v8861
    %v8901 = vpop.f32.mrf.mxu0
    %v8902 = vadd.f32 %v8882, %v8901
    %8903 = vdwg.mxu0
    %8904 = vmatpush.msra.mxu0 %v754
    %8905 = vmatpush.msra.mxu0 %v746
    %8906 = vmatpush.msra.mxu0 %v738
    %8907 = vmatpush.msra.mxu0 %v730
    %8908 = vmatpush.msra.mxu0 %v722
    %8909 = vmatpush.msra.mxu0 %v714
    %8910 = vmatpush.msra.mxu0 %v706
    %8911 = vmatpush.msra.mxu0 %v698
    %8912 = vmatpush.msra.mxu0 %v690
    %8913 = vmatpush.msra.mxu0 %v682
    %8914 = vmatpush.msra.mxu0 %v674
    %8915 = vmatpush.msra.mxu0 %v666
    %8916 = vmatpush.msra.mxu0 %v658
    %8917 = vmatpush.msra.mxu0 %v650
    %8918 = vmatpush.msra.mxu0 %v642
    %8919 = vmatpush.msra.mxu0 %v634
    %8920 = vmatmul.f32.gmra.mxu0 %v8862
    %v8921 = vpop.f32.mrf.mxu0
    %v8922 = vadd.f32 %v8902, %v8921
    %8923 = vdwg.mxu0
    %8924 = vmatpush.msra.mxu0 %v882
    %8925 = vmatpush.msra.mxu0 %v874
    %8926 = vmatpush.msra.mxu0 %v866
    %8927 = vmatpush.msra.mxu0 %v858
    %8928 = vmatpush.msra.mxu0 %v850
    %8929 = vmatpush.msra.mxu0 %v842
    %8930 = vmatpush.msra.mxu0 %v834
    %8931 = vmatpush.msra.mxu0 %v826
    %8932 = vmatpush.msra.mxu0 %v818
    %8933 = vmatpush.msra.mxu0 %v810
    %8934 = vmatpush.msra.mxu0 %v802
    %8935 = vmatpush.msra.mxu0 %v794
    %8936 = vmatpush.msra.mxu0 %v786
    %8937 = vmatpush.msra.mxu0 %v778
    %8938 = vmatpush.msra.mxu0 %v770
    %8939 = vmatpush.msra.mxu0 %v762
    %8940 = vmatmul.f32.gmra.mxu0 %v8863
    %v8941 = vpop.f32.mrf.mxu0
    %v8942 = vadd.f32 %v8922, %v8941
    %8943 = vdwg.mxu0
    %8944 = vmatpush.msra.mxu0 %v499
    %8945 = vmatpush.msra.mxu0 %v491
    %8946 = vmatpush.msra.mxu0 %v483
    %8947 = vmatpush.msra.mxu0 %v475
    %8948 = vmatpush.msra.mxu0 %v467
    %8949 = vmatpush.msra.mxu0 %v459
    %8950 = vmatpush.msra.mxu0 %v451
    %8951 = vmatpush.msra.mxu0 %v443
    %8952 = vmatpush.msra.mxu0 %v435
    %8953 = vmatpush.msra.mxu0 %v427
    %8954 = vmatpush.msra.mxu0 %v419
    %8955 = vmatpush.msra.mxu0 %v411
    %8956 = vmatpush.msra.mxu0 %v403
    %8957 = vmatpush.msra.mxu0 %v395
    %8958 = vmatpush.msra.mxu0 %v387
    %8959 = vmatpush.msra.mxu0 %v379
    %8960 = vmatmul.f32.gmra.mxu0 %v8860
    %v8961 = vpop.f32.mrf.mxu0
    %v8962 = vadd.f32 %v1367, %v8961
    %8963 = vdwg.mxu0
    %8964 = vmatpush.msra.mxu0 %v627
    %8965 = vmatpush.msra.mxu0 %v619
    %8966 = vmatpush.msra.mxu0 %v611
    %8967 = vmatpush.msra.mxu0 %v603
    %8968 = vmatpush.msra.mxu0 %v595
    %8969 = vmatpush.msra.mxu0 %v587
    %8970 = vmatpush.msra.mxu0 %v579
    %8971 = vmatpush.msra.mxu0 %v571
    %8972 = vmatpush.msra.mxu0 %v563
    %8973 = vmatpush.msra.mxu0 %v555
    %8974 = vmatpush.msra.mxu0 %v547
    %8975 = vmatpush.msra.mxu0 %v539
    %8976 = vmatpush.msra.mxu0 %v531
    %8977 = vmatpush.msra.mxu0 %v523
    %8978 = vmatpush.msra.mxu0 %v515
    %8979 = vmatpush.msra.mxu0 %v507
    %8980 = vmatmul.f32.gmra.mxu0 %v8861
    %v8981 = vpop.f32.mrf.mxu0
    %v8982 = vadd.f32 %v8962, %v8981
    %8983 = vdwg.mxu0
    %8984 = vmatpush.msra.mxu0 %v755
    %8985 = vmatpush.msra.mxu0 %v747
    %8986 = vmatpush.msra.mxu0 %v739
    %8987 = vmatpush.msra.mxu0 %v731
    %8988 = vmatpush.msra.mxu0 %v723
    %8989 = vmatpush.msra.mxu0 %v715
    %8990 = vmatpush.msra.mxu0 %v707
    %8991 = vmatpush.msra.mxu0 %v699
    %8992 = vmatpush.msra.mxu0 %v691
    %8993 = vmatpush.msra.mxu0 %v683
    %8994 = vmatpush.msra.mxu0 %v675
    %8995 = vmatpush.msra.mxu0 %v667
    %8996 = vmatpush.msra.mxu0 %v659
    %8997 = vmatpush.msra.mxu0 %v651
    %8998 = vmatpush.msra.mxu0 %v643
    %8999 = vmatpush.msra.mxu0 %v635
    %9000 = vmatmul.f32.gmra.mxu0 %v8862
    %v9001 = vpop.f32.mrf.mxu0
    %v9002 = vadd.f32 %v8982, %v9001
    %9003 = vdwg.mxu0
    %9004 = vmatpush.msra.mxu0 %v883
    %9005 = vmatpush.msra.mxu0 %v875
    %9006 = vmatpush.msra.mxu0 %v867
    %9007 = vmatpush.msra.mxu0 %v859
    %9008 = vmatpush.msra.mxu0 %v851
    %9009 = vmatpush.msra.mxu0 %v843
    %9010 = vmatpush.msra.mxu0 %v835
    %9011 = vmatpush.msra.mxu0 %v827
    %9012 = vmatpush.msra.mxu0 %v819
    %9013 = vmatpush.msra.mxu0 %v811
    %9014 = vmatpush.msra.mxu0 %v803
    %9015 = vmatpush.msra.mxu0 %v795
    %9016 = vmatpush.msra.mxu0 %v787
    %9017 = vmatpush.msra.mxu0 %v779
    %9018 = vmatpush.msra.mxu0 %v771
    %9019 = vmatpush.msra.mxu0 %v763
    %9020 = vmatmul.f32.gmra.mxu0 %v8863
    %v9021 = vpop.f32.mrf.mxu0
    %v9022 = vadd.f32 %v9002, %v9021
    %9023 = vdwg.mxu0
    %9024 = vmatpush.msra.mxu0 %v500
    %9025 = vmatpush.msra.mxu0 %v492
    %9026 = vmatpush.msra.mxu0 %v484
    %9027 = vmatpush.msra.mxu0 %v476
    %9028 = vmatpush.msra.mxu0 %v468
    %9029 = vmatpush.msra.mxu0 %v460
    %9030 = vmatpush.msra.mxu0 %v452
    %9031 = vmatpush.msra.mxu0 %v444
    %9032 = vmatpush.msra.mxu0 %v436
    %9033 = vmatpush.msra.mxu0 %v428
    %9034 = vmatpush.msra.mxu0 %v420
    %9035 = vmatpush.msra.mxu0 %v412
    %9036 = vmatpush.msra.mxu0 %v404
    %9037 = vmatpush.msra.mxu0 %v396
    %9038 = vmatpush.msra.mxu0 %v388
    %9039 = vmatpush.msra.mxu0 %v380
    %9040 = vmatmul.f32.gmra.mxu0 %v8860
    %v9041 = vpop.f32.mrf.mxu0
    %v9042 = vadd.f32 %v1368, %v9041
    %9043 = vdwg.mxu0
    %9044 = vmatpush.msra.mxu0 %v628
    %9045 = vmatpush.msra.mxu0 %v620
    %9046 = vmatpush.msra.mxu0 %v612
    %9047 = vmatpush.msra.mxu0 %v604
    %9048 = vmatpush.msra.mxu0 %v596
    %9049 = vmatpush.msra.mxu0 %v588
    %9050 = vmatpush.msra.mxu0 %v580
    %9051 = vmatpush.msra.mxu0 %v572
    %9052 = vmatpush.msra.mxu0 %v564
    %9053 = vmatpush.msra.mxu0 %v556
    %9054 = vmatpush.msra.mxu0 %v548
    %9055 = vmatpush.msra.mxu0 %v540
    %9056 = vmatpush.msra.mxu0 %v532
    %9057 = vmatpush.msra.mxu0 %v524
    %9058 = vmatpush.msra.mxu0 %v516
    %9059 = vmatpush.msra.mxu0 %v508
    %9060 = vmatmul.f32.gmra.mxu0 %v8861
    %v9061 = vpop.f32.mrf.mxu0
    %v9062 = vadd.f32 %v9042, %v9061
    %9063 = vdwg.mxu0
    %9064 = vmatpush.msra.mxu0 %v756
    %9065 = vmatpush.msra.mxu0 %v748
    %9066 = vmatpush.msra.mxu0 %v740
    %9067 = vmatpush.msra.mxu0 %v732
    %9068 = vmatpush.msra.mxu0 %v724
    %9069 = vmatpush.msra.mxu0 %v716
    %9070 = vmatpush.msra.mxu0 %v708
    %9071 = vmatpush.msra.mxu0 %v700
    %9072 = vmatpush.msra.mxu0 %v692
    %9073 = vmatpush.msra.mxu0 %v684
    %9074 = vmatpush.msra.mxu0 %v676
    %9075 = vmatpush.msra.mxu0 %v668
    %9076 = vmatpush.msra.mxu0 %v660
    %9077 = vmatpush.msra.mxu0 %v652
    %9078 = vmatpush.msra.mxu0 %v644
    %9079 = vmatpush.msra.mxu0 %v636
    %9080 = vmatmul.f32.gmra.mxu0 %v8862
    %v9081 = vpop.f32.mrf.mxu0
    %v9082 = vadd.f32 %v9062, %v9081
    %9083 = vdwg.mxu0
    %9084 = vmatpush.msra.mxu0 %v884
    %9085 = vmatpush.msra.mxu0 %v876
    %9086 = vmatpush.msra.mxu0 %v868
    %9087 = vmatpush.msra.mxu0 %v860
    %9088 = vmatpush.msra.mxu0 %v852
    %9089 = vmatpush.msra.mxu0 %v844
    %9090 = vmatpush.msra.mxu0 %v836
    %9091 = vmatpush.msra.mxu0 %v828
    %9092 = vmatpush.msra.mxu0 %v820
    %9093 = vmatpush.msra.mxu0 %v812
    %9094 = vmatpush.msra.mxu0 %v804
    %9095 = vmatpush.msra.mxu0 %v796
    %9096 = vmatpush.msra.mxu0 %v788
    %9097 = vmatpush.msra.mxu0 %v780
    %9098 = vmatpush.msra.mxu0 %v772
    %9099 = vmatpush.msra.mxu0 %v764
    %9100 = vmatmul.f32.gmra.mxu0 %v8863
    %v9101 = vpop.f32.mrf.mxu0
    %v9102 = vadd.f32 %v9082, %v9101
    %9103 = vdwg.mxu0
    %9104 = vmatpush.msra.mxu0 %v501
    %9105 = vmatpush.msra.mxu0 %v493
    %9106 = vmatpush.msra.mxu0 %v485
    %9107 = vmatpush.msra.mxu0 %v477
    %9108 = vmatpush.msra.mxu0 %v469
    %9109 = vmatpush.msra.mxu0 %v461
    %9110 = vmatpush.msra.mxu0 %v453
    %9111 = vmatpush.msra.mxu0 %v445
    %9112 = vmatpush.msra.mxu0 %v437
    %9113 = vmatpush.msra.mxu0 %v429
    %9114 = vmatpush.msra.mxu0 %v421
    %9115 = vmatpush.msra.mxu0 %v413
    %9116 = vmatpush.msra.mxu0 %v405
    %9117 = vmatpush.msra.mxu0 %v397
    %9118 = vmatpush.msra.mxu0 %v389
    %9119 = vmatpush.msra.mxu0 %v381
    %9120 = vmatmul.f32.gmra.mxu0 %v8860
    %v9121 = vpop.f32.mrf.mxu0
    %v9122 = vadd.f32 %v1369, %v9121
    %9123 = vdwg.mxu0
    %9124 = vmatpush.msra.mxu0 %v629
    %9125 = vmatpush.msra.mxu0 %v621
    %9126 = vmatpush.msra.mxu0 %v613
    %9127 = vmatpush.msra.mxu0 %v605
    %9128 = vmatpush.msra.mxu0 %v597
    %9129 = vmatpush.msra.mxu0 %v589
    %9130 = vmatpush.msra.mxu0 %v581
    %9131 = vmatpush.msra.mxu0 %v573
    %9132 = vmatpush.msra.mxu0 %v565
    %9133 = vmatpush.msra.mxu0 %v557
    %9134 = vmatpush.msra.mxu0 %v549
    %9135 = vmatpush.msra.mxu0 %v541
    %9136 = vmatpush.msra.mxu0 %v533
    %9137 = vmatpush.msra.mxu0 %v525
    %9138 = vmatpush.msra.mxu0 %v517
    %9139 = vmatpush.msra.mxu0 %v509
    %9140 = vmatmul.f32.gmra.mxu0 %v8861
    %v9141 = vpop.f32.mrf.mxu0
    %v9142 = vadd.f32 %v9122, %v9141
    %9143 = vdwg.mxu0
    %9144 = vmatpush.msra.mxu0 %v757
    %9145 = vmatpush.msra.mxu0 %v749
    %9146 = vmatpush.msra.mxu0 %v741
    %9147 = vmatpush.msra.mxu0 %v733
    %9148 = vmatpush.msra.mxu0 %v725
    %9149 = vmatpush.msra.mxu0 %v717
    %9150 = vmatpush.msra.mxu0 %v709
    %9151 = vmatpush.msra.mxu0 %v701
    %9152 = vmatpush.msra.mxu0 %v693
    %9153 = vmatpush.msra.mxu0 %v685
    %9154 = vmatpush.msra.mxu0 %v677
    %9155 = vmatpush.msra.mxu0 %v669
    %9156 = vmatpush.msra.mxu0 %v661
    %9157 = vmatpush.msra.mxu0 %v653
    %9158 = vmatpush.msra.mxu0 %v645
    %9159 = vmatpush.msra.mxu0 %v637
    %9160 = vmatmul.f32.gmra.mxu0 %v8862
    %v9161 = vpop.f32.mrf.mxu0
    %v9162 = vadd.f32 %v9142, %v9161
    %9163 = vdwg.mxu0
    %9164 = vmatpush.msra.mxu0 %v885
    %9165 = vmatpush.msra.mxu0 %v877
    %9166 = vmatpush.msra.mxu0 %v869
    %9167 = vmatpush.msra.mxu0 %v861
    %9168 = vmatpush.msra.mxu0 %v853
    %9169 = vmatpush.msra.mxu0 %v845
    %9170 = vmatpush.msra.mxu0 %v837
    %9171 = vmatpush.msra.mxu0 %v829
    %9172 = vmatpush.msra.mxu0 %v821
    %9173 = vmatpush.msra.mxu0 %v813
    %9174 = vmatpush.msra.mxu0 %v805
    %9175 = vmatpush.msra.mxu0 %v797
    %9176 = vmatpush.msra.mxu0 %v789
    %9177 = vmatpush.msra.mxu0 %v781
    %9178 = vmatpush.msra.mxu0 %v773
    %9179 = vmatpush.msra.mxu0 %v765
    %9180 = vmatmul.f32.gmra.mxu0 %v8863
    %v9181 = vpop.f32.mrf.mxu0
    %v9182 = vadd.f32 %v9162, %v9181
    %9183 = vdwg.mxu0
    %9184 = vmatpush.msra.mxu0 %v502
    %9185 = vmatpush.msra.mxu0 %v494
    %9186 = vmatpush.msra.mxu0 %v486
    %9187 = vmatpush.msra.mxu0 %v478
    %9188 = vmatpush.msra.mxu0 %v470
    %9189 = vmatpush.msra.mxu0 %v462
    %9190 = vmatpush.msra.mxu0 %v454
    %9191 = vmatpush.msra.mxu0 %v446
    %9192 = vmatpush.msra.mxu0 %v438
    %9193 = vmatpush.msra.mxu0 %v430
    %9194 = vmatpush.msra.mxu0 %v422
    %9195 = vmatpush.msra.mxu0 %v414
    %9196 = vmatpush.msra.mxu0 %v406
    %9197 = vmatpush.msra.mxu0 %v398
    %9198 = vmatpush.msra.mxu0 %v390
    %9199 = vmatpush.msra.mxu0 %v382
    %9200 = vmatmul.f32.gmra.mxu0 %v8860
    %v9201 = vpop.f32.mrf.mxu0
    %v9202 = vadd.f32 %v1370, %v9201
    %9203 = vdwg.mxu0
    %9204 = vmatpush.msra.mxu0 %v630
    %9205 = vmatpush.msra.mxu0 %v622
    %9206 = vmatpush.msra.mxu0 %v614
    %9207 = vmatpush.msra.mxu0 %v606
    %9208 = vmatpush.msra.mxu0 %v598
    %9209 = vmatpush.msra.mxu0 %v590
    %9210 = vmatpush.msra.mxu0 %v582
    %9211 = vmatpush.msra.mxu0 %v574
    %9212 = vmatpush.msra.mxu0 %v566
    %9213 = vmatpush.msra.mxu0 %v558
    %9214 = vmatpush.msra.mxu0 %v550
    %9215 = vmatpush.msra.mxu0 %v542
    %9216 = vmatpush.msra.mxu0 %v534
    %9217 = vmatpush.msra.mxu0 %v526
    %9218 = vmatpush.msra.mxu0 %v518
    %9219 = vmatpush.msra.mxu0 %v510
    %9220 = vmatmul.f32.gmra.mxu0 %v8861
    %v9221 = vpop.f32.mrf.mxu0
    %v9222 = vadd.f32 %v9202, %v9221
    %9223 = vdwg.mxu0
    %9224 = vmatpush.msra.mxu0 %v758
    %9225 = vmatpush.msra.mxu0 %v750
    %9226 = vmatpush.msra.mxu0 %v742
    %9227 = vmatpush.msra.mxu0 %v734
    %9228 = vmatpush.msra.mxu0 %v726
    %9229 = vmatpush.msra.mxu0 %v718
    %9230 = vmatpush.msra.mxu0 %v710
    %9231 = vmatpush.msra.mxu0 %v702
    %9232 = vmatpush.msra.mxu0 %v694
    %9233 = vmatpush.msra.mxu0 %v686
    %9234 = vmatpush.msra.mxu0 %v678
    %9235 = vmatpush.msra.mxu0 %v670
    %9236 = vmatpush.msra.mxu0 %v662
    %9237 = vmatpush.msra.mxu0 %v654
    %9238 = vmatpush.msra.mxu0 %v646
    %9239 = vmatpush.msra.mxu0 %v638
    %9240 = vmatmul.f32.gmra.mxu0 %v8862
    %v9241 = vpop.f32.mrf.mxu0
    %v9242 = vadd.f32 %v9222, %v9241
    %9243 = vdwg.mxu0
    %9244 = vmatpush.msra.mxu0 %v886
    %9245 = vmatpush.msra.mxu0 %v878
    %9246 = vmatpush.msra.mxu0 %v870
    %9247 = vmatpush.msra.mxu0 %v862
    %9248 = vmatpush.msra.mxu0 %v854
    %9249 = vmatpush.msra.mxu0 %v846
    %9250 = vmatpush.msra.mxu0 %v838
    %9251 = vmatpush.msra.mxu0 %v830
    %9252 = vmatpush.msra.mxu0 %v822
    %9253 = vmatpush.msra.mxu0 %v814
    %9254 = vmatpush.msra.mxu0 %v806
    %9255 = vmatpush.msra.mxu0 %v798
    %9256 = vmatpush.msra.mxu0 %v790
    %9257 = vmatpush.msra.mxu0 %v782
    %9258 = vmatpush.msra.mxu0 %v774
    %9259 = vmatpush.msra.mxu0 %v766
    %9260 = vmatmul.f32.gmra.mxu0 %v8863
    %v9261 = vpop.f32.mrf.mxu0
    %v9262 = vadd.f32 %v9242, %v9261
    %9263 = vdwg.mxu0
    %9264 = vmatpush.msra.mxu0 %v503
    %9265 = vmatpush.msra.mxu0 %v495
    %9266 = vmatpush.msra.mxu0 %v487
    %9267 = vmatpush.msra.mxu0 %v479
    %9268 = vmatpush.msra.mxu0 %v471
    %9269 = vmatpush.msra.mxu0 %v463
    %9270 = vmatpush.msra.mxu0 %v455
    %9271 = vmatpush.msra.mxu0 %v447
    %9272 = vmatpush.msra.mxu0 %v439
    %9273 = vmatpush.msra.mxu0 %v431
    %9274 = vmatpush.msra.mxu0 %v423
    %9275 = vmatpush.msra.mxu0 %v415
    %9276 = vmatpush.msra.mxu0 %v407
    %9277 = vmatpush.msra.mxu0 %v399
    %9278 = vmatpush.msra.mxu0 %v391
    %9279 = vmatpush.msra.mxu0 %v383
    %9280 = vmatmul.f32.gmra.mxu0 %v8860
    %v9281 = vpop.f32.mrf.mxu0
    %v9282 = vadd.f32 %v1371, %v9281
    %9283 = vdwg.mxu0
    %9284 = vmatpush.msra.mxu0 %v631
    %9285 = vmatpush.msra.mxu0 %v623
    %9286 = vmatpush.msra.mxu0 %v615
    %9287 = vmatpush.msra.mxu0 %v607
    %9288 = vmatpush.msra.mxu0 %v599
    %9289 = vmatpush.msra.mxu0 %v591
    %9290 = vmatpush.msra.mxu0 %v583
    %9291 = vmatpush.msra.mxu0 %v575
    %9292 = vmatpush.msra.mxu0 %v567
    %9293 = vmatpush.msra.mxu0 %v559
    %9294 = vmatpush.msra.mxu0 %v551
    %9295 = vmatpush.msra.mxu0 %v543
    %9296 = vmatpush.msra.mxu0 %v535
    %9297 = vmatpush.msra.mxu0 %v527
    %9298 = vmatpush.msra.mxu0 %v519
    %9299 = vmatpush.msra.mxu0 %v511
    %9300 = vmatmul.f32.gmra.mxu0 %v8861
    %v9301 = vpop.f32.mrf.mxu0
    %v9302 = vadd.f32 %v9282, %v9301
    %9303 = vdwg.mxu0
    %9304 = vmatpush.msra.mxu0 %v759
    %9305 = vmatpush.msra.mxu0 %v751
    %9306 = vmatpush.msra.mxu0 %v743
    %9307 = vmatpush.msra.mxu0 %v735
    %9308 = vmatpush.msra.mxu0 %v727
    %9309 = vmatpush.msra.mxu0 %v719
    %9310 = vmatpush.msra.mxu0 %v711
    %9311 = vmatpush.msra.mxu0 %v703
    %9312 = vmatpush.msra.mxu0 %v695
    %9313 = vmatpush.msra.mxu0 %v687
    %9314 = vmatpush.msra.mxu0 %v679
    %9315 = vmatpush.msra.mxu0 %v671
    %9316 = vmatpush.msra.mxu0 %v663
    %9317 = vmatpush.msra.mxu0 %v655
    %9318 = vmatpush.msra.mxu0 %v647
    %9319 = vmatpush.msra.mxu0 %v639
    %9320 = vmatmul.f32.gmra.mxu0 %v8862
    %v9321 = vpop.f32.mrf.mxu0
    %v9322 = vadd.f32 %v9302, %v9321
    %9323 = vdwg.mxu0
    %9324 = vmatpush.msra.mxu0 %v887
    %9325 = vmatpush.msra.mxu0 %v879
    %9326 = vmatpush.msra.mxu0 %v871
    %9327 = vmatpush.msra.mxu0 %v863
    %9328 = vmatpush.msra.mxu0 %v855
    %9329 = vmatpush.msra.mxu0 %v847
    %9330 = vmatpush.msra.mxu0 %v839
    %9331 = vmatpush.msra.mxu0 %v831
    %9332 = vmatpush.msra.mxu0 %v823
    %9333 = vmatpush.msra.mxu0 %v815
    %9334 = vmatpush.msra.mxu0 %v807
    %9335 = vmatpush.msra.mxu0 %v799
    %9336 = vmatpush.msra.mxu0 %v791
    %9337 = vmatpush.msra.mxu0 %v783
    %9338 = vmatpush.msra.mxu0 %v775
    %9339 = vmatpush.msra.mxu0 %v767
    %9340 = vmatmul.f32.gmra.mxu0 %v8863
    %v9341 = vpop.f32.mrf.mxu0
    %v9342 = vadd.f32 %v9322, %v9341
    %9343 = vdwg.mxu0
    %9344 = vmatpush.msra.mxu0 %v504
    %9345 = vmatpush.msra.mxu0 %v496
    %9346 = vmatpush.msra.mxu0 %v488
    %9347 = vmatpush.msra.mxu0 %v480
    %9348 = vmatpush.msra.mxu0 %v472
    %9349 = vmatpush.msra.mxu0 %v464
    %9350 = vmatpush.msra.mxu0 %v456
    %9351 = vmatpush.msra.mxu0 %v448
    %9352 = vmatpush.msra.mxu0 %v440
    %9353 = vmatpush.msra.mxu0 %v432
    %9354 = vmatpush.msra.mxu0 %v424
    %9355 = vmatpush.msra.mxu0 %v416
    %9356 = vmatpush.msra.mxu0 %v408
    %9357 = vmatpush.msra.mxu0 %v400
    %9358 = vmatpush.msra.mxu0 %v392
    %9359 = vmatpush.msra.mxu0 %v384
    %9360 = vmatmul.f32.gmra.mxu0 %v8860
    %v9361 = vpop.f32.mrf.mxu0
    %v9362 = vadd.f32 %v1372, %v9361
    %9363 = vdwg.mxu0
    %9364 = vmatpush.msra.mxu0 %v632
    %9365 = vmatpush.msra.mxu0 %v624
    %9366 = vmatpush.msra.mxu0 %v616
    %9367 = vmatpush.msra.mxu0 %v608
    %9368 = vmatpush.msra.mxu0 %v600
    %9369 = vmatpush.msra.mxu0 %v592
    %9370 = vmatpush.msra.mxu0 %v584
    %9371 = vmatpush.msra.mxu0 %v576
    %9372 = vmatpush.msra.mxu0 %v568
    %9373 = vmatpush.msra.mxu0 %v560
    %9374 = vmatpush.msra.mxu0 %v552
    %9375 = vmatpush.msra.mxu0 %v544
    %9376 = vmatpush.msra.mxu0 %v536
    %9377 = vmatpush.msra.mxu0 %v528
    %9378 = vmatpush.msra.mxu0 %v520
    %9379 = vmatpush.msra.mxu0 %v512
    %9380 = vmatmul.f32.gmra.mxu0 %v8861
    %v9381 = vpop.f32.mrf.mxu0
    %v9382 = vadd.f32 %v9362, %v9381
    %9383 = vdwg.mxu0
    %9384 = vmatpush.msra.mxu0 %v760
    %9385 = vmatpush.msra.mxu0 %v752
    %9386 = vmatpush.msra.mxu0 %v744
    %9387 = vmatpush.msra.mxu0 %v736
    %9388 = vmatpush.msra.mxu0 %v728
    %9389 = vmatpush.msra.mxu0 %v720
    %9390 = vmatpush.msra.mxu0 %v712
    %9391 = vmatpush.msra.mxu0 %v704
    %9392 = vmatpush.msra.mxu0 %v696
    %9393 = vmatpush.msra.mxu0 %v688
    %9394 = vmatpush.msra.mxu0 %v680
    %9395 = vmatpush.msra.mxu0 %v672
    %9396 = vmatpush.msra.mxu0 %v664
    %9397 = vmatpush.msra.mxu0 %v656
    %9398 = vmatpush.msra.mxu0 %v648
    %9399 = vmatpush.msra.mxu0 %v640
    %9400 = vmatmul.f32.gmra.mxu0 %v8862
    %v9401 = vpop.f32.mrf.mxu0
    %v9402 = vadd.f32 %v9382, %v9401
    %9403 = vdwg.mxu0
    %9404 = vmatpush.msra.mxu0 %v888
    %9405 = vmatpush.msra.mxu0 %v880
    %9406 = vmatpush.msra.mxu0 %v872
    %9407 = vmatpush.msra.mxu0 %v864
    %9408 = vmatpush.msra.mxu0 %v856
    %9409 = vmatpush.msra.mxu0 %v848
    %9410 = vmatpush.msra.mxu0 %v840
    %9411 = vmatpush.msra.mxu0 %v832
    %9412 = vmatpush.msra.mxu0 %v824
    %9413 = vmatpush.msra.mxu0 %v816
    %9414 = vmatpush.msra.mxu0 %v808
    %9415 = vmatpush.msra.mxu0 %v800
    %9416 = vmatpush.msra.mxu0 %v792
    %9417 = vmatpush.msra.mxu0 %v784
    %9418 = vmatpush.msra.mxu0 %v776
    %9419 = vmatpush.msra.mxu0 %v768
    %9420 = vmatmul.f32.gmra.mxu0 %v8863
    %v9421 = vpop.f32.mrf.mxu0
    %v9422 = vadd.f32 %v9402, %v9421
    %9423 = vdwg.mxu0
    %9424 = vmatpush.msra.mxu0 %v505
    %9425 = vmatpush.msra.mxu0 %v497
    %9426 = vmatpush.msra.mxu0 %v489
    %9427 = vmatpush.msra.mxu0 %v481
    %9428 = vmatpush.msra.mxu0 %v473
    %9429 = vmatpush.msra.mxu0 %v465
    %9430 = vmatpush.msra.mxu0 %v457
    %9431 = vmatpush.msra.mxu0 %v449
    %9432 = vmatpush.msra.mxu0 %v441
    %9433 = vmatpush.msra.mxu0 %v433
    %9434 = vmatpush.msra.mxu0 %v425
    %9435 = vmatpush.msra.mxu0 %v417
    %9436 = vmatpush.msra.mxu0 %v409
    %9437 = vmatpush.msra.mxu0 %v401
    %9438 = vmatpush.msra.mxu0 %v393
    %9439 = vmatpush.msra.mxu0 %v385
    %9440 = vmatmul.f32.gmra.mxu0 %v8860
    %v9441 = vpop.f32.mrf.mxu0
    %v9442 = vadd.f32 %v1373, %v9441
    %9443 = vdwg.mxu0
    %9444 = vmatpush.msra.mxu0 %v633
    %9445 = vmatpush.msra.mxu0 %v625
    %9446 = vmatpush.msra.mxu0 %v617
    %9447 = vmatpush.msra.mxu0 %v609
    %9448 = vmatpush.msra.mxu0 %v601
    %9449 = vmatpush.msra.mxu0 %v593
    %9450 = vmatpush.msra.mxu0 %v585
    %9451 = vmatpush.msra.mxu0 %v577
    %9452 = vmatpush.msra.mxu0 %v569
    %9453 = vmatpush.msra.mxu0 %v561
    %9454 = vmatpush.msra.mxu0 %v553
    %9455 = vmatpush.msra.mxu0 %v545
    %9456 = vmatpush.msra.mxu0 %v537
    %9457 = vmatpush.msra.mxu0 %v529
    %9458 = vmatpush.msra.mxu0 %v521
    %9459 = vmatpush.msra.mxu0 %v513
    %9460 = vmatmul.f32.gmra.mxu0 %v8861
    %v9461 = vpop.f32.mrf.mxu0
    %v9462 = vadd.f32 %v9442, %v9461
    %9463 = vdwg.mxu0
    %9464 = vmatpush.msra.mxu0 %v761
    %9465 = vmatpush.msra.mxu0 %v753
    %9466 = vmatpush.msra.mxu0 %v745
    %9467 = vmatpush.msra.mxu0 %v737
    %9468 = vmatpush.msra.mxu0 %v729
    %9469 = vmatpush.msra.mxu0 %v721
    %9470 = vmatpush.msra.mxu0 %v713
    %9471 = vmatpush.msra.mxu0 %v705
    %9472 = vmatpush.msra.mxu0 %v697
    %9473 = vmatpush.msra.mxu0 %v689
    %9474 = vmatpush.msra.mxu0 %v681
    %9475 = vmatpush.msra.mxu0 %v673
    %9476 = vmatpush.msra.mxu0 %v665
    %9477 = vmatpush.msra.mxu0 %v657
    %9478 = vmatpush.msra.mxu0 %v649
    %9479 = vmatpush.msra.mxu0 %v641
    %9480 = vmatmul.f32.gmra.mxu0 %v8862
    %v9481 = vpop.f32.mrf.mxu0
    %v9482 = vadd.f32 %v9462, %v9481
    %9483 = vdwg.mxu0
    %9484 = vmatpush.msra.mxu0 %v889
    %9485 = vmatpush.msra.mxu0 %v881
    %9486 = vmatpush.msra.mxu0 %v873
    %9487 = vmatpush.msra.mxu0 %v865
    %9488 = vmatpush.msra.mxu0 %v857
    %9489 = vmatpush.msra.mxu0 %v849
    %9490 = vmatpush.msra.mxu0 %v841
    %9491 = vmatpush.msra.mxu0 %v833
    %9492 = vmatpush.msra.mxu0 %v825
    %9493 = vmatpush.msra.mxu0 %v817
    %9494 = vmatpush.msra.mxu0 %v809
    %9495 = vmatpush.msra.mxu0 %v801
    %9496 = vmatpush.msra.mxu0 %v793
    %9497 = vmatpush.msra.mxu0 %v785
    %9498 = vmatpush.msra.mxu0 %v777
    %9499 = vmatpush.msra.mxu0 %v769
    %9500 = vmatmul.f32.gmra.mxu0 %v8863
    %v9501 = vpop.f32.mrf.mxu0
    %v9502 = vadd.f32 %v9482, %v9501
    %9503 = vdwg.mxu0
    %v9504 = vld [vmem:[#allocation4] sm:$0xff]
    %v9505 = vld [vmem:[#allocation4 + $0x8] sm:$0xff]
    %v9506 = vxor.u32 %v8942, 2147483648
    %v9507 = vxor.u32 %v9022, 2147483648
    %v9508 = vmul.f32 %v9506, 1.442695
    %v9509 = vpow.pop %v9508
    %v9510 = vmul.f32 %v9507, 1.442695
    %v9511 = vpow.pop %v9510
    %v9512 = vadd.f32 %v9509, 1.0
    %v9513 = vadd.f32 %v9511, 1.0
    %v9514 = vrcp.pop %v9512
    %v9515 = vmul.f32 %v9512, %v9514
    %v9516 = vsub.f32 1.0, %v9515
    %v9517 = vmul.f32 %v9514, %v9516
    %v9518 = vadd.f32 %v9514, %v9517
    %vm9519 = vweird.f32 %v9512
    %vm9520 = vweird.f32 %v9514
    %vm9521 = vmor %vm9519, %vm9520
    %v9522 = vsel %vm9521, %v9514, %v9518
    %v9523 = vand.u32 2147483647, %v9512
    %vm9524 = vcmp.eq.f32.partialorder %v9523, 8.507059e+37
    %v9525 = vand.u32 %v9512, 2147483648
    %v9526 = vor.u32 1.1754944e-38, %v9525
    %v9527 = vsel %vm9524, %v9526, %v9522
    %v9528 = vmul.f32 1.0, %v9527
    %v9529 = vrcp.pop %v9513
    %v9530 = vmul.f32 %v9513, %v9529
    %v9531 = vsub.f32 1.0, %v9530
    %v9532 = vmul.f32 %v9529, %v9531
    %v9533 = vadd.f32 %v9529, %v9532
    %vm9534 = vweird.f32 %v9513
    %vm9535 = vweird.f32 %v9529
    %vm9536 = vmor %vm9534, %vm9535
    %v9537 = vsel %vm9536, %v9529, %v9533
    %v9538 = vand.u32 2147483647, %v9513
    %vm9539 = vcmp.eq.f32.partialorder %v9538, 8.507059e+37
    %v9540 = vand.u32 %v9513, 2147483648
    %v9541 = vor.u32 1.1754944e-38, %v9540
    %v9542 = vsel %vm9539, %v9541, %v9537
    %v9543 = vmul.f32 1.0, %v9542
    %v9544 = vxor.u32 %v9102, 2147483648
    %v9545 = vxor.u32 %v9182, 2147483648
    %v9546 = vmul.f32 %v9544, 1.442695
    %v9547 = vpow.pop %v9546
    %v9548 = vmul.f32 %v9545, 1.442695
    %v9549 = vpow.pop %v9548
    %v9550 = vadd.f32 %v9547, 1.0
    %v9551 = vadd.f32 %v9549, 1.0
    %v9552 = vrcp.pop %v9550
    %v9553 = vmul.f32 %v9550, %v9552
    %v9554 = vsub.f32 1.0, %v9553
    %v9555 = vmul.f32 %v9552, %v9554
    %v9556 = vadd.f32 %v9552, %v9555
    %vm9557 = vweird.f32 %v9550
    %vm9558 = vweird.f32 %v9552
    %vm9559 = vmor %vm9557, %vm9558
    %v9560 = vsel %vm9559, %v9552, %v9556
    %v9561 = vand.u32 2147483647, %v9550
    %vm9562 = vcmp.eq.f32.partialorder %v9561, 8.507059e+37
    %v9563 = vand.u32 %v9550, 2147483648
    %v9564 = vor.u32 1.1754944e-38, %v9563
    %v9565 = vsel %vm9562, %v9564, %v9560
    %v9566 = vmul.f32 1.0, %v9565
    %v9567 = vrcp.pop %v9551
    %v9568 = vmul.f32 %v9551, %v9567
    %v9569 = vsub.f32 1.0, %v9568
    %v9570 = vmul.f32 %v9567, %v9569
    %v9571 = vadd.f32 %v9567, %v9570
    %vm9572 = vweird.f32 %v9551
    %vm9573 = vweird.f32 %v9567
    %vm9574 = vmor %vm9572, %vm9573
    %v9575 = vsel %vm9574, %v9567, %v9571
    %v9576 = vand.u32 2147483647, %v9551
    %vm9577 = vcmp.eq.f32.partialorder %v9576, 8.507059e+37
    %v9578 = vand.u32 %v9551, 2147483648
    %v9579 = vor.u32 1.1754944e-38, %v9578
    %v9580 = vsel %vm9577, %v9579, %v9575
    %v9581 = vmul.f32 1.0, %v9580
    %v9582 = vtanh.pop %v9262
    %v9583 = vtanh.pop %v9342
    %v9584 = vxor.u32 %v9422, 2147483648
    %v9585 = vxor.u32 %v9502, 2147483648
    %v9586 = vmul.f32 %v9584, 1.442695
    %v9587 = vpow.pop %v9586
    %v9588 = vmul.f32 %v9585, 1.442695
    %v9589 = vpow.pop %v9588
    %v9590 = vadd.f32 %v9587, 1.0
    %v9591 = vadd.f32 %v9589, 1.0
    %v9592 = vrcp.pop %v9590
    %v9593 = vmul.f32 %v9590, %v9592
    %v9594 = vsub.f32 1.0, %v9593
    %v9595 = vmul.f32 %v9592, %v9594
    %v9596 = vadd.f32 %v9592, %v9595
    %vm9597 = vweird.f32 %v9590
    %vm9598 = vweird.f32 %v9592
    %vm9599 = vmor %vm9597, %vm9598
    %v9600 = vsel %vm9599, %v9592, %v9596
    %v9601 = vand.u32 2147483647, %v9590
    %vm9602 = vcmp.eq.f32.partialorder %v9601, 8.507059e+37
    %v9603 = vand.u32 %v9590, 2147483648
    %v9604 = vor.u32 1.1754944e-38, %v9603
    %v9605 = vsel %vm9602, %v9604, %v9600
    %v9606 = vmul.f32 1.0, %v9605
    %v9607 = vrcp.pop %v9591
    %v9608 = vmul.f32 %v9591, %v9607
    %v9609 = vsub.f32 1.0, %v9608
    %v9610 = vmul.f32 %v9607, %v9609
    %v9611 = vadd.f32 %v9607, %v9610
    %vm9612 = vweird.f32 %v9591
    %vm9613 = vweird.f32 %v9607
    %vm9614 = vmor %vm9612, %vm9613
    %v9615 = vsel %vm9614, %v9607, %v9611
    %v9616 = vand.u32 2147483647, %v9591
    %vm9617 = vcmp.eq.f32.partialorder %v9616, 8.507059e+37
    %v9618 = vand.u32 %v9591, 2147483648
    %v9619 = vor.u32 1.1754944e-38, %v9618
    %v9620 = vsel %vm9617, %v9619, %v9615
    %v9621 = vmul.f32 1.0, %v9620
    %v9622 = vmul.f32 %v9566, %v9504
    %v9623 = vmul.f32 %v9581, %v9505
    %v9624 = vmul.f32 %v9528, %v9582
    %v9625 = vmul.f32 %v9543, %v9583
    %v9626 = vadd.f32 %v9622, %v9624
    %v9627 = vadd.f32 %v9623, %v9625
    %v9628 = vtanh.pop %v9626
    %v9629 = vtanh.pop %v9627
    %v9630 = vmul.f32 %v9606, %v9628
    %v9631 = vmul.f32 %v9621, %v9629
    %9632 = vst [vmem:[#allocation4] sm:$0xff] %v9626
    %9633 = vst [vmem:[#allocation4 + $0x8] sm:$0xff] %v9627
    %9634 = vst [vmem:[#allocation2 + $0x10] sm:$0xff] %v9630
    %9635 = vst [vmem:[#allocation2 + $0x18] sm:$0xff] %v9631
    %s9636 = scalar_lea.vmem [#allocation5], 448
    %v9637 = vld [vmem:[%s9636] sm:$0xff]
    %v9638 = vld [vmem:[%s9636 + $0x8] sm:$0xff]
    %v9639 = vld [vmem:[%s9636 + $0x10] sm:$0xff]
    %v9640 = vld [vmem:[%s9636 + $0x18] sm:$0xff]
    %v9641 = vld [vmem:[%s9636 + $0x20] sm:$0xff]
    %v9642 = vld [vmem:[%s9636 + $0x28] sm:$0xff]
    %v9643 = vld [vmem:[%s9636 + $0x30] sm:$0xff]
    %v9644 = vld [vmem:[%s9636 + $0x38] sm:$0xff]
    %v9645 = vld [vmem:[#allocation2] sm:$0xff]
    %v9646 = vld [vmem:[#allocation2 + $0x8] sm:$0xff]
    %9647 = vmatpush.msra.mxu0 %v242
    %9648 = vmatpush.msra.mxu0 %v234
    %9649 = vmatpush.msra.mxu0 %v226
    %9650 = vmatpush.msra.mxu0 %v218
    %9651 = vmatpush.msra.mxu0 %v210
    %9652 = vmatpush.msra.mxu0 %v202
    %9653 = vmatpush.msra.mxu0 %v194
    %9654 = vmatpush.msra.mxu0 %v186
    %9655 = vmatpush.msra.mxu0 %v178
    %9656 = vmatpush.msra.mxu0 %v170
    %9657 = vmatpush.msra.mxu0 %v162
    %9658 = vmatpush.msra.mxu0 %v154
    %9659 = vmatpush.msra.mxu0 %v146
    %9660 = vmatpush.msra.mxu0 %v138
    %9661 = vmatpush.msra.mxu0 %v130
    %9662 = vmatpush.msra.mxu0 %v122
    %9663 = vmatmul.f32.gmra.mxu0 %v9645
    %v9664 = vpop.f32.mrf.mxu0
    %v9665 = vadd.f32 0.0, %v9664
    %9666 = vdwg.mxu0
    %9667 = vmatpush.msra.mxu0 %v370
    %9668 = vmatpush.msra.mxu0 %v362
    %9669 = vmatpush.msra.mxu0 %v354
    %9670 = vmatpush.msra.mxu0 %v346
    %9671 = vmatpush.msra.mxu0 %v338
    %9672 = vmatpush.msra.mxu0 %v330
    %9673 = vmatpush.msra.mxu0 %v322
    %9674 = vmatpush.msra.mxu0 %v314
    %9675 = vmatpush.msra.mxu0 %v306
    %9676 = vmatpush.msra.mxu0 %v298
    %9677 = vmatpush.msra.mxu0 %v290
    %9678 = vmatpush.msra.mxu0 %v282
    %9679 = vmatpush.msra.mxu0 %v274
    %9680 = vmatpush.msra.mxu0 %v266
    %9681 = vmatpush.msra.mxu0 %v258
    %9682 = vmatpush.msra.mxu0 %v250
    %9683 = vmatmul.f32.gmra.mxu0 %v9646
    %v9684 = vpop.f32.mrf.mxu0
    %v9685 = vadd.f32 %v9665, %v9684
    %9686 = vdwg.mxu0
    %9687 = vmatpush.msra.mxu0 %v243
    %9688 = vmatpush.msra.mxu0 %v235
    %9689 = vmatpush.msra.mxu0 %v227
    %9690 = vmatpush.msra.mxu0 %v219
    %9691 = vmatpush.msra.mxu0 %v211
    %9692 = vmatpush.msra.mxu0 %v203
    %9693 = vmatpush.msra.mxu0 %v195
    %9694 = vmatpush.msra.mxu0 %v187
    %9695 = vmatpush.msra.mxu0 %v179
    %9696 = vmatpush.msra.mxu0 %v171
    %9697 = vmatpush.msra.mxu0 %v163
    %9698 = vmatpush.msra.mxu0 %v155
    %9699 = vmatpush.msra.mxu0 %v147
    %9700 = vmatpush.msra.mxu0 %v139
    %9701 = vmatpush.msra.mxu0 %v131
    %9702 = vmatpush.msra.mxu0 %v123
    %9703 = vmatmul.f32.gmra.mxu0 %v9645
    %v9704 = vpop.f32.mrf.mxu0
    %v9705 = vadd.f32 0.0, %v9704
    %9706 = vdwg.mxu0
    %9707 = vmatpush.msra.mxu0 %v371
    %9708 = vmatpush.msra.mxu0 %v363
    %9709 = vmatpush.msra.mxu0 %v355
    %9710 = vmatpush.msra.mxu0 %v347
    %9711 = vmatpush.msra.mxu0 %v339
    %9712 = vmatpush.msra.mxu0 %v331
    %9713 = vmatpush.msra.mxu0 %v323
    %9714 = vmatpush.msra.mxu0 %v315
    %9715 = vmatpush.msra.mxu0 %v307
    %9716 = vmatpush.msra.mxu0 %v299
    %9717 = vmatpush.msra.mxu0 %v291
    %9718 = vmatpush.msra.mxu0 %v283
    %9719 = vmatpush.msra.mxu0 %v275
    %9720 = vmatpush.msra.mxu0 %v267
    %9721 = vmatpush.msra.mxu0 %v259
    %9722 = vmatpush.msra.mxu0 %v251
    %9723 = vmatmul.f32.gmra.mxu0 %v9646
    %v9724 = vpop.f32.mrf.mxu0
    %v9725 = vadd.f32 %v9705, %v9724
    %9726 = vdwg.mxu0
    %9727 = vmatpush.msra.mxu0 %v244
    %9728 = vmatpush.msra.mxu0 %v236
    %9729 = vmatpush.msra.mxu0 %v228
    %9730 = vmatpush.msra.mxu0 %v220
    %9731 = vmatpush.msra.mxu0 %v212
    %9732 = vmatpush.msra.mxu0 %v204
    %9733 = vmatpush.msra.mxu0 %v196
    %9734 = vmatpush.msra.mxu0 %v188
    %9735 = vmatpush.msra.mxu0 %v180
    %9736 = vmatpush.msra.mxu0 %v172
    %9737 = vmatpush.msra.mxu0 %v164
    %9738 = vmatpush.msra.mxu0 %v156
    %9739 = vmatpush.msra.mxu0 %v148
    %9740 = vmatpush.msra.mxu0 %v140
    %9741 = vmatpush.msra.mxu0 %v132
    %9742 = vmatpush.msra.mxu0 %v124
    %9743 = vmatmul.f32.gmra.mxu0 %v9645
    %v9744 = vpop.f32.mrf.mxu0
    %v9745 = vadd.f32 0.0, %v9744
    %9746 = vdwg.mxu0
    %9747 = vmatpush.msra.mxu0 %v372
    %9748 = vmatpush.msra.mxu0 %v364
    %9749 = vmatpush.msra.mxu0 %v356
    %9750 = vmatpush.msra.mxu0 %v348
    %9751 = vmatpush.msra.mxu0 %v340
    %9752 = vmatpush.msra.mxu0 %v332
    %9753 = vmatpush.msra.mxu0 %v324
    %9754 = vmatpush.msra.mxu0 %v316
    %9755 = vmatpush.msra.mxu0 %v308
    %9756 = vmatpush.msra.mxu0 %v300
    %9757 = vmatpush.msra.mxu0 %v292
    %9758 = vmatpush.msra.mxu0 %v284
    %9759 = vmatpush.msra.mxu0 %v276
    %9760 = vmatpush.msra.mxu0 %v268
    %9761 = vmatpush.msra.mxu0 %v260
    %9762 = vmatpush.msra.mxu0 %v252
    %9763 = vmatmul.f32.gmra.mxu0 %v9646
    %v9764 = vpop.f32.mrf.mxu0
    %v9765 = vadd.f32 %v9745, %v9764
    %9766 = vdwg.mxu0
    %9767 = vmatpush.msra.mxu0 %v245
    %9768 = vmatpush.msra.mxu0 %v237
    %9769 = vmatpush.msra.mxu0 %v229
    %9770 = vmatpush.msra.mxu0 %v221
    %9771 = vmatpush.msra.mxu0 %v213
    %9772 = vmatpush.msra.mxu0 %v205
    %9773 = vmatpush.msra.mxu0 %v197
    %9774 = vmatpush.msra.mxu0 %v189
    %9775 = vmatpush.msra.mxu0 %v181
    %9776 = vmatpush.msra.mxu0 %v173
    %9777 = vmatpush.msra.mxu0 %v165
    %9778 = vmatpush.msra.mxu0 %v157
    %9779 = vmatpush.msra.mxu0 %v149
    %9780 = vmatpush.msra.mxu0 %v141
    %9781 = vmatpush.msra.mxu0 %v133
    %9782 = vmatpush.msra.mxu0 %v125
    %9783 = vmatmul.f32.gmra.mxu0 %v9645
    %v9784 = vpop.f32.mrf.mxu0
    %v9785 = vadd.f32 0.0, %v9784
    %9786 = vdwg.mxu0
    %9787 = vmatpush.msra.mxu0 %v373
    %9788 = vmatpush.msra.mxu0 %v365
    %9789 = vmatpush.msra.mxu0 %v357
    %9790 = vmatpush.msra.mxu0 %v349
    %9791 = vmatpush.msra.mxu0 %v341
    %9792 = vmatpush.msra.mxu0 %v333
    %9793 = vmatpush.msra.mxu0 %v325
    %9794 = vmatpush.msra.mxu0 %v317
    %9795 = vmatpush.msra.mxu0 %v309
    %9796 = vmatpush.msra.mxu0 %v301
    %9797 = vmatpush.msra.mxu0 %v293
    %9798 = vmatpush.msra.mxu0 %v285
    %9799 = vmatpush.msra.mxu0 %v277
    %9800 = vmatpush.msra.mxu0 %v269
    %9801 = vmatpush.msra.mxu0 %v261
    %9802 = vmatpush.msra.mxu0 %v253
    %9803 = vmatmul.f32.gmra.mxu0 %v9646
    %v9804 = vpop.f32.mrf.mxu0
    %v9805 = vadd.f32 %v9785, %v9804
    %9806 = vdwg.mxu0
    %9807 = vmatpush.msra.mxu0 %v246
    %9808 = vmatpush.msra.mxu0 %v238
    %9809 = vmatpush.msra.mxu0 %v230
    %9810 = vmatpush.msra.mxu0 %v222
    %9811 = vmatpush.msra.mxu0 %v214
    %9812 = vmatpush.msra.mxu0 %v206
    %9813 = vmatpush.msra.mxu0 %v198
    %9814 = vmatpush.msra.mxu0 %v190
    %9815 = vmatpush.msra.mxu0 %v182
    %9816 = vmatpush.msra.mxu0 %v174
    %9817 = vmatpush.msra.mxu0 %v166
    %9818 = vmatpush.msra.mxu0 %v158
    %9819 = vmatpush.msra.mxu0 %v150
    %9820 = vmatpush.msra.mxu0 %v142
    %9821 = vmatpush.msra.mxu0 %v134
    %9822 = vmatpush.msra.mxu0 %v126
    %9823 = vmatmul.f32.gmra.mxu0 %v9645
    %v9824 = vpop.f32.mrf.mxu0
    %v9825 = vadd.f32 0.0, %v9824
    %9826 = vdwg.mxu0
    %9827 = vmatpush.msra.mxu0 %v374
    %9828 = vmatpush.msra.mxu0 %v366
    %9829 = vmatpush.msra.mxu0 %v358
    %9830 = vmatpush.msra.mxu0 %v350
    %9831 = vmatpush.msra.mxu0 %v342
    %9832 = vmatpush.msra.mxu0 %v334
    %9833 = vmatpush.msra.mxu0 %v326
    %9834 = vmatpush.msra.mxu0 %v318
    %9835 = vmatpush.msra.mxu0 %v310
    %9836 = vmatpush.msra.mxu0 %v302
    %9837 = vmatpush.msra.mxu0 %v294
    %9838 = vmatpush.msra.mxu0 %v286
    %9839 = vmatpush.msra.mxu0 %v278
    %9840 = vmatpush.msra.mxu0 %v270
    %9841 = vmatpush.msra.mxu0 %v262
    %9842 = vmatpush.msra.mxu0 %v254
    %9843 = vmatmul.f32.gmra.mxu0 %v9646
    %v9844 = vpop.f32.mrf.mxu0
    %v9845 = vadd.f32 %v9825, %v9844
    %9846 = vdwg.mxu0
    %9847 = vmatpush.msra.mxu0 %v247
    %9848 = vmatpush.msra.mxu0 %v239
    %9849 = vmatpush.msra.mxu0 %v231
    %9850 = vmatpush.msra.mxu0 %v223
    %9851 = vmatpush.msra.mxu0 %v215
    %9852 = vmatpush.msra.mxu0 %v207
    %9853 = vmatpush.msra.mxu0 %v199
    %9854 = vmatpush.msra.mxu0 %v191
    %9855 = vmatpush.msra.mxu0 %v183
    %9856 = vmatpush.msra.mxu0 %v175
    %9857 = vmatpush.msra.mxu0 %v167
    %9858 = vmatpush.msra.mxu0 %v159
    %9859 = vmatpush.msra.mxu0 %v151
    %9860 = vmatpush.msra.mxu0 %v143
    %9861 = vmatpush.msra.mxu0 %v135
    %9862 = vmatpush.msra.mxu0 %v127
    %9863 = vmatmul.f32.gmra.mxu0 %v9645
    %v9864 = vpop.f32.mrf.mxu0
    %v9865 = vadd.f32 0.0, %v9864
    %9866 = vdwg.mxu0
    %9867 = vmatpush.msra.mxu0 %v375
    %9868 = vmatpush.msra.mxu0 %v367
    %9869 = vmatpush.msra.mxu0 %v359
    %9870 = vmatpush.msra.mxu0 %v351
    %9871 = vmatpush.msra.mxu0 %v343
    %9872 = vmatpush.msra.mxu0 %v335
    %9873 = vmatpush.msra.mxu0 %v327
    %9874 = vmatpush.msra.mxu0 %v319
    %9875 = vmatpush.msra.mxu0 %v311
    %9876 = vmatpush.msra.mxu0 %v303
    %9877 = vmatpush.msra.mxu0 %v295
    %9878 = vmatpush.msra.mxu0 %v287
    %9879 = vmatpush.msra.mxu0 %v279
    %9880 = vmatpush.msra.mxu0 %v271
    %9881 = vmatpush.msra.mxu0 %v263
    %9882 = vmatpush.msra.mxu0 %v255
    %9883 = vmatmul.f32.gmra.mxu0 %v9646
    %v9884 = vpop.f32.mrf.mxu0
    %v9885 = vadd.f32 %v9865, %v9884
    %9886 = vdwg.mxu0
    %9887 = vmatpush.msra.mxu0 %v248
    %9888 = vmatpush.msra.mxu0 %v240
    %9889 = vmatpush.msra.mxu0 %v232
    %9890 = vmatpush.msra.mxu0 %v224
    %9891 = vmatpush.msra.mxu0 %v216
    %9892 = vmatpush.msra.mxu0 %v208
    %9893 = vmatpush.msra.mxu0 %v200
    %9894 = vmatpush.msra.mxu0 %v192
    %9895 = vmatpush.msra.mxu0 %v184
    %9896 = vmatpush.msra.mxu0 %v176
    %9897 = vmatpush.msra.mxu0 %v168
    %9898 = vmatpush.msra.mxu0 %v160
    %9899 = vmatpush.msra.mxu0 %v152
    %9900 = vmatpush.msra.mxu0 %v144
    %9901 = vmatpush.msra.mxu0 %v136
    %9902 = vmatpush.msra.mxu0 %v128
    %9903 = vmatmul.f32.gmra.mxu0 %v9645
    %v9904 = vpop.f32.mrf.mxu0
    %v9905 = vadd.f32 0.0, %v9904
    %9906 = vdwg.mxu0
    %9907 = vmatpush.msra.mxu0 %v376
    %9908 = vmatpush.msra.mxu0 %v368
    %9909 = vmatpush.msra.mxu0 %v360
    %9910 = vmatpush.msra.mxu0 %v352
    %9911 = vmatpush.msra.mxu0 %v344
    %9912 = vmatpush.msra.mxu0 %v336
    %9913 = vmatpush.msra.mxu0 %v328
    %9914 = vmatpush.msra.mxu0 %v320
    %9915 = vmatpush.msra.mxu0 %v312
    %9916 = vmatpush.msra.mxu0 %v304
    %9917 = vmatpush.msra.mxu0 %v296
    %9918 = vmatpush.msra.mxu0 %v288
    %9919 = vmatpush.msra.mxu0 %v280
    %9920 = vmatpush.msra.mxu0 %v272
    %9921 = vmatpush.msra.mxu0 %v264
    %9922 = vmatpush.msra.mxu0 %v256
    %9923 = vmatmul.f32.gmra.mxu0 %v9646
    %v9924 = vpop.f32.mrf.mxu0
    %v9925 = vadd.f32 %v9905, %v9924
    %9926 = vdwg.mxu0
    %9927 = vmatpush.msra.mxu0 %v249
    %9928 = vmatpush.msra.mxu0 %v241
    %9929 = vmatpush.msra.mxu0 %v233
    %9930 = vmatpush.msra.mxu0 %v225
    %9931 = vmatpush.msra.mxu0 %v217
    %9932 = vmatpush.msra.mxu0 %v209
    %9933 = vmatpush.msra.mxu0 %v201
    %9934 = vmatpush.msra.mxu0 %v193
    %9935 = vmatpush.msra.mxu0 %v185
    %9936 = vmatpush.msra.mxu0 %v177
    %9937 = vmatpush.msra.mxu0 %v169
    %9938 = vmatpush.msra.mxu0 %v161
    %9939 = vmatpush.msra.mxu0 %v153
    %9940 = vmatpush.msra.mxu0 %v145
    %9941 = vmatpush.msra.mxu0 %v137
    %9942 = vmatpush.msra.mxu0 %v129
    %9943 = vmatmul.f32.gmra.mxu0 %v9645
    %v9944 = vpop.f32.mrf.mxu0
    %v9945 = vadd.f32 0.0, %v9944
    %9946 = vdwg.mxu0
    %9947 = vmatpush.msra.mxu0 %v377
    %9948 = vmatpush.msra.mxu0 %v369
    %9949 = vmatpush.msra.mxu0 %v361
    %9950 = vmatpush.msra.mxu0 %v353
    %9951 = vmatpush.msra.mxu0 %v345
    %9952 = vmatpush.msra.mxu0 %v337
    %9953 = vmatpush.msra.mxu0 %v329
    %9954 = vmatpush.msra.mxu0 %v321
    %9955 = vmatpush.msra.mxu0 %v313
    %9956 = vmatpush.msra.mxu0 %v305
    %9957 = vmatpush.msra.mxu0 %v297
    %9958 = vmatpush.msra.mxu0 %v289
    %9959 = vmatpush.msra.mxu0 %v281
    %9960 = vmatpush.msra.mxu0 %v273
    %9961 = vmatpush.msra.mxu0 %v265
    %9962 = vmatpush.msra.mxu0 %v257
    %9963 = vmatmul.f32.gmra.mxu0 %v9646
    %v9964 = vpop.f32.mrf.mxu0
    %v9965 = vadd.f32 %v9945, %v9964
    %9966 = vdwg.mxu0
    %v9967 = vadd.f32 %v9637, %v9685
    %v9968 = vadd.f32 %v9638, %v9725
    %v9969 = vadd.f32 %v9639, %v9765
    %v9970 = vadd.f32 %v9640, %v9805
    %v9971 = vadd.f32 %v9641, %v9845
    %v9972 = vadd.f32 %v9642, %v9885
    %v9973 = vadd.f32 %v9643, %v9925
    %v9974 = vadd.f32 %v9644, %v9965
    %v9975 = vld [vmem:[#allocation3] sm:$0xff]
    %v9976 = vld [vmem:[#allocation3 + $0x8] sm:$0xff]
    %v9977 = vxor.u32 %v9967, 2147483648
    %v9978 = vxor.u32 %v9968, 2147483648
    %v9979 = vmul.f32 %v9977, 1.442695
    %v9980 = vpow.pop %v9979
    %v9981 = vmul.f32 %v9978, 1.442695
    %v9982 = vpow.pop %v9981
    %v9983 = vadd.f32 %v9980, 1.0
    %v9984 = vadd.f32 %v9982, 1.0
    %v9985 = vrcp.pop %v9983
    %v9986 = vmul.f32 %v9983, %v9985
    %v9987 = vsub.f32 1.0, %v9986
    %v9988 = vmul.f32 %v9985, %v9987
    %v9989 = vadd.f32 %v9985, %v9988
    %vm9990 = vweird.f32 %v9983
    %vm9991 = vweird.f32 %v9985
    %vm9992 = vmor %vm9990, %vm9991
    %v9993 = vsel %vm9992, %v9985, %v9989
    %v9994 = vand.u32 2147483647, %v9983
    %vm9995 = vcmp.eq.f32.partialorder %v9994, 8.507059e+37
    %v9996 = vand.u32 %v9983, 2147483648
    %v9997 = vor.u32 1.1754944e-38, %v9996
    %v9998 = vsel %vm9995, %v9997, %v9993
    %v9999 = vmul.f32 1.0, %v9998
    %v10000 = vrcp.pop %v9984
    %v10001 = vmul.f32 %v9984, %v10000
    %v10002 = vsub.f32 1.0, %v10001
    %v10003 = vmul.f32 %v10000, %v10002
    %v10004 = vadd.f32 %v10000, %v10003
    %vm10005 = vweird.f32 %v9984
    %vm10006 = vweird.f32 %v10000
    %vm10007 = vmor %vm10005, %vm10006
    %v10008 = vsel %vm10007, %v10000, %v10004
    %v10009 = vand.u32 2147483647, %v9984
    %vm10010 = vcmp.eq.f32.partialorder %v10009, 8.507059e+37
    %v10011 = vand.u32 %v9984, 2147483648
    %v10012 = vor.u32 1.1754944e-38, %v10011
    %v10013 = vsel %vm10010, %v10012, %v10008
    %v10014 = vmul.f32 1.0, %v10013
    %v10015 = vxor.u32 %v9969, 2147483648
    %v10016 = vxor.u32 %v9970, 2147483648
    %v10017 = vmul.f32 %v10015, 1.442695
    %v10018 = vpow.pop %v10017
    %v10019 = vmul.f32 %v10016, 1.442695
    %v10020 = vpow.pop %v10019
    %v10021 = vadd.f32 %v10018, 1.0
    %v10022 = vadd.f32 %v10020, 1.0
    %v10023 = vrcp.pop %v10021
    %v10024 = vmul.f32 %v10021, %v10023
    %v10025 = vsub.f32 1.0, %v10024
    %v10026 = vmul.f32 %v10023, %v10025
    %v10027 = vadd.f32 %v10023, %v10026
    %vm10028 = vweird.f32 %v10021
    %vm10029 = vweird.f32 %v10023
    %vm10030 = vmor %vm10028, %vm10029
    %v10031 = vsel %vm10030, %v10023, %v10027
    %v10032 = vand.u32 2147483647, %v10021
    %vm10033 = vcmp.eq.f32.partialorder %v10032, 8.507059e+37
    %v10034 = vand.u32 %v10021, 2147483648
    %v10035 = vor.u32 1.1754944e-38, %v10034
    %v10036 = vsel %vm10033, %v10035, %v10031
    %v10037 = vmul.f32 1.0, %v10036
    %v10038 = vrcp.pop %v10022
    %v10039 = vmul.f32 %v10022, %v10038
    %v10040 = vsub.f32 1.0, %v10039
    %v10041 = vmul.f32 %v10038, %v10040
    %v10042 = vadd.f32 %v10038, %v10041
    %vm10043 = vweird.f32 %v10022
    %vm10044 = vweird.f32 %v10038
    %vm10045 = vmor %vm10043, %vm10044
    %v10046 = vsel %vm10045, %v10038, %v10042
    %v10047 = vand.u32 2147483647, %v10022
    %vm10048 = vcmp.eq.f32.partialorder %v10047, 8.507059e+37
    %v10049 = vand.u32 %v10022, 2147483648
    %v10050 = vor.u32 1.1754944e-38, %v10049
    %v10051 = vsel %vm10048, %v10050, %v10046
    %v10052 = vmul.f32 1.0, %v10051
    %v10053 = vtanh.pop %v9971
    %v10054 = vtanh.pop %v9972
    %v10055 = vxor.u32 %v9973, 2147483648
    %v10056 = vxor.u32 %v9974, 2147483648
    %v10057 = vmul.f32 %v10055, 1.442695
    %v10058 = vpow.pop %v10057
    %v10059 = vmul.f32 %v10056, 1.442695
    %v10060 = vpow.pop %v10059
    %v10061 = vadd.f32 %v10058, 1.0
    %v10062 = vadd.f32 %v10060, 1.0
    %v10063 = vrcp.pop %v10061
    %v10064 = vmul.f32 %v10061, %v10063
    %v10065 = vsub.f32 1.0, %v10064
    %v10066 = vmul.f32 %v10063, %v10065
    %v10067 = vadd.f32 %v10063, %v10066
    %vm10068 = vweird.f32 %v10061
    %vm10069 = vweird.f32 %v10063
    %vm10070 = vmor %vm10068, %vm10069
    %v10071 = vsel %vm10070, %v10063, %v10067
    %v10072 = vand.u32 2147483647, %v10061
    %vm10073 = vcmp.eq.f32.partialorder %v10072, 8.507059e+37
    %v10074 = vand.u32 %v10061, 2147483648
    %v10075 = vor.u32 1.1754944e-38, %v10074
    %v10076 = vsel %vm10073, %v10075, %v10071
    %v10077 = vmul.f32 1.0, %v10076
    %v10078 = vrcp.pop %v10062
    %v10079 = vmul.f32 %v10062, %v10078
    %v10080 = vsub.f32 1.0, %v10079
    %v10081 = vmul.f32 %v10078, %v10080
    %v10082 = vadd.f32 %v10078, %v10081
    %vm10083 = vweird.f32 %v10062
    %vm10084 = vweird.f32 %v10078
    %vm10085 = vmor %vm10083, %vm10084
    %v10086 = vsel %vm10085, %v10078, %v10082
    %v10087 = vand.u32 2147483647, %v10062
    %vm10088 = vcmp.eq.f32.partialorder %v10087, 8.507059e+37
    %v10089 = vand.u32 %v10062, 2147483648
    %v10090 = vor.u32 1.1754944e-38, %v10089
    %v10091 = vsel %vm10088, %v10090, %v10086
    %v10092 = vmul.f32 1.0, %v10091
    %v10093 = vmul.f32 %v10037, %v9975
    %v10094 = vmul.f32 %v10052, %v9976
    %v10095 = vmul.f32 %v9999, %v10053
    %v10096 = vmul.f32 %v10014, %v10054
    %v10097 = vadd.f32 %v10093, %v10095
    %v10098 = vadd.f32 %v10094, %v10096
    %v10099 = vtanh.pop %v10097
    %v10100 = vtanh.pop %v10098
    %v10101 = vmul.f32 %v10077, %v10099
    %v10102 = vmul.f32 %v10092, %v10100
    %10103 = vst [vmem:[#allocation3] sm:$0xff] %v10097
    %10104 = vst [vmem:[#allocation3 + $0x8] sm:$0xff] %v10098
    %10105 = vst [vmem:[#allocation2] sm:$0xff] %v10101
    %10106 = vst [vmem:[#allocation2 + $0x8] sm:$0xff] %v10102
    %v10107 = vld [vmem:[#allocation2] sm:$0xff]
    %v10108 = vld [vmem:[#allocation2 + $0x8] sm:$0xff]
    %v10109 = vld [vmem:[#allocation2 + $0x10] sm:$0xff]
    %v10110 = vld [vmem:[#allocation2 + $0x18] sm:$0xff]
    %10111 = vmatpush.msra.mxu0 %v498
    %10112 = vmatpush.msra.mxu0 %v490
    %10113 = vmatpush.msra.mxu0 %v482
    %10114 = vmatpush.msra.mxu0 %v474
    %10115 = vmatpush.msra.mxu0 %v466
    %10116 = vmatpush.msra.mxu0 %v458
    %10117 = vmatpush.msra.mxu0 %v450
    %10118 = vmatpush.msra.mxu0 %v442
    %10119 = vmatpush.msra.mxu0 %v434
    %10120 = vmatpush.msra.mxu0 %v426
    %10121 = vmatpush.msra.mxu0 %v418
    %10122 = vmatpush.msra.mxu0 %v410
    %10123 = vmatpush.msra.mxu0 %v402
    %10124 = vmatpush.msra.mxu0 %v394
    %10125 = vmatpush.msra.mxu0 %v386
    %10126 = vmatpush.msra.mxu0 %v378
    %10127 = vmatmul.f32.gmra.mxu0 %v10107
    %v10128 = vpop.f32.mrf.mxu0
    %v10129 = vadd.f32 %v1366, %v10128
    %10130 = vdwg.mxu0
    %10131 = vmatpush.msra.mxu0 %v626
    %10132 = vmatpush.msra.mxu0 %v618
    %10133 = vmatpush.msra.mxu0 %v610
    %10134 = vmatpush.msra.mxu0 %v602
    %10135 = vmatpush.msra.mxu0 %v594
    %10136 = vmatpush.msra.mxu0 %v586
    %10137 = vmatpush.msra.mxu0 %v578
    %10138 = vmatpush.msra.mxu0 %v570
    %10139 = vmatpush.msra.mxu0 %v562
    %10140 = vmatpush.msra.mxu0 %v554
    %10141 = vmatpush.msra.mxu0 %v546
    %10142 = vmatpush.msra.mxu0 %v538
    %10143 = vmatpush.msra.mxu0 %v530
    %10144 = vmatpush.msra.mxu0 %v522
    %10145 = vmatpush.msra.mxu0 %v514
    %10146 = vmatpush.msra.mxu0 %v506
    %10147 = vmatmul.f32.gmra.mxu0 %v10108
    %v10148 = vpop.f32.mrf.mxu0
    %v10149 = vadd.f32 %v10129, %v10148
    %10150 = vdwg.mxu0
    %10151 = vmatpush.msra.mxu0 %v754
    %10152 = vmatpush.msra.mxu0 %v746
    %10153 = vmatpush.msra.mxu0 %v738
    %10154 = vmatpush.msra.mxu0 %v730
    %10155 = vmatpush.msra.mxu0 %v722
    %10156 = vmatpush.msra.mxu0 %v714
    %10157 = vmatpush.msra.mxu0 %v706
    %10158 = vmatpush.msra.mxu0 %v698
    %10159 = vmatpush.msra.mxu0 %v690
    %10160 = vmatpush.msra.mxu0 %v682
    %10161 = vmatpush.msra.mxu0 %v674
    %10162 = vmatpush.msra.mxu0 %v666
    %10163 = vmatpush.msra.mxu0 %v658
    %10164 = vmatpush.msra.mxu0 %v650
    %10165 = vmatpush.msra.mxu0 %v642
    %10166 = vmatpush.msra.mxu0 %v634
    %10167 = vmatmul.f32.gmra.mxu0 %v10109
    %v10168 = vpop.f32.mrf.mxu0
    %v10169 = vadd.f32 %v10149, %v10168
    %10170 = vdwg.mxu0
    %10171 = vmatpush.msra.mxu0 %v882
    %10172 = vmatpush.msra.mxu0 %v874
    %10173 = vmatpush.msra.mxu0 %v866
    %10174 = vmatpush.msra.mxu0 %v858
    %10175 = vmatpush.msra.mxu0 %v850
    %10176 = vmatpush.msra.mxu0 %v842
    %10177 = vmatpush.msra.mxu0 %v834
    %10178 = vmatpush.msra.mxu0 %v826
    %10179 = vmatpush.msra.mxu0 %v818
    %10180 = vmatpush.msra.mxu0 %v810
    %10181 = vmatpush.msra.mxu0 %v802
    %10182 = vmatpush.msra.mxu0 %v794
    %10183 = vmatpush.msra.mxu0 %v786
    %10184 = vmatpush.msra.mxu0 %v778
    %10185 = vmatpush.msra.mxu0 %v770
    %10186 = vmatpush.msra.mxu0 %v762
    %10187 = vmatmul.f32.gmra.mxu0 %v10110
    %v10188 = vpop.f32.mrf.mxu0
    %v10189 = vadd.f32 %v10169, %v10188
    %10190 = vdwg.mxu0
    %10191 = vmatpush.msra.mxu0 %v499
    %10192 = vmatpush.msra.mxu0 %v491
    %10193 = vmatpush.msra.mxu0 %v483
    %10194 = vmatpush.msra.mxu0 %v475
    %10195 = vmatpush.msra.mxu0 %v467
    %10196 = vmatpush.msra.mxu0 %v459
    %10197 = vmatpush.msra.mxu0 %v451
    %10198 = vmatpush.msra.mxu0 %v443
    %10199 = vmatpush.msra.mxu0 %v435
    %10200 = vmatpush.msra.mxu0 %v427
    %10201 = vmatpush.msra.mxu0 %v419
    %10202 = vmatpush.msra.mxu0 %v411
    %10203 = vmatpush.msra.mxu0 %v403
    %10204 = vmatpush.msra.mxu0 %v395
    %10205 = vmatpush.msra.mxu0 %v387
    %10206 = vmatpush.msra.mxu0 %v379
    %10207 = vmatmul.f32.gmra.mxu0 %v10107
    %v10208 = vpop.f32.mrf.mxu0
    %v10209 = vadd.f32 %v1367, %v10208
    %10210 = vdwg.mxu0
    %10211 = vmatpush.msra.mxu0 %v627
    %10212 = vmatpush.msra.mxu0 %v619
    %10213 = vmatpush.msra.mxu0 %v611
    %10214 = vmatpush.msra.mxu0 %v603
    %10215 = vmatpush.msra.mxu0 %v595
    %10216 = vmatpush.msra.mxu0 %v587
    %10217 = vmatpush.msra.mxu0 %v579
    %10218 = vmatpush.msra.mxu0 %v571
    %10219 = vmatpush.msra.mxu0 %v563
    %10220 = vmatpush.msra.mxu0 %v555
    %10221 = vmatpush.msra.mxu0 %v547
    %10222 = vmatpush.msra.mxu0 %v539
    %10223 = vmatpush.msra.mxu0 %v531
    %10224 = vmatpush.msra.mxu0 %v523
    %10225 = vmatpush.msra.mxu0 %v515
    %10226 = vmatpush.msra.mxu0 %v507
    %10227 = vmatmul.f32.gmra.mxu0 %v10108
    %v10228 = vpop.f32.mrf.mxu0
    %v10229 = vadd.f32 %v10209, %v10228
    %10230 = vdwg.mxu0
    %10231 = vmatpush.msra.mxu0 %v755
    %10232 = vmatpush.msra.mxu0 %v747
    %10233 = vmatpush.msra.mxu0 %v739
    %10234 = vmatpush.msra.mxu0 %v731
    %10235 = vmatpush.msra.mxu0 %v723
    %10236 = vmatpush.msra.mxu0 %v715
    %10237 = vmatpush.msra.mxu0 %v707
    %10238 = vmatpush.msra.mxu0 %v699
    %10239 = vmatpush.msra.mxu0 %v691
    %10240 = vmatpush.msra.mxu0 %v683
    %10241 = vmatpush.msra.mxu0 %v675
    %10242 = vmatpush.msra.mxu0 %v667
    %10243 = vmatpush.msra.mxu0 %v659
    %10244 = vmatpush.msra.mxu0 %v651
    %10245 = vmatpush.msra.mxu0 %v643
    %10246 = vmatpush.msra.mxu0 %v635
    %10247 = vmatmul.f32.gmra.mxu0 %v10109
    %v10248 = vpop.f32.mrf.mxu0
    %v10249 = vadd.f32 %v10229, %v10248
    %10250 = vdwg.mxu0
    %10251 = vmatpush.msra.mxu0 %v883
    %10252 = vmatpush.msra.mxu0 %v875
    %10253 = vmatpush.msra.mxu0 %v867
    %10254 = vmatpush.msra.mxu0 %v859
    %10255 = vmatpush.msra.mxu0 %v851
    %10256 = vmatpush.msra.mxu0 %v843
    %10257 = vmatpush.msra.mxu0 %v835
    %10258 = vmatpush.msra.mxu0 %v827
    %10259 = vmatpush.msra.mxu0 %v819
    %10260 = vmatpush.msra.mxu0 %v811
    %10261 = vmatpush.msra.mxu0 %v803
    %10262 = vmatpush.msra.mxu0 %v795
    %10263 = vmatpush.msra.mxu0 %v787
    %10264 = vmatpush.msra.mxu0 %v779
    %10265 = vmatpush.msra.mxu0 %v771
    %10266 = vmatpush.msra.mxu0 %v763
    %10267 = vmatmul.f32.gmra.mxu0 %v10110
    %v10268 = vpop.f32.mrf.mxu0
    %v10269 = vadd.f32 %v10249, %v10268
    %10270 = vdwg.mxu0
    %10271 = vmatpush.msra.mxu0 %v500
    %10272 = vmatpush.msra.mxu0 %v492
    %10273 = vmatpush.msra.mxu0 %v484
    %10274 = vmatpush.msra.mxu0 %v476
    %10275 = vmatpush.msra.mxu0 %v468
    %10276 = vmatpush.msra.mxu0 %v460
    %10277 = vmatpush.msra.mxu0 %v452
    %10278 = vmatpush.msra.mxu0 %v444
    %10279 = vmatpush.msra.mxu0 %v436
    %10280 = vmatpush.msra.mxu0 %v428
    %10281 = vmatpush.msra.mxu0 %v420
    %10282 = vmatpush.msra.mxu0 %v412
    %10283 = vmatpush.msra.mxu0 %v404
    %10284 = vmatpush.msra.mxu0 %v396
    %10285 = vmatpush.msra.mxu0 %v388
    %10286 = vmatpush.msra.mxu0 %v380
    %10287 = vmatmul.f32.gmra.mxu0 %v10107
    %v10288 = vpop.f32.mrf.mxu0
    %v10289 = vadd.f32 %v1368, %v10288
    %10290 = vdwg.mxu0
    %10291 = vmatpush.msra.mxu0 %v628
    %10292 = vmatpush.msra.mxu0 %v620
    %10293 = vmatpush.msra.mxu0 %v612
    %10294 = vmatpush.msra.mxu0 %v604
    %10295 = vmatpush.msra.mxu0 %v596
    %10296 = vmatpush.msra.mxu0 %v588
    %10297 = vmatpush.msra.mxu0 %v580
    %10298 = vmatpush.msra.mxu0 %v572
    %10299 = vmatpush.msra.mxu0 %v564
    %10300 = vmatpush.msra.mxu0 %v556
    %10301 = vmatpush.msra.mxu0 %v548
    %10302 = vmatpush.msra.mxu0 %v540
    %10303 = vmatpush.msra.mxu0 %v532
    %10304 = vmatpush.msra.mxu0 %v524
    %10305 = vmatpush.msra.mxu0 %v516
    %10306 = vmatpush.msra.mxu0 %v508
    %10307 = vmatmul.f32.gmra.mxu0 %v10108
    %v10308 = vpop.f32.mrf.mxu0
    %v10309 = vadd.f32 %v10289, %v10308
    %10310 = vdwg.mxu0
    %10311 = vmatpush.msra.mxu0 %v756
    %10312 = vmatpush.msra.mxu0 %v748
    %10313 = vmatpush.msra.mxu0 %v740
    %10314 = vmatpush.msra.mxu0 %v732
    %10315 = vmatpush.msra.mxu0 %v724
    %10316 = vmatpush.msra.mxu0 %v716
    %10317 = vmatpush.msra.mxu0 %v708
    %10318 = vmatpush.msra.mxu0 %v700
    %10319 = vmatpush.msra.mxu0 %v692
    %10320 = vmatpush.msra.mxu0 %v684
    %10321 = vmatpush.msra.mxu0 %v676
    %10322 = vmatpush.msra.mxu0 %v668
    %10323 = vmatpush.msra.mxu0 %v660
    %10324 = vmatpush.msra.mxu0 %v652
    %10325 = vmatpush.msra.mxu0 %v644
    %10326 = vmatpush.msra.mxu0 %v636
    %10327 = vmatmul.f32.gmra.mxu0 %v10109
    %v10328 = vpop.f32.mrf.mxu0
    %v10329 = vadd.f32 %v10309, %v10328
    %10330 = vdwg.mxu0
    %10331 = vmatpush.msra.mxu0 %v884
    %10332 = vmatpush.msra.mxu0 %v876
    %10333 = vmatpush.msra.mxu0 %v868
    %10334 = vmatpush.msra.mxu0 %v860
    %10335 = vmatpush.msra.mxu0 %v852
    %10336 = vmatpush.msra.mxu0 %v844
    %10337 = vmatpush.msra.mxu0 %v836
    %10338 = vmatpush.msra.mxu0 %v828
    %10339 = vmatpush.msra.mxu0 %v820
    %10340 = vmatpush.msra.mxu0 %v812
    %10341 = vmatpush.msra.mxu0 %v804
    %10342 = vmatpush.msra.mxu0 %v796
    %10343 = vmatpush.msra.mxu0 %v788
    %10344 = vmatpush.msra.mxu0 %v780
    %10345 = vmatpush.msra.mxu0 %v772
    %10346 = vmatpush.msra.mxu0 %v764
    %10347 = vmatmul.f32.gmra.mxu0 %v10110
    %v10348 = vpop.f32.mrf.mxu0
    %v10349 = vadd.f32 %v10329, %v10348
    %10350 = vdwg.mxu0
    %10351 = vmatpush.msra.mxu0 %v501
    %10352 = vmatpush.msra.mxu0 %v493
    %10353 = vmatpush.msra.mxu0 %v485
    %10354 = vmatpush.msra.mxu0 %v477
    %10355 = vmatpush.msra.mxu0 %v469
    %10356 = vmatpush.msra.mxu0 %v461
    %10357 = vmatpush.msra.mxu0 %v453
    %10358 = vmatpush.msra.mxu0 %v445
    %10359 = vmatpush.msra.mxu0 %v437
    %10360 = vmatpush.msra.mxu0 %v429
    %10361 = vmatpush.msra.mxu0 %v421
    %10362 = vmatpush.msra.mxu0 %v413
    %10363 = vmatpush.msra.mxu0 %v405
    %10364 = vmatpush.msra.mxu0 %v397
    %10365 = vmatpush.msra.mxu0 %v389
    %10366 = vmatpush.msra.mxu0 %v381
    %10367 = vmatmul.f32.gmra.mxu0 %v10107
    %v10368 = vpop.f32.mrf.mxu0
    %v10369 = vadd.f32 %v1369, %v10368
    %10370 = vdwg.mxu0
    %10371 = vmatpush.msra.mxu0 %v629
    %10372 = vmatpush.msra.mxu0 %v621
    %10373 = vmatpush.msra.mxu0 %v613
    %10374 = vmatpush.msra.mxu0 %v605
    %10375 = vmatpush.msra.mxu0 %v597
    %10376 = vmatpush.msra.mxu0 %v589
    %10377 = vmatpush.msra.mxu0 %v581
    %10378 = vmatpush.msra.mxu0 %v573
    %10379 = vmatpush.msra.mxu0 %v565
    %10380 = vmatpush.msra.mxu0 %v557
    %10381 = vmatpush.msra.mxu0 %v549
    %10382 = vmatpush.msra.mxu0 %v541
    %10383 = vmatpush.msra.mxu0 %v533
    %10384 = vmatpush.msra.mxu0 %v525
    %10385 = vmatpush.msra.mxu0 %v517
    %10386 = vmatpush.msra.mxu0 %v509
    %10387 = vmatmul.f32.gmra.mxu0 %v10108
    %v10388 = vpop.f32.mrf.mxu0
    %v10389 = vadd.f32 %v10369, %v10388
    %10390 = vdwg.mxu0
    %10391 = vmatpush.msra.mxu0 %v757
    %10392 = vmatpush.msra.mxu0 %v749
    %10393 = vmatpush.msra.mxu0 %v741
    %10394 = vmatpush.msra.mxu0 %v733
    %10395 = vmatpush.msra.mxu0 %v725
    %10396 = vmatpush.msra.mxu0 %v717
    %10397 = vmatpush.msra.mxu0 %v709
    %10398 = vmatpush.msra.mxu0 %v701
    %10399 = vmatpush.msra.mxu0 %v693
    %10400 = vmatpush.msra.mxu0 %v685
    %10401 = vmatpush.msra.mxu0 %v677
    %10402 = vmatpush.msra.mxu0 %v669
    %10403 = vmatpush.msra.mxu0 %v661
    %10404 = vmatpush.msra.mxu0 %v653
    %10405 = vmatpush.msra.mxu0 %v645
    %10406 = vmatpush.msra.mxu0 %v637
    %10407 = vmatmul.f32.gmra.mxu0 %v10109
    %v10408 = vpop.f32.mrf.mxu0
    %v10409 = vadd.f32 %v10389, %v10408
    %10410 = vdwg.mxu0
    %10411 = vmatpush.msra.mxu0 %v885
    %10412 = vmatpush.msra.mxu0 %v877
    %10413 = vmatpush.msra.mxu0 %v869
    %10414 = vmatpush.msra.mxu0 %v861
    %10415 = vmatpush.msra.mxu0 %v853
    %10416 = vmatpush.msra.mxu0 %v845
    %10417 = vmatpush.msra.mxu0 %v837
    %10418 = vmatpush.msra.mxu0 %v829
    %10419 = vmatpush.msra.mxu0 %v821
    %10420 = vmatpush.msra.mxu0 %v813
    %10421 = vmatpush.msra.mxu0 %v805
    %10422 = vmatpush.msra.mxu0 %v797
    %10423 = vmatpush.msra.mxu0 %v789
    %10424 = vmatpush.msra.mxu0 %v781
    %10425 = vmatpush.msra.mxu0 %v773
    %10426 = vmatpush.msra.mxu0 %v765
    %10427 = vmatmul.f32.gmra.mxu0 %v10110
    %v10428 = vpop.f32.mrf.mxu0
    %v10429 = vadd.f32 %v10409, %v10428
    %10430 = vdwg.mxu0
    %10431 = vmatpush.msra.mxu0 %v502
    %10432 = vmatpush.msra.mxu0 %v494
    %10433 = vmatpush.msra.mxu0 %v486
    %10434 = vmatpush.msra.mxu0 %v478
    %10435 = vmatpush.msra.mxu0 %v470
    %10436 = vmatpush.msra.mxu0 %v462
    %10437 = vmatpush.msra.mxu0 %v454
    %10438 = vmatpush.msra.mxu0 %v446
    %10439 = vmatpush.msra.mxu0 %v438
    %10440 = vmatpush.msra.mxu0 %v430
    %10441 = vmatpush.msra.mxu0 %v422
    %10442 = vmatpush.msra.mxu0 %v414
    %10443 = vmatpush.msra.mxu0 %v406
    %10444 = vmatpush.msra.mxu0 %v398
    %10445 = vmatpush.msra.mxu0 %v390
    %10446 = vmatpush.msra.mxu0 %v382
    %10447 = vmatmul.f32.gmra.mxu0 %v10107
    %v10448 = vpop.f32.mrf.mxu0
    %v10449 = vadd.f32 %v1370, %v10448
    %10450 = vdwg.mxu0
    %10451 = vmatpush.msra.mxu0 %v630
    %10452 = vmatpush.msra.mxu0 %v622
    %10453 = vmatpush.msra.mxu0 %v614
    %10454 = vmatpush.msra.mxu0 %v606
    %10455 = vmatpush.msra.mxu0 %v598
    %10456 = vmatpush.msra.mxu0 %v590
    %10457 = vmatpush.msra.mxu0 %v582
    %10458 = vmatpush.msra.mxu0 %v574
    %10459 = vmatpush.msra.mxu0 %v566
    %10460 = vmatpush.msra.mxu0 %v558
    %10461 = vmatpush.msra.mxu0 %v550
    %10462 = vmatpush.msra.mxu0 %v542
    %10463 = vmatpush.msra.mxu0 %v534
    %10464 = vmatpush.msra.mxu0 %v526
    %10465 = vmatpush.msra.mxu0 %v518
    %10466 = vmatpush.msra.mxu0 %v510
    %10467 = vmatmul.f32.gmra.mxu0 %v10108
    %v10468 = vpop.f32.mrf.mxu0
    %v10469 = vadd.f32 %v10449, %v10468
    %10470 = vdwg.mxu0
    %10471 = vmatpush.msra.mxu0 %v758
    %10472 = vmatpush.msra.mxu0 %v750
    %10473 = vmatpush.msra.mxu0 %v742
    %10474 = vmatpush.msra.mxu0 %v734
    %10475 = vmatpush.msra.mxu0 %v726
    %10476 = vmatpush.msra.mxu0 %v718
    %10477 = vmatpush.msra.mxu0 %v710
    %10478 = vmatpush.msra.mxu0 %v702
    %10479 = vmatpush.msra.mxu0 %v694
    %10480 = vmatpush.msra.mxu0 %v686
    %10481 = vmatpush.msra.mxu0 %v678
    %10482 = vmatpush.msra.mxu0 %v670
    %10483 = vmatpush.msra.mxu0 %v662
    %10484 = vmatpush.msra.mxu0 %v654
    %10485 = vmatpush.msra.mxu0 %v646
    %10486 = vmatpush.msra.mxu0 %v638
    %10487 = vmatmul.f32.gmra.mxu0 %v10109
    %v10488 = vpop.f32.mrf.mxu0
    %v10489 = vadd.f32 %v10469, %v10488
    %10490 = vdwg.mxu0
    %10491 = vmatpush.msra.mxu0 %v886
    %10492 = vmatpush.msra.mxu0 %v878
    %10493 = vmatpush.msra.mxu0 %v870
    %10494 = vmatpush.msra.mxu0 %v862
    %10495 = vmatpush.msra.mxu0 %v854
    %10496 = vmatpush.msra.mxu0 %v846
    %10497 = vmatpush.msra.mxu0 %v838
    %10498 = vmatpush.msra.mxu0 %v830
    %10499 = vmatpush.msra.mxu0 %v822
    %10500 = vmatpush.msra.mxu0 %v814
    %10501 = vmatpush.msra.mxu0 %v806
    %10502 = vmatpush.msra.mxu0 %v798
    %10503 = vmatpush.msra.mxu0 %v790
    %10504 = vmatpush.msra.mxu0 %v782
    %10505 = vmatpush.msra.mxu0 %v774
    %10506 = vmatpush.msra.mxu0 %v766
    %10507 = vmatmul.f32.gmra.mxu0 %v10110
    %v10508 = vpop.f32.mrf.mxu0
    %v10509 = vadd.f32 %v10489, %v10508
    %10510 = vdwg.mxu0
    %10511 = vmatpush.msra.mxu0 %v503
    %10512 = vmatpush.msra.mxu0 %v495
    %10513 = vmatpush.msra.mxu0 %v487
    %10514 = vmatpush.msra.mxu0 %v479
    %10515 = vmatpush.msra.mxu0 %v471
    %10516 = vmatpush.msra.mxu0 %v463
    %10517 = vmatpush.msra.mxu0 %v455
    %10518 = vmatpush.msra.mxu0 %v447
    %10519 = vmatpush.msra.mxu0 %v439
    %10520 = vmatpush.msra.mxu0 %v431
    %10521 = vmatpush.msra.mxu0 %v423
    %10522 = vmatpush.msra.mxu0 %v415
    %10523 = vmatpush.msra.mxu0 %v407
    %10524 = vmatpush.msra.mxu0 %v399
    %10525 = vmatpush.msra.mxu0 %v391
    %10526 = vmatpush.msra.mxu0 %v383
    %10527 = vmatmul.f32.gmra.mxu0 %v10107
    %v10528 = vpop.f32.mrf.mxu0
    %v10529 = vadd.f32 %v1371, %v10528
    %10530 = vdwg.mxu0
    %10531 = vmatpush.msra.mxu0 %v631
    %10532 = vmatpush.msra.mxu0 %v623
    %10533 = vmatpush.msra.mxu0 %v615
    %10534 = vmatpush.msra.mxu0 %v607
    %10535 = vmatpush.msra.mxu0 %v599
    %10536 = vmatpush.msra.mxu0 %v591
    %10537 = vmatpush.msra.mxu0 %v583
    %10538 = vmatpush.msra.mxu0 %v575
    %10539 = vmatpush.msra.mxu0 %v567
    %10540 = vmatpush.msra.mxu0 %v559
    %10541 = vmatpush.msra.mxu0 %v551
    %10542 = vmatpush.msra.mxu0 %v543
    %10543 = vmatpush.msra.mxu0 %v535
    %10544 = vmatpush.msra.mxu0 %v527
    %10545 = vmatpush.msra.mxu0 %v519
    %10546 = vmatpush.msra.mxu0 %v511
    %10547 = vmatmul.f32.gmra.mxu0 %v10108
    %v10548 = vpop.f32.mrf.mxu0
    %v10549 = vadd.f32 %v10529, %v10548
    %10550 = vdwg.mxu0
    %10551 = vmatpush.msra.mxu0 %v759
    %10552 = vmatpush.msra.mxu0 %v751
    %10553 = vmatpush.msra.mxu0 %v743
    %10554 = vmatpush.msra.mxu0 %v735
    %10555 = vmatpush.msra.mxu0 %v727
    %10556 = vmatpush.msra.mxu0 %v719
    %10557 = vmatpush.msra.mxu0 %v711
    %10558 = vmatpush.msra.mxu0 %v703
    %10559 = vmatpush.msra.mxu0 %v695
    %10560 = vmatpush.msra.mxu0 %v687
    %10561 = vmatpush.msra.mxu0 %v679
    %10562 = vmatpush.msra.mxu0 %v671
    %10563 = vmatpush.msra.mxu0 %v663
    %10564 = vmatpush.msra.mxu0 %v655
    %10565 = vmatpush.msra.mxu0 %v647
    %10566 = vmatpush.msra.mxu0 %v639
    %10567 = vmatmul.f32.gmra.mxu0 %v10109
    %v10568 = vpop.f32.mrf.mxu0
    %v10569 = vadd.f32 %v10549, %v10568
    %10570 = vdwg.mxu0
    %10571 = vmatpush.msra.mxu0 %v887
    %10572 = vmatpush.msra.mxu0 %v879
    %10573 = vmatpush.msra.mxu0 %v871
    %10574 = vmatpush.msra.mxu0 %v863
    %10575 = vmatpush.msra.mxu0 %v855
    %10576 = vmatpush.msra.mxu0 %v847
    %10577 = vmatpush.msra.mxu0 %v839
    %10578 = vmatpush.msra.mxu0 %v831
    %10579 = vmatpush.msra.mxu0 %v823
    %10580 = vmatpush.msra.mxu0 %v815
    %10581 = vmatpush.msra.mxu0 %v807
    %10582 = vmatpush.msra.mxu0 %v799
    %10583 = vmatpush.msra.mxu0 %v791
    %10584 = vmatpush.msra.mxu0 %v783
    %10585 = vmatpush.msra.mxu0 %v775
    %10586 = vmatpush.msra.mxu0 %v767
    %10587 = vmatmul.f32.gmra.mxu0 %v10110
    %v10588 = vpop.f32.mrf.mxu0
    %v10589 = vadd.f32 %v10569, %v10588
    %10590 = vdwg.mxu0
    %10591 = vmatpush.msra.mxu0 %v504
    %10592 = vmatpush.msra.mxu0 %v496
    %10593 = vmatpush.msra.mxu0 %v488
    %10594 = vmatpush.msra.mxu0 %v480
    %10595 = vmatpush.msra.mxu0 %v472
    %10596 = vmatpush.msra.mxu0 %v464
    %10597 = vmatpush.msra.mxu0 %v456
    %10598 = vmatpush.msra.mxu0 %v448
    %10599 = vmatpush.msra.mxu0 %v440
    %10600 = vmatpush.msra.mxu0 %v432
    %10601 = vmatpush.msra.mxu0 %v424
    %10602 = vmatpush.msra.mxu0 %v416
    %10603 = vmatpush.msra.mxu0 %v408
    %10604 = vmatpush.msra.mxu0 %v400
    %10605 = vmatpush.msra.mxu0 %v392
    %10606 = vmatpush.msra.mxu0 %v384
    %10607 = vmatmul.f32.gmra.mxu0 %v10107
    %v10608 = vpop.f32.mrf.mxu0
    %v10609 = vadd.f32 %v1372, %v10608
    %10610 = vdwg.mxu0
    %10611 = vmatpush.msra.mxu0 %v632
    %10612 = vmatpush.msra.mxu0 %v624
    %10613 = vmatpush.msra.mxu0 %v616
    %10614 = vmatpush.msra.mxu0 %v608
    %10615 = vmatpush.msra.mxu0 %v600
    %10616 = vmatpush.msra.mxu0 %v592
    %10617 = vmatpush.msra.mxu0 %v584
    %10618 = vmatpush.msra.mxu0 %v576
    %10619 = vmatpush.msra.mxu0 %v568
    %10620 = vmatpush.msra.mxu0 %v560
    %10621 = vmatpush.msra.mxu0 %v552
    %10622 = vmatpush.msra.mxu0 %v544
    %10623 = vmatpush.msra.mxu0 %v536
    %10624 = vmatpush.msra.mxu0 %v528
    %10625 = vmatpush.msra.mxu0 %v520
    %10626 = vmatpush.msra.mxu0 %v512
    %10627 = vmatmul.f32.gmra.mxu0 %v10108
    %v10628 = vpop.f32.mrf.mxu0
    %v10629 = vadd.f32 %v10609, %v10628
    %10630 = vdwg.mxu0
    %10631 = vmatpush.msra.mxu0 %v760
    %10632 = vmatpush.msra.mxu0 %v752
    %10633 = vmatpush.msra.mxu0 %v744
    %10634 = vmatpush.msra.mxu0 %v736
    %10635 = vmatpush.msra.mxu0 %v728
    %10636 = vmatpush.msra.mxu0 %v720
    %10637 = vmatpush.msra.mxu0 %v712
    %10638 = vmatpush.msra.mxu0 %v704
    %10639 = vmatpush.msra.mxu0 %v696
    %10640 = vmatpush.msra.mxu0 %v688
    %10641 = vmatpush.msra.mxu0 %v680
    %10642 = vmatpush.msra.mxu0 %v672
    %10643 = vmatpush.msra.mxu0 %v664
    %10644 = vmatpush.msra.mxu0 %v656
    %10645 = vmatpush.msra.mxu0 %v648
    %10646 = vmatpush.msra.mxu0 %v640
    %10647 = vmatmul.f32.gmra.mxu0 %v10109
    %v10648 = vpop.f32.mrf.mxu0
    %v10649 = vadd.f32 %v10629, %v10648
    %10650 = vdwg.mxu0
    %10651 = vmatpush.msra.mxu0 %v888
    %10652 = vmatpush.msra.mxu0 %v880
    %10653 = vmatpush.msra.mxu0 %v872
    %10654 = vmatpush.msra.mxu0 %v864
    %10655 = vmatpush.msra.mxu0 %v856
    %10656 = vmatpush.msra.mxu0 %v848
    %10657 = vmatpush.msra.mxu0 %v840
    %10658 = vmatpush.msra.mxu0 %v832
    %10659 = vmatpush.msra.mxu0 %v824
    %10660 = vmatpush.msra.mxu0 %v816
    %10661 = vmatpush.msra.mxu0 %v808
    %10662 = vmatpush.msra.mxu0 %v800
    %10663 = vmatpush.msra.mxu0 %v792
    %10664 = vmatpush.msra.mxu0 %v784
    %10665 = vmatpush.msra.mxu0 %v776
    %10666 = vmatpush.msra.mxu0 %v768
    %10667 = vmatmul.f32.gmra.mxu0 %v10110
    %v10668 = vpop.f32.mrf.mxu0
    %v10669 = vadd.f32 %v10649, %v10668
    %10670 = vdwg.mxu0
    %10671 = vmatpush.msra.mxu0 %v505
    %10672 = vmatpush.msra.mxu0 %v497
    %10673 = vmatpush.msra.mxu0 %v489
    %10674 = vmatpush.msra.mxu0 %v481
    %10675 = vmatpush.msra.mxu0 %v473
    %10676 = vmatpush.msra.mxu0 %v465
    %10677 = vmatpush.msra.mxu0 %v457
    %10678 = vmatpush.msra.mxu0 %v449
    %10679 = vmatpush.msra.mxu0 %v441
    %10680 = vmatpush.msra.mxu0 %v433
    %10681 = vmatpush.msra.mxu0 %v425
    %10682 = vmatpush.msra.mxu0 %v417
    %10683 = vmatpush.msra.mxu0 %v409
    %10684 = vmatpush.msra.mxu0 %v401
    %10685 = vmatpush.msra.mxu0 %v393
    %10686 = vmatpush.msra.mxu0 %v385
    %10687 = vmatmul.f32.gmra.mxu0 %v10107
    %v10688 = vpop.f32.mrf.mxu0
    %v10689 = vadd.f32 %v1373, %v10688
    %10690 = vdwg.mxu0
    %10691 = vmatpush.msra.mxu0 %v633
    %10692 = vmatpush.msra.mxu0 %v625
    %10693 = vmatpush.msra.mxu0 %v617
    %10694 = vmatpush.msra.mxu0 %v609
    %10695 = vmatpush.msra.mxu0 %v601
    %10696 = vmatpush.msra.mxu0 %v593
    %10697 = vmatpush.msra.mxu0 %v585
    %10698 = vmatpush.msra.mxu0 %v577
    %10699 = vmatpush.msra.mxu0 %v569
    %10700 = vmatpush.msra.mxu0 %v561
    %10701 = vmatpush.msra.mxu0 %v553
    %10702 = vmatpush.msra.mxu0 %v545
    %10703 = vmatpush.msra.mxu0 %v537
    %10704 = vmatpush.msra.mxu0 %v529
    %10705 = vmatpush.msra.mxu0 %v521
    %10706 = vmatpush.msra.mxu0 %v513
    %10707 = vmatmul.f32.gmra.mxu0 %v10108
    %v10708 = vpop.f32.mrf.mxu0
    %v10709 = vadd.f32 %v10689, %v10708
    %10710 = vdwg.mxu0
    %10711 = vmatpush.msra.mxu0 %v761
    %10712 = vmatpush.msra.mxu0 %v753
    %10713 = vmatpush.msra.mxu0 %v745
    %10714 = vmatpush.msra.mxu0 %v737
    %10715 = vmatpush.msra.mxu0 %v729
    %10716 = vmatpush.msra.mxu0 %v721
    %10717 = vmatpush.msra.mxu0 %v713
    %10718 = vmatpush.msra.mxu0 %v705
    %10719 = vmatpush.msra.mxu0 %v697
    %10720 = vmatpush.msra.mxu0 %v689
    %10721 = vmatpush.msra.mxu0 %v681
    %10722 = vmatpush.msra.mxu0 %v673
    %10723 = vmatpush.msra.mxu0 %v665
    %10724 = vmatpush.msra.mxu0 %v657
    %10725 = vmatpush.msra.mxu0 %v649
    %10726 = vmatpush.msra.mxu0 %v641
    %10727 = vmatmul.f32.gmra.mxu0 %v10109
    %v10728 = vpop.f32.mrf.mxu0
    %v10729 = vadd.f32 %v10709, %v10728
    %10730 = vdwg.mxu0
    %10731 = vmatpush.msra.mxu0 %v889
    %10732 = vmatpush.msra.mxu0 %v881
    %10733 = vmatpush.msra.mxu0 %v873
    %10734 = vmatpush.msra.mxu0 %v865
    %10735 = vmatpush.msra.mxu0 %v857
    %10736 = vmatpush.msra.mxu0 %v849
    %10737 = vmatpush.msra.mxu0 %v841
    %10738 = vmatpush.msra.mxu0 %v833
    %10739 = vmatpush.msra.mxu0 %v825
    %10740 = vmatpush.msra.mxu0 %v817
    %10741 = vmatpush.msra.mxu0 %v809
    %10742 = vmatpush.msra.mxu0 %v801
    %10743 = vmatpush.msra.mxu0 %v793
    %10744 = vmatpush.msra.mxu0 %v785
    %10745 = vmatpush.msra.mxu0 %v777
    %10746 = vmatpush.msra.mxu0 %v769
    %10747 = vmatmul.f32.gmra.mxu0 %v10110
    %v10748 = vpop.f32.mrf.mxu0
    %v10749 = vadd.f32 %v10729, %v10748
    %10750 = vdwg.mxu0
    %v10751 = vld [vmem:[#allocation4] sm:$0xff]
    %v10752 = vld [vmem:[#allocation4 + $0x8] sm:$0xff]
    %v10753 = vxor.u32 %v10189, 2147483648
    %v10754 = vxor.u32 %v10269, 2147483648
    %v10755 = vmul.f32 %v10753, 1.442695
    %v10756 = vpow.pop %v10755
    %v10757 = vmul.f32 %v10754, 1.442695
    %v10758 = vpow.pop %v10757
    %v10759 = vadd.f32 %v10756, 1.0
    %v10760 = vadd.f32 %v10758, 1.0
    %v10761 = vrcp.pop %v10759
    %v10762 = vmul.f32 %v10759, %v10761
    %v10763 = vsub.f32 1.0, %v10762
    %v10764 = vmul.f32 %v10761, %v10763
    %v10765 = vadd.f32 %v10761, %v10764
    %vm10766 = vweird.f32 %v10759
    %vm10767 = vweird.f32 %v10761
    %vm10768 = vmor %vm10766, %vm10767
    %v10769 = vsel %vm10768, %v10761, %v10765
    %v10770 = vand.u32 2147483647, %v10759
    %vm10771 = vcmp.eq.f32.partialorder %v10770, 8.507059e+37
    %v10772 = vand.u32 %v10759, 2147483648
    %v10773 = vor.u32 1.1754944e-38, %v10772
    %v10774 = vsel %vm10771, %v10773, %v10769
    %v10775 = vmul.f32 1.0, %v10774
    %v10776 = vrcp.pop %v10760
    %v10777 = vmul.f32 %v10760, %v10776
    %v10778 = vsub.f32 1.0, %v10777
    %v10779 = vmul.f32 %v10776, %v10778
    %v10780 = vadd.f32 %v10776, %v10779
    %vm10781 = vweird.f32 %v10760
    %vm10782 = vweird.f32 %v10776
    %vm10783 = vmor %vm10781, %vm10782
    %v10784 = vsel %vm10783, %v10776, %v10780
    %v10785 = vand.u32 2147483647, %v10760
    %vm10786 = vcmp.eq.f32.partialorder %v10785, 8.507059e+37
    %v10787 = vand.u32 %v10760, 2147483648
    %v10788 = vor.u32 1.1754944e-38, %v10787
    %v10789 = vsel %vm10786, %v10788, %v10784
    %v10790 = vmul.f32 1.0, %v10789
    %v10791 = vxor.u32 %v10349, 2147483648
    %v10792 = vxor.u32 %v10429, 2147483648
    %v10793 = vmul.f32 %v10791, 1.442695
    %v10794 = vpow.pop %v10793
    %v10795 = vmul.f32 %v10792, 1.442695
    %v10796 = vpow.pop %v10795
    %v10797 = vadd.f32 %v10794, 1.0
    %v10798 = vadd.f32 %v10796, 1.0
    %v10799 = vrcp.pop %v10797
    %v10800 = vmul.f32 %v10797, %v10799
    %v10801 = vsub.f32 1.0, %v10800
    %v10802 = vmul.f32 %v10799, %v10801
    %v10803 = vadd.f32 %v10799, %v10802
    %vm10804 = vweird.f32 %v10797
    %vm10805 = vweird.f32 %v10799
    %vm10806 = vmor %vm10804, %vm10805
    %v10807 = vsel %vm10806, %v10799, %v10803
    %v10808 = vand.u32 2147483647, %v10797
    %vm10809 = vcmp.eq.f32.partialorder %v10808, 8.507059e+37
    %v10810 = vand.u32 %v10797, 2147483648
    %v10811 = vor.u32 1.1754944e-38, %v10810
    %v10812 = vsel %vm10809, %v10811, %v10807
    %v10813 = vmul.f32 1.0, %v10812
    %v10814 = vrcp.pop %v10798
    %v10815 = vmul.f32 %v10798, %v10814
    %v10816 = vsub.f32 1.0, %v10815
    %v10817 = vmul.f32 %v10814, %v10816
    %v10818 = vadd.f32 %v10814, %v10817
    %vm10819 = vweird.f32 %v10798
    %vm10820 = vweird.f32 %v10814
    %vm10821 = vmor %vm10819, %vm10820
    %v10822 = vsel %vm10821, %v10814, %v10818
    %v10823 = vand.u32 2147483647, %v10798
    %vm10824 = vcmp.eq.f32.partialorder %v10823, 8.507059e+37
    %v10825 = vand.u32 %v10798, 2147483648
    %v10826 = vor.u32 1.1754944e-38, %v10825
    %v10827 = vsel %vm10824, %v10826, %v10822
    %v10828 = vmul.f32 1.0, %v10827
    %v10829 = vtanh.pop %v10509
    %v10830 = vtanh.pop %v10589
    %v10831 = vxor.u32 %v10669, 2147483648
    %v10832 = vxor.u32 %v10749, 2147483648
    %v10833 = vmul.f32 %v10831, 1.442695
    %v10834 = vpow.pop %v10833
    %v10835 = vmul.f32 %v10832, 1.442695
    %v10836 = vpow.pop %v10835
    %v10837 = vadd.f32 %v10834, 1.0
    %v10838 = vadd.f32 %v10836, 1.0
    %v10839 = vrcp.pop %v10837
    %v10840 = vmul.f32 %v10837, %v10839
    %v10841 = vsub.f32 1.0, %v10840
    %v10842 = vmul.f32 %v10839, %v10841
    %v10843 = vadd.f32 %v10839, %v10842
    %vm10844 = vweird.f32 %v10837
    %vm10845 = vweird.f32 %v10839
    %vm10846 = vmor %vm10844, %vm10845
    %v10847 = vsel %vm10846, %v10839, %v10843
    %v10848 = vand.u32 2147483647, %v10837
    %vm10849 = vcmp.eq.f32.partialorder %v10848, 8.507059e+37
    %v10850 = vand.u32 %v10837, 2147483648
    %v10851 = vor.u32 1.1754944e-38, %v10850
    %v10852 = vsel %vm10849, %v10851, %v10847
    %v10853 = vmul.f32 1.0, %v10852
    %v10854 = vrcp.pop %v10838
    %v10855 = vmul.f32 %v10838, %v10854
    %v10856 = vsub.f32 1.0, %v10855
    %v10857 = vmul.f32 %v10854, %v10856
    %v10858 = vadd.f32 %v10854, %v10857
    %vm10859 = vweird.f32 %v10838
    %vm10860 = vweird.f32 %v10854
    %vm10861 = vmor %vm10859, %vm10860
    %v10862 = vsel %vm10861, %v10854, %v10858
    %v10863 = vand.u32 2147483647, %v10838
    %vm10864 = vcmp.eq.f32.partialorder %v10863, 8.507059e+37
    %v10865 = vand.u32 %v10838, 2147483648
    %v10866 = vor.u32 1.1754944e-38, %v10865
    %v10867 = vsel %vm10864, %v10866, %v10862
    %v10868 = vmul.f32 1.0, %v10867
    %v10869 = vmul.f32 %v10813, %v10751
    %v10870 = vmul.f32 %v10828, %v10752
    %v10871 = vmul.f32 %v10775, %v10829
    %v10872 = vmul.f32 %v10790, %v10830
    %v10873 = vadd.f32 %v10869, %v10871
    %v10874 = vadd.f32 %v10870, %v10872
    %v10875 = vtanh.pop %v10873
    %v10876 = vtanh.pop %v10874
    %v10877 = vmul.f32 %v10853, %v10875
    %v10878 = vmul.f32 %v10868, %v10876
    %10879 = vst [vmem:[#allocation4] sm:$0xff] %v10873
    %10880 = vst [vmem:[#allocation4 + $0x8] sm:$0xff] %v10874
    %10881 = vst [vmem:[#allocation2 + $0x10] sm:$0xff] %v10877
    %10882 = vst [vmem:[#allocation2 + $0x18] sm:$0xff] %v10878
    %v10883 = vld [vmem:[#allocation2 + $0x10] sm:$0xff]
    %v10884 = vld [vmem:[#allocation2 + $0x18] sm:$0xff]
    %v10885 = vld [vmem:[#allocation13] sm:$0xff]
    %v10886 = vld [vmem:[#allocation13 + $0x8] sm:$0xff]
    %v10887 = vld [vmem:[#allocation13 + $0x10] sm:$0xff]
    %v10888 = vld [vmem:[#allocation13 + $0x18] sm:$0xff]
    %v10889 = vld [vmem:[#allocation13 + $0x20] sm:$0xff]
    %v10890 = vld [vmem:[#allocation13 + $0x28] sm:$0xff]
    %v10891 = vld [vmem:[#allocation13 + $0x30] sm:$0xff]
    %v10892 = vld [vmem:[#allocation13 + $0x38] sm:$0xff]
    %v10893 = vld [vmem:[#allocation13 + $0x40] sm:$0xff]
    %v10894 = vld [vmem:[#allocation13 + $0x48] sm:$0xff]
    %v10895 = vld [vmem:[#allocation13 + $0x50] sm:$0xff]
    %v10896 = vld [vmem:[#allocation13 + $0x58] sm:$0xff]
    %v10897 = vld [vmem:[#allocation13 + $0x60] sm:$0xff]
    %v10898 = vld [vmem:[#allocation13 + $0x68] sm:$0xff]
    %v10899 = vld [vmem:[#allocation13 + $0x70] sm:$0xff]
    %v10900 = vld [vmem:[#allocation13 + $0x78] sm:$0xff]
    %v10901 = vld [vmem:[#allocation13 + $0x80] sm:$0xff]
    %v10902 = vld [vmem:[#allocation13 + $0x88] sm:$0xff]
    %v10903 = vld [vmem:[#allocation13 + $0x90] sm:$0xff]
    %v10904 = vld [vmem:[#allocation13 + $0x98] sm:$0xff]
    %v10905 = vld [vmem:[#allocation13 + $0xa0] sm:$0xff]
    %v10906 = vld [vmem:[#allocation13 + $0xa8] sm:$0xff]
    %v10907 = vld [vmem:[#allocation13 + $0xb0] sm:$0xff]
    %v10908 = vld [vmem:[#allocation13 + $0xb8] sm:$0xff]
    %v10909 = vld [vmem:[#allocation13 + $0xc0] sm:$0xff]
    %v10910 = vld [vmem:[#allocation13 + $0xc8] sm:$0xff]
    %v10911 = vld [vmem:[#allocation13 + $0xd0] sm:$0xff]
    %v10912 = vld [vmem:[#allocation13 + $0xd8] sm:$0xff]
    %v10913 = vld [vmem:[#allocation13 + $0xe0] sm:$0xff]
    %v10914 = vld [vmem:[#allocation13 + $0xe8] sm:$0xff]
    %v10915 = vld [vmem:[#allocation13 + $0xf0] sm:$0xff]
    %v10916 = vld [vmem:[#allocation13 + $0xf8] sm:$0xff]
    %v10917 = vld [vmem:[#allocation14] sm:$0x1]
    %v10919 = vperm.slane %v10917, 0
    %10921 = vmatpush.msra.mxu0 %v10900
    %10922 = vmatpush.msra.mxu0 %v10899
    %10923 = vmatpush.msra.mxu0 %v10898
    %10924 = vmatpush.msra.mxu0 %v10897
    %10925 = vmatpush.msra.mxu0 %v10896
    %10926 = vmatpush.msra.mxu0 %v10895
    %10927 = vmatpush.msra.mxu0 %v10894
    %10928 = vmatpush.msra.mxu0 %v10893
    %10929 = vmatpush.msra.mxu0 %v10892
    %10930 = vmatpush.msra.mxu0 %v10891
    %10931 = vmatpush.msra.mxu0 %v10890
    %10932 = vmatpush.msra.mxu0 %v10889
    %10933 = vmatpush.msra.mxu0 %v10888
    %10934 = vmatpush.msra.mxu0 %v10887
    %10935 = vmatpush.msra.mxu0 %v10886
    %10936 = vmatpush.msra.mxu0 %v10885
    %10937 = vmatmul.f32.gmra.mxu0 %v10883
    %v10938 = vpop.f32.mrf.mxu0
    %v10939 = vadd.f32 %v10919, %v10938
    %10940 = vdwg.mxu0
    %10941 = vmatpush.msra.mxu0 %v10916
    %10942 = vmatpush.msra.mxu0 %v10915
    %10943 = vmatpush.msra.mxu0 %v10914
    %10944 = vmatpush.msra.mxu0 %v10913
    %10945 = vmatpush.msra.mxu0 %v10912
    %10946 = vmatpush.msra.mxu0 %v10911
    %10947 = vmatpush.msra.mxu0 %v10910
    %10948 = vmatpush.msra.mxu0 %v10909
    %10949 = vmatpush.msra.mxu0 %v10908
    %10950 = vmatpush.msra.mxu0 %v10907
    %10951 = vmatpush.msra.mxu0 %v10906
    %10952 = vmatpush.msra.mxu0 %v10905
    %10953 = vmatpush.msra.mxu0 %v10904
    %10954 = vmatpush.msra.mxu0 %v10903
    %10955 = vmatpush.msra.mxu0 %v10902
    %10956 = vmatpush.msra.mxu0 %v10901
    %10957 = vmatmul.f32.gmra.mxu0 %v10884
    %v10958 = vpop.f32.mrf.mxu0
    %v10959 = vadd.f32 %v10939, %v10958
    %10960 = vdwg.mxu0
    %10961 = vst [vmem:[#allocation16] sm:$0xff] %v10959
    // Predicated region
    $region50: #{tpu_custom_call.1} parent=1 // pred_check
      _
    $region51: #{tpu_custom_call.1} parent=1 // pred_check_branch
      %10963 = sbr.rel (0) target = $region53
    $region52: #{tpu_custom_call.1} parent=1 // pred_region
      %10965 = vsyncadd [#allocation7], 0
      %s10967 = sshll.u32 [#allocation16], 4
      %s10968 = int_to_ptr.vmem [resolvable:$true] %s10967
      %s10969 = sshll.u32 %s6, 4
      %s10970 = int_to_ptr.hbm [resolvable:$true] %s10969
      %10972 = dma.vmem_to_hbm [thread:$0]  %s10968, 128, %s10970, [#allocation7]
    $region53: #{tpu_custom_call.1} parent=1 // pred_fallthru
      _
    // Predicated region
    $region54: #{tpu_custom_call.1} parent=1 // pred_check
      _
    $region55: #{tpu_custom_call.1} parent=1 // pred_check_branch
      %10974 = sbr.rel (0) target = $region57
    $region56: #{tpu_custom_call.1} parent=1 // pred_region
      %10976 = dma.done [#allocation7], 128
    $region57: #{tpu_custom_call.1} parent=1 // pred_fallthru
      _
    %10977 = vsyncpa [#allocation6], 1
    %10978 = vsyncpa [#allocation9], 1
    %10979 = vsyncpa [#allocation12], 1
    %10980 = vsyncpa [#allocation15], 1
    %10981 = vsyncpa [#allocation7], 1

</llo_original>
